<compile_context>
chip_gen: v5e
topology: v5e:2x2
jax: 0.10.0
libtpu: 0.0.40
codegen_flags: <defaults>
</compile_context>

<pallas_src>
import functools

import jax
import jax.numpy as jnp
from jax.experimental import pallas as pl
from jax.experimental.pallas import tpu as pltpu

BN_EPS = 1e-5


# ---------------------------------------------------------------------------
# Pallas kernel: fused (A @ W) + bias [+ residual] [+ ReLU]
# ---------------------------------------------------------------------------
def _make_matmul_kernel(apply_relu, has_residual):
    if has_residual:
        def kernel(a_ref, w_ref, b_ref, r_ref, o_ref):
            y = jnp.dot(a_ref[...], w_ref[...], preferred_element_type=jnp.float32)
            y = y + b_ref[...]
            y = y + r_ref[...]
            if apply_relu:
                y = jnp.maximum(y, 0.0)
            o_ref[...] = y.astype(o_ref.dtype)
    else:
        def kernel(a_ref, w_ref, b_ref, o_ref):
            y = jnp.dot(a_ref[...], w_ref[...], preferred_element_type=jnp.float32)
            y = y + b_ref[...]
            if apply_relu:
                y = jnp.maximum(y, 0.0)
            o_ref[...] = y.astype(o_ref.dtype)
    return kernel


def _round_up(x, m):
    return (x + m - 1) // m * m


def matmul_bias_act(a, w, bias, residual=None, relu=True, tm_max=1024):
    """y = act(a @ w + bias [+ residual]).

    a: (M, K) bf16 (im2col patches), w: (K, N) bf16 with BN scale pre-folded,
    bias: (N,) f32.  Accumulation and epilogue are f32.
    """
    M, K = a.shape
    N = w.shape[1]
    # >= 2 grid steps so v7x shards across both TensorCores; <= tm_max rows
    # per step so the sequential grid-step count stays small on v5e/v6e.
    g = max(2, (M + tm_max - 1) // tm_max)
    tm = _round_up(max(1, (M + g - 1) // g), 8)
    Mp = g * tm

    a_p = a if Mp == M else jnp.pad(a, ((0, Mp - M), (0, 0)))
    bias2 = bias.reshape(1, N).astype(jnp.float32)
    ins = [a_p, w, bias2]
    in_specs = [
        pl.BlockSpec((tm, K), lambda i: (i, 0)),
        pl.BlockSpec((K, N), lambda i: (0, 0)),
        pl.BlockSpec((1, N), lambda i: (0, 0)),
    ]
    if residual is not None:
        r = residual.astype(jnp.float32)
        r_p = r if Mp == M else jnp.pad(r, ((0, Mp - M), (0, 0)))
        ins.append(r_p)
        in_specs.append(pl.BlockSpec((tm, N), lambda i: (i, 0)))

    out = pl.pallas_call(
        _make_matmul_kernel(relu, residual is not None),
        out_shape=jax.ShapeDtypeStruct((Mp, N), jnp.float32),
        grid=(g,),
        in_specs=in_specs,
        out_specs=pl.BlockSpec((tm, N), lambda i: (i, 0)),
        compiler_params=pltpu.CompilerParams(dimension_semantics=("parallel",)),
    )(*ins)
    return out if Mp == M else out[:M]


# ---------------------------------------------------------------------------
# Conv lowering (im2col glue in bf16 + Pallas matmul)
# ---------------------------------------------------------------------------
def _im2col_3d(x, pad):
    """x: (B, D, H, W, C) -> bf16 patches (B*Do*Ho*Wo, 27*C) for 3x3x3 stride-1."""
    B, D, H, W, C = x.shape
    x = x.astype(jnp.bfloat16)
    if pad:
        x = jnp.pad(x, ((0, 0), (pad, pad), (pad, pad), (pad, pad), (0, 0)))
    Do, Ho, Wo = D + 2 * pad - 2, H + 2 * pad - 2, W + 2 * pad - 2
    cols = [x[:, kd:kd + Do, kh:kh + Ho, kw:kw + Wo, :]
            for kd in range(3) for kh in range(3) for kw in range(3)]
    patches = jnp.stack(cols, axis=-2)                       # (B, Do, Ho, Wo, 27, C)
    return patches.reshape(B * Do * Ho * Wo, 27 * C), (B, Do, Ho, Wo)


def conv3d_packed(x, wmat, bias, relu, pad, residual=None):
    """3x3x3 conv (stride 1) with pre-folded BN, optional residual + ReLU fused."""
    patches, (B, Do, Ho, Wo) = _im2col_3d(x, pad)
    Cout = wmat.shape[1]
    res = None if residual is None else residual.reshape(-1, Cout)
    y = matmul_bias_act(patches, wmat, bias, residual=res, relu=relu)
    return y.reshape(B, Do, Ho, Wo, Cout)


def residual_block_fwd(x, p):
    x1 = conv3d_packed(x, p["w1"], p["b1"], relu=True, pad=1)
    x2 = conv3d_packed(x1, p["w2"], p["b2"], relu=True, pad=1)
    # out = relu(x1 + bn(conv3(x2)))  -- residual add and ReLU fused in kernel
    return conv3d_packed(x2, p["w3"], p["b3"], relu=True, pad=1, residual=x1)


def maxpool3d(x, kernel, pad):
    """MaxPool3d with stride == kernel; plain JAX (perf review: Pallas pool was
    pure launch overhead at these sizes).  x: (B, D, H, W, C)."""
    B, D, H, W, C = x.shape
    kd, kh, kw = kernel
    pd, ph, pw = pad
    neg = jnp.finfo(x.dtype).min
    xp = jnp.pad(x, ((0, 0), (pd, pd), (ph, ph), (pw, pw), (0, 0)), constant_values=neg)
    Do = (D + 2 * pd - kd) // kd + 1
    Ho = (H + 2 * ph - kh) // kh + 1
    Wo = (W + 2 * pw - kw) // kw + 1
    xp = xp[:, :Do * kd, :Ho * kh, :Wo * kw, :]
    xw = xp.reshape(B, Do, kd, Ho, kh, Wo, kw, C)
    return xw.max(axis=(2, 4, 6))


# ---------------------------------------------------------------------------
# Network forward
# ---------------------------------------------------------------------------
def network_forward(params, x, domain="source"):
    B, Cin, P, _ = x.shape
    if domain == "target":
        mp, ci = params["target_mapping"], params["cit"]
    else:
        mp, ci = params["source_mapping"], params["cix"]

    # Mapping: 1x1 Conv2d (no bias) + BatchNorm2d  -> single fused matmul
    xt = jnp.transpose(x, (0, 2, 3, 1)).reshape(B * P * P, Cin).astype(jnp.bfloat16)
    n_dim = mp["w"].shape[1]
    y = matmul_bias_act(xt, mp["w"], mp["b"], relu=False)
    y = jnp.transpose(y.reshape(B, P, P, n_dim), (0, 3, 1, 2))  # (B, N_DIM, P, P)

    # concat domain-specific maps along the channel axis
    ci_b = jnp.broadcast_to(ci[None], (B,) + ci.shape)          # (B, 2, P, P)
    xc = jnp.concatenate([y, ci_b], axis=1)                     # (B, N_DIM+2, P, P)

    # D_Res_3d_CNN: unsqueeze(1) -> channels-last NDHWC with C=1, depth=N_DIM+2
    v = xc[..., None]                                           # (B, D, H, W, 1)
    v = residual_block_fwd(v, params["block1"])
    v = maxpool3d(v, (4, 2, 2), (0, 1, 1))
    v = residual_block_fwd(v, params["block2"])
    v = maxpool3d(v, (4, 2, 2), (2, 1, 1))

    # final Conv3d(16 -> 32, k=3, no pad, no bias, no BN, no ReLU)
    v = conv3d_packed(v, params["final_conv"]["w"], params["final_conv"]["b"],
                      relu=False, pad=0)

    # flatten exactly like x.view(B, -1) on an NCDHW tensor
    return jnp.transpose(v, (0, 4, 1, 2, 3)).reshape(B, -1)


# ---------------------------------------------------------------------------
# Deterministic parameter init (BN folded + weights packed at prep time)
# ---------------------------------------------------------------------------
def _fold_bn(gamma, beta, mean, var):
    scale = gamma / jnp.sqrt(var + BN_EPS)
    return scale, beta - mean * scale


def _init_bn(key, c):
    k1, k2, k3, k4 = jax.random.split(key, 4)
    gamma = 1.0 + 0.1 * jax.random.normal(k1, (c,), jnp.float32)
    beta = 0.1 * jax.random.normal(k2, (c,), jnp.float32)
    mean = 0.1 * jax.random.normal(k3, (c,), jnp.float32)
    var = 0.5 + 0.5 * jnp.abs(jax.random.normal(k4, (c,), jnp.float32))
    return _fold_bn(gamma, beta, mean, var)


def _pack_conv3(w_pt, scale):
    """(Cout, Cin, 3,3,3) PyTorch weight -> (27*Cin, Cout) bf16, BN scale folded.
    Column order matches _im2col_3d: tap-major (kd,kh,kw), channel-minor."""
    cout, cin = w_pt.shape[0], w_pt.shape[1]
    wmat = jnp.transpose(w_pt, (2, 3, 4, 1, 0)).reshape(27 * cin, cout)
    return (wmat * scale[None, :]).astype(jnp.bfloat16)


def _init_conv3_bn(key, cout, cin):
    kw, kb = jax.random.split(key)
    fan_in = cin * 27
    w = jax.random.normal(kw, (cout, cin, 3, 3, 3), jnp.float32) / jnp.sqrt(fan_in)
    s, b = _init_bn(kb, cout)
    return _pack_conv3(w, s), b


def _init_block(key, cin, cout):
    k1, k2, k3 = jax.random.split(key, 3)
    w1, b1 = _init_conv3_bn(k1, cout, cin)
    w2, b2 = _init_conv3_bn(k2, cout, cout)
    w3, b3 = _init_conv3_bn(k3, cout, cout)
    return {"w1": w1, "b1": b1, "w2": w2, "b2": b2, "w3": w3, "b3": b3}


def _init_mapping(key, cin, cout):
    kw, kb = jax.random.split(key)
    w = jax.random.normal(kw, (cout, cin, 1, 1), jnp.float32) / jnp.sqrt(cin)
    s, b = _init_bn(kb, cout)
    wmat = (w[:, :, 0, 0].T * s[None, :]).astype(jnp.bfloat16)   # (Cin, N_DIM)
    return {"w": wmat, "b": b}


def init_network_params(key, src_dim, tar_dim, n_dim, patch):
    k1, k2, k3, k4, k5 = jax.random.split(key, 5)
    ones_p = jnp.ones((1, patch, patch), jnp.float32)
    zeros_p = jnp.zeros((1, patch, patch), jnp.float32)
    wf = jax.random.normal(k5, (32, 16, 3, 3, 3), jnp.float32) / jnp.sqrt(16 * 27)
    return {
        "source_mapping": _init_mapping(k1, src_dim, n_dim),
        "target_mapping": _init_mapping(k2, tar_dim, n_dim),
        "block1": _init_block(k3, 1, 8),
        "block2": _init_block(k4, 8, 16),
        "final_conv": {"w": _pack_conv3(wf, jnp.ones((32,), jnp.float32)),
                       "b": jnp.zeros((32,), jnp.float32)},
        "cix": jnp.concatenate([ones_p, zeros_p], axis=0),   # (2, P, P)
        "cit": jnp.concatenate([zeros_p, ones_p], axis=0),   # (2, P, P)
    }


# ---------------------------------------------------------------------------
if __name__ == "__main__":
    SRC_INPUT_DIMENSION = 4
    TAR_INPUT_DIMENSION = 6
    N_DIMENSION = 30
    PATCH = 9
    B = 2

    key = jax.random.PRNGKey(0)
    kp, kx = jax.random.split(key)
    params = init_network_params(kp, SRC_INPUT_DIMENSION, TAR_INPUT_DIMENSION,
                                 N_DIMENSION, PATCH)
    x = jax.random.normal(kx, (B, SRC_INPUT_DIMENSION, PATCH, PATCH), jnp.float32)

    fwd = jax.jit(functools.partial(network_forward, domain="source"))
    feat = fwd(params, x)
    jax.block_until_ready(feat)
    assert feat.shape == (B, 32), feat.shape
    assert jnp.all(jnp.isfinite(feat))
    print("KERNEL_OK")
</pallas_src>

<mosaic_0001>
module attributes {stable_mosaic.version = 11 : i64} {
  func.func @kernel(%arg0: i32, %arg1: memref<88x4xbf16, #tpu.memory_space<vmem>>, %arg2: memref<4x30xbf16, #tpu.memory_space<vmem>>, %arg3: memref<1x30xf32, #tpu.memory_space<vmem>>, %arg4: memref<88x30xf32, #tpu.memory_space<vmem>>) attributes {dimension_semantics = [#tpu.dimension_semantics<parallel>], iteration_bounds = array<i64: 2>, scalar_prefetch = 0 : i64, scratch_operands = 0 : i64, tpu.core_type = #tpu.core_type<tc>, window_params = [{transform_indices = @transform_0, window_bounds = array<i64: 88, 4>}, {pipeline_mode = #tpu.pipeline_mode<synchronous>, transform_indices = @transform_1, window_bounds = array<i64: 4, 30>}, {pipeline_mode = #tpu.pipeline_mode<synchronous>, transform_indices = @transform_2, window_bounds = array<i64: 1, 30>}, {transform_indices = @transform_3, window_bounds = array<i64: 88, 30>}]} {
    %c0 = arith.constant 0 : index
    %c0_0 = arith.constant 0 : index
    %0 = vector.load %arg1[%c0, %c0_0] : memref<88x4xbf16, #tpu.memory_space<vmem>>, vector<88x4xbf16>
    %c0_1 = arith.constant 0 : index
    %c0_2 = arith.constant 0 : index
    %1 = vector.load %arg2[%c0_1, %c0_2] : memref<4x30xbf16, #tpu.memory_space<vmem>>, vector<4x30xbf16>
    %cst = arith.constant dense<0.000000e+00> : vector<88x30xf32>
    %2 = tpu.matmul %0, %1, %cst {dimension_numbers = #tpu.dot_dimension_numbers<[1], [0], [0], [1], [0, 0, 1, 1], [], []>} : vector<88x4xbf16>, vector<4x30xbf16>, vector<88x30xf32> -> vector<88x30xf32>
    %c0_3 = arith.constant 0 : index
    %c0_4 = arith.constant 0 : index
    %3 = vector.load %arg3[%c0_3, %c0_4] : memref<1x30xf32, #tpu.memory_space<vmem>>, vector<1x30xf32>
    %4 = vector.broadcast %3 : vector<1x30xf32> to vector<88x30xf32>
    %5 = arith.addf %2, %4 : vector<88x30xf32>
    %c0_5 = arith.constant 0 : index
    %c0_6 = arith.constant 0 : index
    %6 = vector.load %arg4[%c0_5, %c0_6] : memref<88x30xf32, #tpu.memory_space<vmem>>, vector<88x30xf32>
    tpu.vector_store %arg4[%c0_5, %c0_6], %5 {strides = array<i32>} : memref<88x30xf32, #tpu.memory_space<vmem>>, vector<88x30xf32>,
    return
  }
  func.func @transform_0(%arg0: i32) -> (i32, i32) {
    %c0_i32 = arith.constant 0 : i32
    %c0_i32_0 = arith.constant 0 : i32
    return %arg0, %c0_i32 : i32, i32
  }
  func.func @transform_1(%arg0: i32) -> (i32, i32) {
    %c0_i32 = arith.constant 0 : i32
    %c0_i32_0 = arith.constant 0 : i32
    %c0_i32_1 = arith.constant 0 : i32
    return %c0_i32, %c0_i32_0 : i32, i32
  }
  func.func @transform_2(%arg0: i32) -> (i32, i32) {
    %c0_i32 = arith.constant 0 : i32
    %c0_i32_0 = arith.constant 0 : i32
    %c0_i32_1 = arith.constant 0 : i32
    return %c0_i32, %c0_i32_0 : i32, i32
  }
  func.func @transform_3(%arg0: i32) -> (i32, i32) {
    %c0_i32 = arith.constant 0 : i32
    %c0_i32_0 = arith.constant 0 : i32
    return %arg0, %c0_i32 : i32, i32
  }
}

module attributes {stable_mosaic.version = 11 : i64} {
  func.func @kernel(%arg0: i32, %arg1: memref<864x27xbf16, #tpu.memory_space<vmem>>, %arg2: memref<27x8xbf16, #tpu.memory_space<vmem>>, %arg3: memref<1x8xf32, #tpu.memory_space<vmem>>, %arg4: memref<864x8xf32, #tpu.memory_space<vmem>>) attributes {dimension_semantics = [#tpu.dimension_semantics<parallel>], iteration_bounds = array<i64: 6>, scalar_prefetch = 0 : i64, scratch_operands = 0 : i64, tpu.core_type = #tpu.core_type<tc>, window_params = [{transform_indices = @transform_0, window_bounds = array<i64: 864, 27>}, {pipeline_mode = #tpu.pipeline_mode<synchronous>, transform_indices = @transform_1, window_bounds = array<i64: 27, 8>}, {pipeline_mode = #tpu.pipeline_mode<synchronous>, transform_indices = @transform_2, window_bounds = array<i64: 1, 8>}, {transform_indices = @transform_3, window_bounds = array<i64: 864, 8>}]} {
    %c0 = arith.constant 0 : index
    %c0_0 = arith.constant 0 : index
    %0 = vector.load %arg1[%c0, %c0_0] : memref<864x27xbf16, #tpu.memory_space<vmem>>, vector<864x27xbf16>
    %c0_1 = arith.constant 0 : index
    %c0_2 = arith.constant 0 : index
    %1 = vector.load %arg2[%c0_1, %c0_2] : memref<27x8xbf16, #tpu.memory_space<vmem>>, vector<27x8xbf16>
    %cst = arith.constant dense<0.000000e+00> : vector<864x8xf32>
    %2 = tpu.matmul %0, %1, %cst {dimension_numbers = #tpu.dot_dimension_numbers<[1], [0], [0], [1], [0, 0, 1, 1], [], []>} : vector<864x27xbf16>, vector<27x8xbf16>, vector<864x8xf32> -> vector<864x8xf32>
    %c0_3 = arith.constant 0 : index
    %c0_4 = arith.constant 0 : index
    %3 = vector.load %arg3[%c0_3, %c0_4] : memref<1x8xf32, #tpu.memory_space<vmem>>, vector<1x8xf32>
    %4 = vector.broadcast %3 : vector<1x8xf32> to vector<864x8xf32>
    %5 = arith.addf %2, %4 : vector<864x8xf32>
    %cst_5 = arith.constant 0.000000e+00 : f32
    %6 = vector.broadcast %cst_5 : f32 to vector<864x8xf32>
    %7 = arith.maximumf %5, %6 : vector<864x8xf32>
    %c0_6 = arith.constant 0 : index
    %c0_7 = arith.constant 0 : index
    %8 = vector.load %arg4[%c0_6, %c0_7] : memref<864x8xf32, #tpu.memory_space<vmem>>, vector<864x8xf32>
    tpu.vector_store %arg4[%c0_6, %c0_7], %7 {strides = array<i32>} : memref<864x8xf32, #tpu.memory_space<vmem>>, vector<864x8xf32>,
    return
  }
  func.func @transform_0(%arg0: i32) -> (i32, i32) {
    %c0_i32 = arith.constant 0 : i32
    %c0_i32_0 = arith.constant 0 : i32
    return %arg0, %c0_i32 : i32, i32
  }
  func.func @transform_1(%arg0: i32) -> (i32, i32) {
    %c0_i32 = arith.constant 0 : i32
    %c0_i32_0 = arith.constant 0 : i32
    %c0_i32_1 = arith.constant 0 : i32
    return %c0_i32, %c0_i32_0 : i32, i32
  }
  func.func @transform_2(%arg0: i32) -> (i32, i32) {
    %c0_i32 = arith.constant 0 : i32
    %c0_i32_0 = arith.constant 0 : i32
    %c0_i32_1 = arith.constant 0 : i32
    return %c0_i32, %c0_i32_0 : i32, i32
  }
  func.func @transform_3(%arg0: i32) -> (i32, i32) {
    %c0_i32 = arith.constant 0 : i32
    %c0_i32_0 = arith.constant 0 : i32
    return %arg0, %c0_i32 : i32, i32
  }
}

module attributes {stable_mosaic.version = 11 : i64} {
  func.func @kernel(%arg0: i32, %arg1: memref<864x216xbf16, #tpu.memory_space<vmem>>, %arg2: memref<216x8xbf16, #tpu.memory_space<vmem>>, %arg3: memref<1x8xf32, #tpu.memory_space<vmem>>, %arg4: memref<864x8xf32, #tpu.memory_space<vmem>>) attributes {dimension_semantics = [#tpu.dimension_semantics<parallel>], iteration_bounds = array<i64: 6>, scalar_prefetch = 0 : i64, scratch_operands = 0 : i64, tpu.core_type = #tpu.core_type<tc>, window_params = [{transform_indices = @transform_0, window_bounds = array<i64: 864, 216>}, {pipeline_mode = #tpu.pipeline_mode<synchronous>, transform_indices = @transform_1, window_bounds = array<i64: 216, 8>}, {pipeline_mode = #tpu.pipeline_mode<synchronous>, transform_indices = @transform_2, window_bounds = array<i64: 1, 8>}, {transform_indices = @transform_3, window_bounds = array<i64: 864, 8>}]} {
    %c0 = arith.constant 0 : index
    %c0_0 = arith.constant 0 : index
    %0 = vector.load %arg1[%c0, %c0_0] : memref<864x216xbf16, #tpu.memory_space<vmem>>, vector<864x216xbf16>
    %c0_1 = arith.constant 0 : index
    %c0_2 = arith.constant 0 : index
    %1 = vector.load %arg2[%c0_1, %c0_2] : memref<216x8xbf16, #tpu.memory_space<vmem>>, vector<216x8xbf16>
    %cst = arith.constant dense<0.000000e+00> : vector<864x8xf32>
    %2 = tpu.matmul %0, %1, %cst {dimension_numbers = #tpu.dot_dimension_numbers<[1], [0], [0], [1], [0, 0, 1, 1], [], []>} : vector<864x216xbf16>, vector<216x8xbf16>, vector<864x8xf32> -> vector<864x8xf32>
    %c0_3 = arith.constant 0 : index
    %c0_4 = arith.constant 0 : index
    %3 = vector.load %arg3[%c0_3, %c0_4] : memref<1x8xf32, #tpu.memory_space<vmem>>, vector<1x8xf32>
    %4 = vector.broadcast %3 : vector<1x8xf32> to vector<864x8xf32>
    %5 = arith.addf %2, %4 : vector<864x8xf32>
    %cst_5 = arith.constant 0.000000e+00 : f32
    %6 = vector.broadcast %cst_5 : f32 to vector<864x8xf32>
    %7 = arith.maximumf %5, %6 : vector<864x8xf32>
    %c0_6 = arith.constant 0 : index
    %c0_7 = arith.constant 0 : index
    %8 = vector.load %arg4[%c0_6, %c0_7] : memref<864x8xf32, #tpu.memory_space<vmem>>, vector<864x8xf32>
    tpu.vector_store %arg4[%c0_6, %c0_7], %7 {strides = array<i32>} : memref<864x8xf32, #tpu.memory_space<vmem>>, vector<864x8xf32>,
    return
  }
  func.func @transform_0(%arg0: i32) -> (i32, i32) {
    %c0_i32 = arith.constant 0 : i32
    %c0_i32_0 = arith.constant 0 : i32
    return %arg0, %c0_i32 : i32, i32
  }
  func.func @transform_1(%arg0: i32) -> (i32, i32) {
    %c0_i32 = arith.constant 0 : i32
    %c0_i32_0 = arith.constant 0 : i32
    %c0_i32_1 = arith.constant 0 : i32
    return %c0_i32, %c0_i32_0 : i32, i32
  }
  func.func @transform_2(%arg0: i32) -> (i32, i32) {
    %c0_i32 = arith.constant 0 : i32
    %c0_i32_0 = arith.constant 0 : i32
    %c0_i32_1 = arith.constant 0 : i32
    return %c0_i32, %c0_i32_0 : i32, i32
  }
  func.func @transform_3(%arg0: i32) -> (i32, i32) {
    %c0_i32 = arith.constant 0 : i32
    %c0_i32_0 = arith.constant 0 : i32
    return %arg0, %c0_i32 : i32, i32
  }
}

module attributes {stable_mosaic.version = 11 : i64} {
  func.func @kernel(%arg0: i32, %arg1: memref<864x216xbf16, #tpu.memory_space<vmem>>, %arg2: memref<216x8xbf16, #tpu.memory_space<vmem>>, %arg3: memref<1x8xf32, #tpu.memory_space<vmem>>, %arg4: memref<864x8xf32, #tpu.memory_space<vmem>>, %arg5: memref<864x8xf32, #tpu.memory_space<vmem>>) attributes {dimension_semantics = [#tpu.dimension_semantics<parallel>], iteration_bounds = array<i64: 6>, scalar_prefetch = 0 : i64, scratch_operands = 0 : i64, tpu.core_type = #tpu.core_type<tc>, window_params = [{transform_indices = @transform_0, window_bounds = array<i64: 864, 216>}, {pipeline_mode = #tpu.pipeline_mode<synchronous>, transform_indices = @transform_1, window_bounds = array<i64: 216, 8>}, {pipeline_mode = #tpu.pipeline_mode<synchronous>, transform_indices = @transform_2, window_bounds = array<i64: 1, 8>}, {transform_indices = @transform_3, window_bounds = array<i64: 864, 8>}, {transform_indices = @transform_4, window_bounds = array<i64: 864, 8>}]} {
    %c0 = arith.constant 0 : index
    %c0_0 = arith.constant 0 : index
    %0 = vector.load %arg1[%c0, %c0_0] : memref<864x216xbf16, #tpu.memory_space<vmem>>, vector<864x216xbf16>
    %c0_1 = arith.constant 0 : index
    %c0_2 = arith.constant 0 : index
    %1 = vector.load %arg2[%c0_1, %c0_2] : memref<216x8xbf16, #tpu.memory_space<vmem>>, vector<216x8xbf16>
    %cst = arith.constant dense<0.000000e+00> : vector<864x8xf32>
    %2 = tpu.matmul %0, %1, %cst {dimension_numbers = #tpu.dot_dimension_numbers<[1], [0], [0], [1], [0, 0, 1, 1], [], []>} : vector<864x216xbf16>, vector<216x8xbf16>, vector<864x8xf32> -> vector<864x8xf32>
    %c0_3 = arith.constant 0 : index
    %c0_4 = arith.constant 0 : index
    %3 = vector.load %arg3[%c0_3, %c0_4] : memref<1x8xf32, #tpu.memory_space<vmem>>, vector<1x8xf32>
    %4 = vector.broadcast %3 : vector<1x8xf32> to vector<864x8xf32>
    %5 = arith.addf %2, %4 : vector<864x8xf32>
    %c0_5 = arith.constant 0 : index
    %c0_6 = arith.constant 0 : index
    %6 = vector.load %arg4[%c0_5, %c0_6] : memref<864x8xf32, #tpu.memory_space<vmem>>, vector<864x8xf32>
    %7 = arith.addf %5, %6 : vector<864x8xf32>
    %cst_7 = arith.constant 0.000000e+00 : f32
    %8 = vector.broadcast %cst_7 : f32 to vector<864x8xf32>
    %9 = arith.maximumf %7, %8 : vector<864x8xf32>
    %c0_8 = arith.constant 0 : index
    %c0_9 = arith.constant 0 : index
    %10 = vector.load %arg5[%c0_8, %c0_9] : memref<864x8xf32, #tpu.memory_space<vmem>>, vector<864x8xf32>
    tpu.vector_store %arg5[%c0_8, %c0_9], %9 {strides = array<i32>} : memref<864x8xf32, #tpu.memory_space<vmem>>, vector<864x8xf32>,
    return
  }
  func.func @transform_0(%arg0: i32) -> (i32, i32) {
    %c0_i32 = arith.constant 0 : i32
    %c0_i32_0 = arith.constant 0 : i32
    return %arg0, %c0_i32 : i32, i32
  }
  func.func @transform_1(%arg0: i32) -> (i32, i32) {
    %c0_i32 = arith.constant 0 : i32
    %c0_i32_0 = arith.constant 0 : i32
    %c0_i32_1 = arith.constant 0 : i32
    return %c0_i32, %c0_i32_0 : i32, i32
  }
  func.func @transform_2(%arg0: i32) -> (i32, i32) {
    %c0_i32 = arith.constant 0 : i32
    %c0_i32_0 = arith.constant 0 : i32
    %c0_i32_1 = arith.constant 0 : i32
    return %c0_i32, %c0_i32_0 : i32, i32
  }
  func.func @transform_3(%arg0: i32) -> (i32, i32) {
    %c0_i32 = arith.constant 0 : i32
    %c0_i32_0 = arith.constant 0 : i32
    return %arg0, %c0_i32 : i32, i32
  }
  func.func @transform_4(%arg0: i32) -> (i32, i32) {
    %c0_i32 = arith.constant 0 : i32
    %c0_i32_0 = arith.constant 0 : i32
    return %arg0, %c0_i32 : i32, i32
  }
}

module attributes {stable_mosaic.version = 11 : i64} {
  func.func @kernel(%arg0: i32, %arg1: memref<200x216xbf16, #tpu.memory_space<vmem>>, %arg2: memref<216x16xbf16, #tpu.memory_space<vmem>>, %arg3: memref<1x16xf32, #tpu.memory_space<vmem>>, %arg4: memref<200x16xf32, #tpu.memory_space<vmem>>) attributes {dimension_semantics = [#tpu.dimension_semantics<parallel>], iteration_bounds = array<i64: 2>, scalar_prefetch = 0 : i64, scratch_operands = 0 : i64, tpu.core_type = #tpu.core_type<tc>, window_params = [{transform_indices = @transform_0, window_bounds = array<i64: 200, 216>}, {pipeline_mode = #tpu.pipeline_mode<synchronous>, transform_indices = @transform_1, window_bounds = array<i64: 216, 16>}, {pipeline_mode = #tpu.pipeline_mode<synchronous>, transform_indices = @transform_2, window_bounds = array<i64: 1, 16>}, {transform_indices = @transform_3, window_bounds = array<i64: 200, 16>}]} {
    %c0 = arith.constant 0 : index
    %c0_0 = arith.constant 0 : index
    %0 = vector.load %arg1[%c0, %c0_0] : memref<200x216xbf16, #tpu.memory_space<vmem>>, vector<200x216xbf16>
    %c0_1 = arith.constant 0 : index
    %c0_2 = arith.constant 0 : index
    %1 = vector.load %arg2[%c0_1, %c0_2] : memref<216x16xbf16, #tpu.memory_space<vmem>>, vector<216x16xbf16>
    %cst = arith.constant dense<0.000000e+00> : vector<200x16xf32>
    %2 = tpu.matmul %0, %1, %cst {dimension_numbers = #tpu.dot_dimension_numbers<[1], [0], [0], [1], [0, 0, 1, 1], [], []>} : vector<200x216xbf16>, vector<216x16xbf16>, vector<200x16xf32> -> vector<200x16xf32>
    %c0_3 = arith.constant 0 : index
    %c0_4 = arith.constant 0 : index
    %3 = vector.load %arg3[%c0_3, %c0_4] : memref<1x16xf32, #tpu.memory_space<vmem>>, vector<1x16xf32>
    %4 = vector.broadcast %3 : vector<1x16xf32> to vector<200x16xf32>
    %5 = arith.addf %2, %4 : vector<200x16xf32>
    %cst_5 = arith.constant 0.000000e+00 : f32
    %6 = vector.broadcast %cst_5 : f32 to vector<200x16xf32>
    %7 = arith.maximumf %5, %6 : vector<200x16xf32>
    %c0_6 = arith.constant 0 : index
    %c0_7 = arith.constant 0 : index
    %8 = vector.load %arg4[%c0_6, %c0_7] : memref<200x16xf32, #tpu.memory_space<vmem>>, vector<200x16xf32>
    tpu.vector_store %arg4[%c0_6, %c0_7], %7 {strides = array<i32>} : memref<200x16xf32, #tpu.memory_space<vmem>>, vector<200x16xf32>,
    return
  }
  func.func @transform_0(%arg0: i32) -> (i32, i32) {
    %c0_i32 = arith.constant 0 : i32
    %c0_i32_0 = arith.constant 0 : i32
    return %arg0, %c0_i32 : i32, i32
  }
  func.func @transform_1(%arg0: i32) -> (i32, i32) {
    %c0_i32 = arith.constant 0 : i32
    %c0_i32_0 = arith.constant 0 : i32
    %c0_i32_1 = arith.constant 0 : i32
    return %c0_i32, %c0_i32_0 : i32, i32
  }
  func.func @transform_2(%arg0: i32) -> (i32, i32) {
    %c0_i32 = arith.constant 0 : i32
    %c0_i32_0 = arith.constant 0 : i32
    %c0_i32_1 = arith.constant 0 : i32
    return %c0_i32, %c0_i32_0 : i32, i32
  }
  func.func @transform_3(%arg0: i32) -> (i32, i32) {
    %c0_i32 = arith.constant 0 : i32
    %c0_i32_0 = arith.constant 0 : i32
    return %arg0, %c0_i32 : i32, i32
  }
}

module attributes {stable_mosaic.version = 11 : i64} {
  func.func @kernel(%arg0: i32, %arg1: memref<200x432xbf16, #tpu.memory_space<vmem>>, %arg2: memref<432x16xbf16, #tpu.memory_space<vmem>>, %arg3: memref<1x16xf32, #tpu.memory_space<vmem>>, %arg4: memref<200x16xf32, #tpu.memory_space<vmem>>) attributes {dimension_semantics = [#tpu.dimension_semantics<parallel>], iteration_bounds = array<i64: 2>, scalar_prefetch = 0 : i64, scratch_operands = 0 : i64, tpu.core_type = #tpu.core_type<tc>, window_params = [{transform_indices = @transform_0, window_bounds = array<i64: 200, 432>}, {pipeline_mode = #tpu.pipeline_mode<synchronous>, transform_indices = @transform_1, window_bounds = array<i64: 432, 16>}, {pipeline_mode = #tpu.pipeline_mode<synchronous>, transform_indices = @transform_2, window_bounds = array<i64: 1, 16>}, {transform_indices = @transform_3, window_bounds = array<i64: 200, 16>}]} {
    %c0 = arith.constant 0 : index
    %c0_0 = arith.constant 0 : index
    %0 = vector.load %arg1[%c0, %c0_0] : memref<200x432xbf16, #tpu.memory_space<vmem>>, vector<200x432xbf16>
    %c0_1 = arith.constant 0 : index
    %c0_2 = arith.constant 0 : index
    %1 = vector.load %arg2[%c0_1, %c0_2] : memref<432x16xbf16, #tpu.memory_space<vmem>>, vector<432x16xbf16>
    %cst = arith.constant dense<0.000000e+00> : vector<200x16xf32>
    %2 = tpu.matmul %0, %1, %cst {dimension_numbers = #tpu.dot_dimension_numbers<[1], [0], [0], [1], [0, 0, 1, 1], [], []>} : vector<200x432xbf16>, vector<432x16xbf16>, vector<200x16xf32> -> vector<200x16xf32>
    %c0_3 = arith.constant 0 : index
    %c0_4 = arith.constant 0 : index
    %3 = vector.load %arg3[%c0_3, %c0_4] : memref<1x16xf32, #tpu.memory_space<vmem>>, vector<1x16xf32>
    %4 = vector.broadcast %3 : vector<1x16xf32> to vector<200x16xf32>
    %5 = arith.addf %2, %4 : vector<200x16xf32>
    %cst_5 = arith.constant 0.000000e+00 : f32
    %6 = vector.broadcast %cst_5 : f32 to vector<200x16xf32>
    %7 = arith.maximumf %5, %6 : vector<200x16xf32>
    %c0_6 = arith.constant 0 : index
    %c0_7 = arith.constant 0 : index
    %8 = vector.load %arg4[%c0_6, %c0_7] : memref<200x16xf32, #tpu.memory_space<vmem>>, vector<200x16xf32>
    tpu.vector_store %arg4[%c0_6, %c0_7], %7 {strides = array<i32>} : memref<200x16xf32, #tpu.memory_space<vmem>>, vector<200x16xf32>,
    return
  }
  func.func @transform_0(%arg0: i32) -> (i32, i32) {
    %c0_i32 = arith.constant 0 : i32
    %c0_i32_0 = arith.constant 0 : i32
    return %arg0, %c0_i32 : i32, i32
  }
  func.func @transform_1(%arg0: i32) -> (i32, i32) {
    %c0_i32 = arith.constant 0 : i32
    %c0_i32_0 = arith.constant 0 : i32
    %c0_i32_1 = arith.constant 0 : i32
    return %c0_i32, %c0_i32_0 : i32, i32
  }
  func.func @transform_2(%arg0: i32) -> (i32, i32) {
    %c0_i32 = arith.constant 0 : i32
    %c0_i32_0 = arith.constant 0 : i32
    %c0_i32_1 = arith.constant 0 : i32
    return %c0_i32, %c0_i32_0 : i32, i32
  }
  func.func @transform_3(%arg0: i32) -> (i32, i32) {
    %c0_i32 = arith.constant 0 : i32
    %c0_i32_0 = arith.constant 0 : i32
    return %arg0, %c0_i32 : i32, i32
  }
}

module attributes {stable_mosaic.version = 11 : i64} {
  func.func @kernel(%arg0: i32, %arg1: memref<200x432xbf16, #tpu.memory_space<vmem>>, %arg2: memref<432x16xbf16, #tpu.memory_space<vmem>>, %arg3: memref<1x16xf32, #tpu.memory_space<vmem>>, %arg4: memref<200x16xf32, #tpu.memory_space<vmem>>, %arg5: memref<200x16xf32, #tpu.memory_space<vmem>>) attributes {dimension_semantics = [#tpu.dimension_semantics<parallel>], iteration_bounds = array<i64: 2>, scalar_prefetch = 0 : i64, scratch_operands = 0 : i64, tpu.core_type = #tpu.core_type<tc>, window_params = [{transform_indices = @transform_0, window_bounds = array<i64: 200, 432>}, {pipeline_mode = #tpu.pipeline_mode<synchronous>, transform_indices = @transform_1, window_bounds = array<i64: 432, 16>}, {pipeline_mode = #tpu.pipeline_mode<synchronous>, transform_indices = @transform_2, window_bounds = array<i64: 1, 16>}, {transform_indices = @transform_3, window_bounds = array<i64: 200, 16>}, {transform_indices = @transform_4, window_bounds = array<i64: 200, 16>}]} {
    %c0 = arith.constant 0 : index
    %c0_0 = arith.constant 0 : index
    %0 = vector.load %arg1[%c0, %c0_0] : memref<200x432xbf16, #tpu.memory_space<vmem>>, vector<200x432xbf16>
    %c0_1 = arith.constant 0 : index
    %c0_2 = arith.constant 0 : index
    %1 = vector.load %arg2[%c0_1, %c0_2] : memref<432x16xbf16, #tpu.memory_space<vmem>>, vector<432x16xbf16>
    %cst = arith.constant dense<0.000000e+00> : vector<200x16xf32>
    %2 = tpu.matmul %0, %1, %cst {dimension_numbers = #tpu.dot_dimension_numbers<[1], [0], [0], [1], [0, 0, 1, 1], [], []>} : vector<200x432xbf16>, vector<432x16xbf16>, vector<200x16xf32> -> vector<200x16xf32>
    %c0_3 = arith.constant 0 : index
    %c0_4 = arith.constant 0 : index
    %3 = vector.load %arg3[%c0_3, %c0_4] : memref<1x16xf32, #tpu.memory_space<vmem>>, vector<1x16xf32>
    %4 = vector.broadcast %3 : vector<1x16xf32> to vector<200x16xf32>
    %5 = arith.addf %2, %4 : vector<200x16xf32>
    %c0_5 = arith.constant 0 : index
    %c0_6 = arith.constant 0 : index
    %6 = vector.load %arg4[%c0_5, %c0_6] : memref<200x16xf32, #tpu.memory_space<vmem>>, vector<200x16xf32>
    %7 = arith.addf %5, %6 : vector<200x16xf32>
    %cst_7 = arith.constant 0.000000e+00 : f32
    %8 = vector.broadcast %cst_7 : f32 to vector<200x16xf32>
    %9 = arith.maximumf %7, %8 : vector<200x16xf32>
    %c0_8 = arith.constant 0 : index
    %c0_9 = arith.constant 0 : index
    %10 = vector.load %arg5[%c0_8, %c0_9] : memref<200x16xf32, #tpu.memory_space<vmem>>, vector<200x16xf32>
    tpu.vector_store %arg5[%c0_8, %c0_9], %9 {strides = array<i32>} : memref<200x16xf32, #tpu.memory_space<vmem>>, vector<200x16xf32>,
    return
  }
  func.func @transform_0(%arg0: i32) -> (i32, i32) {
    %c0_i32 = arith.constant 0 : i32
    %c0_i32_0 = arith.constant 0 : i32
    return %arg0, %c0_i32 : i32, i32
  }
  func.func @transform_1(%arg0: i32) -> (i32, i32) {
    %c0_i32 = arith.constant 0 : i32
    %c0_i32_0 = arith.constant 0 : i32
    %c0_i32_1 = arith.constant 0 : i32
    return %c0_i32, %c0_i32_0 : i32, i32
  }
  func.func @transform_2(%arg0: i32) -> (i32, i32) {
    %c0_i32 = arith.constant 0 : i32
    %c0_i32_0 = arith.constant 0 : i32
    %c0_i32_1 = arith.constant 0 : i32
    return %c0_i32, %c0_i32_0 : i32, i32
  }
  func.func @transform_3(%arg0: i32) -> (i32, i32) {
    %c0_i32 = arith.constant 0 : i32
    %c0_i32_0 = arith.constant 0 : i32
    return %arg0, %c0_i32 : i32, i32
  }
  func.func @transform_4(%arg0: i32) -> (i32, i32) {
    %c0_i32 = arith.constant 0 : i32
    %c0_i32_0 = arith.constant 0 : i32
    return %arg0, %c0_i32 : i32, i32
  }
}

module attributes {stable_mosaic.version = 11 : i64} {
  func.func @kernel(%arg0: i32, %arg1: memref<8x432xbf16, #tpu.memory_space<vmem>>, %arg2: memref<432x32xbf16, #tpu.memory_space<vmem>>, %arg3: memref<1x32xf32, #tpu.memory_space<vmem>>, %arg4: memref<8x32xf32, #tpu.memory_space<vmem>>) attributes {dimension_semantics = [#tpu.dimension_semantics<parallel>], iteration_bounds = array<i64: 2>, scalar_prefetch = 0 : i64, scratch_operands = 0 : i64, tpu.core_type = #tpu.core_type<tc>, window_params = [{transform_indices = @transform_0, window_bounds = array<i64: 8, 432>}, {pipeline_mode = #tpu.pipeline_mode<synchronous>, transform_indices = @transform_1, window_bounds = array<i64: 432, 32>}, {pipeline_mode = #tpu.pipeline_mode<synchronous>, transform_indices = @transform_2, window_bounds = array<i64: 1, 32>}, {transform_indices = @transform_3, window_bounds = array<i64: 8, 32>}]} {
    %c0 = arith.constant 0 : index
    %c0_0 = arith.constant 0 : index
    %0 = vector.load %arg1[%c0, %c0_0] : memref<8x432xbf16, #tpu.memory_space<vmem>>, vector<8x432xbf16>
    %c0_1 = arith.constant 0 : index
    %c0_2 = arith.constant 0 : index
    %1 = vector.load %arg2[%c0_1, %c0_2] : memref<432x32xbf16, #tpu.memory_space<vmem>>, vector<432x32xbf16>
    %cst = arith.constant dense<0.000000e+00> : vector<8x32xf32>
    %2 = tpu.matmul %0, %1, %cst {dimension_numbers = #tpu.dot_dimension_numbers<[1], [0], [0], [1], [0, 0, 1, 1], [], []>} : vector<8x432xbf16>, vector<432x32xbf16>, vector<8x32xf32> -> vector<8x32xf32>
    %c0_3 = arith.constant 0 : index
    %c0_4 = arith.constant 0 : index
    %3 = vector.load %arg3[%c0_3, %c0_4] : memref<1x32xf32, #tpu.memory_space<vmem>>, vector<1x32xf32>
    %4 = vector.broadcast %3 : vector<1x32xf32> to vector<8x32xf32>
    %5 = arith.addf %2, %4 : vector<8x32xf32>
    %c0_5 = arith.constant 0 : index
    %c0_6 = arith.constant 0 : index
    %6 = vector.load %arg4[%c0_5, %c0_6] : memref<8x32xf32, #tpu.memory_space<vmem>>, vector<8x32xf32>
    tpu.vector_store %arg4[%c0_5, %c0_6], %5 {strides = array<i32>} : memref<8x32xf32, #tpu.memory_space<vmem>>, vector<8x32xf32>,
    return
  }
  func.func @transform_0(%arg0: i32) -> (i32, i32) {
    %c0_i32 = arith.constant 0 : i32
    %c0_i32_0 = arith.constant 0 : i32
    return %arg0, %c0_i32 : i32, i32
  }
  func.func @transform_1(%arg0: i32) -> (i32, i32) {
    %c0_i32 = arith.constant 0 : i32
    %c0_i32_0 = arith.constant 0 : i32
    %c0_i32_1 = arith.constant 0 : i32
    return %c0_i32, %c0_i32_0 : i32, i32
  }
  func.func @transform_2(%arg0: i32) -> (i32, i32) {
    %c0_i32 = arith.constant 0 : i32
    %c0_i32_0 = arith.constant 0 : i32
    %c0_i32_1 = arith.constant 0 : i32
    return %c0_i32, %c0_i32_0 : i32, i32
  }
  func.func @transform_3(%arg0: i32) -> (i32, i32) {
    %c0_i32 = arith.constant 0 : i32
    %c0_i32_0 = arith.constant 0 : i32
    return %arg0, %c0_i32 : i32, i32
  }
}

</mosaic_0001>

<llo_original>
// kernel: network_forward.8
$region0: #{network_forward.8}
  #allocation0 [shape = 'u32[]', space=smem, size = 0x4, offset = 0x4, fixed_abs, tag = 'smem constant byte address 0x4 - core index']
  #allocation1 [shape = 'u32[72,128]{1,0:T(1,128)}', space=vmem, size = 0x9000, scoped, tag = 'internal scratch']
  %s0 = inlined_call_operand.vmem [shape: bf16[176,4], index: 0, kind: input, shape index: {}]
  %s1 = inlined_call_operand.hbm [shape: bf16[4,30], index: 1, kind: input, shape index: {}]
  %s2 = inlined_call_operand.hbm [shape: f32[1,30], index: 2, kind: input, shape index: {}]
  %s3 = inlined_call_operand.vmem [shape: f32[176,30], index: 3, kind: output, shape index: {}]
  %s4 = sld [smem:[#allocation0]]
  $region53: #{network_forward.8} parent=0
    _
  %s6 = ssub.s32 1, %s4
  %s7 = scalar_select 0, %s6, %s4
  $region1: #{network_forward.8} parent=0
    #allocation2 [shape = 'u8[1024]{0}', space=vmem, size = 0x400, scoped, tag = 'input window, operand 1, single buffered']
    #allocation3 [shape = 's32[2]{0}', space=sflag, size = 0x8, scoped, tag = 'scoped memory for network_forward.8']
    #allocation4 [shape = 'u8[512]{0}', space=vmem, size = 0x400, scoped, tag = 'input window, operand 2, single buffered']
    #allocation5 [shape = 's32[1]{0}', space=sflag, size = 0x4, scoped, tag = 'scoped memory for network_forward.8']
    %8 = vsyncpa [#allocation3], 0
    %9 = vsyncpa [#allocation5], 0
    loop: start=0, step=1, limit=4
    $region2: #{network_forward.8} parent=1 // loop_pre_header
      _
    $region3: #{network_forward.8} parent=1 // loop_header
      %s11 = sphi 0, %s15
      %p12 = scmp.ge.s32.totalorder %s11, 4
      %s21 = sphi 0, %s23
      %s24 = sphi 0, %s21
      %s25 = sphi 0, %s24
      %s41 = sphi 0, %s25
      %s45 = sphi 0, %s45
      %s47 = sphi 0, %s45
      %s48 = sphi 0, %s47
      %s62 = sphi 0, %s48
      %s66 = sphi 0, %s66
      %s68 = sphi 0, %s66
      %s69 = sphi 0, %s68
      %s83 = sphi 0, %s69
      %s89 = sphi 0, %s91
      %s92 = sphi 0, %s89
      %s93 = sphi 0, %s92
      %s109 = sphi 0, %s93
    $region4: #{network_forward.8} parent=1 // loop_header_branch
      %14 = sbr.rel (%p12) target = $region8
    $region5: #{network_forward.8} parent=1 // loop_body
      %s16 = ssub.s32 %s11, 1
      %s17 = ssub.s32 %s11, 2
      %s18 = sadd.s32 %s11, 1
      %s19 = ssub.s32 %s11, %s18
      %p20 = scmp.eq.s32.totalorder %s19, 0
      %s22 = sadd.s32 %s21, 1
      %s23 = scalar_select %p20, %s21, %s22
      %p26 = pneg %p20
      %p27 = scmp.eq.s32.totalorder %s11, 1
      %p28 = por %p26, %p27
      %p29 = scmp.ne.s32.totalorder %s21, %s24
      %p30 = scmp.eq.s32.totalorder %s11, 0
      %p31 = por %p29, %p30
      %p32 = scmp.ne.s32.totalorder %s21, %s24
      %p33 = scmp.eq.s32.totalorder %s16, 1
      %p34 = por %p32, %p33
      %p35 = scmp.ne.s32.totalorder %s24, %s25
      %p36 = scmp.eq.s32.totalorder %s16, 0
      %p37 = por %p35, %p36
      %p38 = scmp.ne.s32.totalorder %s24, %s25
      %p39 = scmp.eq.s32.totalorder %s17, 1
      %p40 = por %p38, %p39
      %p42 = scmp.ne.s32.totalorder %s25, %s41
      %p43 = scmp.eq.s32.totalorder %s17, 0
      %p44 = por %p42, %p43
      %s46 = sadd.s32 %s45, 1
      %p49 = scmp.eq.s32.totalorder %s11, 1
      %p50 = scmp.ne.s32.totalorder %s45, %s47
      %p51 = scmp.eq.s32.totalorder %s11, 0
      %p52 = por %p50, %p51
      %p53 = scmp.ne.s32.totalorder %s45, %s47
      %p54 = scmp.eq.s32.totalorder %s16, 1
      %p55 = por %p53, %p54
      %p56 = scmp.ne.s32.totalorder %s47, %s48
      %p57 = scmp.eq.s32.totalorder %s16, 0
      %p58 = por %p56, %p57
      %p59 = scmp.ne.s32.totalorder %s47, %s48
      %p60 = scmp.eq.s32.totalorder %s17, 1
      %p61 = por %p59, %p60
      %p63 = scmp.ne.s32.totalorder %s48, %s62
      %p64 = scmp.eq.s32.totalorder %s17, 0
      %p65 = por %p63, %p64
      %s67 = sadd.s32 %s66, 1
      %p70 = scmp.eq.s32.totalorder %s11, 1
      %p71 = scmp.ne.s32.totalorder %s66, %s68
      %p72 = scmp.eq.s32.totalorder %s11, 0
      %p73 = por %p71, %p72
      %p74 = scmp.ne.s32.totalorder %s66, %s68
      %p75 = scmp.eq.s32.totalorder %s16, 1
      %p76 = por %p74, %p75
      %p77 = scmp.ne.s32.totalorder %s68, %s69
      %p78 = scmp.eq.s32.totalorder %s16, 0
      %p79 = por %p77, %p78
      %p80 = scmp.ne.s32.totalorder %s68, %s69
      %p81 = scmp.eq.s32.totalorder %s17, 1
      %p82 = por %p80, %p81
      %p84 = scmp.ne.s32.totalorder %s69, %s83
      %p85 = scmp.eq.s32.totalorder %s17, 0
      %p86 = por %p84, %p85
      %s87 = ssub.s32 %s11, %s18
      %p88 = scmp.eq.s32.totalorder %s87, 0
      %s90 = sadd.s32 %s89, 1
      %s91 = scalar_select %p88, %s89, %s90
      %p94 = pneg %p88
      %p95 = scmp.eq.s32.totalorder %s11, 1
      %p96 = por %p94, %p95
      %p97 = scmp.ne.s32.totalorder %s89, %s92
      %p98 = scmp.eq.s32.totalorder %s11, 0
      %p99 = por %p97, %p98
      %p100 = scmp.ne.s32.totalorder %s89, %s92
      %p101 = scmp.eq.s32.totalorder %s16, 1
      %p102 = por %p100, %p101
      %p103 = scmp.ne.s32.totalorder %s92, %s93
      %p104 = scmp.eq.s32.totalorder %s16, 0
      %p105 = por %p103, %p104
      %p106 = scmp.ne.s32.totalorder %s92, %s93
      %p107 = scmp.eq.s32.totalorder %s17, 1
      %p108 = por %p106, %p107
      %p110 = scmp.ne.s32.totalorder %s93, %s109
      %p111 = scmp.eq.s32.totalorder %s17, 0
      %p112 = por %p110, %p111
      %p113 = scmp.le.s32.totalorder 1, %s11
      %p114 = scmp.lt.s32.totalorder %s11, 3
      %p115 = pnand %p113, %p114
      %p116 = pneg %p115
      // Predicated region
      $region9: #{network_forward.8} parent=5 // pred_check
        _
      $region10: #{network_forward.8} parent=5 // pred_check_branch
        %118 = sbr.rel (%p115) target = $region12
      $region11: #{network_forward.8} parent=5 // pred_region
        %s119 = ssub.s32 %s11, 1
        // Predicated region
        $region13: #{network_forward.8} parent=11 // pred_check
          %p120 = pneg %p58
        $region14: #{network_forward.8} parent=11 // pred_check_branch
          %122 = sbr.rel (%p120) target = $region16
        $region15: #{network_forward.8} parent=11 // pred_region
          %124 = vsyncadd [#allocation3], 0
          %s126 = sshll.u32 %s1, 4
          %s127 = int_to_ptr.hbm [resolvable:$true] %s126
          %s128 = sshll.u32 [#allocation2], 4
          %s129 = int_to_ptr.vmem [resolvable:$true] %s128
          %131 = dma.hbm_to_vmem [thread:$0]  %s127, 32, %s129, [#allocation3]
        $region16: #{network_forward.8} parent=11 // pred_fallthru
          _
        // Predicated region
        $region17: #{network_forward.8} parent=11 // pred_check
          %p132 = pneg %p79
        $region18: #{network_forward.8} parent=11 // pred_check_branch
          %134 = sbr.rel (%p132) target = $region20
        $region19: #{network_forward.8} parent=11 // pred_region
          %136 = vsyncadd [#allocation5], 0
          %s138 = sshll.u32 %s2, 4
          %s139 = int_to_ptr.hbm [resolvable:$true] %s138
          %s140 = sshll.u32 [#allocation4], 4
          %s141 = int_to_ptr.vmem [resolvable:$true] %s140
          %143 = dma.hbm_to_vmem [thread:$0]  %s139, 16, %s141, [#allocation5]
        $region20: #{network_forward.8} parent=11 // pred_fallthru
          _
      $region12: #{network_forward.8} parent=5 // pred_fallthru
        _
      %p144 = scmp.lt.s32.totalorder %s11, 2
      // Predicated region
      $region21: #{network_forward.8} parent=5 // pred_check
        %p145 = pneg %p144
      $region22: #{network_forward.8} parent=5 // pred_check_branch
        %147 = sbr.rel (%p145) target = $region24
      $region23: #{network_forward.8} parent=5 // pred_region
        // Predicated region
        $region25: #{network_forward.8} parent=23 // pred_check
          %p148 = pneg %p31
        $region26: #{network_forward.8} parent=23 // pred_check_branch
          %150 = sbr.rel (%p148) target = $region28
        $region27: #{network_forward.8} parent=23 // pred_region
          %s151 = smul.u32 11, %s11
          %p152 = scmp.lt.s32.totalorder %s151, 21
          %s153 = scalar_select %p152, %s151, 21
          %s154 = smul.addr %s153, 4
          %s155 = scalar_lea.vmem %s0, %s154
          %s156 = smul.u32 11, %s11
        $region28: #{network_forward.8} parent=23 // pred_fallthru
          _
      $region24: #{network_forward.8} parent=5 // pred_fallthru
        _
      %p157 = scmp.le.s32.totalorder 1, %s11
      %p158 = scmp.lt.s32.totalorder %s11, 3
      %p159 = pnand %p157, %p158
      %p160 = pneg %p159
      // Predicated region
      $region29: #{network_forward.8} parent=5 // pred_check
        _
      $region30: #{network_forward.8} parent=5 // pred_check_branch
        %162 = sbr.rel (%p159) target = $region32
      $region31: #{network_forward.8} parent=5 // pred_region
        %s163 = ssub.s32 %s11, 1
        // Predicated region
        $region33: #{network_forward.8} parent=31 // pred_check
          %p164 = pneg %p58
        $region34: #{network_forward.8} parent=31 // pred_check_branch
          %166 = sbr.rel (%p164) target = $region36
        $region35: #{network_forward.8} parent=31 // pred_region
          %168 = dma.done [#allocation3], 32
        $region36: #{network_forward.8} parent=31 // pred_fallthru
          _
        // Predicated region
        $region37: #{network_forward.8} parent=31 // pred_check
          %p169 = pneg %p79
        $region38: #{network_forward.8} parent=31 // pred_check_branch
          %171 = sbr.rel (%p169) target = $region40
        $region39: #{network_forward.8} parent=31 // pred_region
          %173 = dma.done [#allocation5], 16
        $region40: #{network_forward.8} parent=31 // pred_fallthru
          _
        %s174 = smul.u32 11, %s16
        %p175 = scmp.lt.s32.totalorder %s174, 21
        %s176 = scalar_select %p175, %s174, 21
        %s177 = smul.addr %s176, 4
        %s178 = scalar_lea.vmem %s0, %s177
        %p179 = pneg %p37
        %p180 = pneg %p34
        %p181 = pneg %p58
        %p182 = pneg %p55
        %p183 = pneg %p79
        %p184 = pneg %p76
        %p185 = pneg %p105
        %p186 = pneg %p102
        %s187 = smul.u32 11, %s16
        %p188 = scmp.lt.s32.totalorder %s187, 21
        %s189 = scalar_select %p188, %s187, 21
        %s190 = smul.addr %s189, 8
        %s191 = scalar_lea.vmem %s3, %s190
        %s192 = smul.u32 11, %s16
        %p193 = scmp.lt.s32.totalorder %s192, 21
        %s194 = scalar_select %p193, %s192, 21
        %s195 = smul.addr %s194, 4
        %s196 = scalar_lea.vmem %s0, %s195
        %s197 = smul.u32 11, %s16
        %s198 = smul.u32 11, %s16
        %p199 = scmp.lt.s32.totalorder %s198, 21
        %s200 = scalar_select %p199, %s198, 21
        %s201 = smul.addr %s200, 8
        %s202 = scalar_lea.vmem %s3, %s201
        %s203 = smul.u32 11, %s16
        %v205 = vld [vmem:[%s196] sm:$0xf]
        %v206 = vld [vmem:[%s196 + $0x4] sm:$0xf]
        %v207 = vld [vmem:[%s196 + $0x8] sm:$0xf]
        %v208 = vld [vmem:[%s196 + $0xc] sm:$0xf]
        %v209 = vld [vmem:[%s196 + $0x10] sm:$0xf]
        %v210 = vld [vmem:[%s196 + $0x14] sm:$0xf]
        %v211 = vld [vmem:[%s196 + $0x18] sm:$0xf]
        %v212 = vld [vmem:[%s196 + $0x1c] sm:$0xf]
        %v213 = vld [vmem:[%s196 + $0x20] sm:$0xf]
        %v214 = vld [vmem:[%s196 + $0x24] sm:$0xf]
        %v215 = vld [vmem:[%s196 + $0x28] sm:$0xf]
        %v216 = vld [vmem:[#allocation2] sm:$0x3]
        %v217 = vld [vmem:[#allocation4] sm:$0x1]
        %v219 = vperm.slane %v217, 0
        %v232 = vunpack.c.l.b16 %v205
        %v233 = vunpack.c.l.b16 %v206
        %v234 = vunpack.c.l.b16 %v207
        %v235 = vunpack.c.l.b16 %v208
        %v236 = vunpack.c.l.b16 %v209
        %v237 = vunpack.c.l.b16 %v210
        %v238 = vunpack.c.l.b16 %v211
        %v239 = vunpack.c.l.b16 %v212
        %v240 = vunpack.c.l.b16 %v213
        %v241 = vunpack.c.l.b16 %v214
        %v242 = vunpack.c.l.b16 %v215
        %v243 = vpack.c.b16 %v233, %v232
        %v244 = vpack.c.b16 %v235, %v234
        %v245 = vpack.c.b16 %v237, %v236
        %v246 = vpack.c.b16 %v239, %v238
        %v247 = vpack.c.b16 %v241, %v240
        %v248 = vpack.c.b16 %v242, %v242
        %vm249 = vcmask 31744
        %v251 = vsel %vm249, %v243, 0
        %v254 = vsel %vm249, %v244, 0
        %v257 = vsel %vm249, %v245, 0
        %v260 = vsel %vm249, %v246, 0
        %v263 = vsel %vm249, %v247, 0
        %v266 = vsel %vm249, %v248, 0
        %vm268 = vcmask 1041408
        %v270 = vsel %vm268, %v216, 0
        %272 = vmatpush.bf16.msra.mxu0 0
        %273 = vmatpush.bf16.msra.mxu0 0
        %274 = vmatpush.bf16.msra.mxu0 0
        %275 = vmatpush.bf16.msra.mxu0 0
        %276 = vmatpush.bf16.msra.mxu0 0
        %277 = vmatpush.bf16.msra.mxu0 0
        %278 = vmatpush.bf16.msra.mxu0 0
        %279 = vmatpush.bf16.msra.mxu0 %v270
        %280 = vmatmul.bf16.gmra.mxu0 %v251
        %v281 = vpop.f32.mrf.mxu0
        %v282 = vadd.f32 %v219, %v281
        %v283 = vpop.f32.mrf.mxu0
        %v284 = vadd.f32 %v219, %v283
        %285 = vmatmul.bf16.gmra.mxu0 %v254
        %v286 = vpop.f32.mrf.mxu0
        %v287 = vadd.f32 %v219, %v286
        %v288 = vpop.f32.mrf.mxu0
        %v289 = vadd.f32 %v219, %v288
        %290 = vmatmul.bf16.gmra.mxu0 %v257
        %v291 = vpop.f32.mrf.mxu0
        %v292 = vadd.f32 %v219, %v291
        %v293 = vpop.f32.mrf.mxu0
        %v294 = vadd.f32 %v219, %v293
        %295 = vmatmul.bf16.gmra.mxu0 %v260
        %v296 = vpop.f32.mrf.mxu0
        %v297 = vadd.f32 %v219, %v296
        %v298 = vpop.f32.mrf.mxu0
        %v299 = vadd.f32 %v219, %v298
        %300 = vmatmul.bf16.gmra.mxu0 %v263
        %v301 = vpop.f32.mrf.mxu0
        %v302 = vadd.f32 %v219, %v301
        %v303 = vpop.f32.mrf.mxu0
        %v304 = vadd.f32 %v219, %v303
        %305 = vmatmul.bf16.gmra.mxu0 %v266
        %v306 = vpop.f32.mrf.mxu0
        %v307 = vadd.f32 %v219, %v306
        %v308 = vpop.f32.mrf.mxu0
        %309 = vdwg.mxu0
        %vm310 = vcmask 244736
        %311 = vst.msk [vmem:[%s202] sm:$0xff] %vm310, %v282
        %312 = vst.msk [vmem:[%s202 + $0x8] sm:$0xff] %vm310, %v284
        %313 = vst.msk [vmem:[%s202 + $0x10] sm:$0xff] %vm310, %v287
        %314 = vst.msk [vmem:[%s202 + $0x18] sm:$0xff] %vm310, %v289
        %315 = vst.msk [vmem:[%s202 + $0x20] sm:$0xff] %vm310, %v292
        %316 = vst.msk [vmem:[%s202 + $0x28] sm:$0xff] %vm310, %v294
        %317 = vst.msk [vmem:[%s202 + $0x30] sm:$0xff] %vm310, %v297
        %318 = vst.msk [vmem:[%s202 + $0x38] sm:$0xff] %vm310, %v299
        %319 = vst.msk [vmem:[%s202 + $0x40] sm:$0xff] %vm310, %v302
        %320 = vst.msk [vmem:[%s202 + $0x48] sm:$0xff] %vm310, %v304
        %321 = vst.msk [vmem:[%s202 + $0x50] sm:$0xff] %vm310, %v307
        %s322 = smul.u32 11, %s16
        %p323 = scmp.lt.s32.totalorder %s322, 21
        %s324 = scalar_select %p323, %s322, 21
        %s325 = smul.addr %s324, 8
        %s326 = scalar_lea.vmem %s3, %s325
        // Predicated region
        $region41: #{network_forward.8} parent=31 // pred_check
          %p327 = pneg %p102
        $region42: #{network_forward.8} parent=31 // pred_check_branch
          %329 = sbr.rel (%p327) target = $region44
        $region43: #{network_forward.8} parent=31 // pred_region
          %s330 = smul.u32 11, %s16
        $region44: #{network_forward.8} parent=31 // pred_fallthru
          _
      $region32: #{network_forward.8} parent=5 // pred_fallthru
        _
      %p331 = scmp.le.s32.totalorder 2, %s11
      // Predicated region
      $region45: #{network_forward.8} parent=5 // pred_check
        %p332 = pneg %p331
      $region46: #{network_forward.8} parent=5 // pred_check_branch
        %334 = sbr.rel (%p332) target = $region48
      $region47: #{network_forward.8} parent=5 // pred_region
        %s335 = ssub.s32 %s11, 2
        // Predicated region
        $region49: #{network_forward.8} parent=47 // pred_check
          %p336 = pneg %p108
        $region50: #{network_forward.8} parent=47 // pred_check_branch
          %338 = sbr.rel (%p336) target = $region52
        $region51: #{network_forward.8} parent=47 // pred_region
          %s339 = smul.u32 11, %s17
          %p340 = scmp.lt.s32.totalorder %s339, 21
          %s341 = scalar_select %p340, %s339, 21
          %s342 = smul.addr %s341, 8
          %s343 = scalar_lea.vmem %s3, %s342
        $region52: #{network_forward.8} parent=47 // pred_fallthru
          _
      $region48: #{network_forward.8} parent=5 // pred_fallthru
        _
    $region6: #{network_forward.8} parent=1 // loop_footer
      %s15 = sadd.s32 1, %s11
    $region7: #{network_forward.8} parent=1 // loop_footer_branch
      %10 = sbr.rel target = $region3
    $region8: #{network_forward.8} parent=1 // loop_exit
      _
    %344 = vsyncpa [#allocation3], 1
    %s345 = scalar_lea.sflag [#allocation3], 1
    %346 = vsyncpa %s345, 1
    %347 = vsyncpa [#allocation5], 1

// kernel: network_forward.9
$region0: #{network_forward.9}
  #allocation0 [shape = 'u32[]', space=smem, size = 0x4, offset = 0x4, fixed_abs, tag = 'smem constant byte address 0x4 - core index']
  #allocation1 [shape = 'u32[72,128]{1,0:T(1,128)}', space=vmem, size = 0x9000, scoped, tag = 'internal scratch']
  %s0 = inlined_call_operand.vmem [shape: bf16[5184,27], index: 0, kind: input, shape index: {}]
  %s1 = inlined_call_operand.vmem [shape: bf16[27,8], index: 1, kind: input, shape index: {}]
  %s2 = inlined_call_operand.vmem [shape: f32[1,8], index: 2, kind: input, shape index: {}]
  %s3 = inlined_call_operand.vmem [shape: f32[5184,8], index: 3, kind: output, shape index: {}]
  %s4 = sld [smem:[#allocation0]]
  $region45: #{network_forward.9} parent=0
    _
  %s6 = ssub.s32 1, %s4
  %s7 = scalar_select 0, %s6, %s4
  loop: start=0, step=1, limit=8
  $region2: #{network_forward.9} parent=0 // loop_pre_header
    _
  $region3: #{network_forward.9} parent=0 // loop_header
    %s9 = sphi 0, %s13
    %p10 = scmp.ge.s32.totalorder %s9, 8
    %s19 = sphi 0, %s21
    %s22 = sphi 0, %s19
    %s23 = sphi 0, %s22
    %s39 = sphi 0, %s23
    %s43 = sphi 0, %s43
    %s45 = sphi 0, %s43
    %s46 = sphi 0, %s45
    %s60 = sphi 0, %s46
    %s64 = sphi 0, %s64
    %s66 = sphi 0, %s64
    %s67 = sphi 0, %s66
    %s81 = sphi 0, %s67
    %s87 = sphi 0, %s89
    %s90 = sphi 0, %s87
    %s91 = sphi 0, %s90
    %s107 = sphi 0, %s91
  $region4: #{network_forward.9} parent=0 // loop_header_branch
    %12 = sbr.rel (%p10) target = $region8
  $region5: #{network_forward.9} parent=0 // loop_body
    %s14 = ssub.s32 %s9, 1
    %s15 = ssub.s32 %s9, 2
    %s16 = sadd.s32 %s9, 1
    %s17 = ssub.s32 %s9, %s16
    %p18 = scmp.eq.s32.totalorder %s17, 0
    %s20 = sadd.s32 %s19, 1
    %s21 = scalar_select %p18, %s19, %s20
    %p24 = pneg %p18
    %p25 = scmp.eq.s32.totalorder %s9, 5
    %p26 = por %p24, %p25
    %p27 = scmp.ne.s32.totalorder %s19, %s22
    %p28 = scmp.eq.s32.totalorder %s9, 0
    %p29 = por %p27, %p28
    %p30 = scmp.ne.s32.totalorder %s19, %s22
    %p31 = scmp.eq.s32.totalorder %s14, 5
    %p32 = por %p30, %p31
    %p33 = scmp.ne.s32.totalorder %s22, %s23
    %p34 = scmp.eq.s32.totalorder %s14, 0
    %p35 = por %p33, %p34
    %p36 = scmp.ne.s32.totalorder %s22, %s23
    %p37 = scmp.eq.s32.totalorder %s15, 5
    %p38 = por %p36, %p37
    %p40 = scmp.ne.s32.totalorder %s23, %s39
    %p41 = scmp.eq.s32.totalorder %s15, 0
    %p42 = por %p40, %p41
    %s44 = sadd.s32 %s43, 1
    %p47 = scmp.eq.s32.totalorder %s9, 5
    %p48 = scmp.ne.s32.totalorder %s43, %s45
    %p49 = scmp.eq.s32.totalorder %s9, 0
    %p50 = por %p48, %p49
    %p51 = scmp.ne.s32.totalorder %s43, %s45
    %p52 = scmp.eq.s32.totalorder %s14, 5
    %p53 = por %p51, %p52
    %p54 = scmp.ne.s32.totalorder %s45, %s46
    %p55 = scmp.eq.s32.totalorder %s14, 0
    %p56 = por %p54, %p55
    %p57 = scmp.ne.s32.totalorder %s45, %s46
    %p58 = scmp.eq.s32.totalorder %s15, 5
    %p59 = por %p57, %p58
    %p61 = scmp.ne.s32.totalorder %s46, %s60
    %p62 = scmp.eq.s32.totalorder %s15, 0
    %p63 = por %p61, %p62
    %s65 = sadd.s32 %s64, 1
    %p68 = scmp.eq.s32.totalorder %s9, 5
    %p69 = scmp.ne.s32.totalorder %s64, %s66
    %p70 = scmp.eq.s32.totalorder %s9, 0
    %p71 = por %p69, %p70
    %p72 = scmp.ne.s32.totalorder %s64, %s66
    %p73 = scmp.eq.s32.totalorder %s14, 5
    %p74 = por %p72, %p73
    %p75 = scmp.ne.s32.totalorder %s66, %s67
    %p76 = scmp.eq.s32.totalorder %s14, 0
    %p77 = por %p75, %p76
    %p78 = scmp.ne.s32.totalorder %s66, %s67
    %p79 = scmp.eq.s32.totalorder %s15, 5
    %p80 = por %p78, %p79
    %p82 = scmp.ne.s32.totalorder %s67, %s81
    %p83 = scmp.eq.s32.totalorder %s15, 0
    %p84 = por %p82, %p83
    %s85 = ssub.s32 %s9, %s16
    %p86 = scmp.eq.s32.totalorder %s85, 0
    %s88 = sadd.s32 %s87, 1
    %s89 = scalar_select %p86, %s87, %s88
    %p92 = pneg %p86
    %p93 = scmp.eq.s32.totalorder %s9, 5
    %p94 = por %p92, %p93
    %p95 = scmp.ne.s32.totalorder %s87, %s90
    %p96 = scmp.eq.s32.totalorder %s9, 0
    %p97 = por %p95, %p96
    %p98 = scmp.ne.s32.totalorder %s87, %s90
    %p99 = scmp.eq.s32.totalorder %s14, 5
    %p100 = por %p98, %p99
    %p101 = scmp.ne.s32.totalorder %s90, %s91
    %p102 = scmp.eq.s32.totalorder %s14, 0
    %p103 = por %p101, %p102
    %p104 = scmp.ne.s32.totalorder %s90, %s91
    %p105 = scmp.eq.s32.totalorder %s15, 5
    %p106 = por %p104, %p105
    %p108 = scmp.ne.s32.totalorder %s91, %s107
    %p109 = scmp.eq.s32.totalorder %s15, 0
    %p110 = por %p108, %p109
    %p111 = scmp.le.s32.totalorder 1, %s9
    %p112 = scmp.lt.s32.totalorder %s9, 7
    %p113 = pnand %p111, %p112
    %p114 = pneg %p113
    // Predicated region
    $region9: #{network_forward.9} parent=5 // pred_check
      _
    $region10: #{network_forward.9} parent=5 // pred_check_branch
      %116 = sbr.rel (%p113) target = $region12
    $region11: #{network_forward.9} parent=5 // pred_region
      %s117 = ssub.s32 %s9, 1
      // Predicated region
      $region13: #{network_forward.9} parent=11 // pred_check
        %p118 = pneg %p56
      $region14: #{network_forward.9} parent=11 // pred_check_branch
        %120 = sbr.rel (%p118) target = $region16
      $region15: #{network_forward.9} parent=11 // pred_region
        _
      $region16: #{network_forward.9} parent=11 // pred_fallthru
        _
      // Predicated region
      $region17: #{network_forward.9} parent=11 // pred_check
        %p121 = pneg %p77
      $region18: #{network_forward.9} parent=11 // pred_check_branch
        %123 = sbr.rel (%p121) target = $region20
      $region19: #{network_forward.9} parent=11 // pred_region
        _
      $region20: #{network_forward.9} parent=11 // pred_fallthru
        _
    $region12: #{network_forward.9} parent=5 // pred_fallthru
      _
    %p124 = scmp.lt.s32.totalorder %s9, 6
    // Predicated region
    $region21: #{network_forward.9} parent=5 // pred_check
      %p125 = pneg %p124
    $region22: #{network_forward.9} parent=5 // pred_check_branch
      %127 = sbr.rel (%p125) target = $region24
    $region23: #{network_forward.9} parent=5 // pred_region
      // Predicated region
      $region25: #{network_forward.9} parent=23 // pred_check
        %p128 = pneg %p29
      $region26: #{network_forward.9} parent=23 // pred_check_branch
        %130 = sbr.rel (%p128) target = $region28
      $region27: #{network_forward.9} parent=23 // pred_region
        %s131 = smul.u32 108, %s9
        %p132 = scmp.lt.s32.totalorder %s131, 647
        %s133 = scalar_select %p132, %s131, 647
        %s134 = smul.addr %s133, 4
        %s135 = scalar_lea.vmem %s0, %s134
        %s136 = smul.u32 108, %s9
      $region28: #{network_forward.9} parent=23 // pred_fallthru
        _
    $region24: #{network_forward.9} parent=5 // pred_fallthru
      _
    %p137 = scmp.le.s32.totalorder 1, %s9
    %p138 = scmp.lt.s32.totalorder %s9, 7
    %p139 = pnand %p137, %p138
    %p140 = pneg %p139
    // Predicated region
    $region29: #{network_forward.9} parent=5 // pred_check
      _
    $region30: #{network_forward.9} parent=5 // pred_check_branch
      %142 = sbr.rel (%p139) target = $region32
    $region31: #{network_forward.9} parent=5 // pred_region
      %s143 = ssub.s32 %s9, 1
      %s144 = smul.u32 108, %s14
      %p145 = scmp.lt.s32.totalorder %s144, 647
      %s146 = scalar_select %p145, %s144, 647
      %s147 = smul.addr %s146, 4
      %s148 = scalar_lea.vmem %s0, %s147
      %p149 = pneg %p35
      %p150 = pneg %p32
      %p151 = pneg %p56
      %p152 = pneg %p53
      %p153 = pneg %p77
      %p154 = pneg %p74
      %p155 = pneg %p103
      %p156 = pneg %p100
      %s157 = smul.u32 108, %s14
      %p158 = scmp.lt.s32.totalorder %s157, 647
      %s159 = scalar_select %p158, %s157, 647
      %s160 = smul.addr %s159, 8
      %s161 = scalar_lea.vmem %s3, %s160
      %s162 = smul.u32 108, %s14
      %p163 = scmp.lt.s32.totalorder %s162, 647
      %s164 = scalar_select %p163, %s162, 647
      %s165 = smul.addr %s164, 4
      %s166 = scalar_lea.vmem %s0, %s165
      %s167 = smul.u32 108, %s14
      %s168 = smul.u32 108, %s14
      %p169 = scmp.lt.s32.totalorder %s168, 647
      %s170 = scalar_select %p169, %s168, 647
      %s171 = smul.addr %s170, 8
      %s172 = scalar_lea.vmem %s3, %s171
      %s173 = smul.u32 108, %s14
      %v175 = vld [vmem:[%s166] sm:$0xf]
      %v176 = vld [vmem:[%s166 + $0x4] sm:$0xf]
      %v177 = vld [vmem:[%s166 + $0x8] sm:$0xf]
      %v178 = vld [vmem:[%s166 + $0xc] sm:$0xf]
      %v179 = vld [vmem:[%s166 + $0x10] sm:$0xf]
      %v180 = vld [vmem:[%s166 + $0x14] sm:$0xf]
      %v181 = vld [vmem:[%s166 + $0x18] sm:$0xf]
      %v182 = vld [vmem:[%s166 + $0x1c] sm:$0xf]
      %v183 = vld [vmem:[%s166 + $0x20] sm:$0xf]
      %v184 = vld [vmem:[%s166 + $0x24] sm:$0xf]
      %v185 = vld [vmem:[%s166 + $0x28] sm:$0xf]
      %v186 = vld [vmem:[%s166 + $0x2c] sm:$0xf]
      %v187 = vld [vmem:[%s166 + $0x30] sm:$0xf]
      %v188 = vld [vmem:[%s166 + $0x34] sm:$0xf]
      %v189 = vld [vmem:[%s166 + $0x38] sm:$0xf]
      %v190 = vld [vmem:[%s166 + $0x3c] sm:$0xf]
      %v191 = vld [vmem:[%s166 + $0x40] sm:$0xf]
      %v192 = vld [vmem:[%s166 + $0x44] sm:$0xf]
      %v193 = vld [vmem:[%s166 + $0x48] sm:$0xf]
      %v194 = vld [vmem:[%s166 + $0x4c] sm:$0xf]
      %v195 = vld [vmem:[%s166 + $0x50] sm:$0xf]
      %v196 = vld [vmem:[%s166 + $0x54] sm:$0xf]
      %v197 = vld [vmem:[%s166 + $0x58] sm:$0xf]
      %v198 = vld [vmem:[%s166 + $0x5c] sm:$0xf]
      %v199 = vld [vmem:[%s166 + $0x60] sm:$0xf]
      %v200 = vld [vmem:[%s166 + $0x64] sm:$0xf]
      %v201 = vld [vmem:[%s166 + $0x68] sm:$0xf]
      %v202 = vld [vmem:[%s166 + $0x6c] sm:$0xf]
      %v203 = vld [vmem:[%s166 + $0x70] sm:$0xf]
      %v204 = vld [vmem:[%s166 + $0x74] sm:$0xf]
      %v205 = vld [vmem:[%s166 + $0x78] sm:$0xf]
      %v206 = vld [vmem:[%s166 + $0x7c] sm:$0xf]
      %v207 = vld [vmem:[%s166 + $0x80] sm:$0xf]
      %v208 = vld [vmem:[%s166 + $0x84] sm:$0xf]
      %v209 = vld [vmem:[%s166 + $0x88] sm:$0xf]
      %v210 = vld [vmem:[%s166 + $0x8c] sm:$0xf]
      %v211 = vld [vmem:[%s166 + $0x90] sm:$0xf]
      %v212 = vld [vmem:[%s166 + $0x94] sm:$0xf]
      %v213 = vld [vmem:[%s166 + $0x98] sm:$0xf]
      %v214 = vld [vmem:[%s166 + $0x9c] sm:$0xf]
      %v215 = vld [vmem:[%s166 + $0xa0] sm:$0xf]
      %v216 = vld [vmem:[%s166 + $0xa4] sm:$0xf]
      %v217 = vld [vmem:[%s166 + $0xa8] sm:$0xf]
      %v218 = vld [vmem:[%s166 + $0xac] sm:$0xf]
      %v219 = vld [vmem:[%s166 + $0xb0] sm:$0xf]
      %v220 = vld [vmem:[%s166 + $0xb4] sm:$0xf]
      %v221 = vld [vmem:[%s166 + $0xb8] sm:$0xf]
      %v222 = vld [vmem:[%s166 + $0xbc] sm:$0xf]
      %v223 = vld [vmem:[%s166 + $0xc0] sm:$0xf]
      %v224 = vld [vmem:[%s166 + $0xc4] sm:$0xf]
      %v225 = vld [vmem:[%s166 + $0xc8] sm:$0xf]
      %v226 = vld [vmem:[%s166 + $0xcc] sm:$0xf]
      %v227 = vld [vmem:[%s166 + $0xd0] sm:$0xf]
      %v228 = vld [vmem:[%s166 + $0xd4] sm:$0xf]
      %v229 = vld [vmem:[%s166 + $0xd8] sm:$0xf]
      %v230 = vld [vmem:[%s166 + $0xdc] sm:$0xf]
      %v231 = vld [vmem:[%s166 + $0xe0] sm:$0xf]
      %v232 = vld [vmem:[%s166 + $0xe4] sm:$0xf]
      %v233 = vld [vmem:[%s166 + $0xe8] sm:$0xf]
      %v234 = vld [vmem:[%s166 + $0xec] sm:$0xf]
      %v235 = vld [vmem:[%s166 + $0xf0] sm:$0xf]
      %v236 = vld [vmem:[%s166 + $0xf4] sm:$0xf]
      %v237 = vld [vmem:[%s166 + $0xf8] sm:$0xf]
      %v238 = vld [vmem:[%s166 + $0xfc] sm:$0xf]
      %v239 = vld [vmem:[%s166 + $0x100] sm:$0xf]
      %v240 = vld [vmem:[%s166 + $0x104] sm:$0xf]
      %v241 = vld [vmem:[%s166 + $0x108] sm:$0xf]
      %v242 = vld [vmem:[%s166 + $0x10c] sm:$0xf]
      %v243 = vld [vmem:[%s166 + $0x110] sm:$0xf]
      %v244 = vld [vmem:[%s166 + $0x114] sm:$0xf]
      %v245 = vld [vmem:[%s166 + $0x118] sm:$0xf]
      %v246 = vld [vmem:[%s166 + $0x11c] sm:$0xf]
      %v247 = vld [vmem:[%s166 + $0x120] sm:$0xf]
      %v248 = vld [vmem:[%s166 + $0x124] sm:$0xf]
      %v249 = vld [vmem:[%s166 + $0x128] sm:$0xf]
      %v250 = vld [vmem:[%s166 + $0x12c] sm:$0xf]
      %v251 = vld [vmem:[%s166 + $0x130] sm:$0xf]
      %v252 = vld [vmem:[%s166 + $0x134] sm:$0xf]
      %v253 = vld [vmem:[%s166 + $0x138] sm:$0xf]
      %v254 = vld [vmem:[%s166 + $0x13c] sm:$0xf]
      %v255 = vld [vmem:[%s166 + $0x140] sm:$0xf]
      %v256 = vld [vmem:[%s166 + $0x144] sm:$0xf]
      %v257 = vld [vmem:[%s166 + $0x148] sm:$0xf]
      %v258 = vld [vmem:[%s166 + $0x14c] sm:$0xf]
      %v259 = vld [vmem:[%s166 + $0x150] sm:$0xf]
      %v260 = vld [vmem:[%s166 + $0x154] sm:$0xf]
      %v261 = vld [vmem:[%s166 + $0x158] sm:$0xf]
      %v262 = vld [vmem:[%s166 + $0x15c] sm:$0xf]
      %v263 = vld [vmem:[%s166 + $0x160] sm:$0xf]
      %v264 = vld [vmem:[%s166 + $0x164] sm:$0xf]
      %v265 = vld [vmem:[%s166 + $0x168] sm:$0xf]
      %v266 = vld [vmem:[%s166 + $0x16c] sm:$0xf]
      %v267 = vld [vmem:[%s166 + $0x170] sm:$0xf]
      %v268 = vld [vmem:[%s166 + $0x174] sm:$0xf]
      %v269 = vld [vmem:[%s166 + $0x178] sm:$0xf]
      %v270 = vld [vmem:[%s166 + $0x17c] sm:$0xf]
      %v271 = vld [vmem:[%s166 + $0x180] sm:$0xf]
      %v272 = vld [vmem:[%s166 + $0x184] sm:$0xf]
      %v273 = vld [vmem:[%s166 + $0x188] sm:$0xf]
      %v274 = vld [vmem:[%s166 + $0x18c] sm:$0xf]
      %v275 = vld [vmem:[%s166 + $0x190] sm:$0xf]
      %v276 = vld [vmem:[%s166 + $0x194] sm:$0xf]
      %v277 = vld [vmem:[%s166 + $0x198] sm:$0xf]
      %v278 = vld [vmem:[%s166 + $0x19c] sm:$0xf]
      %v279 = vld [vmem:[%s166 + $0x1a0] sm:$0xf]
      %v280 = vld [vmem:[%s166 + $0x1a4] sm:$0xf]
      %v281 = vld [vmem:[%s166 + $0x1a8] sm:$0xf]
      %v282 = vld [vmem:[%s166 + $0x1ac] sm:$0xf]
      %v283 = vld [vmem:[%s1] sm:$0xf]
      %v284 = vld [vmem:[%s1 + $0x4] sm:$0xf]
      %v285 = vld [vmem:[%s1 + $0x8] sm:$0xf]
      %v286 = vld [vmem:[%s1 + $0xc] sm:$0x3]
      %v287 = vld [vmem:[%s2] sm:$0x1]
      %v289 = vperm.slane %v287, 0
      %v399 = vunpack.c.l.b16 %v175
      %v400 = vunpack.c.l.b16 %v176
      %v401 = vunpack.c.l.b16 %v177
      %v402 = vunpack.c.l.b16 %v178
      %v403 = vunpack.c.l.b16 %v179
      %v404 = vunpack.c.l.b16 %v180
      %v405 = vunpack.c.l.b16 %v181
      %v406 = vunpack.c.l.b16 %v182
      %v407 = vunpack.c.l.b16 %v183
      %v408 = vunpack.c.l.b16 %v184
      %v409 = vunpack.c.l.b16 %v185
      %v410 = vunpack.c.l.b16 %v186
      %v411 = vunpack.c.l.b16 %v187
      %v412 = vunpack.c.l.b16 %v188
      %v413 = vunpack.c.l.b16 %v189
      %v414 = vunpack.c.l.b16 %v190
      %v415 = vunpack.c.l.b16 %v191
      %v416 = vunpack.c.l.b16 %v192
      %v417 = vunpack.c.l.b16 %v193
      %v418 = vunpack.c.l.b16 %v194
      %v419 = vunpack.c.l.b16 %v195
      %v420 = vunpack.c.l.b16 %v196
      %v421 = vunpack.c.l.b16 %v197
      %v422 = vunpack.c.l.b16 %v198
      %v423 = vunpack.c.l.b16 %v199
      %v424 = vunpack.c.l.b16 %v200
      %v425 = vunpack.c.l.b16 %v201
      %v426 = vunpack.c.l.b16 %v202
      %v427 = vunpack.c.l.b16 %v203
      %v428 = vunpack.c.l.b16 %v204
      %v429 = vunpack.c.l.b16 %v205
      %v430 = vunpack.c.l.b16 %v206
      %v431 = vunpack.c.l.b16 %v207
      %v432 = vunpack.c.l.b16 %v208
      %v433 = vunpack.c.l.b16 %v209
      %v434 = vunpack.c.l.b16 %v210
      %v435 = vunpack.c.l.b16 %v211
      %v436 = vunpack.c.l.b16 %v212
      %v437 = vunpack.c.l.b16 %v213
      %v438 = vunpack.c.l.b16 %v214
      %v439 = vunpack.c.l.b16 %v215
      %v440 = vunpack.c.l.b16 %v216
      %v441 = vunpack.c.l.b16 %v217
      %v442 = vunpack.c.l.b16 %v218
      %v443 = vunpack.c.l.b16 %v219
      %v444 = vunpack.c.l.b16 %v220
      %v445 = vunpack.c.l.b16 %v221
      %v446 = vunpack.c.l.b16 %v222
      %v447 = vunpack.c.l.b16 %v223
      %v448 = vunpack.c.l.b16 %v224
      %v449 = vunpack.c.l.b16 %v225
      %v450 = vunpack.c.l.b16 %v226
      %v451 = vunpack.c.l.b16 %v227
      %v452 = vunpack.c.l.b16 %v228
      %v453 = vunpack.c.l.b16 %v229
      %v454 = vunpack.c.l.b16 %v230
      %v455 = vunpack.c.l.b16 %v231
      %v456 = vunpack.c.l.b16 %v232
      %v457 = vunpack.c.l.b16 %v233
      %v458 = vunpack.c.l.b16 %v234
      %v459 = vunpack.c.l.b16 %v235
      %v460 = vunpack.c.l.b16 %v236
      %v461 = vunpack.c.l.b16 %v237
      %v462 = vunpack.c.l.b16 %v238
      %v463 = vunpack.c.l.b16 %v239
      %v464 = vunpack.c.l.b16 %v240
      %v465 = vunpack.c.l.b16 %v241
      %v466 = vunpack.c.l.b16 %v242
      %v467 = vunpack.c.l.b16 %v243
      %v468 = vunpack.c.l.b16 %v244
      %v469 = vunpack.c.l.b16 %v245
      %v470 = vunpack.c.l.b16 %v246
      %v471 = vunpack.c.l.b16 %v247
      %v472 = vunpack.c.l.b16 %v248
      %v473 = vunpack.c.l.b16 %v249
      %v474 = vunpack.c.l.b16 %v250
      %v475 = vunpack.c.l.b16 %v251
      %v476 = vunpack.c.l.b16 %v252
      %v477 = vunpack.c.l.b16 %v253
      %v478 = vunpack.c.l.b16 %v254
      %v479 = vunpack.c.l.b16 %v255
      %v480 = vunpack.c.l.b16 %v256
      %v481 = vunpack.c.l.b16 %v257
      %v482 = vunpack.c.l.b16 %v258
      %v483 = vunpack.c.l.b16 %v259
      %v484 = vunpack.c.l.b16 %v260
      %v485 = vunpack.c.l.b16 %v261
      %v486 = vunpack.c.l.b16 %v262
      %v487 = vunpack.c.l.b16 %v263
      %v488 = vunpack.c.l.b16 %v264
      %v489 = vunpack.c.l.b16 %v265
      %v490 = vunpack.c.l.b16 %v266
      %v491 = vunpack.c.l.b16 %v267
      %v492 = vunpack.c.l.b16 %v268
      %v493 = vunpack.c.l.b16 %v269
      %v494 = vunpack.c.l.b16 %v270
      %v495 = vunpack.c.l.b16 %v271
      %v496 = vunpack.c.l.b16 %v272
      %v497 = vunpack.c.l.b16 %v273
      %v498 = vunpack.c.l.b16 %v274
      %v499 = vunpack.c.l.b16 %v275
      %v500 = vunpack.c.l.b16 %v276
      %v501 = vunpack.c.l.b16 %v277
      %v502 = vunpack.c.l.b16 %v278
      %v503 = vunpack.c.l.b16 %v279
      %v504 = vunpack.c.l.b16 %v280
      %v505 = vunpack.c.l.b16 %v281
      %v506 = vunpack.c.l.b16 %v282
      %v507 = vpack.c.b16 %v400, %v399
      %v508 = vpack.c.b16 %v402, %v401
      %v509 = vpack.c.b16 %v404, %v403
      %v510 = vpack.c.b16 %v406, %v405
      %v511 = vpack.c.b16 %v408, %v407
      %v512 = vpack.c.b16 %v410, %v409
      %v513 = vpack.c.b16 %v412, %v411
      %v514 = vpack.c.b16 %v414, %v413
      %v515 = vpack.c.b16 %v416, %v415
      %v516 = vpack.c.b16 %v418, %v417
      %v517 = vpack.c.b16 %v420, %v419
      %v518 = vpack.c.b16 %v422, %v421
      %v519 = vpack.c.b16 %v424, %v423
      %v520 = vpack.c.b16 %v426, %v425
      %v521 = vpack.c.b16 %v428, %v427
      %v522 = vpack.c.b16 %v430, %v429
      %v523 = vpack.c.b16 %v432, %v431
      %v524 = vpack.c.b16 %v434, %v433
      %v525 = vpack.c.b16 %v436, %v435
      %v526 = vpack.c.b16 %v438, %v437
      %v527 = vpack.c.b16 %v440, %v439
      %v528 = vpack.c.b16 %v442, %v441
      %v529 = vpack.c.b16 %v444, %v443
      %v530 = vpack.c.b16 %v446, %v445
      %v531 = vpack.c.b16 %v448, %v447
      %v532 = vpack.c.b16 %v450, %v449
      %v533 = vpack.c.b16 %v452, %v451
      %v534 = vpack.c.b16 %v454, %v453
      %v535 = vpack.c.b16 %v456, %v455
      %v536 = vpack.c.b16 %v458, %v457
      %v537 = vpack.c.b16 %v460, %v459
      %v538 = vpack.c.b16 %v462, %v461
      %v539 = vpack.c.b16 %v464, %v463
      %v540 = vpack.c.b16 %v466, %v465
      %v541 = vpack.c.b16 %v468, %v467
      %v542 = vpack.c.b16 %v470, %v469
      %v543 = vpack.c.b16 %v472, %v471
      %v544 = vpack.c.b16 %v474, %v473
      %v545 = vpack.c.b16 %v476, %v475
      %v546 = vpack.c.b16 %v478, %v477
      %v547 = vpack.c.b16 %v480, %v479
      %v548 = vpack.c.b16 %v482, %v481
      %v549 = vpack.c.b16 %v484, %v483
      %v550 = vpack.c.b16 %v486, %v485
      %v551 = vpack.c.b16 %v488, %v487
      %v552 = vpack.c.b16 %v490, %v489
      %v553 = vpack.c.b16 %v492, %v491
      %v554 = vpack.c.b16 %v494, %v493
      %v555 = vpack.c.b16 %v496, %v495
      %v556 = vpack.c.b16 %v498, %v497
      %v557 = vpack.c.b16 %v500, %v499
      %v558 = vpack.c.b16 %v502, %v501
      %v559 = vpack.c.b16 %v504, %v503
      %v560 = vpack.c.b16 %v506, %v505
      %v565 = vunpack.c.l.b16 %v283
      %v566 = vunpack.c.l.b16 %v284
      %v567 = vunpack.c.l.b16 %v285
      %v568 = vunpack.c.l.b16 %v286
      %v569 = vpack.c.b16 %v566, %v565
      %v570 = vpack.c.b16 %v568, %v567
      %vm572 = vcmask 220160
      %v574 = vsel %vm572, %v507, 0
      %v577 = vsel %vm572, %v508, 0
      %v580 = vsel %vm572, %v509, 0
      %v583 = vsel %vm572, %v510, 0
      %v586 = vsel %vm572, %v511, 0
      %v589 = vsel %vm572, %v512, 0
      %v592 = vsel %vm572, %v513, 0
      %v595 = vsel %vm572, %v514, 0
      %v598 = vsel %vm572, %v515, 0
      %v601 = vsel %vm572, %v516, 0
      %v604 = vsel %vm572, %v517, 0
      %v607 = vsel %vm572, %v518, 0
      %v610 = vsel %vm572, %v519, 0
      %v613 = vsel %vm572, %v520, 0
      %v616 = vsel %vm572, %v521, 0
      %v619 = vsel %vm572, %v522, 0
      %v622 = vsel %vm572, %v523, 0
      %v625 = vsel %vm572, %v524, 0
      %v628 = vsel %vm572, %v525, 0
      %v631 = vsel %vm572, %v526, 0
      %v634 = vsel %vm572, %v527, 0
      %v637 = vsel %vm572, %v528, 0
      %v640 = vsel %vm572, %v529, 0
      %v643 = vsel %vm572, %v530, 0
      %v646 = vsel %vm572, %v531, 0
      %v649 = vsel %vm572, %v532, 0
      %v652 = vsel %vm572, %v533, 0
      %v655 = vsel %vm572, %v534, 0
      %v658 = vsel %vm572, %v535, 0
      %v661 = vsel %vm572, %v536, 0
      %v664 = vsel %vm572, %v537, 0
      %v667 = vsel %vm572, %v538, 0
      %v670 = vsel %vm572, %v539, 0
      %v673 = vsel %vm572, %v540, 0
      %v676 = vsel %vm572, %v541, 0
      %v679 = vsel %vm572, %v542, 0
      %v682 = vsel %vm572, %v543, 0
      %v685 = vsel %vm572, %v544, 0
      %v688 = vsel %vm572, %v545, 0
      %v691 = vsel %vm572, %v546, 0
      %v694 = vsel %vm572, %v547, 0
      %v697 = vsel %vm572, %v548, 0
      %v700 = vsel %vm572, %v549, 0
      %v703 = vsel %vm572, %v550, 0
      %v706 = vsel %vm572, %v551, 0
      %v709 = vsel %vm572, %v552, 0
      %v712 = vsel %vm572, %v553, 0
      %v715 = vsel %vm572, %v554, 0
      %v718 = vsel %vm572, %v555, 0
      %v721 = vsel %vm572, %v556, 0
      %v724 = vsel %vm572, %v557, 0
      %v727 = vsel %vm572, %v558, 0
      %v730 = vsel %vm572, %v559, 0
      %v733 = vsel %vm572, %v560, 0
      %vm735 = vcmask 1044480
      %vm736 = vcmask 1045504
      %v737 = vsel %vm735, 4294967295, 65535
      %v738 = vsel %vm736, %v737, 0
      %v740 = vand.u32 %v570, %v738
      %742 = vmatpush.bf16.msra.mxu0 0
      %743 = vmatpush.bf16.msra.mxu0 0
      %744 = vmatpush.bf16.msra.mxu0 0
      %745 = vmatpush.bf16.msra.mxu0 0
      %746 = vmatpush.bf16.msra.mxu0 0
      %747 = vmatpush.bf16.msra.mxu0 0
      %748 = vmatpush.bf16.msra.mxu0 %v740
      %749 = vmatpush.bf16.msra.mxu0 %v569
      %750 = vmatmul.bf16.gmra.mxu0 %v574
      %v751 = vpop.f32.mrf.mxu0
      %v752 = vadd.f32 %v289, %v751
      %v753 = vpop.f32.mrf.mxu0
      %v754 = vadd.f32 %v289, %v753
      %755 = vmatmul.bf16.gmra.mxu0 %v577
      %v756 = vpop.f32.mrf.mxu0
      %v757 = vadd.f32 %v289, %v756
      %v758 = vpop.f32.mrf.mxu0
      %v759 = vadd.f32 %v289, %v758
      %760 = vmatmul.bf16.gmra.mxu0 %v580
      %v761 = vpop.f32.mrf.mxu0
      %v762 = vadd.f32 %v289, %v761
      %v763 = vpop.f32.mrf.mxu0
      %v764 = vadd.f32 %v289, %v763
      %765 = vmatmul.bf16.gmra.mxu0 %v583
      %v766 = vpop.f32.mrf.mxu0
      %v767 = vadd.f32 %v289, %v766
      %v768 = vpop.f32.mrf.mxu0
      %v769 = vadd.f32 %v289, %v768
      %770 = vmatmul.bf16.gmra.mxu0 %v586
      %v771 = vpop.f32.mrf.mxu0
      %v772 = vadd.f32 %v289, %v771
      %v773 = vpop.f32.mrf.mxu0
      %v774 = vadd.f32 %v289, %v773
      %775 = vmatmul.bf16.gmra.mxu0 %v589
      %v776 = vpop.f32.mrf.mxu0
      %v777 = vadd.f32 %v289, %v776
      %v778 = vpop.f32.mrf.mxu0
      %v779 = vadd.f32 %v289, %v778
      %780 = vmatmul.bf16.gmra.mxu0 %v592
      %v781 = vpop.f32.mrf.mxu0
      %v782 = vadd.f32 %v289, %v781
      %v783 = vpop.f32.mrf.mxu0
      %v784 = vadd.f32 %v289, %v783
      %785 = vmatmul.bf16.gmra.mxu0 %v595
      %v786 = vpop.f32.mrf.mxu0
      %v787 = vadd.f32 %v289, %v786
      %v788 = vpop.f32.mrf.mxu0
      %v789 = vadd.f32 %v289, %v788
      %790 = vmatmul.bf16.gmra.mxu0 %v598
      %v791 = vpop.f32.mrf.mxu0
      %v792 = vadd.f32 %v289, %v791
      %v793 = vpop.f32.mrf.mxu0
      %v794 = vadd.f32 %v289, %v793
      %795 = vmatmul.bf16.gmra.mxu0 %v601
      %v796 = vpop.f32.mrf.mxu0
      %v797 = vadd.f32 %v289, %v796
      %v798 = vpop.f32.mrf.mxu0
      %v799 = vadd.f32 %v289, %v798
      %800 = vmatmul.bf16.gmra.mxu0 %v604
      %v801 = vpop.f32.mrf.mxu0
      %v802 = vadd.f32 %v289, %v801
      %v803 = vpop.f32.mrf.mxu0
      %v804 = vadd.f32 %v289, %v803
      %805 = vmatmul.bf16.gmra.mxu0 %v607
      %v806 = vpop.f32.mrf.mxu0
      %v807 = vadd.f32 %v289, %v806
      %v808 = vpop.f32.mrf.mxu0
      %v809 = vadd.f32 %v289, %v808
      %810 = vmatmul.bf16.gmra.mxu0 %v610
      %v811 = vpop.f32.mrf.mxu0
      %v812 = vadd.f32 %v289, %v811
      %v813 = vpop.f32.mrf.mxu0
      %v814 = vadd.f32 %v289, %v813
      %815 = vmatmul.bf16.gmra.mxu0 %v613
      %v816 = vpop.f32.mrf.mxu0
      %v817 = vadd.f32 %v289, %v816
      %v818 = vpop.f32.mrf.mxu0
      %v819 = vadd.f32 %v289, %v818
      %820 = vmatmul.bf16.gmra.mxu0 %v616
      %v821 = vpop.f32.mrf.mxu0
      %v822 = vadd.f32 %v289, %v821
      %v823 = vpop.f32.mrf.mxu0
      %v824 = vadd.f32 %v289, %v823
      %825 = vmatmul.bf16.gmra.mxu0 %v619
      %v826 = vpop.f32.mrf.mxu0
      %v827 = vadd.f32 %v289, %v826
      %v828 = vpop.f32.mrf.mxu0
      %v829 = vadd.f32 %v289, %v828
      %830 = vmatmul.bf16.gmra.mxu0 %v622
      %v831 = vpop.f32.mrf.mxu0
      %v832 = vadd.f32 %v289, %v831
      %v833 = vpop.f32.mrf.mxu0
      %v834 = vadd.f32 %v289, %v833
      %835 = vmatmul.bf16.gmra.mxu0 %v625
      %v836 = vpop.f32.mrf.mxu0
      %v837 = vadd.f32 %v289, %v836
      %v838 = vpop.f32.mrf.mxu0
      %v839 = vadd.f32 %v289, %v838
      %840 = vmatmul.bf16.gmra.mxu0 %v628
      %v841 = vpop.f32.mrf.mxu0
      %v842 = vadd.f32 %v289, %v841
      %v843 = vpop.f32.mrf.mxu0
      %v844 = vadd.f32 %v289, %v843
      %845 = vmatmul.bf16.gmra.mxu0 %v631
      %v846 = vpop.f32.mrf.mxu0
      %v847 = vadd.f32 %v289, %v846
      %v848 = vpop.f32.mrf.mxu0
      %v849 = vadd.f32 %v289, %v848
      %850 = vmatmul.bf16.gmra.mxu0 %v634
      %v851 = vpop.f32.mrf.mxu0
      %v852 = vadd.f32 %v289, %v851
      %v853 = vpop.f32.mrf.mxu0
      %v854 = vadd.f32 %v289, %v853
      %855 = vmatmul.bf16.gmra.mxu0 %v637
      %v856 = vpop.f32.mrf.mxu0
      %v857 = vadd.f32 %v289, %v856
      %v858 = vpop.f32.mrf.mxu0
      %v859 = vadd.f32 %v289, %v858
      %860 = vmatmul.bf16.gmra.mxu0 %v640
      %v861 = vpop.f32.mrf.mxu0
      %v862 = vadd.f32 %v289, %v861
      %v863 = vpop.f32.mrf.mxu0
      %v864 = vadd.f32 %v289, %v863
      %865 = vmatmul.bf16.gmra.mxu0 %v643
      %v866 = vpop.f32.mrf.mxu0
      %v867 = vadd.f32 %v289, %v866
      %v868 = vpop.f32.mrf.mxu0
      %v869 = vadd.f32 %v289, %v868
      %870 = vmatmul.bf16.gmra.mxu0 %v646
      %v871 = vpop.f32.mrf.mxu0
      %v872 = vadd.f32 %v289, %v871
      %v873 = vpop.f32.mrf.mxu0
      %v874 = vadd.f32 %v289, %v873
      %875 = vmatmul.bf16.gmra.mxu0 %v649
      %v876 = vpop.f32.mrf.mxu0
      %v877 = vadd.f32 %v289, %v876
      %v878 = vpop.f32.mrf.mxu0
      %v879 = vadd.f32 %v289, %v878
      %880 = vmatmul.bf16.gmra.mxu0 %v652
      %v881 = vpop.f32.mrf.mxu0
      %v882 = vadd.f32 %v289, %v881
      %v883 = vpop.f32.mrf.mxu0
      %v884 = vadd.f32 %v289, %v883
      %885 = vmatmul.bf16.gmra.mxu0 %v655
      %v886 = vpop.f32.mrf.mxu0
      %v887 = vadd.f32 %v289, %v886
      %v888 = vpop.f32.mrf.mxu0
      %v889 = vadd.f32 %v289, %v888
      %890 = vmatmul.bf16.gmra.mxu0 %v658
      %v891 = vpop.f32.mrf.mxu0
      %v892 = vadd.f32 %v289, %v891
      %v893 = vpop.f32.mrf.mxu0
      %v894 = vadd.f32 %v289, %v893
      %895 = vmatmul.bf16.gmra.mxu0 %v661
      %v896 = vpop.f32.mrf.mxu0
      %v897 = vadd.f32 %v289, %v896
      %v898 = vpop.f32.mrf.mxu0
      %v899 = vadd.f32 %v289, %v898
      %900 = vmatmul.bf16.gmra.mxu0 %v664
      %v901 = vpop.f32.mrf.mxu0
      %v902 = vadd.f32 %v289, %v901
      %v903 = vpop.f32.mrf.mxu0
      %v904 = vadd.f32 %v289, %v903
      %905 = vmatmul.bf16.gmra.mxu0 %v667
      %v906 = vpop.f32.mrf.mxu0
      %v907 = vadd.f32 %v289, %v906
      %v908 = vpop.f32.mrf.mxu0
      %v909 = vadd.f32 %v289, %v908
      %910 = vmatmul.bf16.gmra.mxu0 %v670
      %v911 = vpop.f32.mrf.mxu0
      %v912 = vadd.f32 %v289, %v911
      %v913 = vpop.f32.mrf.mxu0
      %v914 = vadd.f32 %v289, %v913
      %915 = vmatmul.bf16.gmra.mxu0 %v673
      %v916 = vpop.f32.mrf.mxu0
      %v917 = vadd.f32 %v289, %v916
      %v918 = vpop.f32.mrf.mxu0
      %v919 = vadd.f32 %v289, %v918
      %920 = vmatmul.bf16.gmra.mxu0 %v676
      %v921 = vpop.f32.mrf.mxu0
      %v922 = vadd.f32 %v289, %v921
      %v923 = vpop.f32.mrf.mxu0
      %v924 = vadd.f32 %v289, %v923
      %925 = vmatmul.bf16.gmra.mxu0 %v679
      %v926 = vpop.f32.mrf.mxu0
      %v927 = vadd.f32 %v289, %v926
      %v928 = vpop.f32.mrf.mxu0
      %v929 = vadd.f32 %v289, %v928
      %930 = vmatmul.bf16.gmra.mxu0 %v682
      %v931 = vpop.f32.mrf.mxu0
      %v932 = vadd.f32 %v289, %v931
      %v933 = vpop.f32.mrf.mxu0
      %v934 = vadd.f32 %v289, %v933
      %935 = vmatmul.bf16.gmra.mxu0 %v685
      %v936 = vpop.f32.mrf.mxu0
      %v937 = vadd.f32 %v289, %v936
      %v938 = vpop.f32.mrf.mxu0
      %v939 = vadd.f32 %v289, %v938
      %940 = vmatmul.bf16.gmra.mxu0 %v688
      %v941 = vpop.f32.mrf.mxu0
      %v942 = vadd.f32 %v289, %v941
      %v943 = vpop.f32.mrf.mxu0
      %v944 = vadd.f32 %v289, %v943
      %945 = vmatmul.bf16.gmra.mxu0 %v691
      %v946 = vpop.f32.mrf.mxu0
      %v947 = vadd.f32 %v289, %v946
      %v948 = vpop.f32.mrf.mxu0
      %v949 = vadd.f32 %v289, %v948
      %950 = vmatmul.bf16.gmra.mxu0 %v694
      %v951 = vpop.f32.mrf.mxu0
      %v952 = vadd.f32 %v289, %v951
      %v953 = vpop.f32.mrf.mxu0
      %v954 = vadd.f32 %v289, %v953
      %955 = vmatmul.bf16.gmra.mxu0 %v697
      %v956 = vpop.f32.mrf.mxu0
      %v957 = vadd.f32 %v289, %v956
      %v958 = vpop.f32.mrf.mxu0
      %v959 = vadd.f32 %v289, %v958
      %960 = vmatmul.bf16.gmra.mxu0 %v700
      %v961 = vpop.f32.mrf.mxu0
      %v962 = vadd.f32 %v289, %v961
      %v963 = vpop.f32.mrf.mxu0
      %v964 = vadd.f32 %v289, %v963
      %965 = vmatmul.bf16.gmra.mxu0 %v703
      %v966 = vpop.f32.mrf.mxu0
      %v967 = vadd.f32 %v289, %v966
      %v968 = vpop.f32.mrf.mxu0
      %v969 = vadd.f32 %v289, %v968
      %970 = vmatmul.bf16.gmra.mxu0 %v706
      %v971 = vpop.f32.mrf.mxu0
      %v972 = vadd.f32 %v289, %v971
      %v973 = vpop.f32.mrf.mxu0
      %v974 = vadd.f32 %v289, %v973
      %975 = vmatmul.bf16.gmra.mxu0 %v709
      %v976 = vpop.f32.mrf.mxu0
      %v977 = vadd.f32 %v289, %v976
      %v978 = vpop.f32.mrf.mxu0
      %v979 = vadd.f32 %v289, %v978
      %980 = vmatmul.bf16.gmra.mxu0 %v712
      %v981 = vpop.f32.mrf.mxu0
      %v982 = vadd.f32 %v289, %v981
      %v983 = vpop.f32.mrf.mxu0
      %v984 = vadd.f32 %v289, %v983
      %985 = vmatmul.bf16.gmra.mxu0 %v715
      %v986 = vpop.f32.mrf.mxu0
      %v987 = vadd.f32 %v289, %v986
      %v988 = vpop.f32.mrf.mxu0
      %v989 = vadd.f32 %v289, %v988
      %990 = vmatmul.bf16.gmra.mxu0 %v718
      %v991 = vpop.f32.mrf.mxu0
      %v992 = vadd.f32 %v289, %v991
      %v993 = vpop.f32.mrf.mxu0
      %v994 = vadd.f32 %v289, %v993
      %995 = vmatmul.bf16.gmra.mxu0 %v721
      %v996 = vpop.f32.mrf.mxu0
      %v997 = vadd.f32 %v289, %v996
      %v998 = vpop.f32.mrf.mxu0
      %v999 = vadd.f32 %v289, %v998
      %1000 = vmatmul.bf16.gmra.mxu0 %v724
      %v1001 = vpop.f32.mrf.mxu0
      %v1002 = vadd.f32 %v289, %v1001
      %v1003 = vpop.f32.mrf.mxu0
      %v1004 = vadd.f32 %v289, %v1003
      %1005 = vmatmul.bf16.gmra.mxu0 %v727
      %v1006 = vpop.f32.mrf.mxu0
      %v1007 = vadd.f32 %v289, %v1006
      %v1008 = vpop.f32.mrf.mxu0
      %v1009 = vadd.f32 %v289, %v1008
      %1010 = vmatmul.bf16.gmra.mxu0 %v730
      %v1011 = vpop.f32.mrf.mxu0
      %v1012 = vadd.f32 %v289, %v1011
      %v1013 = vpop.f32.mrf.mxu0
      %v1014 = vadd.f32 %v289, %v1013
      %1015 = vmatmul.bf16.gmra.mxu0 %v733
      %v1016 = vpop.f32.mrf.mxu0
      %v1017 = vadd.f32 %v289, %v1016
      %v1018 = vpop.f32.mrf.mxu0
      %v1019 = vadd.f32 %v289, %v1018
      %1020 = vdwg.mxu0
      %v1021 = vmax.f32 %v752, 0.0
      %v1022 = vmax.f32 %v754, 0.0
      %v1023 = vmax.f32 %v757, 0.0
      %v1024 = vmax.f32 %v759, 0.0
      %v1025 = vmax.f32 %v762, 0.0
      %v1026 = vmax.f32 %v764, 0.0
      %v1027 = vmax.f32 %v767, 0.0
      %v1028 = vmax.f32 %v769, 0.0
      %v1029 = vmax.f32 %v772, 0.0
      %v1030 = vmax.f32 %v774, 0.0
      %v1031 = vmax.f32 %v777, 0.0
      %v1032 = vmax.f32 %v779, 0.0
      %v1033 = vmax.f32 %v782, 0.0
      %v1034 = vmax.f32 %v784, 0.0
      %v1035 = vmax.f32 %v787, 0.0
      %v1036 = vmax.f32 %v789, 0.0
      %v1037 = vmax.f32 %v792, 0.0
      %v1038 = vmax.f32 %v794, 0.0
      %v1039 = vmax.f32 %v797, 0.0
      %v1040 = vmax.f32 %v799, 0.0
      %v1041 = vmax.f32 %v802, 0.0
      %v1042 = vmax.f32 %v804, 0.0
      %v1043 = vmax.f32 %v807, 0.0
      %v1044 = vmax.f32 %v809, 0.0
      %v1045 = vmax.f32 %v812, 0.0
      %v1046 = vmax.f32 %v814, 0.0
      %v1047 = vmax.f32 %v817, 0.0
      %v1048 = vmax.f32 %v819, 0.0
      %v1049 = vmax.f32 %v822, 0.0
      %v1050 = vmax.f32 %v824, 0.0
      %v1051 = vmax.f32 %v827, 0.0
      %v1052 = vmax.f32 %v829, 0.0
      %v1053 = vmax.f32 %v832, 0.0
      %v1054 = vmax.f32 %v834, 0.0
      %v1055 = vmax.f32 %v837, 0.0
      %v1056 = vmax.f32 %v839, 0.0
      %v1057 = vmax.f32 %v842, 0.0
      %v1058 = vmax.f32 %v844, 0.0
      %v1059 = vmax.f32 %v847, 0.0
      %v1060 = vmax.f32 %v849, 0.0
      %v1061 = vmax.f32 %v852, 0.0
      %v1062 = vmax.f32 %v854, 0.0
      %v1063 = vmax.f32 %v857, 0.0
      %v1064 = vmax.f32 %v859, 0.0
      %v1065 = vmax.f32 %v862, 0.0
      %v1066 = vmax.f32 %v864, 0.0
      %v1067 = vmax.f32 %v867, 0.0
      %v1068 = vmax.f32 %v869, 0.0
      %v1069 = vmax.f32 %v872, 0.0
      %v1070 = vmax.f32 %v874, 0.0
      %v1071 = vmax.f32 %v877, 0.0
      %v1072 = vmax.f32 %v879, 0.0
      %v1073 = vmax.f32 %v882, 0.0
      %v1074 = vmax.f32 %v884, 0.0
      %v1075 = vmax.f32 %v887, 0.0
      %v1076 = vmax.f32 %v889, 0.0
      %v1077 = vmax.f32 %v892, 0.0
      %v1078 = vmax.f32 %v894, 0.0
      %v1079 = vmax.f32 %v897, 0.0
      %v1080 = vmax.f32 %v899, 0.0
      %v1081 = vmax.f32 %v902, 0.0
      %v1082 = vmax.f32 %v904, 0.0
      %v1083 = vmax.f32 %v907, 0.0
      %v1084 = vmax.f32 %v909, 0.0
      %v1085 = vmax.f32 %v912, 0.0
      %v1086 = vmax.f32 %v914, 0.0
      %v1087 = vmax.f32 %v917, 0.0
      %v1088 = vmax.f32 %v919, 0.0
      %v1089 = vmax.f32 %v922, 0.0
      %v1090 = vmax.f32 %v924, 0.0
      %v1091 = vmax.f32 %v927, 0.0
      %v1092 = vmax.f32 %v929, 0.0
      %v1093 = vmax.f32 %v932, 0.0
      %v1094 = vmax.f32 %v934, 0.0
      %v1095 = vmax.f32 %v937, 0.0
      %v1096 = vmax.f32 %v939, 0.0
      %v1097 = vmax.f32 %v942, 0.0
      %v1098 = vmax.f32 %v944, 0.0
      %v1099 = vmax.f32 %v947, 0.0
      %v1100 = vmax.f32 %v949, 0.0
      %v1101 = vmax.f32 %v952, 0.0
      %v1102 = vmax.f32 %v954, 0.0
      %v1103 = vmax.f32 %v957, 0.0
      %v1104 = vmax.f32 %v959, 0.0
      %v1105 = vmax.f32 %v962, 0.0
      %v1106 = vmax.f32 %v964, 0.0
      %v1107 = vmax.f32 %v967, 0.0
      %v1108 = vmax.f32 %v969, 0.0
      %v1109 = vmax.f32 %v972, 0.0
      %v1110 = vmax.f32 %v974, 0.0
      %v1111 = vmax.f32 %v977, 0.0
      %v1112 = vmax.f32 %v979, 0.0
      %v1113 = vmax.f32 %v982, 0.0
      %v1114 = vmax.f32 %v984, 0.0
      %v1115 = vmax.f32 %v987, 0.0
      %v1116 = vmax.f32 %v989, 0.0
      %v1117 = vmax.f32 %v992, 0.0
      %v1118 = vmax.f32 %v994, 0.0
      %v1119 = vmax.f32 %v997, 0.0
      %v1120 = vmax.f32 %v999, 0.0
      %v1121 = vmax.f32 %v1002, 0.0
      %v1122 = vmax.f32 %v1004, 0.0
      %v1123 = vmax.f32 %v1007, 0.0
      %v1124 = vmax.f32 %v1009, 0.0
      %v1125 = vmax.f32 %v1012, 0.0
      %v1126 = vmax.f32 %v1014, 0.0
      %v1127 = vmax.f32 %v1017, 0.0
      %v1128 = vmax.f32 %v1019, 0.0
      %vm1129 = vcmask 64512
      %1130 = vst.msk [vmem:[%s172] sm:$0xff] %vm1129, %v1021
      %1131 = vst.msk [vmem:[%s172 + $0x8] sm:$0xff] %vm1129, %v1022
      %1132 = vst.msk [vmem:[%s172 + $0x10] sm:$0xff] %vm1129, %v1023
      %1133 = vst.msk [vmem:[%s172 + $0x18] sm:$0xff] %vm1129, %v1024
      %1134 = vst.msk [vmem:[%s172 + $0x20] sm:$0xff] %vm1129, %v1025
      %1135 = vst.msk [vmem:[%s172 + $0x28] sm:$0xff] %vm1129, %v1026
      %1136 = vst.msk [vmem:[%s172 + $0x30] sm:$0xff] %vm1129, %v1027
      %1137 = vst.msk [vmem:[%s172 + $0x38] sm:$0xff] %vm1129, %v1028
      %1138 = vst.msk [vmem:[%s172 + $0x40] sm:$0xff] %vm1129, %v1029
      %1139 = vst.msk [vmem:[%s172 + $0x48] sm:$0xff] %vm1129, %v1030
      %1140 = vst.msk [vmem:[%s172 + $0x50] sm:$0xff] %vm1129, %v1031
      %1141 = vst.msk [vmem:[%s172 + $0x58] sm:$0xff] %vm1129, %v1032
      %1142 = vst.msk [vmem:[%s172 + $0x60] sm:$0xff] %vm1129, %v1033
      %1143 = vst.msk [vmem:[%s172 + $0x68] sm:$0xff] %vm1129, %v1034
      %1144 = vst.msk [vmem:[%s172 + $0x70] sm:$0xff] %vm1129, %v1035
      %1145 = vst.msk [vmem:[%s172 + $0x78] sm:$0xff] %vm1129, %v1036
      %1146 = vst.msk [vmem:[%s172 + $0x80] sm:$0xff] %vm1129, %v1037
      %1147 = vst.msk [vmem:[%s172 + $0x88] sm:$0xff] %vm1129, %v1038
      %1148 = vst.msk [vmem:[%s172 + $0x90] sm:$0xff] %vm1129, %v1039
      %1149 = vst.msk [vmem:[%s172 + $0x98] sm:$0xff] %vm1129, %v1040
      %1150 = vst.msk [vmem:[%s172 + $0xa0] sm:$0xff] %vm1129, %v1041
      %1151 = vst.msk [vmem:[%s172 + $0xa8] sm:$0xff] %vm1129, %v1042
      %1152 = vst.msk [vmem:[%s172 + $0xb0] sm:$0xff] %vm1129, %v1043
      %1153 = vst.msk [vmem:[%s172 + $0xb8] sm:$0xff] %vm1129, %v1044
      %1154 = vst.msk [vmem:[%s172 + $0xc0] sm:$0xff] %vm1129, %v1045
      %1155 = vst.msk [vmem:[%s172 + $0xc8] sm:$0xff] %vm1129, %v1046
      %1156 = vst.msk [vmem:[%s172 + $0xd0] sm:$0xff] %vm1129, %v1047
      %1157 = vst.msk [vmem:[%s172 + $0xd8] sm:$0xff] %vm1129, %v1048
      %1158 = vst.msk [vmem:[%s172 + $0xe0] sm:$0xff] %vm1129, %v1049
      %1159 = vst.msk [vmem:[%s172 + $0xe8] sm:$0xff] %vm1129, %v1050
      %1160 = vst.msk [vmem:[%s172 + $0xf0] sm:$0xff] %vm1129, %v1051
      %1161 = vst.msk [vmem:[%s172 + $0xf8] sm:$0xff] %vm1129, %v1052
      %1162 = vst.msk [vmem:[%s172 + $0x100] sm:$0xff] %vm1129, %v1053
      %1163 = vst.msk [vmem:[%s172 + $0x108] sm:$0xff] %vm1129, %v1054
      %1164 = vst.msk [vmem:[%s172 + $0x110] sm:$0xff] %vm1129, %v1055
      %1165 = vst.msk [vmem:[%s172 + $0x118] sm:$0xff] %vm1129, %v1056
      %1166 = vst.msk [vmem:[%s172 + $0x120] sm:$0xff] %vm1129, %v1057
      %1167 = vst.msk [vmem:[%s172 + $0x128] sm:$0xff] %vm1129, %v1058
      %1168 = vst.msk [vmem:[%s172 + $0x130] sm:$0xff] %vm1129, %v1059
      %1169 = vst.msk [vmem:[%s172 + $0x138] sm:$0xff] %vm1129, %v1060
      %1170 = vst.msk [vmem:[%s172 + $0x140] sm:$0xff] %vm1129, %v1061
      %1171 = vst.msk [vmem:[%s172 + $0x148] sm:$0xff] %vm1129, %v1062
      %1172 = vst.msk [vmem:[%s172 + $0x150] sm:$0xff] %vm1129, %v1063
      %1173 = vst.msk [vmem:[%s172 + $0x158] sm:$0xff] %vm1129, %v1064
      %1174 = vst.msk [vmem:[%s172 + $0x160] sm:$0xff] %vm1129, %v1065
      %1175 = vst.msk [vmem:[%s172 + $0x168] sm:$0xff] %vm1129, %v1066
      %1176 = vst.msk [vmem:[%s172 + $0x170] sm:$0xff] %vm1129, %v1067
      %1177 = vst.msk [vmem:[%s172 + $0x178] sm:$0xff] %vm1129, %v1068
      %1178 = vst.msk [vmem:[%s172 + $0x180] sm:$0xff] %vm1129, %v1069
      %1179 = vst.msk [vmem:[%s172 + $0x188] sm:$0xff] %vm1129, %v1070
      %1180 = vst.msk [vmem:[%s172 + $0x190] sm:$0xff] %vm1129, %v1071
      %1181 = vst.msk [vmem:[%s172 + $0x198] sm:$0xff] %vm1129, %v1072
      %1182 = vst.msk [vmem:[%s172 + $0x1a0] sm:$0xff] %vm1129, %v1073
      %1183 = vst.msk [vmem:[%s172 + $0x1a8] sm:$0xff] %vm1129, %v1074
      %1184 = vst.msk [vmem:[%s172 + $0x1b0] sm:$0xff] %vm1129, %v1075
      %1185 = vst.msk [vmem:[%s172 + $0x1b8] sm:$0xff] %vm1129, %v1076
      %1186 = vst.msk [vmem:[%s172 + $0x1c0] sm:$0xff] %vm1129, %v1077
      %1187 = vst.msk [vmem:[%s172 + $0x1c8] sm:$0xff] %vm1129, %v1078
      %1188 = vst.msk [vmem:[%s172 + $0x1d0] sm:$0xff] %vm1129, %v1079
      %1189 = vst.msk [vmem:[%s172 + $0x1d8] sm:$0xff] %vm1129, %v1080
      %1190 = vst.msk [vmem:[%s172 + $0x1e0] sm:$0xff] %vm1129, %v1081
      %1191 = vst.msk [vmem:[%s172 + $0x1e8] sm:$0xff] %vm1129, %v1082
      %1192 = vst.msk [vmem:[%s172 + $0x1f0] sm:$0xff] %vm1129, %v1083
      %1193 = vst.msk [vmem:[%s172 + $0x1f8] sm:$0xff] %vm1129, %v1084
      %1194 = vst.msk [vmem:[%s172 + $0x200] sm:$0xff] %vm1129, %v1085
      %1195 = vst.msk [vmem:[%s172 + $0x208] sm:$0xff] %vm1129, %v1086
      %1196 = vst.msk [vmem:[%s172 + $0x210] sm:$0xff] %vm1129, %v1087
      %1197 = vst.msk [vmem:[%s172 + $0x218] sm:$0xff] %vm1129, %v1088
      %1198 = vst.msk [vmem:[%s172 + $0x220] sm:$0xff] %vm1129, %v1089
      %1199 = vst.msk [vmem:[%s172 + $0x228] sm:$0xff] %vm1129, %v1090
      %1200 = vst.msk [vmem:[%s172 + $0x230] sm:$0xff] %vm1129, %v1091
      %1201 = vst.msk [vmem:[%s172 + $0x238] sm:$0xff] %vm1129, %v1092
      %1202 = vst.msk [vmem:[%s172 + $0x240] sm:$0xff] %vm1129, %v1093
      %1203 = vst.msk [vmem:[%s172 + $0x248] sm:$0xff] %vm1129, %v1094
      %1204 = vst.msk [vmem:[%s172 + $0x250] sm:$0xff] %vm1129, %v1095
      %1205 = vst.msk [vmem:[%s172 + $0x258] sm:$0xff] %vm1129, %v1096
      %1206 = vst.msk [vmem:[%s172 + $0x260] sm:$0xff] %vm1129, %v1097
      %1207 = vst.msk [vmem:[%s172 + $0x268] sm:$0xff] %vm1129, %v1098
      %1208 = vst.msk [vmem:[%s172 + $0x270] sm:$0xff] %vm1129, %v1099
      %1209 = vst.msk [vmem:[%s172 + $0x278] sm:$0xff] %vm1129, %v1100
      %1210 = vst.msk [vmem:[%s172 + $0x280] sm:$0xff] %vm1129, %v1101
      %1211 = vst.msk [vmem:[%s172 + $0x288] sm:$0xff] %vm1129, %v1102
      %1212 = vst.msk [vmem:[%s172 + $0x290] sm:$0xff] %vm1129, %v1103
      %1213 = vst.msk [vmem:[%s172 + $0x298] sm:$0xff] %vm1129, %v1104
      %1214 = vst.msk [vmem:[%s172 + $0x2a0] sm:$0xff] %vm1129, %v1105
      %1215 = vst.msk [vmem:[%s172 + $0x2a8] sm:$0xff] %vm1129, %v1106
      %1216 = vst.msk [vmem:[%s172 + $0x2b0] sm:$0xff] %vm1129, %v1107
      %1217 = vst.msk [vmem:[%s172 + $0x2b8] sm:$0xff] %vm1129, %v1108
      %1218 = vst.msk [vmem:[%s172 + $0x2c0] sm:$0xff] %vm1129, %v1109
      %1219 = vst.msk [vmem:[%s172 + $0x2c8] sm:$0xff] %vm1129, %v1110
      %1220 = vst.msk [vmem:[%s172 + $0x2d0] sm:$0xff] %vm1129, %v1111
      %1221 = vst.msk [vmem:[%s172 + $0x2d8] sm:$0xff] %vm1129, %v1112
      %1222 = vst.msk [vmem:[%s172 + $0x2e0] sm:$0xff] %vm1129, %v1113
      %1223 = vst.msk [vmem:[%s172 + $0x2e8] sm:$0xff] %vm1129, %v1114
      %1224 = vst.msk [vmem:[%s172 + $0x2f0] sm:$0xff] %vm1129, %v1115
      %1225 = vst.msk [vmem:[%s172 + $0x2f8] sm:$0xff] %vm1129, %v1116
      %1226 = vst.msk [vmem:[%s172 + $0x300] sm:$0xff] %vm1129, %v1117
      %1227 = vst.msk [vmem:[%s172 + $0x308] sm:$0xff] %vm1129, %v1118
      %1228 = vst.msk [vmem:[%s172 + $0x310] sm:$0xff] %vm1129, %v1119
      %1229 = vst.msk [vmem:[%s172 + $0x318] sm:$0xff] %vm1129, %v1120
      %1230 = vst.msk [vmem:[%s172 + $0x320] sm:$0xff] %vm1129, %v1121
      %1231 = vst.msk [vmem:[%s172 + $0x328] sm:$0xff] %vm1129, %v1122
      %1232 = vst.msk [vmem:[%s172 + $0x330] sm:$0xff] %vm1129, %v1123
      %1233 = vst.msk [vmem:[%s172 + $0x338] sm:$0xff] %vm1129, %v1124
      %1234 = vst.msk [vmem:[%s172 + $0x340] sm:$0xff] %vm1129, %v1125
      %1235 = vst.msk [vmem:[%s172 + $0x348] sm:$0xff] %vm1129, %v1126
      %1236 = vst.msk [vmem:[%s172 + $0x350] sm:$0xff] %vm1129, %v1127
      %1237 = vst.msk [vmem:[%s172 + $0x358] sm:$0xff] %vm1129, %v1128
      %s1238 = smul.u32 108, %s14
      %p1239 = scmp.lt.s32.totalorder %s1238, 647
      %s1240 = scalar_select %p1239, %s1238, 647
      %s1241 = smul.addr %s1240, 8
      %s1242 = scalar_lea.vmem %s3, %s1241
      // Predicated region
      $region33: #{network_forward.9} parent=31 // pred_check
        %p1243 = pneg %p100
      $region34: #{network_forward.9} parent=31 // pred_check_branch
        %1245 = sbr.rel (%p1243) target = $region36
      $region35: #{network_forward.9} parent=31 // pred_region
        %s1246 = smul.u32 108, %s14
      $region36: #{network_forward.9} parent=31 // pred_fallthru
        _
    $region32: #{network_forward.9} parent=5 // pred_fallthru
      _
    %p1247 = scmp.le.s32.totalorder 2, %s9
    // Predicated region
    $region37: #{network_forward.9} parent=5 // pred_check
      %p1248 = pneg %p1247
    $region38: #{network_forward.9} parent=5 // pred_check_branch
      %1250 = sbr.rel (%p1248) target = $region40
    $region39: #{network_forward.9} parent=5 // pred_region
      %s1251 = ssub.s32 %s9, 2
      // Predicated region
      $region41: #{network_forward.9} parent=39 // pred_check
        %p1252 = pneg %p106
      $region42: #{network_forward.9} parent=39 // pred_check_branch
        %1254 = sbr.rel (%p1252) target = $region44
      $region43: #{network_forward.9} parent=39 // pred_region
        %s1255 = smul.u32 108, %s15
        %p1256 = scmp.lt.s32.totalorder %s1255, 647
        %s1257 = scalar_select %p1256, %s1255, 647
        %s1258 = smul.addr %s1257, 8
        %s1259 = scalar_lea.vmem %s3, %s1258
      $region44: #{network_forward.9} parent=39 // pred_fallthru
        _
    $region40: #{network_forward.9} parent=5 // pred_fallthru
      _
  $region6: #{network_forward.9} parent=0 // loop_footer
    %s13 = sadd.s32 1, %s9
  $region7: #{network_forward.9} parent=0 // loop_footer_branch
    %8 = sbr.rel target = $region3
  $region8: #{network_forward.9} parent=0 // loop_exit
    _

// kernel: network_forward.10
$region0: #{network_forward.10}
  #allocation0 [shape = 'u32[]', space=smem, size = 0x4, offset = 0x4, fixed_abs, tag = 'smem constant byte address 0x4 - core index']
  #allocation1 [shape = 'u32[72,128]{1,0:T(1,128)}', space=vmem, size = 0x9000, scoped, tag = 'internal scratch']
  %s0 = inlined_call_operand.vmem [shape: bf16[5184,216], index: 0, kind: input, shape index: {}]
  %s1 = inlined_call_operand.vmem [shape: bf16[216,8], index: 1, kind: input, shape index: {}]
  %s2 = inlined_call_operand.vmem [shape: f32[1,8], index: 2, kind: input, shape index: {}]
  %s3 = inlined_call_operand.vmem [shape: f32[5184,8], index: 3, kind: output, shape index: {}]
  %s4 = sld [smem:[#allocation0]]
  $region45: #{network_forward.10} parent=0
    _
  %s6 = ssub.s32 1, %s4
  %s7 = scalar_select 0, %s6, %s4
  loop: start=0, step=1, limit=8
  $region2: #{network_forward.10} parent=0 // loop_pre_header
    _
  $region3: #{network_forward.10} parent=0 // loop_header
    %s9 = sphi 0, %s13
    %p10 = scmp.ge.s32.totalorder %s9, 8
    %s19 = sphi 0, %s21
    %s22 = sphi 0, %s19
    %s23 = sphi 0, %s22
    %s39 = sphi 0, %s23
    %s43 = sphi 0, %s43
    %s45 = sphi 0, %s43
    %s46 = sphi 0, %s45
    %s60 = sphi 0, %s46
    %s64 = sphi 0, %s64
    %s66 = sphi 0, %s64
    %s67 = sphi 0, %s66
    %s81 = sphi 0, %s67
    %s87 = sphi 0, %s89
    %s90 = sphi 0, %s87
    %s91 = sphi 0, %s90
    %s107 = sphi 0, %s91
  $region4: #{network_forward.10} parent=0 // loop_header_branch
    %12 = sbr.rel (%p10) target = $region8
  $region5: #{network_forward.10} parent=0 // loop_body
    %s14 = ssub.s32 %s9, 1
    %s15 = ssub.s32 %s9, 2
    %s16 = sadd.s32 %s9, 1
    %s17 = ssub.s32 %s9, %s16
    %p18 = scmp.eq.s32.totalorder %s17, 0
    %s20 = sadd.s32 %s19, 1
    %s21 = scalar_select %p18, %s19, %s20
    %p24 = pneg %p18
    %p25 = scmp.eq.s32.totalorder %s9, 5
    %p26 = por %p24, %p25
    %p27 = scmp.ne.s32.totalorder %s19, %s22
    %p28 = scmp.eq.s32.totalorder %s9, 0
    %p29 = por %p27, %p28
    %p30 = scmp.ne.s32.totalorder %s19, %s22
    %p31 = scmp.eq.s32.totalorder %s14, 5
    %p32 = por %p30, %p31
    %p33 = scmp.ne.s32.totalorder %s22, %s23
    %p34 = scmp.eq.s32.totalorder %s14, 0
    %p35 = por %p33, %p34
    %p36 = scmp.ne.s32.totalorder %s22, %s23
    %p37 = scmp.eq.s32.totalorder %s15, 5
    %p38 = por %p36, %p37
    %p40 = scmp.ne.s32.totalorder %s23, %s39
    %p41 = scmp.eq.s32.totalorder %s15, 0
    %p42 = por %p40, %p41
    %s44 = sadd.s32 %s43, 1
    %p47 = scmp.eq.s32.totalorder %s9, 5
    %p48 = scmp.ne.s32.totalorder %s43, %s45
    %p49 = scmp.eq.s32.totalorder %s9, 0
    %p50 = por %p48, %p49
    %p51 = scmp.ne.s32.totalorder %s43, %s45
    %p52 = scmp.eq.s32.totalorder %s14, 5
    %p53 = por %p51, %p52
    %p54 = scmp.ne.s32.totalorder %s45, %s46
    %p55 = scmp.eq.s32.totalorder %s14, 0
    %p56 = por %p54, %p55
    %p57 = scmp.ne.s32.totalorder %s45, %s46
    %p58 = scmp.eq.s32.totalorder %s15, 5
    %p59 = por %p57, %p58
    %p61 = scmp.ne.s32.totalorder %s46, %s60
    %p62 = scmp.eq.s32.totalorder %s15, 0
    %p63 = por %p61, %p62
    %s65 = sadd.s32 %s64, 1
    %p68 = scmp.eq.s32.totalorder %s9, 5
    %p69 = scmp.ne.s32.totalorder %s64, %s66
    %p70 = scmp.eq.s32.totalorder %s9, 0
    %p71 = por %p69, %p70
    %p72 = scmp.ne.s32.totalorder %s64, %s66
    %p73 = scmp.eq.s32.totalorder %s14, 5
    %p74 = por %p72, %p73
    %p75 = scmp.ne.s32.totalorder %s66, %s67
    %p76 = scmp.eq.s32.totalorder %s14, 0
    %p77 = por %p75, %p76
    %p78 = scmp.ne.s32.totalorder %s66, %s67
    %p79 = scmp.eq.s32.totalorder %s15, 5
    %p80 = por %p78, %p79
    %p82 = scmp.ne.s32.totalorder %s67, %s81
    %p83 = scmp.eq.s32.totalorder %s15, 0
    %p84 = por %p82, %p83
    %s85 = ssub.s32 %s9, %s16
    %p86 = scmp.eq.s32.totalorder %s85, 0
    %s88 = sadd.s32 %s87, 1
    %s89 = scalar_select %p86, %s87, %s88
    %p92 = pneg %p86
    %p93 = scmp.eq.s32.totalorder %s9, 5
    %p94 = por %p92, %p93
    %p95 = scmp.ne.s32.totalorder %s87, %s90
    %p96 = scmp.eq.s32.totalorder %s9, 0
    %p97 = por %p95, %p96
    %p98 = scmp.ne.s32.totalorder %s87, %s90
    %p99 = scmp.eq.s32.totalorder %s14, 5
    %p100 = por %p98, %p99
    %p101 = scmp.ne.s32.totalorder %s90, %s91
    %p102 = scmp.eq.s32.totalorder %s14, 0
    %p103 = por %p101, %p102
    %p104 = scmp.ne.s32.totalorder %s90, %s91
    %p105 = scmp.eq.s32.totalorder %s15, 5
    %p106 = por %p104, %p105
    %p108 = scmp.ne.s32.totalorder %s91, %s107
    %p109 = scmp.eq.s32.totalorder %s15, 0
    %p110 = por %p108, %p109
    %p111 = scmp.le.s32.totalorder 1, %s9
    %p112 = scmp.lt.s32.totalorder %s9, 7
    %p113 = pnand %p111, %p112
    %p114 = pneg %p113
    // Predicated region
    $region9: #{network_forward.10} parent=5 // pred_check
      _
    $region10: #{network_forward.10} parent=5 // pred_check_branch
      %116 = sbr.rel (%p113) target = $region12
    $region11: #{network_forward.10} parent=5 // pred_region
      %s117 = ssub.s32 %s9, 1
      // Predicated region
      $region13: #{network_forward.10} parent=11 // pred_check
        %p118 = pneg %p56
      $region14: #{network_forward.10} parent=11 // pred_check_branch
        %120 = sbr.rel (%p118) target = $region16
      $region15: #{network_forward.10} parent=11 // pred_region
        _
      $region16: #{network_forward.10} parent=11 // pred_fallthru
        _
      // Predicated region
      $region17: #{network_forward.10} parent=11 // pred_check
        %p121 = pneg %p77
      $region18: #{network_forward.10} parent=11 // pred_check_branch
        %123 = sbr.rel (%p121) target = $region20
      $region19: #{network_forward.10} parent=11 // pred_region
        _
      $region20: #{network_forward.10} parent=11 // pred_fallthru
        _
    $region12: #{network_forward.10} parent=5 // pred_fallthru
      _
    %p124 = scmp.lt.s32.totalorder %s9, 6
    // Predicated region
    $region21: #{network_forward.10} parent=5 // pred_check
      %p125 = pneg %p124
    $region22: #{network_forward.10} parent=5 // pred_check_branch
      %127 = sbr.rel (%p125) target = $region24
    $region23: #{network_forward.10} parent=5 // pred_region
      // Predicated region
      $region25: #{network_forward.10} parent=23 // pred_check
        %p128 = pneg %p29
      $region26: #{network_forward.10} parent=23 // pred_check_branch
        %130 = sbr.rel (%p128) target = $region28
      $region27: #{network_forward.10} parent=23 // pred_region
        %s131 = smul.u32 108, %s9
        %p132 = scmp.lt.s32.totalorder %s131, 647
        %s133 = scalar_select %p132, %s131, 647
        %s134 = smul.addr %s133, 2
        %s135 = smul.addr %s134, 4
        %s136 = scalar_lea.vmem %s0, %s135
        %s137 = smul.u32 108, %s9
      $region28: #{network_forward.10} parent=23 // pred_fallthru
        _
    $region24: #{network_forward.10} parent=5 // pred_fallthru
      _
    %p138 = scmp.le.s32.totalorder 1, %s9
    %p139 = scmp.lt.s32.totalorder %s9, 7
    %p140 = pnand %p138, %p139
    %p141 = pneg %p140
    // Predicated region
    $region29: #{network_forward.10} parent=5 // pred_check
      _
    $region30: #{network_forward.10} parent=5 // pred_check_branch
      %143 = sbr.rel (%p140) target = $region32
    $region31: #{network_forward.10} parent=5 // pred_region
      %s144 = ssub.s32 %s9, 1
      %s145 = smul.u32 108, %s14
      %p146 = scmp.lt.s32.totalorder %s145, 647
      %s147 = scalar_select %p146, %s145, 647
      %s148 = smul.addr %s147, 2
      %s149 = smul.addr %s148, 4
      %s150 = scalar_lea.vmem %s0, %s149
      %p151 = pneg %p35
      %p152 = pneg %p32
      %p153 = pneg %p56
      %p154 = pneg %p53
      %p155 = pneg %p77
      %p156 = pneg %p74
      %p157 = pneg %p103
      %p158 = pneg %p100
      %s159 = smul.u32 108, %s14
      %p160 = scmp.lt.s32.totalorder %s159, 647
      %s161 = scalar_select %p160, %s159, 647
      %s162 = smul.addr %s161, 8
      %s163 = scalar_lea.vmem %s3, %s162
      %s164 = smul.u32 108, %s14
      %p165 = scmp.lt.s32.totalorder %s164, 647
      %s166 = scalar_select %p165, %s164, 647
      %s167 = smul.addr %s166, 2
      %s168 = smul.addr %s167, 4
      %s169 = scalar_lea.vmem %s0, %s168
      %s170 = smul.u32 108, %s14
      %s171 = smul.u32 108, %s14
      %p172 = scmp.lt.s32.totalorder %s171, 647
      %s173 = scalar_select %p172, %s171, 647
      %s174 = smul.addr %s173, 8
      %s175 = scalar_lea.vmem %s3, %s174
      %s176 = smul.u32 108, %s14
      %v178 = vld [vmem:[%s169] sm:$0xff]
      %v179 = vld [vmem:[%s169 + $0x8] sm:$0xff]
      %v180 = vld [vmem:[%s169 + $0x10] sm:$0xff]
      %v181 = vld [vmem:[%s169 + $0x18] sm:$0xff]
      %v182 = vld [vmem:[%s169 + $0x20] sm:$0xff]
      %v183 = vld [vmem:[%s169 + $0x28] sm:$0xff]
      %v184 = vld [vmem:[%s169 + $0x30] sm:$0xff]
      %v185 = vld [vmem:[%s169 + $0x38] sm:$0xff]
      %v186 = vld [vmem:[%s169 + $0x40] sm:$0xff]
      %v187 = vld [vmem:[%s169 + $0x48] sm:$0xff]
      %v188 = vld [vmem:[%s169 + $0x50] sm:$0xff]
      %v189 = vld [vmem:[%s169 + $0x58] sm:$0xff]
      %v190 = vld [vmem:[%s169 + $0x60] sm:$0xff]
      %v191 = vld [vmem:[%s169 + $0x68] sm:$0xff]
      %v192 = vld [vmem:[%s169 + $0x70] sm:$0xff]
      %v193 = vld [vmem:[%s169 + $0x78] sm:$0xff]
      %v194 = vld [vmem:[%s169 + $0x80] sm:$0xff]
      %v195 = vld [vmem:[%s169 + $0x88] sm:$0xff]
      %v196 = vld [vmem:[%s169 + $0x90] sm:$0xff]
      %v197 = vld [vmem:[%s169 + $0x98] sm:$0xff]
      %v198 = vld [vmem:[%s169 + $0xa0] sm:$0xff]
      %v199 = vld [vmem:[%s169 + $0xa8] sm:$0xff]
      %v200 = vld [vmem:[%s169 + $0xb0] sm:$0xff]
      %v201 = vld [vmem:[%s169 + $0xb8] sm:$0xff]
      %v202 = vld [vmem:[%s169 + $0xc0] sm:$0xff]
      %v203 = vld [vmem:[%s169 + $0xc8] sm:$0xff]
      %v204 = vld [vmem:[%s169 + $0xd0] sm:$0xff]
      %v205 = vld [vmem:[%s169 + $0xd8] sm:$0xff]
      %v206 = vld [vmem:[%s169 + $0xe0] sm:$0xff]
      %v207 = vld [vmem:[%s169 + $0xe8] sm:$0xff]
      %v208 = vld [vmem:[%s169 + $0xf0] sm:$0xff]
      %v209 = vld [vmem:[%s169 + $0xf8] sm:$0xff]
      %v210 = vld [vmem:[%s169 + $0x100] sm:$0xff]
      %v211 = vld [vmem:[%s169 + $0x108] sm:$0xff]
      %v212 = vld [vmem:[%s169 + $0x110] sm:$0xff]
      %v213 = vld [vmem:[%s169 + $0x118] sm:$0xff]
      %v214 = vld [vmem:[%s169 + $0x120] sm:$0xff]
      %v215 = vld [vmem:[%s169 + $0x128] sm:$0xff]
      %v216 = vld [vmem:[%s169 + $0x130] sm:$0xff]
      %v217 = vld [vmem:[%s169 + $0x138] sm:$0xff]
      %v218 = vld [vmem:[%s169 + $0x140] sm:$0xff]
      %v219 = vld [vmem:[%s169 + $0x148] sm:$0xff]
      %v220 = vld [vmem:[%s169 + $0x150] sm:$0xff]
      %v221 = vld [vmem:[%s169 + $0x158] sm:$0xff]
      %v222 = vld [vmem:[%s169 + $0x160] sm:$0xff]
      %v223 = vld [vmem:[%s169 + $0x168] sm:$0xff]
      %v224 = vld [vmem:[%s169 + $0x170] sm:$0xff]
      %v225 = vld [vmem:[%s169 + $0x178] sm:$0xff]
      %v226 = vld [vmem:[%s169 + $0x180] sm:$0xff]
      %v227 = vld [vmem:[%s169 + $0x188] sm:$0xff]
      %v228 = vld [vmem:[%s169 + $0x190] sm:$0xff]
      %v229 = vld [vmem:[%s169 + $0x198] sm:$0xff]
      %v230 = vld [vmem:[%s169 + $0x1a0] sm:$0xff]
      %v231 = vld [vmem:[%s169 + $0x1a8] sm:$0xff]
      %v232 = vld [vmem:[%s169 + $0x1b0] sm:$0xff]
      %v233 = vld [vmem:[%s169 + $0x1b8] sm:$0xff]
      %v234 = vld [vmem:[%s169 + $0x1c0] sm:$0xff]
      %v235 = vld [vmem:[%s169 + $0x1c8] sm:$0xff]
      %v236 = vld [vmem:[%s169 + $0x1d0] sm:$0xff]
      %v237 = vld [vmem:[%s169 + $0x1d8] sm:$0xff]
      %v238 = vld [vmem:[%s169 + $0x1e0] sm:$0xff]
      %v239 = vld [vmem:[%s169 + $0x1e8] sm:$0xff]
      %v240 = vld [vmem:[%s169 + $0x1f0] sm:$0xff]
      %v241 = vld [vmem:[%s169 + $0x1f8] sm:$0xff]
      %v242 = vld [vmem:[%s169 + $0x200] sm:$0xff]
      %v243 = vld [vmem:[%s169 + $0x208] sm:$0xff]
      %v244 = vld [vmem:[%s169 + $0x210] sm:$0xff]
      %v245 = vld [vmem:[%s169 + $0x218] sm:$0xff]
      %v246 = vld [vmem:[%s169 + $0x220] sm:$0xff]
      %v247 = vld [vmem:[%s169 + $0x228] sm:$0xff]
      %v248 = vld [vmem:[%s169 + $0x230] sm:$0xff]
      %v249 = vld [vmem:[%s169 + $0x238] sm:$0xff]
      %v250 = vld [vmem:[%s169 + $0x240] sm:$0xff]
      %v251 = vld [vmem:[%s169 + $0x248] sm:$0xff]
      %v252 = vld [vmem:[%s169 + $0x250] sm:$0xff]
      %v253 = vld [vmem:[%s169 + $0x258] sm:$0xff]
      %v254 = vld [vmem:[%s169 + $0x260] sm:$0xff]
      %v255 = vld [vmem:[%s169 + $0x268] sm:$0xff]
      %v256 = vld [vmem:[%s169 + $0x270] sm:$0xff]
      %v257 = vld [vmem:[%s169 + $0x278] sm:$0xff]
      %v258 = vld [vmem:[%s169 + $0x280] sm:$0xff]
      %v259 = vld [vmem:[%s169 + $0x288] sm:$0xff]
      %v260 = vld [vmem:[%s169 + $0x290] sm:$0xff]
      %v261 = vld [vmem:[%s169 + $0x298] sm:$0xff]
      %v262 = vld [vmem:[%s169 + $0x2a0] sm:$0xff]
      %v263 = vld [vmem:[%s169 + $0x2a8] sm:$0xff]
      %v264 = vld [vmem:[%s169 + $0x2b0] sm:$0xff]
      %v265 = vld [vmem:[%s169 + $0x2b8] sm:$0xff]
      %v266 = vld [vmem:[%s169 + $0x2c0] sm:$0xff]
      %v267 = vld [vmem:[%s169 + $0x2c8] sm:$0xff]
      %v268 = vld [vmem:[%s169 + $0x2d0] sm:$0xff]
      %v269 = vld [vmem:[%s169 + $0x2d8] sm:$0xff]
      %v270 = vld [vmem:[%s169 + $0x2e0] sm:$0xff]
      %v271 = vld [vmem:[%s169 + $0x2e8] sm:$0xff]
      %v272 = vld [vmem:[%s169 + $0x2f0] sm:$0xff]
      %v273 = vld [vmem:[%s169 + $0x2f8] sm:$0xff]
      %v274 = vld [vmem:[%s169 + $0x300] sm:$0xff]
      %v275 = vld [vmem:[%s169 + $0x308] sm:$0xff]
      %v276 = vld [vmem:[%s169 + $0x310] sm:$0xff]
      %v277 = vld [vmem:[%s169 + $0x318] sm:$0xff]
      %v278 = vld [vmem:[%s169 + $0x320] sm:$0xff]
      %v279 = vld [vmem:[%s169 + $0x328] sm:$0xff]
      %v280 = vld [vmem:[%s169 + $0x330] sm:$0xff]
      %v281 = vld [vmem:[%s169 + $0x338] sm:$0xff]
      %v282 = vld [vmem:[%s169 + $0x340] sm:$0xff]
      %v283 = vld [vmem:[%s169 + $0x348] sm:$0xff]
      %v284 = vld [vmem:[%s169 + $0x350] sm:$0xff]
      %v285 = vld [vmem:[%s169 + $0x358] sm:$0xff]
      %v286 = vld [vmem:[%s1] sm:$0xf]
      %v287 = vld [vmem:[%s1 + $0x4] sm:$0xf]
      %v288 = vld [vmem:[%s1 + $0x8] sm:$0xf]
      %v289 = vld [vmem:[%s1 + $0xc] sm:$0xf]
      %v290 = vld [vmem:[%s1 + $0x10] sm:$0xf]
      %v291 = vld [vmem:[%s1 + $0x14] sm:$0xf]
      %v292 = vld [vmem:[%s1 + $0x18] sm:$0xf]
      %v293 = vld [vmem:[%s1 + $0x1c] sm:$0xf]
      %v294 = vld [vmem:[%s1 + $0x20] sm:$0xf]
      %v295 = vld [vmem:[%s1 + $0x24] sm:$0xf]
      %v296 = vld [vmem:[%s1 + $0x28] sm:$0xf]
      %v297 = vld [vmem:[%s1 + $0x2c] sm:$0xf]
      %v298 = vld [vmem:[%s1 + $0x30] sm:$0xf]
      %v299 = vld [vmem:[%s1 + $0x34] sm:$0xf]
      %v300 = vld [vmem:[%s1 + $0x38] sm:$0xf]
      %v301 = vld [vmem:[%s1 + $0x3c] sm:$0xf]
      %v302 = vld [vmem:[%s1 + $0x40] sm:$0xf]
      %v303 = vld [vmem:[%s1 + $0x44] sm:$0xf]
      %v304 = vld [vmem:[%s1 + $0x48] sm:$0xf]
      %v305 = vld [vmem:[%s1 + $0x4c] sm:$0xf]
      %v306 = vld [vmem:[%s1 + $0x50] sm:$0xf]
      %v307 = vld [vmem:[%s1 + $0x54] sm:$0xf]
      %v308 = vld [vmem:[%s1 + $0x58] sm:$0xf]
      %v309 = vld [vmem:[%s1 + $0x5c] sm:$0xf]
      %v310 = vld [vmem:[%s1 + $0x60] sm:$0xf]
      %v311 = vld [vmem:[%s1 + $0x64] sm:$0xf]
      %v312 = vld [vmem:[%s1 + $0x68] sm:$0xf]
      %v313 = vld [vmem:[%s2] sm:$0x1]
      %v315 = vperm.slane %v313, 0
      %v425 = vunpack.c.l.b16 %v178
      %v426 = vunpack.c.h.b16 %v178
      %v427 = vunpack.c.l.b16 %v179
      %v428 = vunpack.c.h.b16 %v179
      %v429 = vunpack.c.l.b16 %v180
      %v430 = vunpack.c.h.b16 %v180
      %v431 = vunpack.c.l.b16 %v181
      %v432 = vunpack.c.h.b16 %v181
      %v433 = vunpack.c.l.b16 %v182
      %v434 = vunpack.c.h.b16 %v182
      %v435 = vunpack.c.l.b16 %v183
      %v436 = vunpack.c.h.b16 %v183
      %v437 = vunpack.c.l.b16 %v184
      %v438 = vunpack.c.h.b16 %v184
      %v439 = vunpack.c.l.b16 %v185
      %v440 = vunpack.c.h.b16 %v185
      %v441 = vunpack.c.l.b16 %v186
      %v442 = vunpack.c.h.b16 %v186
      %v443 = vunpack.c.l.b16 %v187
      %v444 = vunpack.c.h.b16 %v187
      %v445 = vunpack.c.l.b16 %v188
      %v446 = vunpack.c.h.b16 %v188
      %v447 = vunpack.c.l.b16 %v189
      %v448 = vunpack.c.h.b16 %v189
      %v449 = vunpack.c.l.b16 %v190
      %v450 = vunpack.c.h.b16 %v190
      %v451 = vunpack.c.l.b16 %v191
      %v452 = vunpack.c.h.b16 %v191
      %v453 = vunpack.c.l.b16 %v192
      %v454 = vunpack.c.h.b16 %v192
      %v455 = vunpack.c.l.b16 %v193
      %v456 = vunpack.c.h.b16 %v193
      %v457 = vunpack.c.l.b16 %v194
      %v458 = vunpack.c.h.b16 %v194
      %v459 = vunpack.c.l.b16 %v195
      %v460 = vunpack.c.h.b16 %v195
      %v461 = vunpack.c.l.b16 %v196
      %v462 = vunpack.c.h.b16 %v196
      %v463 = vunpack.c.l.b16 %v197
      %v464 = vunpack.c.h.b16 %v197
      %v465 = vunpack.c.l.b16 %v198
      %v466 = vunpack.c.h.b16 %v198
      %v467 = vunpack.c.l.b16 %v199
      %v468 = vunpack.c.h.b16 %v199
      %v469 = vunpack.c.l.b16 %v200
      %v470 = vunpack.c.h.b16 %v200
      %v471 = vunpack.c.l.b16 %v201
      %v472 = vunpack.c.h.b16 %v201
      %v473 = vunpack.c.l.b16 %v202
      %v474 = vunpack.c.h.b16 %v202
      %v475 = vunpack.c.l.b16 %v203
      %v476 = vunpack.c.h.b16 %v203
      %v477 = vunpack.c.l.b16 %v204
      %v478 = vunpack.c.h.b16 %v204
      %v479 = vunpack.c.l.b16 %v205
      %v480 = vunpack.c.h.b16 %v205
      %v481 = vunpack.c.l.b16 %v206
      %v482 = vunpack.c.h.b16 %v206
      %v483 = vunpack.c.l.b16 %v207
      %v484 = vunpack.c.h.b16 %v207
      %v485 = vunpack.c.l.b16 %v208
      %v486 = vunpack.c.h.b16 %v208
      %v487 = vunpack.c.l.b16 %v209
      %v488 = vunpack.c.h.b16 %v209
      %v489 = vunpack.c.l.b16 %v210
      %v490 = vunpack.c.h.b16 %v210
      %v491 = vunpack.c.l.b16 %v211
      %v492 = vunpack.c.h.b16 %v211
      %v493 = vunpack.c.l.b16 %v212
      %v494 = vunpack.c.h.b16 %v212
      %v495 = vunpack.c.l.b16 %v213
      %v496 = vunpack.c.h.b16 %v213
      %v497 = vunpack.c.l.b16 %v214
      %v498 = vunpack.c.h.b16 %v214
      %v499 = vunpack.c.l.b16 %v215
      %v500 = vunpack.c.h.b16 %v215
      %v501 = vunpack.c.l.b16 %v216
      %v502 = vunpack.c.h.b16 %v216
      %v503 = vunpack.c.l.b16 %v217
      %v504 = vunpack.c.h.b16 %v217
      %v505 = vunpack.c.l.b16 %v218
      %v506 = vunpack.c.h.b16 %v218
      %v507 = vunpack.c.l.b16 %v219
      %v508 = vunpack.c.h.b16 %v219
      %v509 = vunpack.c.l.b16 %v220
      %v510 = vunpack.c.h.b16 %v220
      %v511 = vunpack.c.l.b16 %v221
      %v512 = vunpack.c.h.b16 %v221
      %v513 = vunpack.c.l.b16 %v222
      %v514 = vunpack.c.h.b16 %v222
      %v515 = vunpack.c.l.b16 %v223
      %v516 = vunpack.c.h.b16 %v223
      %v517 = vunpack.c.l.b16 %v224
      %v518 = vunpack.c.h.b16 %v224
      %v519 = vunpack.c.l.b16 %v225
      %v520 = vunpack.c.h.b16 %v225
      %v521 = vunpack.c.l.b16 %v226
      %v522 = vunpack.c.h.b16 %v226
      %v523 = vunpack.c.l.b16 %v227
      %v524 = vunpack.c.h.b16 %v227
      %v525 = vunpack.c.l.b16 %v228
      %v526 = vunpack.c.h.b16 %v228
      %v527 = vunpack.c.l.b16 %v229
      %v528 = vunpack.c.h.b16 %v229
      %v529 = vunpack.c.l.b16 %v230
      %v530 = vunpack.c.h.b16 %v230
      %v531 = vunpack.c.l.b16 %v231
      %v532 = vunpack.c.h.b16 %v231
      %v533 = vunpack.c.l.b16 %v232
      %v534 = vunpack.c.h.b16 %v232
      %v535 = vunpack.c.l.b16 %v233
      %v536 = vunpack.c.h.b16 %v233
      %v537 = vunpack.c.l.b16 %v234
      %v538 = vunpack.c.h.b16 %v234
      %v539 = vunpack.c.l.b16 %v235
      %v540 = vunpack.c.h.b16 %v235
      %v541 = vunpack.c.l.b16 %v236
      %v542 = vunpack.c.h.b16 %v236
      %v543 = vunpack.c.l.b16 %v237
      %v544 = vunpack.c.h.b16 %v237
      %v545 = vunpack.c.l.b16 %v238
      %v546 = vunpack.c.h.b16 %v238
      %v547 = vunpack.c.l.b16 %v239
      %v548 = vunpack.c.h.b16 %v239
      %v549 = vunpack.c.l.b16 %v240
      %v550 = vunpack.c.h.b16 %v240
      %v551 = vunpack.c.l.b16 %v241
      %v552 = vunpack.c.h.b16 %v241
      %v553 = vunpack.c.l.b16 %v242
      %v554 = vunpack.c.h.b16 %v242
      %v555 = vunpack.c.l.b16 %v243
      %v556 = vunpack.c.h.b16 %v243
      %v557 = vunpack.c.l.b16 %v244
      %v558 = vunpack.c.h.b16 %v244
      %v559 = vunpack.c.l.b16 %v245
      %v560 = vunpack.c.h.b16 %v245
      %v561 = vunpack.c.l.b16 %v246
      %v562 = vunpack.c.h.b16 %v246
      %v563 = vunpack.c.l.b16 %v247
      %v564 = vunpack.c.h.b16 %v247
      %v565 = vunpack.c.l.b16 %v248
      %v566 = vunpack.c.h.b16 %v248
      %v567 = vunpack.c.l.b16 %v249
      %v568 = vunpack.c.h.b16 %v249
      %v569 = vunpack.c.l.b16 %v250
      %v570 = vunpack.c.h.b16 %v250
      %v571 = vunpack.c.l.b16 %v251
      %v572 = vunpack.c.h.b16 %v251
      %v573 = vunpack.c.l.b16 %v252
      %v574 = vunpack.c.h.b16 %v252
      %v575 = vunpack.c.l.b16 %v253
      %v576 = vunpack.c.h.b16 %v253
      %v577 = vunpack.c.l.b16 %v254
      %v578 = vunpack.c.h.b16 %v254
      %v579 = vunpack.c.l.b16 %v255
      %v580 = vunpack.c.h.b16 %v255
      %v581 = vunpack.c.l.b16 %v256
      %v582 = vunpack.c.h.b16 %v256
      %v583 = vunpack.c.l.b16 %v257
      %v584 = vunpack.c.h.b16 %v257
      %v585 = vunpack.c.l.b16 %v258
      %v586 = vunpack.c.h.b16 %v258
      %v587 = vunpack.c.l.b16 %v259
      %v588 = vunpack.c.h.b16 %v259
      %v589 = vunpack.c.l.b16 %v260
      %v590 = vunpack.c.h.b16 %v260
      %v591 = vunpack.c.l.b16 %v261
      %v592 = vunpack.c.h.b16 %v261
      %v593 = vunpack.c.l.b16 %v262
      %v594 = vunpack.c.h.b16 %v262
      %v595 = vunpack.c.l.b16 %v263
      %v596 = vunpack.c.h.b16 %v263
      %v597 = vunpack.c.l.b16 %v264
      %v598 = vunpack.c.h.b16 %v264
      %v599 = vunpack.c.l.b16 %v265
      %v600 = vunpack.c.h.b16 %v265
      %v601 = vunpack.c.l.b16 %v266
      %v602 = vunpack.c.h.b16 %v266
      %v603 = vunpack.c.l.b16 %v267
      %v604 = vunpack.c.h.b16 %v267
      %v605 = vunpack.c.l.b16 %v268
      %v606 = vunpack.c.h.b16 %v268
      %v607 = vunpack.c.l.b16 %v269
      %v608 = vunpack.c.h.b16 %v269
      %v609 = vunpack.c.l.b16 %v270
      %v610 = vunpack.c.h.b16 %v270
      %v611 = vunpack.c.l.b16 %v271
      %v612 = vunpack.c.h.b16 %v271
      %v613 = vunpack.c.l.b16 %v272
      %v614 = vunpack.c.h.b16 %v272
      %v615 = vunpack.c.l.b16 %v273
      %v616 = vunpack.c.h.b16 %v273
      %v617 = vunpack.c.l.b16 %v274
      %v618 = vunpack.c.h.b16 %v274
      %v619 = vunpack.c.l.b16 %v275
      %v620 = vunpack.c.h.b16 %v275
      %v621 = vunpack.c.l.b16 %v276
      %v622 = vunpack.c.h.b16 %v276
      %v623 = vunpack.c.l.b16 %v277
      %v624 = vunpack.c.h.b16 %v277
      %v625 = vunpack.c.l.b16 %v278
      %v626 = vunpack.c.h.b16 %v278
      %v627 = vunpack.c.l.b16 %v279
      %v628 = vunpack.c.h.b16 %v279
      %v629 = vunpack.c.l.b16 %v280
      %v630 = vunpack.c.h.b16 %v280
      %v631 = vunpack.c.l.b16 %v281
      %v632 = vunpack.c.h.b16 %v281
      %v633 = vunpack.c.l.b16 %v282
      %v634 = vunpack.c.h.b16 %v282
      %v635 = vunpack.c.l.b16 %v283
      %v636 = vunpack.c.h.b16 %v283
      %v637 = vunpack.c.l.b16 %v284
      %v638 = vunpack.c.h.b16 %v284
      %v639 = vunpack.c.l.b16 %v285
      %v640 = vunpack.c.h.b16 %v285
      %v641 = vpack.c.b16 %v427, %v425
      %v642 = vpack.c.b16 %v428, %v426
      %v643 = vpack.c.b16 %v431, %v429
      %v644 = vpack.c.b16 %v432, %v430
      %v645 = vpack.c.b16 %v435, %v433
      %v646 = vpack.c.b16 %v436, %v434
      %v647 = vpack.c.b16 %v439, %v437
      %v648 = vpack.c.b16 %v440, %v438
      %v649 = vpack.c.b16 %v443, %v441
      %v650 = vpack.c.b16 %v444, %v442
      %v651 = vpack.c.b16 %v447, %v445
      %v652 = vpack.c.b16 %v448, %v446
      %v653 = vpack.c.b16 %v451, %v449
      %v654 = vpack.c.b16 %v452, %v450
      %v655 = vpack.c.b16 %v455, %v453
      %v656 = vpack.c.b16 %v456, %v454
      %v657 = vpack.c.b16 %v459, %v457
      %v658 = vpack.c.b16 %v460, %v458
      %v659 = vpack.c.b16 %v463, %v461
      %v660 = vpack.c.b16 %v464, %v462
      %v661 = vpack.c.b16 %v467, %v465
      %v662 = vpack.c.b16 %v468, %v466
      %v663 = vpack.c.b16 %v471, %v469
      %v664 = vpack.c.b16 %v472, %v470
      %v665 = vpack.c.b16 %v475, %v473
      %v666 = vpack.c.b16 %v476, %v474
      %v667 = vpack.c.b16 %v479, %v477
      %v668 = vpack.c.b16 %v480, %v478
      %v669 = vpack.c.b16 %v483, %v481
      %v670 = vpack.c.b16 %v484, %v482
      %v671 = vpack.c.b16 %v487, %v485
      %v672 = vpack.c.b16 %v488, %v486
      %v673 = vpack.c.b16 %v491, %v489
      %v674 = vpack.c.b16 %v492, %v490
      %v675 = vpack.c.b16 %v495, %v493
      %v676 = vpack.c.b16 %v496, %v494
      %v677 = vpack.c.b16 %v499, %v497
      %v678 = vpack.c.b16 %v500, %v498
      %v679 = vpack.c.b16 %v503, %v501
      %v680 = vpack.c.b16 %v504, %v502
      %v681 = vpack.c.b16 %v507, %v505
      %v682 = vpack.c.b16 %v508, %v506
      %v683 = vpack.c.b16 %v511, %v509
      %v684 = vpack.c.b16 %v512, %v510
      %v685 = vpack.c.b16 %v515, %v513
      %v686 = vpack.c.b16 %v516, %v514
      %v687 = vpack.c.b16 %v519, %v517
      %v688 = vpack.c.b16 %v520, %v518
      %v689 = vpack.c.b16 %v523, %v521
      %v690 = vpack.c.b16 %v524, %v522
      %v691 = vpack.c.b16 %v527, %v525
      %v692 = vpack.c.b16 %v528, %v526
      %v693 = vpack.c.b16 %v531, %v529
      %v694 = vpack.c.b16 %v532, %v530
      %v695 = vpack.c.b16 %v535, %v533
      %v696 = vpack.c.b16 %v536, %v534
      %v697 = vpack.c.b16 %v539, %v537
      %v698 = vpack.c.b16 %v540, %v538
      %v699 = vpack.c.b16 %v543, %v541
      %v700 = vpack.c.b16 %v544, %v542
      %v701 = vpack.c.b16 %v547, %v545
      %v702 = vpack.c.b16 %v548, %v546
      %v703 = vpack.c.b16 %v551, %v549
      %v704 = vpack.c.b16 %v552, %v550
      %v705 = vpack.c.b16 %v555, %v553
      %v706 = vpack.c.b16 %v556, %v554
      %v707 = vpack.c.b16 %v559, %v557
      %v708 = vpack.c.b16 %v560, %v558
      %v709 = vpack.c.b16 %v563, %v561
      %v710 = vpack.c.b16 %v564, %v562
      %v711 = vpack.c.b16 %v567, %v565
      %v712 = vpack.c.b16 %v568, %v566
      %v713 = vpack.c.b16 %v571, %v569
      %v714 = vpack.c.b16 %v572, %v570
      %v715 = vpack.c.b16 %v575, %v573
      %v716 = vpack.c.b16 %v576, %v574
      %v717 = vpack.c.b16 %v579, %v577
      %v718 = vpack.c.b16 %v580, %v578
      %v719 = vpack.c.b16 %v583, %v581
      %v720 = vpack.c.b16 %v584, %v582
      %v721 = vpack.c.b16 %v587, %v585
      %v722 = vpack.c.b16 %v588, %v586
      %v723 = vpack.c.b16 %v591, %v589
      %v724 = vpack.c.b16 %v592, %v590
      %v725 = vpack.c.b16 %v595, %v593
      %v726 = vpack.c.b16 %v596, %v594
      %v727 = vpack.c.b16 %v599, %v597
      %v728 = vpack.c.b16 %v600, %v598
      %v729 = vpack.c.b16 %v603, %v601
      %v730 = vpack.c.b16 %v604, %v602
      %v731 = vpack.c.b16 %v607, %v605
      %v732 = vpack.c.b16 %v608, %v606
      %v733 = vpack.c.b16 %v611, %v609
      %v734 = vpack.c.b16 %v612, %v610
      %v735 = vpack.c.b16 %v615, %v613
      %v736 = vpack.c.b16 %v616, %v614
      %v737 = vpack.c.b16 %v619, %v617
      %v738 = vpack.c.b16 %v620, %v618
      %v739 = vpack.c.b16 %v623, %v621
      %v740 = vpack.c.b16 %v624, %v622
      %v741 = vpack.c.b16 %v627, %v625
      %v742 = vpack.c.b16 %v628, %v626
      %v743 = vpack.c.b16 %v631, %v629
      %v744 = vpack.c.b16 %v632, %v630
      %v745 = vpack.c.b16 %v635, %v633
      %v746 = vpack.c.b16 %v636, %v634
      %v747 = vpack.c.b16 %v639, %v637
      %v748 = vpack.c.b16 %v640, %v638
      %v830 = vunpack.c.l.b16 %v286
      %v831 = vunpack.c.l.b16 %v287
      %v832 = vunpack.c.l.b16 %v288
      %v833 = vunpack.c.l.b16 %v289
      %v834 = vunpack.c.l.b16 %v290
      %v835 = vunpack.c.l.b16 %v291
      %v836 = vunpack.c.l.b16 %v292
      %v837 = vunpack.c.l.b16 %v293
      %v838 = vunpack.c.l.b16 %v294
      %v839 = vunpack.c.l.b16 %v295
      %v840 = vunpack.c.l.b16 %v296
      %v841 = vunpack.c.l.b16 %v297
      %v842 = vunpack.c.l.b16 %v298
      %v843 = vunpack.c.l.b16 %v299
      %v844 = vunpack.c.l.b16 %v300
      %v845 = vunpack.c.l.b16 %v301
      %v846 = vunpack.c.l.b16 %v302
      %v847 = vunpack.c.l.b16 %v303
      %v848 = vunpack.c.l.b16 %v304
      %v849 = vunpack.c.l.b16 %v305
      %v850 = vunpack.c.l.b16 %v306
      %v851 = vunpack.c.l.b16 %v307
      %v852 = vunpack.c.l.b16 %v308
      %v853 = vunpack.c.l.b16 %v309
      %v854 = vunpack.c.l.b16 %v310
      %v855 = vunpack.c.l.b16 %v311
      %v856 = vunpack.c.l.b16 %v312
      %v857 = vpack.c.b16 %v831, %v830
      %v858 = vpack.c.b16 %v833, %v832
      %v859 = vpack.c.b16 %v835, %v834
      %v860 = vpack.c.b16 %v837, %v836
      %v861 = vpack.c.b16 %v839, %v838
      %v862 = vpack.c.b16 %v841, %v840
      %v863 = vpack.c.b16 %v843, %v842
      %v864 = vpack.c.b16 %v845, %v844
      %v865 = vpack.c.b16 %v847, %v846
      %v866 = vpack.c.b16 %v849, %v848
      %v867 = vpack.c.b16 %v851, %v850
      %v868 = vpack.c.b16 %v853, %v852
      %v869 = vpack.c.b16 %v855, %v854
      %v870 = vpack.c.b16 %v856, %v856
      %vm884 = vcmask 719872
      %v886 = vsel %vm884, %v642, 0
      %v889 = vsel %vm884, %v644, 0
      %v892 = vsel %vm884, %v646, 0
      %v895 = vsel %vm884, %v648, 0
      %v898 = vsel %vm884, %v650, 0
      %v901 = vsel %vm884, %v652, 0
      %v904 = vsel %vm884, %v654, 0
      %v907 = vsel %vm884, %v656, 0
      %v910 = vsel %vm884, %v658, 0
      %v913 = vsel %vm884, %v660, 0
      %v916 = vsel %vm884, %v662, 0
      %v919 = vsel %vm884, %v664, 0
      %v922 = vsel %vm884, %v666, 0
      %v925 = vsel %vm884, %v668, 0
      %v928 = vsel %vm884, %v670, 0
      %v931 = vsel %vm884, %v672, 0
      %v934 = vsel %vm884, %v674, 0
      %v937 = vsel %vm884, %v676, 0
      %v940 = vsel %vm884, %v678, 0
      %v943 = vsel %vm884, %v680, 0
      %v946 = vsel %vm884, %v682, 0
      %v949 = vsel %vm884, %v684, 0
      %v952 = vsel %vm884, %v686, 0
      %v955 = vsel %vm884, %v688, 0
      %v958 = vsel %vm884, %v690, 0
      %v961 = vsel %vm884, %v692, 0
      %v964 = vsel %vm884, %v694, 0
      %v967 = vsel %vm884, %v696, 0
      %v970 = vsel %vm884, %v698, 0
      %v973 = vsel %vm884, %v700, 0
      %v976 = vsel %vm884, %v702, 0
      %v979 = vsel %vm884, %v704, 0
      %v982 = vsel %vm884, %v706, 0
      %v985 = vsel %vm884, %v708, 0
      %v988 = vsel %vm884, %v710, 0
      %v991 = vsel %vm884, %v712, 0
      %v994 = vsel %vm884, %v714, 0
      %v997 = vsel %vm884, %v716, 0
      %v1000 = vsel %vm884, %v718, 0
      %v1003 = vsel %vm884, %v720, 0
      %v1006 = vsel %vm884, %v722, 0
      %v1009 = vsel %vm884, %v724, 0
      %v1012 = vsel %vm884, %v726, 0
      %v1015 = vsel %vm884, %v728, 0
      %v1018 = vsel %vm884, %v730, 0
      %v1021 = vsel %vm884, %v732, 0
      %v1024 = vsel %vm884, %v734, 0
      %v1027 = vsel %vm884, %v736, 0
      %v1030 = vsel %vm884, %v738, 0
      %v1033 = vsel %vm884, %v740, 0
      %v1036 = vsel %vm884, %v742, 0
      %v1039 = vsel %vm884, %v744, 0
      %v1042 = vsel %vm884, %v746, 0
      %v1045 = vsel %vm884, %v748, 0
      %vm1047 = vcmask 1043456
      %v1049 = vsel %vm1047, %v870, 0
      %1051 = vmatpush.bf16.msra.mxu0 %v864
      %1052 = vmatpush.bf16.msra.mxu0 %v863
      %1053 = vmatpush.bf16.msra.mxu0 %v862
      %1054 = vmatpush.bf16.msra.mxu0 %v861
      %1055 = vmatpush.bf16.msra.mxu0 %v860
      %1056 = vmatpush.bf16.msra.mxu0 %v859
      %1057 = vmatpush.bf16.msra.mxu0 %v858
      %1058 = vmatpush.bf16.msra.mxu0 %v857
      %1059 = vmatmul.bf16.gmra.mxu0 %v641
      %v1060 = vpop.f32.mrf.mxu0
      %v1061 = vadd.f32 %v315, %v1060
      %v1062 = vpop.f32.mrf.mxu0
      %v1063 = vadd.f32 %v315, %v1062
      %1064 = vmatmul.bf16.gmra.mxu0 %v643
      %v1065 = vpop.f32.mrf.mxu0
      %v1066 = vadd.f32 %v315, %v1065
      %v1067 = vpop.f32.mrf.mxu0
      %v1068 = vadd.f32 %v315, %v1067
      %1069 = vmatmul.bf16.gmra.mxu0 %v645
      %v1070 = vpop.f32.mrf.mxu0
      %v1071 = vadd.f32 %v315, %v1070
      %v1072 = vpop.f32.mrf.mxu0
      %v1073 = vadd.f32 %v315, %v1072
      %1074 = vmatmul.bf16.gmra.mxu0 %v647
      %v1075 = vpop.f32.mrf.mxu0
      %v1076 = vadd.f32 %v315, %v1075
      %v1077 = vpop.f32.mrf.mxu0
      %v1078 = vadd.f32 %v315, %v1077
      %1079 = vmatmul.bf16.gmra.mxu0 %v649
      %v1080 = vpop.f32.mrf.mxu0
      %v1081 = vadd.f32 %v315, %v1080
      %v1082 = vpop.f32.mrf.mxu0
      %v1083 = vadd.f32 %v315, %v1082
      %1084 = vmatmul.bf16.gmra.mxu0 %v651
      %v1085 = vpop.f32.mrf.mxu0
      %v1086 = vadd.f32 %v315, %v1085
      %v1087 = vpop.f32.mrf.mxu0
      %v1088 = vadd.f32 %v315, %v1087
      %1089 = vmatmul.bf16.gmra.mxu0 %v653
      %v1090 = vpop.f32.mrf.mxu0
      %v1091 = vadd.f32 %v315, %v1090
      %v1092 = vpop.f32.mrf.mxu0
      %v1093 = vadd.f32 %v315, %v1092
      %1094 = vmatmul.bf16.gmra.mxu0 %v655
      %v1095 = vpop.f32.mrf.mxu0
      %v1096 = vadd.f32 %v315, %v1095
      %v1097 = vpop.f32.mrf.mxu0
      %v1098 = vadd.f32 %v315, %v1097
      %1099 = vmatmul.bf16.gmra.mxu0 %v657
      %v1100 = vpop.f32.mrf.mxu0
      %v1101 = vadd.f32 %v315, %v1100
      %v1102 = vpop.f32.mrf.mxu0
      %v1103 = vadd.f32 %v315, %v1102
      %1104 = vmatmul.bf16.gmra.mxu0 %v659
      %v1105 = vpop.f32.mrf.mxu0
      %v1106 = vadd.f32 %v315, %v1105
      %v1107 = vpop.f32.mrf.mxu0
      %v1108 = vadd.f32 %v315, %v1107
      %1109 = vmatmul.bf16.gmra.mxu0 %v661
      %v1110 = vpop.f32.mrf.mxu0
      %v1111 = vadd.f32 %v315, %v1110
      %v1112 = vpop.f32.mrf.mxu0
      %v1113 = vadd.f32 %v315, %v1112
      %1114 = vmatmul.bf16.gmra.mxu0 %v663
      %v1115 = vpop.f32.mrf.mxu0
      %v1116 = vadd.f32 %v315, %v1115
      %v1117 = vpop.f32.mrf.mxu0
      %v1118 = vadd.f32 %v315, %v1117
      %1119 = vmatmul.bf16.gmra.mxu0 %v665
      %v1120 = vpop.f32.mrf.mxu0
      %v1121 = vadd.f32 %v315, %v1120
      %v1122 = vpop.f32.mrf.mxu0
      %v1123 = vadd.f32 %v315, %v1122
      %1124 = vmatmul.bf16.gmra.mxu0 %v667
      %v1125 = vpop.f32.mrf.mxu0
      %v1126 = vadd.f32 %v315, %v1125
      %v1127 = vpop.f32.mrf.mxu0
      %v1128 = vadd.f32 %v315, %v1127
      %1129 = vmatmul.bf16.gmra.mxu0 %v669
      %v1130 = vpop.f32.mrf.mxu0
      %v1131 = vadd.f32 %v315, %v1130
      %v1132 = vpop.f32.mrf.mxu0
      %v1133 = vadd.f32 %v315, %v1132
      %1134 = vmatmul.bf16.gmra.mxu0 %v671
      %v1135 = vpop.f32.mrf.mxu0
      %v1136 = vadd.f32 %v315, %v1135
      %v1137 = vpop.f32.mrf.mxu0
      %v1138 = vadd.f32 %v315, %v1137
      %1139 = vmatmul.bf16.gmra.mxu0 %v673
      %v1140 = vpop.f32.mrf.mxu0
      %v1141 = vadd.f32 %v315, %v1140
      %v1142 = vpop.f32.mrf.mxu0
      %v1143 = vadd.f32 %v315, %v1142
      %1144 = vmatmul.bf16.gmra.mxu0 %v675
      %v1145 = vpop.f32.mrf.mxu0
      %v1146 = vadd.f32 %v315, %v1145
      %v1147 = vpop.f32.mrf.mxu0
      %v1148 = vadd.f32 %v315, %v1147
      %1149 = vmatmul.bf16.gmra.mxu0 %v677
      %v1150 = vpop.f32.mrf.mxu0
      %v1151 = vadd.f32 %v315, %v1150
      %v1152 = vpop.f32.mrf.mxu0
      %v1153 = vadd.f32 %v315, %v1152
      %1154 = vmatmul.bf16.gmra.mxu0 %v679
      %v1155 = vpop.f32.mrf.mxu0
      %v1156 = vadd.f32 %v315, %v1155
      %v1157 = vpop.f32.mrf.mxu0
      %v1158 = vadd.f32 %v315, %v1157
      %1159 = vmatmul.bf16.gmra.mxu0 %v681
      %v1160 = vpop.f32.mrf.mxu0
      %v1161 = vadd.f32 %v315, %v1160
      %v1162 = vpop.f32.mrf.mxu0
      %v1163 = vadd.f32 %v315, %v1162
      %1164 = vmatmul.bf16.gmra.mxu0 %v683
      %v1165 = vpop.f32.mrf.mxu0
      %v1166 = vadd.f32 %v315, %v1165
      %v1167 = vpop.f32.mrf.mxu0
      %v1168 = vadd.f32 %v315, %v1167
      %1169 = vmatmul.bf16.gmra.mxu0 %v685
      %v1170 = vpop.f32.mrf.mxu0
      %v1171 = vadd.f32 %v315, %v1170
      %v1172 = vpop.f32.mrf.mxu0
      %v1173 = vadd.f32 %v315, %v1172
      %1174 = vmatmul.bf16.gmra.mxu0 %v687
      %v1175 = vpop.f32.mrf.mxu0
      %v1176 = vadd.f32 %v315, %v1175
      %v1177 = vpop.f32.mrf.mxu0
      %v1178 = vadd.f32 %v315, %v1177
      %1179 = vmatmul.bf16.gmra.mxu0 %v689
      %v1180 = vpop.f32.mrf.mxu0
      %v1181 = vadd.f32 %v315, %v1180
      %v1182 = vpop.f32.mrf.mxu0
      %v1183 = vadd.f32 %v315, %v1182
      %1184 = vmatmul.bf16.gmra.mxu0 %v691
      %v1185 = vpop.f32.mrf.mxu0
      %v1186 = vadd.f32 %v315, %v1185
      %v1187 = vpop.f32.mrf.mxu0
      %v1188 = vadd.f32 %v315, %v1187
      %1189 = vmatmul.bf16.gmra.mxu0 %v693
      %v1190 = vpop.f32.mrf.mxu0
      %v1191 = vadd.f32 %v315, %v1190
      %v1192 = vpop.f32.mrf.mxu0
      %v1193 = vadd.f32 %v315, %v1192
      %1194 = vmatmul.bf16.gmra.mxu0 %v695
      %v1195 = vpop.f32.mrf.mxu0
      %v1196 = vadd.f32 %v315, %v1195
      %v1197 = vpop.f32.mrf.mxu0
      %v1198 = vadd.f32 %v315, %v1197
      %1199 = vmatmul.bf16.gmra.mxu0 %v697
      %v1200 = vpop.f32.mrf.mxu0
      %v1201 = vadd.f32 %v315, %v1200
      %v1202 = vpop.f32.mrf.mxu0
      %v1203 = vadd.f32 %v315, %v1202
      %1204 = vmatmul.bf16.gmra.mxu0 %v699
      %v1205 = vpop.f32.mrf.mxu0
      %v1206 = vadd.f32 %v315, %v1205
      %v1207 = vpop.f32.mrf.mxu0
      %v1208 = vadd.f32 %v315, %v1207
      %1209 = vmatmul.bf16.gmra.mxu0 %v701
      %v1210 = vpop.f32.mrf.mxu0
      %v1211 = vadd.f32 %v315, %v1210
      %v1212 = vpop.f32.mrf.mxu0
      %v1213 = vadd.f32 %v315, %v1212
      %1214 = vmatmul.bf16.gmra.mxu0 %v703
      %v1215 = vpop.f32.mrf.mxu0
      %v1216 = vadd.f32 %v315, %v1215
      %v1217 = vpop.f32.mrf.mxu0
      %v1218 = vadd.f32 %v315, %v1217
      %1219 = vmatmul.bf16.gmra.mxu0 %v705
      %v1220 = vpop.f32.mrf.mxu0
      %v1221 = vadd.f32 %v315, %v1220
      %v1222 = vpop.f32.mrf.mxu0
      %v1223 = vadd.f32 %v315, %v1222
      %1224 = vmatmul.bf16.gmra.mxu0 %v707
      %v1225 = vpop.f32.mrf.mxu0
      %v1226 = vadd.f32 %v315, %v1225
      %v1227 = vpop.f32.mrf.mxu0
      %v1228 = vadd.f32 %v315, %v1227
      %1229 = vmatmul.bf16.gmra.mxu0 %v709
      %v1230 = vpop.f32.mrf.mxu0
      %v1231 = vadd.f32 %v315, %v1230
      %v1232 = vpop.f32.mrf.mxu0
      %v1233 = vadd.f32 %v315, %v1232
      %1234 = vmatmul.bf16.gmra.mxu0 %v711
      %v1235 = vpop.f32.mrf.mxu0
      %v1236 = vadd.f32 %v315, %v1235
      %v1237 = vpop.f32.mrf.mxu0
      %v1238 = vadd.f32 %v315, %v1237
      %1239 = vmatmul.bf16.gmra.mxu0 %v713
      %v1240 = vpop.f32.mrf.mxu0
      %v1241 = vadd.f32 %v315, %v1240
      %v1242 = vpop.f32.mrf.mxu0
      %v1243 = vadd.f32 %v315, %v1242
      %1244 = vmatmul.bf16.gmra.mxu0 %v715
      %v1245 = vpop.f32.mrf.mxu0
      %v1246 = vadd.f32 %v315, %v1245
      %v1247 = vpop.f32.mrf.mxu0
      %v1248 = vadd.f32 %v315, %v1247
      %1249 = vmatmul.bf16.gmra.mxu0 %v717
      %v1250 = vpop.f32.mrf.mxu0
      %v1251 = vadd.f32 %v315, %v1250
      %v1252 = vpop.f32.mrf.mxu0
      %v1253 = vadd.f32 %v315, %v1252
      %1254 = vmatmul.bf16.gmra.mxu0 %v719
      %v1255 = vpop.f32.mrf.mxu0
      %v1256 = vadd.f32 %v315, %v1255
      %v1257 = vpop.f32.mrf.mxu0
      %v1258 = vadd.f32 %v315, %v1257
      %1259 = vmatmul.bf16.gmra.mxu0 %v721
      %v1260 = vpop.f32.mrf.mxu0
      %v1261 = vadd.f32 %v315, %v1260
      %v1262 = vpop.f32.mrf.mxu0
      %v1263 = vadd.f32 %v315, %v1262
      %1264 = vmatmul.bf16.gmra.mxu0 %v723
      %v1265 = vpop.f32.mrf.mxu0
      %v1266 = vadd.f32 %v315, %v1265
      %v1267 = vpop.f32.mrf.mxu0
      %v1268 = vadd.f32 %v315, %v1267
      %1269 = vmatmul.bf16.gmra.mxu0 %v725
      %v1270 = vpop.f32.mrf.mxu0
      %v1271 = vadd.f32 %v315, %v1270
      %v1272 = vpop.f32.mrf.mxu0
      %v1273 = vadd.f32 %v315, %v1272
      %1274 = vmatmul.bf16.gmra.mxu0 %v727
      %v1275 = vpop.f32.mrf.mxu0
      %v1276 = vadd.f32 %v315, %v1275
      %v1277 = vpop.f32.mrf.mxu0
      %v1278 = vadd.f32 %v315, %v1277
      %1279 = vmatmul.bf16.gmra.mxu0 %v729
      %v1280 = vpop.f32.mrf.mxu0
      %v1281 = vadd.f32 %v315, %v1280
      %v1282 = vpop.f32.mrf.mxu0
      %v1283 = vadd.f32 %v315, %v1282
      %1284 = vmatmul.bf16.gmra.mxu0 %v731
      %v1285 = vpop.f32.mrf.mxu0
      %v1286 = vadd.f32 %v315, %v1285
      %v1287 = vpop.f32.mrf.mxu0
      %v1288 = vadd.f32 %v315, %v1287
      %1289 = vmatmul.bf16.gmra.mxu0 %v733
      %v1290 = vpop.f32.mrf.mxu0
      %v1291 = vadd.f32 %v315, %v1290
      %v1292 = vpop.f32.mrf.mxu0
      %v1293 = vadd.f32 %v315, %v1292
      %1294 = vmatmul.bf16.gmra.mxu0 %v735
      %v1295 = vpop.f32.mrf.mxu0
      %v1296 = vadd.f32 %v315, %v1295
      %v1297 = vpop.f32.mrf.mxu0
      %v1298 = vadd.f32 %v315, %v1297
      %1299 = vmatmul.bf16.gmra.mxu0 %v737
      %v1300 = vpop.f32.mrf.mxu0
      %v1301 = vadd.f32 %v315, %v1300
      %v1302 = vpop.f32.mrf.mxu0
      %v1303 = vadd.f32 %v315, %v1302
      %1304 = vmatmul.bf16.gmra.mxu0 %v739
      %v1305 = vpop.f32.mrf.mxu0
      %v1306 = vadd.f32 %v315, %v1305
      %v1307 = vpop.f32.mrf.mxu0
      %v1308 = vadd.f32 %v315, %v1307
      %1309 = vmatmul.bf16.gmra.mxu0 %v741
      %v1310 = vpop.f32.mrf.mxu0
      %v1311 = vadd.f32 %v315, %v1310
      %v1312 = vpop.f32.mrf.mxu0
      %v1313 = vadd.f32 %v315, %v1312
      %1314 = vmatmul.bf16.gmra.mxu0 %v743
      %v1315 = vpop.f32.mrf.mxu0
      %v1316 = vadd.f32 %v315, %v1315
      %v1317 = vpop.f32.mrf.mxu0
      %v1318 = vadd.f32 %v315, %v1317
      %1319 = vmatmul.bf16.gmra.mxu0 %v745
      %v1320 = vpop.f32.mrf.mxu0
      %v1321 = vadd.f32 %v315, %v1320
      %v1322 = vpop.f32.mrf.mxu0
      %v1323 = vadd.f32 %v315, %v1322
      %1324 = vmatmul.bf16.gmra.mxu0 %v747
      %v1325 = vpop.f32.mrf.mxu0
      %v1326 = vadd.f32 %v315, %v1325
      %v1327 = vpop.f32.mrf.mxu0
      %v1328 = vadd.f32 %v315, %v1327
      %1329 = vdwg.mxu0
      %1330 = vmatpush.bf16.msra.mxu0 0
      %1331 = vmatpush.bf16.msra.mxu0 0
      %1332 = vmatpush.bf16.msra.mxu0 %v1049
      %1333 = vmatpush.bf16.msra.mxu0 %v869
      %1334 = vmatpush.bf16.msra.mxu0 %v868
      %1335 = vmatpush.bf16.msra.mxu0 %v867
      %1336 = vmatpush.bf16.msra.mxu0 %v866
      %1337 = vmatpush.bf16.msra.mxu0 %v865
      %1338 = vmatmul.bf16.gmra.mxu0 %v886
      %v1339 = vpop.f32.mrf.mxu0
      %v1340 = vadd.f32 %v1061, %v1339
      %v1341 = vpop.f32.mrf.mxu0
      %v1342 = vadd.f32 %v1063, %v1341
      %1343 = vmatmul.bf16.gmra.mxu0 %v889
      %v1344 = vpop.f32.mrf.mxu0
      %v1345 = vadd.f32 %v1066, %v1344
      %v1346 = vpop.f32.mrf.mxu0
      %v1347 = vadd.f32 %v1068, %v1346
      %1348 = vmatmul.bf16.gmra.mxu0 %v892
      %v1349 = vpop.f32.mrf.mxu0
      %v1350 = vadd.f32 %v1071, %v1349
      %v1351 = vpop.f32.mrf.mxu0
      %v1352 = vadd.f32 %v1073, %v1351
      %1353 = vmatmul.bf16.gmra.mxu0 %v895
      %v1354 = vpop.f32.mrf.mxu0
      %v1355 = vadd.f32 %v1076, %v1354
      %v1356 = vpop.f32.mrf.mxu0
      %v1357 = vadd.f32 %v1078, %v1356
      %1358 = vmatmul.bf16.gmra.mxu0 %v898
      %v1359 = vpop.f32.mrf.mxu0
      %v1360 = vadd.f32 %v1081, %v1359
      %v1361 = vpop.f32.mrf.mxu0
      %v1362 = vadd.f32 %v1083, %v1361
      %1363 = vmatmul.bf16.gmra.mxu0 %v901
      %v1364 = vpop.f32.mrf.mxu0
      %v1365 = vadd.f32 %v1086, %v1364
      %v1366 = vpop.f32.mrf.mxu0
      %v1367 = vadd.f32 %v1088, %v1366
      %1368 = vmatmul.bf16.gmra.mxu0 %v904
      %v1369 = vpop.f32.mrf.mxu0
      %v1370 = vadd.f32 %v1091, %v1369
      %v1371 = vpop.f32.mrf.mxu0
      %v1372 = vadd.f32 %v1093, %v1371
      %1373 = vmatmul.bf16.gmra.mxu0 %v907
      %v1374 = vpop.f32.mrf.mxu0
      %v1375 = vadd.f32 %v1096, %v1374
      %v1376 = vpop.f32.mrf.mxu0
      %v1377 = vadd.f32 %v1098, %v1376
      %1378 = vmatmul.bf16.gmra.mxu0 %v910
      %v1379 = vpop.f32.mrf.mxu0
      %v1380 = vadd.f32 %v1101, %v1379
      %v1381 = vpop.f32.mrf.mxu0
      %v1382 = vadd.f32 %v1103, %v1381
      %1383 = vmatmul.bf16.gmra.mxu0 %v913
      %v1384 = vpop.f32.mrf.mxu0
      %v1385 = vadd.f32 %v1106, %v1384
      %v1386 = vpop.f32.mrf.mxu0
      %v1387 = vadd.f32 %v1108, %v1386
      %1388 = vmatmul.bf16.gmra.mxu0 %v916
      %v1389 = vpop.f32.mrf.mxu0
      %v1390 = vadd.f32 %v1111, %v1389
      %v1391 = vpop.f32.mrf.mxu0
      %v1392 = vadd.f32 %v1113, %v1391
      %1393 = vmatmul.bf16.gmra.mxu0 %v919
      %v1394 = vpop.f32.mrf.mxu0
      %v1395 = vadd.f32 %v1116, %v1394
      %v1396 = vpop.f32.mrf.mxu0
      %v1397 = vadd.f32 %v1118, %v1396
      %1398 = vmatmul.bf16.gmra.mxu0 %v922
      %v1399 = vpop.f32.mrf.mxu0
      %v1400 = vadd.f32 %v1121, %v1399
      %v1401 = vpop.f32.mrf.mxu0
      %v1402 = vadd.f32 %v1123, %v1401
      %1403 = vmatmul.bf16.gmra.mxu0 %v925
      %v1404 = vpop.f32.mrf.mxu0
      %v1405 = vadd.f32 %v1126, %v1404
      %v1406 = vpop.f32.mrf.mxu0
      %v1407 = vadd.f32 %v1128, %v1406
      %1408 = vmatmul.bf16.gmra.mxu0 %v928
      %v1409 = vpop.f32.mrf.mxu0
      %v1410 = vadd.f32 %v1131, %v1409
      %v1411 = vpop.f32.mrf.mxu0
      %v1412 = vadd.f32 %v1133, %v1411
      %1413 = vmatmul.bf16.gmra.mxu0 %v931
      %v1414 = vpop.f32.mrf.mxu0
      %v1415 = vadd.f32 %v1136, %v1414
      %v1416 = vpop.f32.mrf.mxu0
      %v1417 = vadd.f32 %v1138, %v1416
      %1418 = vmatmul.bf16.gmra.mxu0 %v934
      %v1419 = vpop.f32.mrf.mxu0
      %v1420 = vadd.f32 %v1141, %v1419
      %v1421 = vpop.f32.mrf.mxu0
      %v1422 = vadd.f32 %v1143, %v1421
      %1423 = vmatmul.bf16.gmra.mxu0 %v937
      %v1424 = vpop.f32.mrf.mxu0
      %v1425 = vadd.f32 %v1146, %v1424
      %v1426 = vpop.f32.mrf.mxu0
      %v1427 = vadd.f32 %v1148, %v1426
      %1428 = vmatmul.bf16.gmra.mxu0 %v940
      %v1429 = vpop.f32.mrf.mxu0
      %v1430 = vadd.f32 %v1151, %v1429
      %v1431 = vpop.f32.mrf.mxu0
      %v1432 = vadd.f32 %v1153, %v1431
      %1433 = vmatmul.bf16.gmra.mxu0 %v943
      %v1434 = vpop.f32.mrf.mxu0
      %v1435 = vadd.f32 %v1156, %v1434
      %v1436 = vpop.f32.mrf.mxu0
      %v1437 = vadd.f32 %v1158, %v1436
      %1438 = vmatmul.bf16.gmra.mxu0 %v946
      %v1439 = vpop.f32.mrf.mxu0
      %v1440 = vadd.f32 %v1161, %v1439
      %v1441 = vpop.f32.mrf.mxu0
      %v1442 = vadd.f32 %v1163, %v1441
      %1443 = vmatmul.bf16.gmra.mxu0 %v949
      %v1444 = vpop.f32.mrf.mxu0
      %v1445 = vadd.f32 %v1166, %v1444
      %v1446 = vpop.f32.mrf.mxu0
      %v1447 = vadd.f32 %v1168, %v1446
      %1448 = vmatmul.bf16.gmra.mxu0 %v952
      %v1449 = vpop.f32.mrf.mxu0
      %v1450 = vadd.f32 %v1171, %v1449
      %v1451 = vpop.f32.mrf.mxu0
      %v1452 = vadd.f32 %v1173, %v1451
      %1453 = vmatmul.bf16.gmra.mxu0 %v955
      %v1454 = vpop.f32.mrf.mxu0
      %v1455 = vadd.f32 %v1176, %v1454
      %v1456 = vpop.f32.mrf.mxu0
      %v1457 = vadd.f32 %v1178, %v1456
      %1458 = vmatmul.bf16.gmra.mxu0 %v958
      %v1459 = vpop.f32.mrf.mxu0
      %v1460 = vadd.f32 %v1181, %v1459
      %v1461 = vpop.f32.mrf.mxu0
      %v1462 = vadd.f32 %v1183, %v1461
      %1463 = vmatmul.bf16.gmra.mxu0 %v961
      %v1464 = vpop.f32.mrf.mxu0
      %v1465 = vadd.f32 %v1186, %v1464
      %v1466 = vpop.f32.mrf.mxu0
      %v1467 = vadd.f32 %v1188, %v1466
      %1468 = vmatmul.bf16.gmra.mxu0 %v964
      %v1469 = vpop.f32.mrf.mxu0
      %v1470 = vadd.f32 %v1191, %v1469
      %v1471 = vpop.f32.mrf.mxu0
      %v1472 = vadd.f32 %v1193, %v1471
      %1473 = vmatmul.bf16.gmra.mxu0 %v967
      %v1474 = vpop.f32.mrf.mxu0
      %v1475 = vadd.f32 %v1196, %v1474
      %v1476 = vpop.f32.mrf.mxu0
      %v1477 = vadd.f32 %v1198, %v1476
      %1478 = vmatmul.bf16.gmra.mxu0 %v970
      %v1479 = vpop.f32.mrf.mxu0
      %v1480 = vadd.f32 %v1201, %v1479
      %v1481 = vpop.f32.mrf.mxu0
      %v1482 = vadd.f32 %v1203, %v1481
      %1483 = vmatmul.bf16.gmra.mxu0 %v973
      %v1484 = vpop.f32.mrf.mxu0
      %v1485 = vadd.f32 %v1206, %v1484
      %v1486 = vpop.f32.mrf.mxu0
      %v1487 = vadd.f32 %v1208, %v1486
      %1488 = vmatmul.bf16.gmra.mxu0 %v976
      %v1489 = vpop.f32.mrf.mxu0
      %v1490 = vadd.f32 %v1211, %v1489
      %v1491 = vpop.f32.mrf.mxu0
      %v1492 = vadd.f32 %v1213, %v1491
      %1493 = vmatmul.bf16.gmra.mxu0 %v979
      %v1494 = vpop.f32.mrf.mxu0
      %v1495 = vadd.f32 %v1216, %v1494
      %v1496 = vpop.f32.mrf.mxu0
      %v1497 = vadd.f32 %v1218, %v1496
      %1498 = vmatmul.bf16.gmra.mxu0 %v982
      %v1499 = vpop.f32.mrf.mxu0
      %v1500 = vadd.f32 %v1221, %v1499
      %v1501 = vpop.f32.mrf.mxu0
      %v1502 = vadd.f32 %v1223, %v1501
      %1503 = vmatmul.bf16.gmra.mxu0 %v985
      %v1504 = vpop.f32.mrf.mxu0
      %v1505 = vadd.f32 %v1226, %v1504
      %v1506 = vpop.f32.mrf.mxu0
      %v1507 = vadd.f32 %v1228, %v1506
      %1508 = vmatmul.bf16.gmra.mxu0 %v988
      %v1509 = vpop.f32.mrf.mxu0
      %v1510 = vadd.f32 %v1231, %v1509
      %v1511 = vpop.f32.mrf.mxu0
      %v1512 = vadd.f32 %v1233, %v1511
      %1513 = vmatmul.bf16.gmra.mxu0 %v991
      %v1514 = vpop.f32.mrf.mxu0
      %v1515 = vadd.f32 %v1236, %v1514
      %v1516 = vpop.f32.mrf.mxu0
      %v1517 = vadd.f32 %v1238, %v1516
      %1518 = vmatmul.bf16.gmra.mxu0 %v994
      %v1519 = vpop.f32.mrf.mxu0
      %v1520 = vadd.f32 %v1241, %v1519
      %v1521 = vpop.f32.mrf.mxu0
      %v1522 = vadd.f32 %v1243, %v1521
      %1523 = vmatmul.bf16.gmra.mxu0 %v997
      %v1524 = vpop.f32.mrf.mxu0
      %v1525 = vadd.f32 %v1246, %v1524
      %v1526 = vpop.f32.mrf.mxu0
      %v1527 = vadd.f32 %v1248, %v1526
      %1528 = vmatmul.bf16.gmra.mxu0 %v1000
      %v1529 = vpop.f32.mrf.mxu0
      %v1530 = vadd.f32 %v1251, %v1529
      %v1531 = vpop.f32.mrf.mxu0
      %v1532 = vadd.f32 %v1253, %v1531
      %1533 = vmatmul.bf16.gmra.mxu0 %v1003
      %v1534 = vpop.f32.mrf.mxu0
      %v1535 = vadd.f32 %v1256, %v1534
      %v1536 = vpop.f32.mrf.mxu0
      %v1537 = vadd.f32 %v1258, %v1536
      %1538 = vmatmul.bf16.gmra.mxu0 %v1006
      %v1539 = vpop.f32.mrf.mxu0
      %v1540 = vadd.f32 %v1261, %v1539
      %v1541 = vpop.f32.mrf.mxu0
      %v1542 = vadd.f32 %v1263, %v1541
      %1543 = vmatmul.bf16.gmra.mxu0 %v1009
      %v1544 = vpop.f32.mrf.mxu0
      %v1545 = vadd.f32 %v1266, %v1544
      %v1546 = vpop.f32.mrf.mxu0
      %v1547 = vadd.f32 %v1268, %v1546
      %1548 = vmatmul.bf16.gmra.mxu0 %v1012
      %v1549 = vpop.f32.mrf.mxu0
      %v1550 = vadd.f32 %v1271, %v1549
      %v1551 = vpop.f32.mrf.mxu0
      %v1552 = vadd.f32 %v1273, %v1551
      %1553 = vmatmul.bf16.gmra.mxu0 %v1015
      %v1554 = vpop.f32.mrf.mxu0
      %v1555 = vadd.f32 %v1276, %v1554
      %v1556 = vpop.f32.mrf.mxu0
      %v1557 = vadd.f32 %v1278, %v1556
      %1558 = vmatmul.bf16.gmra.mxu0 %v1018
      %v1559 = vpop.f32.mrf.mxu0
      %v1560 = vadd.f32 %v1281, %v1559
      %v1561 = vpop.f32.mrf.mxu0
      %v1562 = vadd.f32 %v1283, %v1561
      %1563 = vmatmul.bf16.gmra.mxu0 %v1021
      %v1564 = vpop.f32.mrf.mxu0
      %v1565 = vadd.f32 %v1286, %v1564
      %v1566 = vpop.f32.mrf.mxu0
      %v1567 = vadd.f32 %v1288, %v1566
      %1568 = vmatmul.bf16.gmra.mxu0 %v1024
      %v1569 = vpop.f32.mrf.mxu0
      %v1570 = vadd.f32 %v1291, %v1569
      %v1571 = vpop.f32.mrf.mxu0
      %v1572 = vadd.f32 %v1293, %v1571
      %1573 = vmatmul.bf16.gmra.mxu0 %v1027
      %v1574 = vpop.f32.mrf.mxu0
      %v1575 = vadd.f32 %v1296, %v1574
      %v1576 = vpop.f32.mrf.mxu0
      %v1577 = vadd.f32 %v1298, %v1576
      %1578 = vmatmul.bf16.gmra.mxu0 %v1030
      %v1579 = vpop.f32.mrf.mxu0
      %v1580 = vadd.f32 %v1301, %v1579
      %v1581 = vpop.f32.mrf.mxu0
      %v1582 = vadd.f32 %v1303, %v1581
      %1583 = vmatmul.bf16.gmra.mxu0 %v1033
      %v1584 = vpop.f32.mrf.mxu0
      %v1585 = vadd.f32 %v1306, %v1584
      %v1586 = vpop.f32.mrf.mxu0
      %v1587 = vadd.f32 %v1308, %v1586
      %1588 = vmatmul.bf16.gmra.mxu0 %v1036
      %v1589 = vpop.f32.mrf.mxu0
      %v1590 = vadd.f32 %v1311, %v1589
      %v1591 = vpop.f32.mrf.mxu0
      %v1592 = vadd.f32 %v1313, %v1591
      %1593 = vmatmul.bf16.gmra.mxu0 %v1039
      %v1594 = vpop.f32.mrf.mxu0
      %v1595 = vadd.f32 %v1316, %v1594
      %v1596 = vpop.f32.mrf.mxu0
      %v1597 = vadd.f32 %v1318, %v1596
      %1598 = vmatmul.bf16.gmra.mxu0 %v1042
      %v1599 = vpop.f32.mrf.mxu0
      %v1600 = vadd.f32 %v1321, %v1599
      %v1601 = vpop.f32.mrf.mxu0
      %v1602 = vadd.f32 %v1323, %v1601
      %1603 = vmatmul.bf16.gmra.mxu0 %v1045
      %v1604 = vpop.f32.mrf.mxu0
      %v1605 = vadd.f32 %v1326, %v1604
      %v1606 = vpop.f32.mrf.mxu0
      %v1607 = vadd.f32 %v1328, %v1606
      %1608 = vdwg.mxu0
      %v1609 = vmax.f32 %v1340, 0.0
      %v1610 = vmax.f32 %v1342, 0.0
      %v1611 = vmax.f32 %v1345, 0.0
      %v1612 = vmax.f32 %v1347, 0.0
      %v1613 = vmax.f32 %v1350, 0.0
      %v1614 = vmax.f32 %v1352, 0.0
      %v1615 = vmax.f32 %v1355, 0.0
      %v1616 = vmax.f32 %v1357, 0.0
      %v1617 = vmax.f32 %v1360, 0.0
      %v1618 = vmax.f32 %v1362, 0.0
      %v1619 = vmax.f32 %v1365, 0.0
      %v1620 = vmax.f32 %v1367, 0.0
      %v1621 = vmax.f32 %v1370, 0.0
      %v1622 = vmax.f32 %v1372, 0.0
      %v1623 = vmax.f32 %v1375, 0.0
      %v1624 = vmax.f32 %v1377, 0.0
      %v1625 = vmax.f32 %v1380, 0.0
      %v1626 = vmax.f32 %v1382, 0.0
      %v1627 = vmax.f32 %v1385, 0.0
      %v1628 = vmax.f32 %v1387, 0.0
      %v1629 = vmax.f32 %v1390, 0.0
      %v1630 = vmax.f32 %v1392, 0.0
      %v1631 = vmax.f32 %v1395, 0.0
      %v1632 = vmax.f32 %v1397, 0.0
      %v1633 = vmax.f32 %v1400, 0.0
      %v1634 = vmax.f32 %v1402, 0.0
      %v1635 = vmax.f32 %v1405, 0.0
      %v1636 = vmax.f32 %v1407, 0.0
      %v1637 = vmax.f32 %v1410, 0.0
      %v1638 = vmax.f32 %v1412, 0.0
      %v1639 = vmax.f32 %v1415, 0.0
      %v1640 = vmax.f32 %v1417, 0.0
      %v1641 = vmax.f32 %v1420, 0.0
      %v1642 = vmax.f32 %v1422, 0.0
      %v1643 = vmax.f32 %v1425, 0.0
      %v1644 = vmax.f32 %v1427, 0.0
      %v1645 = vmax.f32 %v1430, 0.0
      %v1646 = vmax.f32 %v1432, 0.0
      %v1647 = vmax.f32 %v1435, 0.0
      %v1648 = vmax.f32 %v1437, 0.0
      %v1649 = vmax.f32 %v1440, 0.0
      %v1650 = vmax.f32 %v1442, 0.0
      %v1651 = vmax.f32 %v1445, 0.0
      %v1652 = vmax.f32 %v1447, 0.0
      %v1653 = vmax.f32 %v1450, 0.0
      %v1654 = vmax.f32 %v1452, 0.0
      %v1655 = vmax.f32 %v1455, 0.0
      %v1656 = vmax.f32 %v1457, 0.0
      %v1657 = vmax.f32 %v1460, 0.0
      %v1658 = vmax.f32 %v1462, 0.0
      %v1659 = vmax.f32 %v1465, 0.0
      %v1660 = vmax.f32 %v1467, 0.0
      %v1661 = vmax.f32 %v1470, 0.0
      %v1662 = vmax.f32 %v1472, 0.0
      %v1663 = vmax.f32 %v1475, 0.0
      %v1664 = vmax.f32 %v1477, 0.0
      %v1665 = vmax.f32 %v1480, 0.0
      %v1666 = vmax.f32 %v1482, 0.0
      %v1667 = vmax.f32 %v1485, 0.0
      %v1668 = vmax.f32 %v1487, 0.0
      %v1669 = vmax.f32 %v1490, 0.0
      %v1670 = vmax.f32 %v1492, 0.0
      %v1671 = vmax.f32 %v1495, 0.0
      %v1672 = vmax.f32 %v1497, 0.0
      %v1673 = vmax.f32 %v1500, 0.0
      %v1674 = vmax.f32 %v1502, 0.0
      %v1675 = vmax.f32 %v1505, 0.0
      %v1676 = vmax.f32 %v1507, 0.0
      %v1677 = vmax.f32 %v1510, 0.0
      %v1678 = vmax.f32 %v1512, 0.0
      %v1679 = vmax.f32 %v1515, 0.0
      %v1680 = vmax.f32 %v1517, 0.0
      %v1681 = vmax.f32 %v1520, 0.0
      %v1682 = vmax.f32 %v1522, 0.0
      %v1683 = vmax.f32 %v1525, 0.0
      %v1684 = vmax.f32 %v1527, 0.0
      %v1685 = vmax.f32 %v1530, 0.0
      %v1686 = vmax.f32 %v1532, 0.0
      %v1687 = vmax.f32 %v1535, 0.0
      %v1688 = vmax.f32 %v1537, 0.0
      %v1689 = vmax.f32 %v1540, 0.0
      %v1690 = vmax.f32 %v1542, 0.0
      %v1691 = vmax.f32 %v1545, 0.0
      %v1692 = vmax.f32 %v1547, 0.0
      %v1693 = vmax.f32 %v1550, 0.0
      %v1694 = vmax.f32 %v1552, 0.0
      %v1695 = vmax.f32 %v1555, 0.0
      %v1696 = vmax.f32 %v1557, 0.0
      %v1697 = vmax.f32 %v1560, 0.0
      %v1698 = vmax.f32 %v1562, 0.0
      %v1699 = vmax.f32 %v1565, 0.0
      %v1700 = vmax.f32 %v1567, 0.0
      %v1701 = vmax.f32 %v1570, 0.0
      %v1702 = vmax.f32 %v1572, 0.0
      %v1703 = vmax.f32 %v1575, 0.0
      %v1704 = vmax.f32 %v1577, 0.0
      %v1705 = vmax.f32 %v1580, 0.0
      %v1706 = vmax.f32 %v1582, 0.0
      %v1707 = vmax.f32 %v1585, 0.0
      %v1708 = vmax.f32 %v1587, 0.0
      %v1709 = vmax.f32 %v1590, 0.0
      %v1710 = vmax.f32 %v1592, 0.0
      %v1711 = vmax.f32 %v1595, 0.0
      %v1712 = vmax.f32 %v1597, 0.0
      %v1713 = vmax.f32 %v1600, 0.0
      %v1714 = vmax.f32 %v1602, 0.0
      %v1715 = vmax.f32 %v1605, 0.0
      %v1716 = vmax.f32 %v1607, 0.0
      %vm1717 = vcmask 64512
      %1718 = vst.msk [vmem:[%s175] sm:$0xff] %vm1717, %v1609
      %1719 = vst.msk [vmem:[%s175 + $0x8] sm:$0xff] %vm1717, %v1610
      %1720 = vst.msk [vmem:[%s175 + $0x10] sm:$0xff] %vm1717, %v1611
      %1721 = vst.msk [vmem:[%s175 + $0x18] sm:$0xff] %vm1717, %v1612
      %1722 = vst.msk [vmem:[%s175 + $0x20] sm:$0xff] %vm1717, %v1613
      %1723 = vst.msk [vmem:[%s175 + $0x28] sm:$0xff] %vm1717, %v1614
      %1724 = vst.msk [vmem:[%s175 + $0x30] sm:$0xff] %vm1717, %v1615
      %1725 = vst.msk [vmem:[%s175 + $0x38] sm:$0xff] %vm1717, %v1616
      %1726 = vst.msk [vmem:[%s175 + $0x40] sm:$0xff] %vm1717, %v1617
      %1727 = vst.msk [vmem:[%s175 + $0x48] sm:$0xff] %vm1717, %v1618
      %1728 = vst.msk [vmem:[%s175 + $0x50] sm:$0xff] %vm1717, %v1619
      %1729 = vst.msk [vmem:[%s175 + $0x58] sm:$0xff] %vm1717, %v1620
      %1730 = vst.msk [vmem:[%s175 + $0x60] sm:$0xff] %vm1717, %v1621
      %1731 = vst.msk [vmem:[%s175 + $0x68] sm:$0xff] %vm1717, %v1622
      %1732 = vst.msk [vmem:[%s175 + $0x70] sm:$0xff] %vm1717, %v1623
      %1733 = vst.msk [vmem:[%s175 + $0x78] sm:$0xff] %vm1717, %v1624
      %1734 = vst.msk [vmem:[%s175 + $0x80] sm:$0xff] %vm1717, %v1625
      %1735 = vst.msk [vmem:[%s175 + $0x88] sm:$0xff] %vm1717, %v1626
      %1736 = vst.msk [vmem:[%s175 + $0x90] sm:$0xff] %vm1717, %v1627
      %1737 = vst.msk [vmem:[%s175 + $0x98] sm:$0xff] %vm1717, %v1628
      %1738 = vst.msk [vmem:[%s175 + $0xa0] sm:$0xff] %vm1717, %v1629
      %1739 = vst.msk [vmem:[%s175 + $0xa8] sm:$0xff] %vm1717, %v1630
      %1740 = vst.msk [vmem:[%s175 + $0xb0] sm:$0xff] %vm1717, %v1631
      %1741 = vst.msk [vmem:[%s175 + $0xb8] sm:$0xff] %vm1717, %v1632
      %1742 = vst.msk [vmem:[%s175 + $0xc0] sm:$0xff] %vm1717, %v1633
      %1743 = vst.msk [vmem:[%s175 + $0xc8] sm:$0xff] %vm1717, %v1634
      %1744 = vst.msk [vmem:[%s175 + $0xd0] sm:$0xff] %vm1717, %v1635
      %1745 = vst.msk [vmem:[%s175 + $0xd8] sm:$0xff] %vm1717, %v1636
      %1746 = vst.msk [vmem:[%s175 + $0xe0] sm:$0xff] %vm1717, %v1637
      %1747 = vst.msk [vmem:[%s175 + $0xe8] sm:$0xff] %vm1717, %v1638
      %1748 = vst.msk [vmem:[%s175 + $0xf0] sm:$0xff] %vm1717, %v1639
      %1749 = vst.msk [vmem:[%s175 + $0xf8] sm:$0xff] %vm1717, %v1640
      %1750 = vst.msk [vmem:[%s175 + $0x100] sm:$0xff] %vm1717, %v1641
      %1751 = vst.msk [vmem:[%s175 + $0x108] sm:$0xff] %vm1717, %v1642
      %1752 = vst.msk [vmem:[%s175 + $0x110] sm:$0xff] %vm1717, %v1643
      %1753 = vst.msk [vmem:[%s175 + $0x118] sm:$0xff] %vm1717, %v1644
      %1754 = vst.msk [vmem:[%s175 + $0x120] sm:$0xff] %vm1717, %v1645
      %1755 = vst.msk [vmem:[%s175 + $0x128] sm:$0xff] %vm1717, %v1646
      %1756 = vst.msk [vmem:[%s175 + $0x130] sm:$0xff] %vm1717, %v1647
      %1757 = vst.msk [vmem:[%s175 + $0x138] sm:$0xff] %vm1717, %v1648
      %1758 = vst.msk [vmem:[%s175 + $0x140] sm:$0xff] %vm1717, %v1649
      %1759 = vst.msk [vmem:[%s175 + $0x148] sm:$0xff] %vm1717, %v1650
      %1760 = vst.msk [vmem:[%s175 + $0x150] sm:$0xff] %vm1717, %v1651
      %1761 = vst.msk [vmem:[%s175 + $0x158] sm:$0xff] %vm1717, %v1652
      %1762 = vst.msk [vmem:[%s175 + $0x160] sm:$0xff] %vm1717, %v1653
      %1763 = vst.msk [vmem:[%s175 + $0x168] sm:$0xff] %vm1717, %v1654
      %1764 = vst.msk [vmem:[%s175 + $0x170] sm:$0xff] %vm1717, %v1655
      %1765 = vst.msk [vmem:[%s175 + $0x178] sm:$0xff] %vm1717, %v1656
      %1766 = vst.msk [vmem:[%s175 + $0x180] sm:$0xff] %vm1717, %v1657
      %1767 = vst.msk [vmem:[%s175 + $0x188] sm:$0xff] %vm1717, %v1658
      %1768 = vst.msk [vmem:[%s175 + $0x190] sm:$0xff] %vm1717, %v1659
      %1769 = vst.msk [vmem:[%s175 + $0x198] sm:$0xff] %vm1717, %v1660
      %1770 = vst.msk [vmem:[%s175 + $0x1a0] sm:$0xff] %vm1717, %v1661
      %1771 = vst.msk [vmem:[%s175 + $0x1a8] sm:$0xff] %vm1717, %v1662
      %1772 = vst.msk [vmem:[%s175 + $0x1b0] sm:$0xff] %vm1717, %v1663
      %1773 = vst.msk [vmem:[%s175 + $0x1b8] sm:$0xff] %vm1717, %v1664
      %1774 = vst.msk [vmem:[%s175 + $0x1c0] sm:$0xff] %vm1717, %v1665
      %1775 = vst.msk [vmem:[%s175 + $0x1c8] sm:$0xff] %vm1717, %v1666
      %1776 = vst.msk [vmem:[%s175 + $0x1d0] sm:$0xff] %vm1717, %v1667
      %1777 = vst.msk [vmem:[%s175 + $0x1d8] sm:$0xff] %vm1717, %v1668
      %1778 = vst.msk [vmem:[%s175 + $0x1e0] sm:$0xff] %vm1717, %v1669
      %1779 = vst.msk [vmem:[%s175 + $0x1e8] sm:$0xff] %vm1717, %v1670
      %1780 = vst.msk [vmem:[%s175 + $0x1f0] sm:$0xff] %vm1717, %v1671
      %1781 = vst.msk [vmem:[%s175 + $0x1f8] sm:$0xff] %vm1717, %v1672
      %1782 = vst.msk [vmem:[%s175 + $0x200] sm:$0xff] %vm1717, %v1673
      %1783 = vst.msk [vmem:[%s175 + $0x208] sm:$0xff] %vm1717, %v1674
      %1784 = vst.msk [vmem:[%s175 + $0x210] sm:$0xff] %vm1717, %v1675
      %1785 = vst.msk [vmem:[%s175 + $0x218] sm:$0xff] %vm1717, %v1676
      %1786 = vst.msk [vmem:[%s175 + $0x220] sm:$0xff] %vm1717, %v1677
      %1787 = vst.msk [vmem:[%s175 + $0x228] sm:$0xff] %vm1717, %v1678
      %1788 = vst.msk [vmem:[%s175 + $0x230] sm:$0xff] %vm1717, %v1679
      %1789 = vst.msk [vmem:[%s175 + $0x238] sm:$0xff] %vm1717, %v1680
      %1790 = vst.msk [vmem:[%s175 + $0x240] sm:$0xff] %vm1717, %v1681
      %1791 = vst.msk [vmem:[%s175 + $0x248] sm:$0xff] %vm1717, %v1682
      %1792 = vst.msk [vmem:[%s175 + $0x250] sm:$0xff] %vm1717, %v1683
      %1793 = vst.msk [vmem:[%s175 + $0x258] sm:$0xff] %vm1717, %v1684
      %1794 = vst.msk [vmem:[%s175 + $0x260] sm:$0xff] %vm1717, %v1685
      %1795 = vst.msk [vmem:[%s175 + $0x268] sm:$0xff] %vm1717, %v1686
      %1796 = vst.msk [vmem:[%s175 + $0x270] sm:$0xff] %vm1717, %v1687
      %1797 = vst.msk [vmem:[%s175 + $0x278] sm:$0xff] %vm1717, %v1688
      %1798 = vst.msk [vmem:[%s175 + $0x280] sm:$0xff] %vm1717, %v1689
      %1799 = vst.msk [vmem:[%s175 + $0x288] sm:$0xff] %vm1717, %v1690
      %1800 = vst.msk [vmem:[%s175 + $0x290] sm:$0xff] %vm1717, %v1691
      %1801 = vst.msk [vmem:[%s175 + $0x298] sm:$0xff] %vm1717, %v1692
      %1802 = vst.msk [vmem:[%s175 + $0x2a0] sm:$0xff] %vm1717, %v1693
      %1803 = vst.msk [vmem:[%s175 + $0x2a8] sm:$0xff] %vm1717, %v1694
      %1804 = vst.msk [vmem:[%s175 + $0x2b0] sm:$0xff] %vm1717, %v1695
      %1805 = vst.msk [vmem:[%s175 + $0x2b8] sm:$0xff] %vm1717, %v1696
      %1806 = vst.msk [vmem:[%s175 + $0x2c0] sm:$0xff] %vm1717, %v1697
      %1807 = vst.msk [vmem:[%s175 + $0x2c8] sm:$0xff] %vm1717, %v1698
      %1808 = vst.msk [vmem:[%s175 + $0x2d0] sm:$0xff] %vm1717, %v1699
      %1809 = vst.msk [vmem:[%s175 + $0x2d8] sm:$0xff] %vm1717, %v1700
      %1810 = vst.msk [vmem:[%s175 + $0x2e0] sm:$0xff] %vm1717, %v1701
      %1811 = vst.msk [vmem:[%s175 + $0x2e8] sm:$0xff] %vm1717, %v1702
      %1812 = vst.msk [vmem:[%s175 + $0x2f0] sm:$0xff] %vm1717, %v1703
      %1813 = vst.msk [vmem:[%s175 + $0x2f8] sm:$0xff] %vm1717, %v1704
      %1814 = vst.msk [vmem:[%s175 + $0x300] sm:$0xff] %vm1717, %v1705
      %1815 = vst.msk [vmem:[%s175 + $0x308] sm:$0xff] %vm1717, %v1706
      %1816 = vst.msk [vmem:[%s175 + $0x310] sm:$0xff] %vm1717, %v1707
      %1817 = vst.msk [vmem:[%s175 + $0x318] sm:$0xff] %vm1717, %v1708
      %1818 = vst.msk [vmem:[%s175 + $0x320] sm:$0xff] %vm1717, %v1709
      %1819 = vst.msk [vmem:[%s175 + $0x328] sm:$0xff] %vm1717, %v1710
      %1820 = vst.msk [vmem:[%s175 + $0x330] sm:$0xff] %vm1717, %v1711
      %1821 = vst.msk [vmem:[%s175 + $0x338] sm:$0xff] %vm1717, %v1712
      %1822 = vst.msk [vmem:[%s175 + $0x340] sm:$0xff] %vm1717, %v1713
      %1823 = vst.msk [vmem:[%s175 + $0x348] sm:$0xff] %vm1717, %v1714
      %1824 = vst.msk [vmem:[%s175 + $0x350] sm:$0xff] %vm1717, %v1715
      %1825 = vst.msk [vmem:[%s175 + $0x358] sm:$0xff] %vm1717, %v1716
      %s1826 = smul.u32 108, %s14
      %p1827 = scmp.lt.s32.totalorder %s1826, 647
      %s1828 = scalar_select %p1827, %s1826, 647
      %s1829 = smul.addr %s1828, 8
      %s1830 = scalar_lea.vmem %s3, %s1829
      // Predicated region
      $region33: #{network_forward.10} parent=31 // pred_check
        %p1831 = pneg %p100
      $region34: #{network_forward.10} parent=31 // pred_check_branch
        %1833 = sbr.rel (%p1831) target = $region36
      $region35: #{network_forward.10} parent=31 // pred_region
        %s1834 = smul.u32 108, %s14
      $region36: #{network_forward.10} parent=31 // pred_fallthru
        _
    $region32: #{network_forward.10} parent=5 // pred_fallthru
      _
    %p1835 = scmp.le.s32.totalorder 2, %s9
    // Predicated region
    $region37: #{network_forward.10} parent=5 // pred_check
      %p1836 = pneg %p1835
    $region38: #{network_forward.10} parent=5 // pred_check_branch
      %1838 = sbr.rel (%p1836) target = $region40
    $region39: #{network_forward.10} parent=5 // pred_region
      %s1839 = ssub.s32 %s9, 2
      // Predicated region
      $region41: #{network_forward.10} parent=39 // pred_check
        %p1840 = pneg %p106
      $region42: #{network_forward.10} parent=39 // pred_check_branch
        %1842 = sbr.rel (%p1840) target = $region44
      $region43: #{network_forward.10} parent=39 // pred_region
        %s1843 = smul.u32 108, %s15
        %p1844 = scmp.lt.s32.totalorder %s1843, 647
        %s1845 = scalar_select %p1844, %s1843, 647
        %s1846 = smul.addr %s1845, 8
        %s1847 = scalar_lea.vmem %s3, %s1846
      $region44: #{network_forward.10} parent=39 // pred_fallthru
        _
    $region40: #{network_forward.10} parent=5 // pred_fallthru
      _
  $region6: #{network_forward.10} parent=0 // loop_footer
    %s13 = sadd.s32 1, %s9
  $region7: #{network_forward.10} parent=0 // loop_footer_branch
    %8 = sbr.rel target = $region3
  $region8: #{network_forward.10} parent=0 // loop_exit
    _

// kernel: network_forward.11
$region0: #{network_forward.11}
  #allocation0 [shape = 'u32[]', space=smem, size = 0x4, offset = 0x4, fixed_abs, tag = 'smem constant byte address 0x4 - core index']
  #allocation1 [shape = 'u32[72,128]{1,0:T(1,128)}', space=vmem, size = 0x9000, scoped, tag = 'internal scratch']
  %s0 = inlined_call_operand.vmem [shape: bf16[5184,216], index: 0, kind: input, shape index: {}]
  %s1 = inlined_call_operand.vmem [shape: bf16[216,8], index: 1, kind: input, shape index: {}]
  %s2 = inlined_call_operand.vmem [shape: f32[1,8], index: 2, kind: input, shape index: {}]
  %s3 = inlined_call_operand.vmem [shape: f32[5184,8], index: 3, kind: input, shape index: {}]
  %s4 = inlined_call_operand.vmem [shape: f32[5184,8], index: 4, kind: output, shape index: {}]
  %s5 = sld [smem:[#allocation0]]
  $region49: #{network_forward.11} parent=0
    _
  %s7 = ssub.s32 1, %s5
  %s8 = scalar_select 0, %s7, %s5
  loop: start=0, step=1, limit=8
  $region2: #{network_forward.11} parent=0 // loop_pre_header
    _
  $region3: #{network_forward.11} parent=0 // loop_header
    %s10 = sphi 0, %s14
    %p11 = scmp.ge.s32.totalorder %s10, 8
    %s20 = sphi 0, %s22
    %s23 = sphi 0, %s20
    %s24 = sphi 0, %s23
    %s40 = sphi 0, %s24
    %s44 = sphi 0, %s44
    %s46 = sphi 0, %s44
    %s47 = sphi 0, %s46
    %s61 = sphi 0, %s47
    %s65 = sphi 0, %s65
    %s67 = sphi 0, %s65
    %s68 = sphi 0, %s67
    %s82 = sphi 0, %s68
    %s88 = sphi 0, %s90
    %s91 = sphi 0, %s88
    %s92 = sphi 0, %s91
    %s108 = sphi 0, %s92
    %s114 = sphi 0, %s116
    %s117 = sphi 0, %s114
    %s118 = sphi 0, %s117
    %s134 = sphi 0, %s118
  $region4: #{network_forward.11} parent=0 // loop_header_branch
    %13 = sbr.rel (%p11) target = $region8
  $region5: #{network_forward.11} parent=0 // loop_body
    %s15 = ssub.s32 %s10, 1
    %s16 = ssub.s32 %s10, 2
    %s17 = sadd.s32 %s10, 1
    %s18 = ssub.s32 %s10, %s17
    %p19 = scmp.eq.s32.totalorder %s18, 0
    %s21 = sadd.s32 %s20, 1
    %s22 = scalar_select %p19, %s20, %s21
    %p25 = pneg %p19
    %p26 = scmp.eq.s32.totalorder %s10, 5
    %p27 = por %p25, %p26
    %p28 = scmp.ne.s32.totalorder %s20, %s23
    %p29 = scmp.eq.s32.totalorder %s10, 0
    %p30 = por %p28, %p29
    %p31 = scmp.ne.s32.totalorder %s20, %s23
    %p32 = scmp.eq.s32.totalorder %s15, 5
    %p33 = por %p31, %p32
    %p34 = scmp.ne.s32.totalorder %s23, %s24
    %p35 = scmp.eq.s32.totalorder %s15, 0
    %p36 = por %p34, %p35
    %p37 = scmp.ne.s32.totalorder %s23, %s24
    %p38 = scmp.eq.s32.totalorder %s16, 5
    %p39 = por %p37, %p38
    %p41 = scmp.ne.s32.totalorder %s24, %s40
    %p42 = scmp.eq.s32.totalorder %s16, 0
    %p43 = por %p41, %p42
    %s45 = sadd.s32 %s44, 1
    %p48 = scmp.eq.s32.totalorder %s10, 5
    %p49 = scmp.ne.s32.totalorder %s44, %s46
    %p50 = scmp.eq.s32.totalorder %s10, 0
    %p51 = por %p49, %p50
    %p52 = scmp.ne.s32.totalorder %s44, %s46
    %p53 = scmp.eq.s32.totalorder %s15, 5
    %p54 = por %p52, %p53
    %p55 = scmp.ne.s32.totalorder %s46, %s47
    %p56 = scmp.eq.s32.totalorder %s15, 0
    %p57 = por %p55, %p56
    %p58 = scmp.ne.s32.totalorder %s46, %s47
    %p59 = scmp.eq.s32.totalorder %s16, 5
    %p60 = por %p58, %p59
    %p62 = scmp.ne.s32.totalorder %s47, %s61
    %p63 = scmp.eq.s32.totalorder %s16, 0
    %p64 = por %p62, %p63
    %s66 = sadd.s32 %s65, 1
    %p69 = scmp.eq.s32.totalorder %s10, 5
    %p70 = scmp.ne.s32.totalorder %s65, %s67
    %p71 = scmp.eq.s32.totalorder %s10, 0
    %p72 = por %p70, %p71
    %p73 = scmp.ne.s32.totalorder %s65, %s67
    %p74 = scmp.eq.s32.totalorder %s15, 5
    %p75 = por %p73, %p74
    %p76 = scmp.ne.s32.totalorder %s67, %s68
    %p77 = scmp.eq.s32.totalorder %s15, 0
    %p78 = por %p76, %p77
    %p79 = scmp.ne.s32.totalorder %s67, %s68
    %p80 = scmp.eq.s32.totalorder %s16, 5
    %p81 = por %p79, %p80
    %p83 = scmp.ne.s32.totalorder %s68, %s82
    %p84 = scmp.eq.s32.totalorder %s16, 0
    %p85 = por %p83, %p84
    %s86 = ssub.s32 %s10, %s17
    %p87 = scmp.eq.s32.totalorder %s86, 0
    %s89 = sadd.s32 %s88, 1
    %s90 = scalar_select %p87, %s88, %s89
    %p93 = pneg %p87
    %p94 = scmp.eq.s32.totalorder %s10, 5
    %p95 = por %p93, %p94
    %p96 = scmp.ne.s32.totalorder %s88, %s91
    %p97 = scmp.eq.s32.totalorder %s10, 0
    %p98 = por %p96, %p97
    %p99 = scmp.ne.s32.totalorder %s88, %s91
    %p100 = scmp.eq.s32.totalorder %s15, 5
    %p101 = por %p99, %p100
    %p102 = scmp.ne.s32.totalorder %s91, %s92
    %p103 = scmp.eq.s32.totalorder %s15, 0
    %p104 = por %p102, %p103
    %p105 = scmp.ne.s32.totalorder %s91, %s92
    %p106 = scmp.eq.s32.totalorder %s16, 5
    %p107 = por %p105, %p106
    %p109 = scmp.ne.s32.totalorder %s92, %s108
    %p110 = scmp.eq.s32.totalorder %s16, 0
    %p111 = por %p109, %p110
    %s112 = ssub.s32 %s10, %s17
    %p113 = scmp.eq.s32.totalorder %s112, 0
    %s115 = sadd.s32 %s114, 1
    %s116 = scalar_select %p113, %s114, %s115
    %p119 = pneg %p113
    %p120 = scmp.eq.s32.totalorder %s10, 5
    %p121 = por %p119, %p120
    %p122 = scmp.ne.s32.totalorder %s114, %s117
    %p123 = scmp.eq.s32.totalorder %s10, 0
    %p124 = por %p122, %p123
    %p125 = scmp.ne.s32.totalorder %s114, %s117
    %p126 = scmp.eq.s32.totalorder %s15, 5
    %p127 = por %p125, %p126
    %p128 = scmp.ne.s32.totalorder %s117, %s118
    %p129 = scmp.eq.s32.totalorder %s15, 0
    %p130 = por %p128, %p129
    %p131 = scmp.ne.s32.totalorder %s117, %s118
    %p132 = scmp.eq.s32.totalorder %s16, 5
    %p133 = por %p131, %p132
    %p135 = scmp.ne.s32.totalorder %s118, %s134
    %p136 = scmp.eq.s32.totalorder %s16, 0
    %p137 = por %p135, %p136
    %p138 = scmp.le.s32.totalorder 1, %s10
    %p139 = scmp.lt.s32.totalorder %s10, 7
    %p140 = pnand %p138, %p139
    %p141 = pneg %p140
    // Predicated region
    $region9: #{network_forward.11} parent=5 // pred_check
      _
    $region10: #{network_forward.11} parent=5 // pred_check_branch
      %143 = sbr.rel (%p140) target = $region12
    $region11: #{network_forward.11} parent=5 // pred_region
      %s144 = ssub.s32 %s10, 1
      // Predicated region
      $region13: #{network_forward.11} parent=11 // pred_check
        %p145 = pneg %p57
      $region14: #{network_forward.11} parent=11 // pred_check_branch
        %147 = sbr.rel (%p145) target = $region16
      $region15: #{network_forward.11} parent=11 // pred_region
        _
      $region16: #{network_forward.11} parent=11 // pred_fallthru
        _
      // Predicated region
      $region17: #{network_forward.11} parent=11 // pred_check
        %p148 = pneg %p78
      $region18: #{network_forward.11} parent=11 // pred_check_branch
        %150 = sbr.rel (%p148) target = $region20
      $region19: #{network_forward.11} parent=11 // pred_region
        _
      $region20: #{network_forward.11} parent=11 // pred_fallthru
        _
    $region12: #{network_forward.11} parent=5 // pred_fallthru
      _
    %p151 = scmp.lt.s32.totalorder %s10, 6
    // Predicated region
    $region21: #{network_forward.11} parent=5 // pred_check
      %p152 = pneg %p151
    $region22: #{network_forward.11} parent=5 // pred_check_branch
      %154 = sbr.rel (%p152) target = $region24
    $region23: #{network_forward.11} parent=5 // pred_region
      // Predicated region
      $region25: #{network_forward.11} parent=23 // pred_check
        %p155 = pneg %p30
      $region26: #{network_forward.11} parent=23 // pred_check_branch
        %157 = sbr.rel (%p155) target = $region28
      $region27: #{network_forward.11} parent=23 // pred_region
        %s158 = smul.u32 108, %s10
        %p159 = scmp.lt.s32.totalorder %s158, 647
        %s160 = scalar_select %p159, %s158, 647
        %s161 = smul.addr %s160, 2
        %s162 = smul.addr %s161, 4
        %s163 = scalar_lea.vmem %s0, %s162
        %s164 = smul.u32 108, %s10
      $region28: #{network_forward.11} parent=23 // pred_fallthru
        _
      // Predicated region
      $region29: #{network_forward.11} parent=23 // pred_check
        %p165 = pneg %p98
      $region30: #{network_forward.11} parent=23 // pred_check_branch
        %167 = sbr.rel (%p165) target = $region32
      $region31: #{network_forward.11} parent=23 // pred_region
        %s168 = smul.u32 108, %s10
        %p169 = scmp.lt.s32.totalorder %s168, 647
        %s170 = scalar_select %p169, %s168, 647
        %s171 = smul.addr %s170, 8
        %s172 = scalar_lea.vmem %s3, %s171
        %s173 = smul.u32 108, %s10
      $region32: #{network_forward.11} parent=23 // pred_fallthru
        _
    $region24: #{network_forward.11} parent=5 // pred_fallthru
      _
    %p174 = scmp.le.s32.totalorder 1, %s10
    %p175 = scmp.lt.s32.totalorder %s10, 7
    %p176 = pnand %p174, %p175
    %p177 = pneg %p176
    // Predicated region
    $region33: #{network_forward.11} parent=5 // pred_check
      _
    $region34: #{network_forward.11} parent=5 // pred_check_branch
      %179 = sbr.rel (%p176) target = $region36
    $region35: #{network_forward.11} parent=5 // pred_region
      %s180 = ssub.s32 %s10, 1
      %s181 = smul.u32 108, %s15
      %p182 = scmp.lt.s32.totalorder %s181, 647
      %s183 = scalar_select %p182, %s181, 647
      %s184 = smul.addr %s183, 2
      %s185 = smul.addr %s184, 4
      %s186 = scalar_lea.vmem %s0, %s185
      %p187 = pneg %p36
      %p188 = pneg %p33
      %p189 = pneg %p57
      %p190 = pneg %p54
      %p191 = pneg %p78
      %p192 = pneg %p75
      %s193 = smul.u32 108, %s15
      %p194 = scmp.lt.s32.totalorder %s193, 647
      %s195 = scalar_select %p194, %s193, 647
      %s196 = smul.addr %s195, 8
      %s197 = scalar_lea.vmem %s3, %s196
      %p198 = pneg %p104
      %p199 = pneg %p101
      %p200 = pneg %p130
      %p201 = pneg %p127
      %s202 = smul.u32 108, %s15
      %p203 = scmp.lt.s32.totalorder %s202, 647
      %s204 = scalar_select %p203, %s202, 647
      %s205 = smul.addr %s204, 8
      %s206 = scalar_lea.vmem %s4, %s205
      %s207 = smul.u32 108, %s15
      %p208 = scmp.lt.s32.totalorder %s207, 647
      %s209 = scalar_select %p208, %s207, 647
      %s210 = smul.addr %s209, 2
      %s211 = smul.addr %s210, 4
      %s212 = scalar_lea.vmem %s0, %s211
      %s213 = smul.u32 108, %s15
      %s214 = smul.u32 108, %s15
      %p215 = scmp.lt.s32.totalorder %s214, 647
      %s216 = scalar_select %p215, %s214, 647
      %s217 = smul.addr %s216, 8
      %s218 = scalar_lea.vmem %s3, %s217
      %s219 = smul.u32 108, %s15
      %s220 = smul.u32 108, %s15
      %p221 = scmp.lt.s32.totalorder %s220, 647
      %s222 = scalar_select %p221, %s220, 647
      %s223 = smul.addr %s222, 8
      %s224 = scalar_lea.vmem %s4, %s223
      %s225 = smul.u32 108, %s15
      %v227 = vld [vmem:[%s212] sm:$0xff]
      %v228 = vld [vmem:[%s212 + $0x8] sm:$0xff]
      %v229 = vld [vmem:[%s212 + $0x10] sm:$0xff]
      %v230 = vld [vmem:[%s212 + $0x18] sm:$0xff]
      %v231 = vld [vmem:[%s212 + $0x20] sm:$0xff]
      %v232 = vld [vmem:[%s212 + $0x28] sm:$0xff]
      %v233 = vld [vmem:[%s212 + $0x30] sm:$0xff]
      %v234 = vld [vmem:[%s212 + $0x38] sm:$0xff]
      %v235 = vld [vmem:[%s212 + $0x40] sm:$0xff]
      %v236 = vld [vmem:[%s212 + $0x48] sm:$0xff]
      %v237 = vld [vmem:[%s212 + $0x50] sm:$0xff]
      %v238 = vld [vmem:[%s212 + $0x58] sm:$0xff]
      %v239 = vld [vmem:[%s212 + $0x60] sm:$0xff]
      %v240 = vld [vmem:[%s212 + $0x68] sm:$0xff]
      %v241 = vld [vmem:[%s212 + $0x70] sm:$0xff]
      %v242 = vld [vmem:[%s212 + $0x78] sm:$0xff]
      %v243 = vld [vmem:[%s212 + $0x80] sm:$0xff]
      %v244 = vld [vmem:[%s212 + $0x88] sm:$0xff]
      %v245 = vld [vmem:[%s212 + $0x90] sm:$0xff]
      %v246 = vld [vmem:[%s212 + $0x98] sm:$0xff]
      %v247 = vld [vmem:[%s212 + $0xa0] sm:$0xff]
      %v248 = vld [vmem:[%s212 + $0xa8] sm:$0xff]
      %v249 = vld [vmem:[%s212 + $0xb0] sm:$0xff]
      %v250 = vld [vmem:[%s212 + $0xb8] sm:$0xff]
      %v251 = vld [vmem:[%s212 + $0xc0] sm:$0xff]
      %v252 = vld [vmem:[%s212 + $0xc8] sm:$0xff]
      %v253 = vld [vmem:[%s212 + $0xd0] sm:$0xff]
      %v254 = vld [vmem:[%s212 + $0xd8] sm:$0xff]
      %v255 = vld [vmem:[%s212 + $0xe0] sm:$0xff]
      %v256 = vld [vmem:[%s212 + $0xe8] sm:$0xff]
      %v257 = vld [vmem:[%s212 + $0xf0] sm:$0xff]
      %v258 = vld [vmem:[%s212 + $0xf8] sm:$0xff]
      %v259 = vld [vmem:[%s212 + $0x100] sm:$0xff]
      %v260 = vld [vmem:[%s212 + $0x108] sm:$0xff]
      %v261 = vld [vmem:[%s212 + $0x110] sm:$0xff]
      %v262 = vld [vmem:[%s212 + $0x118] sm:$0xff]
      %v263 = vld [vmem:[%s212 + $0x120] sm:$0xff]
      %v264 = vld [vmem:[%s212 + $0x128] sm:$0xff]
      %v265 = vld [vmem:[%s212 + $0x130] sm:$0xff]
      %v266 = vld [vmem:[%s212 + $0x138] sm:$0xff]
      %v267 = vld [vmem:[%s212 + $0x140] sm:$0xff]
      %v268 = vld [vmem:[%s212 + $0x148] sm:$0xff]
      %v269 = vld [vmem:[%s212 + $0x150] sm:$0xff]
      %v270 = vld [vmem:[%s212 + $0x158] sm:$0xff]
      %v271 = vld [vmem:[%s212 + $0x160] sm:$0xff]
      %v272 = vld [vmem:[%s212 + $0x168] sm:$0xff]
      %v273 = vld [vmem:[%s212 + $0x170] sm:$0xff]
      %v274 = vld [vmem:[%s212 + $0x178] sm:$0xff]
      %v275 = vld [vmem:[%s212 + $0x180] sm:$0xff]
      %v276 = vld [vmem:[%s212 + $0x188] sm:$0xff]
      %v277 = vld [vmem:[%s212 + $0x190] sm:$0xff]
      %v278 = vld [vmem:[%s212 + $0x198] sm:$0xff]
      %v279 = vld [vmem:[%s212 + $0x1a0] sm:$0xff]
      %v280 = vld [vmem:[%s212 + $0x1a8] sm:$0xff]
      %v281 = vld [vmem:[%s212 + $0x1b0] sm:$0xff]
      %v282 = vld [vmem:[%s212 + $0x1b8] sm:$0xff]
      %v283 = vld [vmem:[%s212 + $0x1c0] sm:$0xff]
      %v284 = vld [vmem:[%s212 + $0x1c8] sm:$0xff]
      %v285 = vld [vmem:[%s212 + $0x1d0] sm:$0xff]
      %v286 = vld [vmem:[%s212 + $0x1d8] sm:$0xff]
      %v287 = vld [vmem:[%s212 + $0x1e0] sm:$0xff]
      %v288 = vld [vmem:[%s212 + $0x1e8] sm:$0xff]
      %v289 = vld [vmem:[%s212 + $0x1f0] sm:$0xff]
      %v290 = vld [vmem:[%s212 + $0x1f8] sm:$0xff]
      %v291 = vld [vmem:[%s212 + $0x200] sm:$0xff]
      %v292 = vld [vmem:[%s212 + $0x208] sm:$0xff]
      %v293 = vld [vmem:[%s212 + $0x210] sm:$0xff]
      %v294 = vld [vmem:[%s212 + $0x218] sm:$0xff]
      %v295 = vld [vmem:[%s212 + $0x220] sm:$0xff]
      %v296 = vld [vmem:[%s212 + $0x228] sm:$0xff]
      %v297 = vld [vmem:[%s212 + $0x230] sm:$0xff]
      %v298 = vld [vmem:[%s212 + $0x238] sm:$0xff]
      %v299 = vld [vmem:[%s212 + $0x240] sm:$0xff]
      %v300 = vld [vmem:[%s212 + $0x248] sm:$0xff]
      %v301 = vld [vmem:[%s212 + $0x250] sm:$0xff]
      %v302 = vld [vmem:[%s212 + $0x258] sm:$0xff]
      %v303 = vld [vmem:[%s212 + $0x260] sm:$0xff]
      %v304 = vld [vmem:[%s212 + $0x268] sm:$0xff]
      %v305 = vld [vmem:[%s212 + $0x270] sm:$0xff]
      %v306 = vld [vmem:[%s212 + $0x278] sm:$0xff]
      %v307 = vld [vmem:[%s212 + $0x280] sm:$0xff]
      %v308 = vld [vmem:[%s212 + $0x288] sm:$0xff]
      %v309 = vld [vmem:[%s212 + $0x290] sm:$0xff]
      %v310 = vld [vmem:[%s212 + $0x298] sm:$0xff]
      %v311 = vld [vmem:[%s212 + $0x2a0] sm:$0xff]
      %v312 = vld [vmem:[%s212 + $0x2a8] sm:$0xff]
      %v313 = vld [vmem:[%s212 + $0x2b0] sm:$0xff]
      %v314 = vld [vmem:[%s212 + $0x2b8] sm:$0xff]
      %v315 = vld [vmem:[%s212 + $0x2c0] sm:$0xff]
      %v316 = vld [vmem:[%s212 + $0x2c8] sm:$0xff]
      %v317 = vld [vmem:[%s212 + $0x2d0] sm:$0xff]
      %v318 = vld [vmem:[%s212 + $0x2d8] sm:$0xff]
      %v319 = vld [vmem:[%s212 + $0x2e0] sm:$0xff]
      %v320 = vld [vmem:[%s212 + $0x2e8] sm:$0xff]
      %v321 = vld [vmem:[%s212 + $0x2f0] sm:$0xff]
      %v322 = vld [vmem:[%s212 + $0x2f8] sm:$0xff]
      %v323 = vld [vmem:[%s212 + $0x300] sm:$0xff]
      %v324 = vld [vmem:[%s212 + $0x308] sm:$0xff]
      %v325 = vld [vmem:[%s212 + $0x310] sm:$0xff]
      %v326 = vld [vmem:[%s212 + $0x318] sm:$0xff]
      %v327 = vld [vmem:[%s212 + $0x320] sm:$0xff]
      %v328 = vld [vmem:[%s212 + $0x328] sm:$0xff]
      %v329 = vld [vmem:[%s212 + $0x330] sm:$0xff]
      %v330 = vld [vmem:[%s212 + $0x338] sm:$0xff]
      %v331 = vld [vmem:[%s212 + $0x340] sm:$0xff]
      %v332 = vld [vmem:[%s212 + $0x348] sm:$0xff]
      %v333 = vld [vmem:[%s212 + $0x350] sm:$0xff]
      %v334 = vld [vmem:[%s212 + $0x358] sm:$0xff]
      %v335 = vld [vmem:[%s1] sm:$0xf]
      %v336 = vld [vmem:[%s1 + $0x4] sm:$0xf]
      %v337 = vld [vmem:[%s1 + $0x8] sm:$0xf]
      %v338 = vld [vmem:[%s1 + $0xc] sm:$0xf]
      %v339 = vld [vmem:[%s1 + $0x10] sm:$0xf]
      %v340 = vld [vmem:[%s1 + $0x14] sm:$0xf]
      %v341 = vld [vmem:[%s1 + $0x18] sm:$0xf]
      %v342 = vld [vmem:[%s1 + $0x1c] sm:$0xf]
      %v343 = vld [vmem:[%s1 + $0x20] sm:$0xf]
      %v344 = vld [vmem:[%s1 + $0x24] sm:$0xf]
      %v345 = vld [vmem:[%s1 + $0x28] sm:$0xf]
      %v346 = vld [vmem:[%s1 + $0x2c] sm:$0xf]
      %v347 = vld [vmem:[%s1 + $0x30] sm:$0xf]
      %v348 = vld [vmem:[%s1 + $0x34] sm:$0xf]
      %v349 = vld [vmem:[%s1 + $0x38] sm:$0xf]
      %v350 = vld [vmem:[%s1 + $0x3c] sm:$0xf]
      %v351 = vld [vmem:[%s1 + $0x40] sm:$0xf]
      %v352 = vld [vmem:[%s1 + $0x44] sm:$0xf]
      %v353 = vld [vmem:[%s1 + $0x48] sm:$0xf]
      %v354 = vld [vmem:[%s1 + $0x4c] sm:$0xf]
      %v355 = vld [vmem:[%s1 + $0x50] sm:$0xf]
      %v356 = vld [vmem:[%s1 + $0x54] sm:$0xf]
      %v357 = vld [vmem:[%s1 + $0x58] sm:$0xf]
      %v358 = vld [vmem:[%s1 + $0x5c] sm:$0xf]
      %v359 = vld [vmem:[%s1 + $0x60] sm:$0xf]
      %v360 = vld [vmem:[%s1 + $0x64] sm:$0xf]
      %v361 = vld [vmem:[%s1 + $0x68] sm:$0xf]
      %v362 = vld [vmem:[%s2] sm:$0x1]
      %v364 = vperm.slane %v362, 0
      %v474 = vunpack.c.l.b16 %v227
      %v475 = vunpack.c.h.b16 %v227
      %v476 = vunpack.c.l.b16 %v228
      %v477 = vunpack.c.h.b16 %v228
      %v478 = vunpack.c.l.b16 %v229
      %v479 = vunpack.c.h.b16 %v229
      %v480 = vunpack.c.l.b16 %v230
      %v481 = vunpack.c.h.b16 %v230
      %v482 = vunpack.c.l.b16 %v231
      %v483 = vunpack.c.h.b16 %v231
      %v484 = vunpack.c.l.b16 %v232
      %v485 = vunpack.c.h.b16 %v232
      %v486 = vunpack.c.l.b16 %v233
      %v487 = vunpack.c.h.b16 %v233
      %v488 = vunpack.c.l.b16 %v234
      %v489 = vunpack.c.h.b16 %v234
      %v490 = vunpack.c.l.b16 %v235
      %v491 = vunpack.c.h.b16 %v235
      %v492 = vunpack.c.l.b16 %v236
      %v493 = vunpack.c.h.b16 %v236
      %v494 = vunpack.c.l.b16 %v237
      %v495 = vunpack.c.h.b16 %v237
      %v496 = vunpack.c.l.b16 %v238
      %v497 = vunpack.c.h.b16 %v238
      %v498 = vunpack.c.l.b16 %v239
      %v499 = vunpack.c.h.b16 %v239
      %v500 = vunpack.c.l.b16 %v240
      %v501 = vunpack.c.h.b16 %v240
      %v502 = vunpack.c.l.b16 %v241
      %v503 = vunpack.c.h.b16 %v241
      %v504 = vunpack.c.l.b16 %v242
      %v505 = vunpack.c.h.b16 %v242
      %v506 = vunpack.c.l.b16 %v243
      %v507 = vunpack.c.h.b16 %v243
      %v508 = vunpack.c.l.b16 %v244
      %v509 = vunpack.c.h.b16 %v244
      %v510 = vunpack.c.l.b16 %v245
      %v511 = vunpack.c.h.b16 %v245
      %v512 = vunpack.c.l.b16 %v246
      %v513 = vunpack.c.h.b16 %v246
      %v514 = vunpack.c.l.b16 %v247
      %v515 = vunpack.c.h.b16 %v247
      %v516 = vunpack.c.l.b16 %v248
      %v517 = vunpack.c.h.b16 %v248
      %v518 = vunpack.c.l.b16 %v249
      %v519 = vunpack.c.h.b16 %v249
      %v520 = vunpack.c.l.b16 %v250
      %v521 = vunpack.c.h.b16 %v250
      %v522 = vunpack.c.l.b16 %v251
      %v523 = vunpack.c.h.b16 %v251
      %v524 = vunpack.c.l.b16 %v252
      %v525 = vunpack.c.h.b16 %v252
      %v526 = vunpack.c.l.b16 %v253
      %v527 = vunpack.c.h.b16 %v253
      %v528 = vunpack.c.l.b16 %v254
      %v529 = vunpack.c.h.b16 %v254
      %v530 = vunpack.c.l.b16 %v255
      %v531 = vunpack.c.h.b16 %v255
      %v532 = vunpack.c.l.b16 %v256
      %v533 = vunpack.c.h.b16 %v256
      %v534 = vunpack.c.l.b16 %v257
      %v535 = vunpack.c.h.b16 %v257
      %v536 = vunpack.c.l.b16 %v258
      %v537 = vunpack.c.h.b16 %v258
      %v538 = vunpack.c.l.b16 %v259
      %v539 = vunpack.c.h.b16 %v259
      %v540 = vunpack.c.l.b16 %v260
      %v541 = vunpack.c.h.b16 %v260
      %v542 = vunpack.c.l.b16 %v261
      %v543 = vunpack.c.h.b16 %v261
      %v544 = vunpack.c.l.b16 %v262
      %v545 = vunpack.c.h.b16 %v262
      %v546 = vunpack.c.l.b16 %v263
      %v547 = vunpack.c.h.b16 %v263
      %v548 = vunpack.c.l.b16 %v264
      %v549 = vunpack.c.h.b16 %v264
      %v550 = vunpack.c.l.b16 %v265
      %v551 = vunpack.c.h.b16 %v265
      %v552 = vunpack.c.l.b16 %v266
      %v553 = vunpack.c.h.b16 %v266
      %v554 = vunpack.c.l.b16 %v267
      %v555 = vunpack.c.h.b16 %v267
      %v556 = vunpack.c.l.b16 %v268
      %v557 = vunpack.c.h.b16 %v268
      %v558 = vunpack.c.l.b16 %v269
      %v559 = vunpack.c.h.b16 %v269
      %v560 = vunpack.c.l.b16 %v270
      %v561 = vunpack.c.h.b16 %v270
      %v562 = vunpack.c.l.b16 %v271
      %v563 = vunpack.c.h.b16 %v271
      %v564 = vunpack.c.l.b16 %v272
      %v565 = vunpack.c.h.b16 %v272
      %v566 = vunpack.c.l.b16 %v273
      %v567 = vunpack.c.h.b16 %v273
      %v568 = vunpack.c.l.b16 %v274
      %v569 = vunpack.c.h.b16 %v274
      %v570 = vunpack.c.l.b16 %v275
      %v571 = vunpack.c.h.b16 %v275
      %v572 = vunpack.c.l.b16 %v276
      %v573 = vunpack.c.h.b16 %v276
      %v574 = vunpack.c.l.b16 %v277
      %v575 = vunpack.c.h.b16 %v277
      %v576 = vunpack.c.l.b16 %v278
      %v577 = vunpack.c.h.b16 %v278
      %v578 = vunpack.c.l.b16 %v279
      %v579 = vunpack.c.h.b16 %v279
      %v580 = vunpack.c.l.b16 %v280
      %v581 = vunpack.c.h.b16 %v280
      %v582 = vunpack.c.l.b16 %v281
      %v583 = vunpack.c.h.b16 %v281
      %v584 = vunpack.c.l.b16 %v282
      %v585 = vunpack.c.h.b16 %v282
      %v586 = vunpack.c.l.b16 %v283
      %v587 = vunpack.c.h.b16 %v283
      %v588 = vunpack.c.l.b16 %v284
      %v589 = vunpack.c.h.b16 %v284
      %v590 = vunpack.c.l.b16 %v285
      %v591 = vunpack.c.h.b16 %v285
      %v592 = vunpack.c.l.b16 %v286
      %v593 = vunpack.c.h.b16 %v286
      %v594 = vunpack.c.l.b16 %v287
      %v595 = vunpack.c.h.b16 %v287
      %v596 = vunpack.c.l.b16 %v288
      %v597 = vunpack.c.h.b16 %v288
      %v598 = vunpack.c.l.b16 %v289
      %v599 = vunpack.c.h.b16 %v289
      %v600 = vunpack.c.l.b16 %v290
      %v601 = vunpack.c.h.b16 %v290
      %v602 = vunpack.c.l.b16 %v291
      %v603 = vunpack.c.h.b16 %v291
      %v604 = vunpack.c.l.b16 %v292
      %v605 = vunpack.c.h.b16 %v292
      %v606 = vunpack.c.l.b16 %v293
      %v607 = vunpack.c.h.b16 %v293
      %v608 = vunpack.c.l.b16 %v294
      %v609 = vunpack.c.h.b16 %v294
      %v610 = vunpack.c.l.b16 %v295
      %v611 = vunpack.c.h.b16 %v295
      %v612 = vunpack.c.l.b16 %v296
      %v613 = vunpack.c.h.b16 %v296
      %v614 = vunpack.c.l.b16 %v297
      %v615 = vunpack.c.h.b16 %v297
      %v616 = vunpack.c.l.b16 %v298
      %v617 = vunpack.c.h.b16 %v298
      %v618 = vunpack.c.l.b16 %v299
      %v619 = vunpack.c.h.b16 %v299
      %v620 = vunpack.c.l.b16 %v300
      %v621 = vunpack.c.h.b16 %v300
      %v622 = vunpack.c.l.b16 %v301
      %v623 = vunpack.c.h.b16 %v301
      %v624 = vunpack.c.l.b16 %v302
      %v625 = vunpack.c.h.b16 %v302
      %v626 = vunpack.c.l.b16 %v303
      %v627 = vunpack.c.h.b16 %v303
      %v628 = vunpack.c.l.b16 %v304
      %v629 = vunpack.c.h.b16 %v304
      %v630 = vunpack.c.l.b16 %v305
      %v631 = vunpack.c.h.b16 %v305
      %v632 = vunpack.c.l.b16 %v306
      %v633 = vunpack.c.h.b16 %v306
      %v634 = vunpack.c.l.b16 %v307
      %v635 = vunpack.c.h.b16 %v307
      %v636 = vunpack.c.l.b16 %v308
      %v637 = vunpack.c.h.b16 %v308
      %v638 = vunpack.c.l.b16 %v309
      %v639 = vunpack.c.h.b16 %v309
      %v640 = vunpack.c.l.b16 %v310
      %v641 = vunpack.c.h.b16 %v310
      %v642 = vunpack.c.l.b16 %v311
      %v643 = vunpack.c.h.b16 %v311
      %v644 = vunpack.c.l.b16 %v312
      %v645 = vunpack.c.h.b16 %v312
      %v646 = vunpack.c.l.b16 %v313
      %v647 = vunpack.c.h.b16 %v313
      %v648 = vunpack.c.l.b16 %v314
      %v649 = vunpack.c.h.b16 %v314
      %v650 = vunpack.c.l.b16 %v315
      %v651 = vunpack.c.h.b16 %v315
      %v652 = vunpack.c.l.b16 %v316
      %v653 = vunpack.c.h.b16 %v316
      %v654 = vunpack.c.l.b16 %v317
      %v655 = vunpack.c.h.b16 %v317
      %v656 = vunpack.c.l.b16 %v318
      %v657 = vunpack.c.h.b16 %v318
      %v658 = vunpack.c.l.b16 %v319
      %v659 = vunpack.c.h.b16 %v319
      %v660 = vunpack.c.l.b16 %v320
      %v661 = vunpack.c.h.b16 %v320
      %v662 = vunpack.c.l.b16 %v321
      %v663 = vunpack.c.h.b16 %v321
      %v664 = vunpack.c.l.b16 %v322
      %v665 = vunpack.c.h.b16 %v322
      %v666 = vunpack.c.l.b16 %v323
      %v667 = vunpack.c.h.b16 %v323
      %v668 = vunpack.c.l.b16 %v324
      %v669 = vunpack.c.h.b16 %v324
      %v670 = vunpack.c.l.b16 %v325
      %v671 = vunpack.c.h.b16 %v325
      %v672 = vunpack.c.l.b16 %v326
      %v673 = vunpack.c.h.b16 %v326
      %v674 = vunpack.c.l.b16 %v327
      %v675 = vunpack.c.h.b16 %v327
      %v676 = vunpack.c.l.b16 %v328
      %v677 = vunpack.c.h.b16 %v328
      %v678 = vunpack.c.l.b16 %v329
      %v679 = vunpack.c.h.b16 %v329
      %v680 = vunpack.c.l.b16 %v330
      %v681 = vunpack.c.h.b16 %v330
      %v682 = vunpack.c.l.b16 %v331
      %v683 = vunpack.c.h.b16 %v331
      %v684 = vunpack.c.l.b16 %v332
      %v685 = vunpack.c.h.b16 %v332
      %v686 = vunpack.c.l.b16 %v333
      %v687 = vunpack.c.h.b16 %v333
      %v688 = vunpack.c.l.b16 %v334
      %v689 = vunpack.c.h.b16 %v334
      %v690 = vpack.c.b16 %v476, %v474
      %v691 = vpack.c.b16 %v477, %v475
      %v692 = vpack.c.b16 %v480, %v478
      %v693 = vpack.c.b16 %v481, %v479
      %v694 = vpack.c.b16 %v484, %v482
      %v695 = vpack.c.b16 %v485, %v483
      %v696 = vpack.c.b16 %v488, %v486
      %v697 = vpack.c.b16 %v489, %v487
      %v698 = vpack.c.b16 %v492, %v490
      %v699 = vpack.c.b16 %v493, %v491
      %v700 = vpack.c.b16 %v496, %v494
      %v701 = vpack.c.b16 %v497, %v495
      %v702 = vpack.c.b16 %v500, %v498
      %v703 = vpack.c.b16 %v501, %v499
      %v704 = vpack.c.b16 %v504, %v502
      %v705 = vpack.c.b16 %v505, %v503
      %v706 = vpack.c.b16 %v508, %v506
      %v707 = vpack.c.b16 %v509, %v507
      %v708 = vpack.c.b16 %v512, %v510
      %v709 = vpack.c.b16 %v513, %v511
      %v710 = vpack.c.b16 %v516, %v514
      %v711 = vpack.c.b16 %v517, %v515
      %v712 = vpack.c.b16 %v520, %v518
      %v713 = vpack.c.b16 %v521, %v519
      %v714 = vpack.c.b16 %v524, %v522
      %v715 = vpack.c.b16 %v525, %v523
      %v716 = vpack.c.b16 %v528, %v526
      %v717 = vpack.c.b16 %v529, %v527
      %v718 = vpack.c.b16 %v532, %v530
      %v719 = vpack.c.b16 %v533, %v531
      %v720 = vpack.c.b16 %v536, %v534
      %v721 = vpack.c.b16 %v537, %v535
      %v722 = vpack.c.b16 %v540, %v538
      %v723 = vpack.c.b16 %v541, %v539
      %v724 = vpack.c.b16 %v544, %v542
      %v725 = vpack.c.b16 %v545, %v543
      %v726 = vpack.c.b16 %v548, %v546
      %v727 = vpack.c.b16 %v549, %v547
      %v728 = vpack.c.b16 %v552, %v550
      %v729 = vpack.c.b16 %v553, %v551
      %v730 = vpack.c.b16 %v556, %v554
      %v731 = vpack.c.b16 %v557, %v555
      %v732 = vpack.c.b16 %v560, %v558
      %v733 = vpack.c.b16 %v561, %v559
      %v734 = vpack.c.b16 %v564, %v562
      %v735 = vpack.c.b16 %v565, %v563
      %v736 = vpack.c.b16 %v568, %v566
      %v737 = vpack.c.b16 %v569, %v567
      %v738 = vpack.c.b16 %v572, %v570
      %v739 = vpack.c.b16 %v573, %v571
      %v740 = vpack.c.b16 %v576, %v574
      %v741 = vpack.c.b16 %v577, %v575
      %v742 = vpack.c.b16 %v580, %v578
      %v743 = vpack.c.b16 %v581, %v579
      %v744 = vpack.c.b16 %v584, %v582
      %v745 = vpack.c.b16 %v585, %v583
      %v746 = vpack.c.b16 %v588, %v586
      %v747 = vpack.c.b16 %v589, %v587
      %v748 = vpack.c.b16 %v592, %v590
      %v749 = vpack.c.b16 %v593, %v591
      %v750 = vpack.c.b16 %v596, %v594
      %v751 = vpack.c.b16 %v597, %v595
      %v752 = vpack.c.b16 %v600, %v598
      %v753 = vpack.c.b16 %v601, %v599
      %v754 = vpack.c.b16 %v604, %v602
      %v755 = vpack.c.b16 %v605, %v603
      %v756 = vpack.c.b16 %v608, %v606
      %v757 = vpack.c.b16 %v609, %v607
      %v758 = vpack.c.b16 %v612, %v610
      %v759 = vpack.c.b16 %v613, %v611
      %v760 = vpack.c.b16 %v616, %v614
      %v761 = vpack.c.b16 %v617, %v615
      %v762 = vpack.c.b16 %v620, %v618
      %v763 = vpack.c.b16 %v621, %v619
      %v764 = vpack.c.b16 %v624, %v622
      %v765 = vpack.c.b16 %v625, %v623
      %v766 = vpack.c.b16 %v628, %v626
      %v767 = vpack.c.b16 %v629, %v627
      %v768 = vpack.c.b16 %v632, %v630
      %v769 = vpack.c.b16 %v633, %v631
      %v770 = vpack.c.b16 %v636, %v634
      %v771 = vpack.c.b16 %v637, %v635
      %v772 = vpack.c.b16 %v640, %v638
      %v773 = vpack.c.b16 %v641, %v639
      %v774 = vpack.c.b16 %v644, %v642
      %v775 = vpack.c.b16 %v645, %v643
      %v776 = vpack.c.b16 %v648, %v646
      %v777 = vpack.c.b16 %v649, %v647
      %v778 = vpack.c.b16 %v652, %v650
      %v779 = vpack.c.b16 %v653, %v651
      %v780 = vpack.c.b16 %v656, %v654
      %v781 = vpack.c.b16 %v657, %v655
      %v782 = vpack.c.b16 %v660, %v658
      %v783 = vpack.c.b16 %v661, %v659
      %v784 = vpack.c.b16 %v664, %v662
      %v785 = vpack.c.b16 %v665, %v663
      %v786 = vpack.c.b16 %v668, %v666
      %v787 = vpack.c.b16 %v669, %v667
      %v788 = vpack.c.b16 %v672, %v670
      %v789 = vpack.c.b16 %v673, %v671
      %v790 = vpack.c.b16 %v676, %v674
      %v791 = vpack.c.b16 %v677, %v675
      %v792 = vpack.c.b16 %v680, %v678
      %v793 = vpack.c.b16 %v681, %v679
      %v794 = vpack.c.b16 %v684, %v682
      %v795 = vpack.c.b16 %v685, %v683
      %v796 = vpack.c.b16 %v688, %v686
      %v797 = vpack.c.b16 %v689, %v687
      %v879 = vunpack.c.l.b16 %v335
      %v880 = vunpack.c.l.b16 %v336
      %v881 = vunpack.c.l.b16 %v337
      %v882 = vunpack.c.l.b16 %v338
      %v883 = vunpack.c.l.b16 %v339
      %v884 = vunpack.c.l.b16 %v340
      %v885 = vunpack.c.l.b16 %v341
      %v886 = vunpack.c.l.b16 %v342
      %v887 = vunpack.c.l.b16 %v343
      %v888 = vunpack.c.l.b16 %v344
      %v889 = vunpack.c.l.b16 %v345
      %v890 = vunpack.c.l.b16 %v346
      %v891 = vunpack.c.l.b16 %v347
      %v892 = vunpack.c.l.b16 %v348
      %v893 = vunpack.c.l.b16 %v349
      %v894 = vunpack.c.l.b16 %v350
      %v895 = vunpack.c.l.b16 %v351
      %v896 = vunpack.c.l.b16 %v352
      %v897 = vunpack.c.l.b16 %v353
      %v898 = vunpack.c.l.b16 %v354
      %v899 = vunpack.c.l.b16 %v355
      %v900 = vunpack.c.l.b16 %v356
      %v901 = vunpack.c.l.b16 %v357
      %v902 = vunpack.c.l.b16 %v358
      %v903 = vunpack.c.l.b16 %v359
      %v904 = vunpack.c.l.b16 %v360
      %v905 = vunpack.c.l.b16 %v361
      %v906 = vpack.c.b16 %v880, %v879
      %v907 = vpack.c.b16 %v882, %v881
      %v908 = vpack.c.b16 %v884, %v883
      %v909 = vpack.c.b16 %v886, %v885
      %v910 = vpack.c.b16 %v888, %v887
      %v911 = vpack.c.b16 %v890, %v889
      %v912 = vpack.c.b16 %v892, %v891
      %v913 = vpack.c.b16 %v894, %v893
      %v914 = vpack.c.b16 %v896, %v895
      %v915 = vpack.c.b16 %v898, %v897
      %v916 = vpack.c.b16 %v900, %v899
      %v917 = vpack.c.b16 %v902, %v901
      %v918 = vpack.c.b16 %v904, %v903
      %v919 = vpack.c.b16 %v905, %v905
      %vm933 = vcmask 719872
      %v935 = vsel %vm933, %v691, 0
      %v938 = vsel %vm933, %v693, 0
      %v941 = vsel %vm933, %v695, 0
      %v944 = vsel %vm933, %v697, 0
      %v947 = vsel %vm933, %v699, 0
      %v950 = vsel %vm933, %v701, 0
      %v953 = vsel %vm933, %v703, 0
      %v956 = vsel %vm933, %v705, 0
      %v959 = vsel %vm933, %v707, 0
      %v962 = vsel %vm933, %v709, 0
      %v965 = vsel %vm933, %v711, 0
      %v968 = vsel %vm933, %v713, 0
      %v971 = vsel %vm933, %v715, 0
      %v974 = vsel %vm933, %v717, 0
      %v977 = vsel %vm933, %v719, 0
      %v980 = vsel %vm933, %v721, 0
      %v983 = vsel %vm933, %v723, 0
      %v986 = vsel %vm933, %v725, 0
      %v989 = vsel %vm933, %v727, 0
      %v992 = vsel %vm933, %v729, 0
      %v995 = vsel %vm933, %v731, 0
      %v998 = vsel %vm933, %v733, 0
      %v1001 = vsel %vm933, %v735, 0
      %v1004 = vsel %vm933, %v737, 0
      %v1007 = vsel %vm933, %v739, 0
      %v1010 = vsel %vm933, %v741, 0
      %v1013 = vsel %vm933, %v743, 0
      %v1016 = vsel %vm933, %v745, 0
      %v1019 = vsel %vm933, %v747, 0
      %v1022 = vsel %vm933, %v749, 0
      %v1025 = vsel %vm933, %v751, 0
      %v1028 = vsel %vm933, %v753, 0
      %v1031 = vsel %vm933, %v755, 0
      %v1034 = vsel %vm933, %v757, 0
      %v1037 = vsel %vm933, %v759, 0
      %v1040 = vsel %vm933, %v761, 0
      %v1043 = vsel %vm933, %v763, 0
      %v1046 = vsel %vm933, %v765, 0
      %v1049 = vsel %vm933, %v767, 0
      %v1052 = vsel %vm933, %v769, 0
      %v1055 = vsel %vm933, %v771, 0
      %v1058 = vsel %vm933, %v773, 0
      %v1061 = vsel %vm933, %v775, 0
      %v1064 = vsel %vm933, %v777, 0
      %v1067 = vsel %vm933, %v779, 0
      %v1070 = vsel %vm933, %v781, 0
      %v1073 = vsel %vm933, %v783, 0
      %v1076 = vsel %vm933, %v785, 0
      %v1079 = vsel %vm933, %v787, 0
      %v1082 = vsel %vm933, %v789, 0
      %v1085 = vsel %vm933, %v791, 0
      %v1088 = vsel %vm933, %v793, 0
      %v1091 = vsel %vm933, %v795, 0
      %v1094 = vsel %vm933, %v797, 0
      %vm1096 = vcmask 1043456
      %v1098 = vsel %vm1096, %v919, 0
      %1100 = vmatpush.bf16.msra.mxu0 %v913
      %1101 = vmatpush.bf16.msra.mxu0 %v912
      %1102 = vmatpush.bf16.msra.mxu0 %v911
      %1103 = vmatpush.bf16.msra.mxu0 %v910
      %1104 = vmatpush.bf16.msra.mxu0 %v909
      %1105 = vmatpush.bf16.msra.mxu0 %v908
      %1106 = vmatpush.bf16.msra.mxu0 %v907
      %1107 = vmatpush.bf16.msra.mxu0 %v906
      %1108 = vmatmul.bf16.gmra.mxu0 %v690
      %v1109 = vpop.f32.mrf.mxu0
      %v1110 = vadd.f32 %v364, %v1109
      %v1111 = vpop.f32.mrf.mxu0
      %v1112 = vadd.f32 %v364, %v1111
      %1113 = vmatmul.bf16.gmra.mxu0 %v692
      %v1114 = vpop.f32.mrf.mxu0
      %v1115 = vadd.f32 %v364, %v1114
      %v1116 = vpop.f32.mrf.mxu0
      %v1117 = vadd.f32 %v364, %v1116
      %1118 = vmatmul.bf16.gmra.mxu0 %v694
      %v1119 = vpop.f32.mrf.mxu0
      %v1120 = vadd.f32 %v364, %v1119
      %v1121 = vpop.f32.mrf.mxu0
      %v1122 = vadd.f32 %v364, %v1121
      %1123 = vmatmul.bf16.gmra.mxu0 %v696
      %v1124 = vpop.f32.mrf.mxu0
      %v1125 = vadd.f32 %v364, %v1124
      %v1126 = vpop.f32.mrf.mxu0
      %v1127 = vadd.f32 %v364, %v1126
      %1128 = vmatmul.bf16.gmra.mxu0 %v698
      %v1129 = vpop.f32.mrf.mxu0
      %v1130 = vadd.f32 %v364, %v1129
      %v1131 = vpop.f32.mrf.mxu0
      %v1132 = vadd.f32 %v364, %v1131
      %1133 = vmatmul.bf16.gmra.mxu0 %v700
      %v1134 = vpop.f32.mrf.mxu0
      %v1135 = vadd.f32 %v364, %v1134
      %v1136 = vpop.f32.mrf.mxu0
      %v1137 = vadd.f32 %v364, %v1136
      %1138 = vmatmul.bf16.gmra.mxu0 %v702
      %v1139 = vpop.f32.mrf.mxu0
      %v1140 = vadd.f32 %v364, %v1139
      %v1141 = vpop.f32.mrf.mxu0
      %v1142 = vadd.f32 %v364, %v1141
      %1143 = vmatmul.bf16.gmra.mxu0 %v704
      %v1144 = vpop.f32.mrf.mxu0
      %v1145 = vadd.f32 %v364, %v1144
      %v1146 = vpop.f32.mrf.mxu0
      %v1147 = vadd.f32 %v364, %v1146
      %1148 = vmatmul.bf16.gmra.mxu0 %v706
      %v1149 = vpop.f32.mrf.mxu0
      %v1150 = vadd.f32 %v364, %v1149
      %v1151 = vpop.f32.mrf.mxu0
      %v1152 = vadd.f32 %v364, %v1151
      %1153 = vmatmul.bf16.gmra.mxu0 %v708
      %v1154 = vpop.f32.mrf.mxu0
      %v1155 = vadd.f32 %v364, %v1154
      %v1156 = vpop.f32.mrf.mxu0
      %v1157 = vadd.f32 %v364, %v1156
      %1158 = vmatmul.bf16.gmra.mxu0 %v710
      %v1159 = vpop.f32.mrf.mxu0
      %v1160 = vadd.f32 %v364, %v1159
      %v1161 = vpop.f32.mrf.mxu0
      %v1162 = vadd.f32 %v364, %v1161
      %1163 = vmatmul.bf16.gmra.mxu0 %v712
      %v1164 = vpop.f32.mrf.mxu0
      %v1165 = vadd.f32 %v364, %v1164
      %v1166 = vpop.f32.mrf.mxu0
      %v1167 = vadd.f32 %v364, %v1166
      %1168 = vmatmul.bf16.gmra.mxu0 %v714
      %v1169 = vpop.f32.mrf.mxu0
      %v1170 = vadd.f32 %v364, %v1169
      %v1171 = vpop.f32.mrf.mxu0
      %v1172 = vadd.f32 %v364, %v1171
      %1173 = vmatmul.bf16.gmra.mxu0 %v716
      %v1174 = vpop.f32.mrf.mxu0
      %v1175 = vadd.f32 %v364, %v1174
      %v1176 = vpop.f32.mrf.mxu0
      %v1177 = vadd.f32 %v364, %v1176
      %1178 = vmatmul.bf16.gmra.mxu0 %v718
      %v1179 = vpop.f32.mrf.mxu0
      %v1180 = vadd.f32 %v364, %v1179
      %v1181 = vpop.f32.mrf.mxu0
      %v1182 = vadd.f32 %v364, %v1181
      %1183 = vmatmul.bf16.gmra.mxu0 %v720
      %v1184 = vpop.f32.mrf.mxu0
      %v1185 = vadd.f32 %v364, %v1184
      %v1186 = vpop.f32.mrf.mxu0
      %v1187 = vadd.f32 %v364, %v1186
      %1188 = vmatmul.bf16.gmra.mxu0 %v722
      %v1189 = vpop.f32.mrf.mxu0
      %v1190 = vadd.f32 %v364, %v1189
      %v1191 = vpop.f32.mrf.mxu0
      %v1192 = vadd.f32 %v364, %v1191
      %1193 = vmatmul.bf16.gmra.mxu0 %v724
      %v1194 = vpop.f32.mrf.mxu0
      %v1195 = vadd.f32 %v364, %v1194
      %v1196 = vpop.f32.mrf.mxu0
      %v1197 = vadd.f32 %v364, %v1196
      %1198 = vmatmul.bf16.gmra.mxu0 %v726
      %v1199 = vpop.f32.mrf.mxu0
      %v1200 = vadd.f32 %v364, %v1199
      %v1201 = vpop.f32.mrf.mxu0
      %v1202 = vadd.f32 %v364, %v1201
      %1203 = vmatmul.bf16.gmra.mxu0 %v728
      %v1204 = vpop.f32.mrf.mxu0
      %v1205 = vadd.f32 %v364, %v1204
      %v1206 = vpop.f32.mrf.mxu0
      %v1207 = vadd.f32 %v364, %v1206
      %1208 = vmatmul.bf16.gmra.mxu0 %v730
      %v1209 = vpop.f32.mrf.mxu0
      %v1210 = vadd.f32 %v364, %v1209
      %v1211 = vpop.f32.mrf.mxu0
      %v1212 = vadd.f32 %v364, %v1211
      %1213 = vmatmul.bf16.gmra.mxu0 %v732
      %v1214 = vpop.f32.mrf.mxu0
      %v1215 = vadd.f32 %v364, %v1214
      %v1216 = vpop.f32.mrf.mxu0
      %v1217 = vadd.f32 %v364, %v1216
      %1218 = vmatmul.bf16.gmra.mxu0 %v734
      %v1219 = vpop.f32.mrf.mxu0
      %v1220 = vadd.f32 %v364, %v1219
      %v1221 = vpop.f32.mrf.mxu0
      %v1222 = vadd.f32 %v364, %v1221
      %1223 = vmatmul.bf16.gmra.mxu0 %v736
      %v1224 = vpop.f32.mrf.mxu0
      %v1225 = vadd.f32 %v364, %v1224
      %v1226 = vpop.f32.mrf.mxu0
      %v1227 = vadd.f32 %v364, %v1226
      %1228 = vmatmul.bf16.gmra.mxu0 %v738
      %v1229 = vpop.f32.mrf.mxu0
      %v1230 = vadd.f32 %v364, %v1229
      %v1231 = vpop.f32.mrf.mxu0
      %v1232 = vadd.f32 %v364, %v1231
      %1233 = vmatmul.bf16.gmra.mxu0 %v740
      %v1234 = vpop.f32.mrf.mxu0
      %v1235 = vadd.f32 %v364, %v1234
      %v1236 = vpop.f32.mrf.mxu0
      %v1237 = vadd.f32 %v364, %v1236
      %1238 = vmatmul.bf16.gmra.mxu0 %v742
      %v1239 = vpop.f32.mrf.mxu0
      %v1240 = vadd.f32 %v364, %v1239
      %v1241 = vpop.f32.mrf.mxu0
      %v1242 = vadd.f32 %v364, %v1241
      %1243 = vmatmul.bf16.gmra.mxu0 %v744
      %v1244 = vpop.f32.mrf.mxu0
      %v1245 = vadd.f32 %v364, %v1244
      %v1246 = vpop.f32.mrf.mxu0
      %v1247 = vadd.f32 %v364, %v1246
      %1248 = vmatmul.bf16.gmra.mxu0 %v746
      %v1249 = vpop.f32.mrf.mxu0
      %v1250 = vadd.f32 %v364, %v1249
      %v1251 = vpop.f32.mrf.mxu0
      %v1252 = vadd.f32 %v364, %v1251
      %1253 = vmatmul.bf16.gmra.mxu0 %v748
      %v1254 = vpop.f32.mrf.mxu0
      %v1255 = vadd.f32 %v364, %v1254
      %v1256 = vpop.f32.mrf.mxu0
      %v1257 = vadd.f32 %v364, %v1256
      %1258 = vmatmul.bf16.gmra.mxu0 %v750
      %v1259 = vpop.f32.mrf.mxu0
      %v1260 = vadd.f32 %v364, %v1259
      %v1261 = vpop.f32.mrf.mxu0
      %v1262 = vadd.f32 %v364, %v1261
      %1263 = vmatmul.bf16.gmra.mxu0 %v752
      %v1264 = vpop.f32.mrf.mxu0
      %v1265 = vadd.f32 %v364, %v1264
      %v1266 = vpop.f32.mrf.mxu0
      %v1267 = vadd.f32 %v364, %v1266
      %1268 = vmatmul.bf16.gmra.mxu0 %v754
      %v1269 = vpop.f32.mrf.mxu0
      %v1270 = vadd.f32 %v364, %v1269
      %v1271 = vpop.f32.mrf.mxu0
      %v1272 = vadd.f32 %v364, %v1271
      %1273 = vmatmul.bf16.gmra.mxu0 %v756
      %v1274 = vpop.f32.mrf.mxu0
      %v1275 = vadd.f32 %v364, %v1274
      %v1276 = vpop.f32.mrf.mxu0
      %v1277 = vadd.f32 %v364, %v1276
      %1278 = vmatmul.bf16.gmra.mxu0 %v758
      %v1279 = vpop.f32.mrf.mxu0
      %v1280 = vadd.f32 %v364, %v1279
      %v1281 = vpop.f32.mrf.mxu0
      %v1282 = vadd.f32 %v364, %v1281
      %1283 = vmatmul.bf16.gmra.mxu0 %v760
      %v1284 = vpop.f32.mrf.mxu0
      %v1285 = vadd.f32 %v364, %v1284
      %v1286 = vpop.f32.mrf.mxu0
      %v1287 = vadd.f32 %v364, %v1286
      %1288 = vmatmul.bf16.gmra.mxu0 %v762
      %v1289 = vpop.f32.mrf.mxu0
      %v1290 = vadd.f32 %v364, %v1289
      %v1291 = vpop.f32.mrf.mxu0
      %v1292 = vadd.f32 %v364, %v1291
      %1293 = vmatmul.bf16.gmra.mxu0 %v764
      %v1294 = vpop.f32.mrf.mxu0
      %v1295 = vadd.f32 %v364, %v1294
      %v1296 = vpop.f32.mrf.mxu0
      %v1297 = vadd.f32 %v364, %v1296
      %1298 = vmatmul.bf16.gmra.mxu0 %v766
      %v1299 = vpop.f32.mrf.mxu0
      %v1300 = vadd.f32 %v364, %v1299
      %v1301 = vpop.f32.mrf.mxu0
      %v1302 = vadd.f32 %v364, %v1301
      %1303 = vmatmul.bf16.gmra.mxu0 %v768
      %v1304 = vpop.f32.mrf.mxu0
      %v1305 = vadd.f32 %v364, %v1304
      %v1306 = vpop.f32.mrf.mxu0
      %v1307 = vadd.f32 %v364, %v1306
      %1308 = vmatmul.bf16.gmra.mxu0 %v770
      %v1309 = vpop.f32.mrf.mxu0
      %v1310 = vadd.f32 %v364, %v1309
      %v1311 = vpop.f32.mrf.mxu0
      %v1312 = vadd.f32 %v364, %v1311
      %1313 = vmatmul.bf16.gmra.mxu0 %v772
      %v1314 = vpop.f32.mrf.mxu0
      %v1315 = vadd.f32 %v364, %v1314
      %v1316 = vpop.f32.mrf.mxu0
      %v1317 = vadd.f32 %v364, %v1316
      %1318 = vmatmul.bf16.gmra.mxu0 %v774
      %v1319 = vpop.f32.mrf.mxu0
      %v1320 = vadd.f32 %v364, %v1319
      %v1321 = vpop.f32.mrf.mxu0
      %v1322 = vadd.f32 %v364, %v1321
      %1323 = vmatmul.bf16.gmra.mxu0 %v776
      %v1324 = vpop.f32.mrf.mxu0
      %v1325 = vadd.f32 %v364, %v1324
      %v1326 = vpop.f32.mrf.mxu0
      %v1327 = vadd.f32 %v364, %v1326
      %1328 = vmatmul.bf16.gmra.mxu0 %v778
      %v1329 = vpop.f32.mrf.mxu0
      %v1330 = vadd.f32 %v364, %v1329
      %v1331 = vpop.f32.mrf.mxu0
      %v1332 = vadd.f32 %v364, %v1331
      %1333 = vmatmul.bf16.gmra.mxu0 %v780
      %v1334 = vpop.f32.mrf.mxu0
      %v1335 = vadd.f32 %v364, %v1334
      %v1336 = vpop.f32.mrf.mxu0
      %v1337 = vadd.f32 %v364, %v1336
      %1338 = vmatmul.bf16.gmra.mxu0 %v782
      %v1339 = vpop.f32.mrf.mxu0
      %v1340 = vadd.f32 %v364, %v1339
      %v1341 = vpop.f32.mrf.mxu0
      %v1342 = vadd.f32 %v364, %v1341
      %1343 = vmatmul.bf16.gmra.mxu0 %v784
      %v1344 = vpop.f32.mrf.mxu0
      %v1345 = vadd.f32 %v364, %v1344
      %v1346 = vpop.f32.mrf.mxu0
      %v1347 = vadd.f32 %v364, %v1346
      %1348 = vmatmul.bf16.gmra.mxu0 %v786
      %v1349 = vpop.f32.mrf.mxu0
      %v1350 = vadd.f32 %v364, %v1349
      %v1351 = vpop.f32.mrf.mxu0
      %v1352 = vadd.f32 %v364, %v1351
      %1353 = vmatmul.bf16.gmra.mxu0 %v788
      %v1354 = vpop.f32.mrf.mxu0
      %v1355 = vadd.f32 %v364, %v1354
      %v1356 = vpop.f32.mrf.mxu0
      %v1357 = vadd.f32 %v364, %v1356
      %1358 = vmatmul.bf16.gmra.mxu0 %v790
      %v1359 = vpop.f32.mrf.mxu0
      %v1360 = vadd.f32 %v364, %v1359
      %v1361 = vpop.f32.mrf.mxu0
      %v1362 = vadd.f32 %v364, %v1361
      %1363 = vmatmul.bf16.gmra.mxu0 %v792
      %v1364 = vpop.f32.mrf.mxu0
      %v1365 = vadd.f32 %v364, %v1364
      %v1366 = vpop.f32.mrf.mxu0
      %v1367 = vadd.f32 %v364, %v1366
      %1368 = vmatmul.bf16.gmra.mxu0 %v794
      %v1369 = vpop.f32.mrf.mxu0
      %v1370 = vadd.f32 %v364, %v1369
      %v1371 = vpop.f32.mrf.mxu0
      %v1372 = vadd.f32 %v364, %v1371
      %1373 = vmatmul.bf16.gmra.mxu0 %v796
      %v1374 = vpop.f32.mrf.mxu0
      %v1375 = vadd.f32 %v364, %v1374
      %v1376 = vpop.f32.mrf.mxu0
      %v1377 = vadd.f32 %v364, %v1376
      %1378 = vdwg.mxu0
      %1379 = vmatpush.bf16.msra.mxu0 0
      %1380 = vmatpush.bf16.msra.mxu0 0
      %1381 = vmatpush.bf16.msra.mxu0 %v1098
      %1382 = vmatpush.bf16.msra.mxu0 %v918
      %1383 = vmatpush.bf16.msra.mxu0 %v917
      %1384 = vmatpush.bf16.msra.mxu0 %v916
      %1385 = vmatpush.bf16.msra.mxu0 %v915
      %1386 = vmatpush.bf16.msra.mxu0 %v914
      %1387 = vmatmul.bf16.gmra.mxu0 %v935
      %v1388 = vpop.f32.mrf.mxu0
      %v1389 = vadd.f32 %v1110, %v1388
      %v1390 = vpop.f32.mrf.mxu0
      %v1391 = vadd.f32 %v1112, %v1390
      %1392 = vmatmul.bf16.gmra.mxu0 %v938
      %v1393 = vpop.f32.mrf.mxu0
      %v1394 = vadd.f32 %v1115, %v1393
      %v1395 = vpop.f32.mrf.mxu0
      %v1396 = vadd.f32 %v1117, %v1395
      %1397 = vmatmul.bf16.gmra.mxu0 %v941
      %v1398 = vpop.f32.mrf.mxu0
      %v1399 = vadd.f32 %v1120, %v1398
      %v1400 = vpop.f32.mrf.mxu0
      %v1401 = vadd.f32 %v1122, %v1400
      %1402 = vmatmul.bf16.gmra.mxu0 %v944
      %v1403 = vpop.f32.mrf.mxu0
      %v1404 = vadd.f32 %v1125, %v1403
      %v1405 = vpop.f32.mrf.mxu0
      %v1406 = vadd.f32 %v1127, %v1405
      %1407 = vmatmul.bf16.gmra.mxu0 %v947
      %v1408 = vpop.f32.mrf.mxu0
      %v1409 = vadd.f32 %v1130, %v1408
      %v1410 = vpop.f32.mrf.mxu0
      %v1411 = vadd.f32 %v1132, %v1410
      %1412 = vmatmul.bf16.gmra.mxu0 %v950
      %v1413 = vpop.f32.mrf.mxu0
      %v1414 = vadd.f32 %v1135, %v1413
      %v1415 = vpop.f32.mrf.mxu0
      %v1416 = vadd.f32 %v1137, %v1415
      %1417 = vmatmul.bf16.gmra.mxu0 %v953
      %v1418 = vpop.f32.mrf.mxu0
      %v1419 = vadd.f32 %v1140, %v1418
      %v1420 = vpop.f32.mrf.mxu0
      %v1421 = vadd.f32 %v1142, %v1420
      %1422 = vmatmul.bf16.gmra.mxu0 %v956
      %v1423 = vpop.f32.mrf.mxu0
      %v1424 = vadd.f32 %v1145, %v1423
      %v1425 = vpop.f32.mrf.mxu0
      %v1426 = vadd.f32 %v1147, %v1425
      %1427 = vmatmul.bf16.gmra.mxu0 %v959
      %v1428 = vpop.f32.mrf.mxu0
      %v1429 = vadd.f32 %v1150, %v1428
      %v1430 = vpop.f32.mrf.mxu0
      %v1431 = vadd.f32 %v1152, %v1430
      %1432 = vmatmul.bf16.gmra.mxu0 %v962
      %v1433 = vpop.f32.mrf.mxu0
      %v1434 = vadd.f32 %v1155, %v1433
      %v1435 = vpop.f32.mrf.mxu0
      %v1436 = vadd.f32 %v1157, %v1435
      %1437 = vmatmul.bf16.gmra.mxu0 %v965
      %v1438 = vpop.f32.mrf.mxu0
      %v1439 = vadd.f32 %v1160, %v1438
      %v1440 = vpop.f32.mrf.mxu0
      %v1441 = vadd.f32 %v1162, %v1440
      %1442 = vmatmul.bf16.gmra.mxu0 %v968
      %v1443 = vpop.f32.mrf.mxu0
      %v1444 = vadd.f32 %v1165, %v1443
      %v1445 = vpop.f32.mrf.mxu0
      %v1446 = vadd.f32 %v1167, %v1445
      %1447 = vmatmul.bf16.gmra.mxu0 %v971
      %v1448 = vpop.f32.mrf.mxu0
      %v1449 = vadd.f32 %v1170, %v1448
      %v1450 = vpop.f32.mrf.mxu0
      %v1451 = vadd.f32 %v1172, %v1450
      %1452 = vmatmul.bf16.gmra.mxu0 %v974
      %v1453 = vpop.f32.mrf.mxu0
      %v1454 = vadd.f32 %v1175, %v1453
      %v1455 = vpop.f32.mrf.mxu0
      %v1456 = vadd.f32 %v1177, %v1455
      %1457 = vmatmul.bf16.gmra.mxu0 %v977
      %v1458 = vpop.f32.mrf.mxu0
      %v1459 = vadd.f32 %v1180, %v1458
      %v1460 = vpop.f32.mrf.mxu0
      %v1461 = vadd.f32 %v1182, %v1460
      %1462 = vmatmul.bf16.gmra.mxu0 %v980
      %v1463 = vpop.f32.mrf.mxu0
      %v1464 = vadd.f32 %v1185, %v1463
      %v1465 = vpop.f32.mrf.mxu0
      %v1466 = vadd.f32 %v1187, %v1465
      %1467 = vmatmul.bf16.gmra.mxu0 %v983
      %v1468 = vpop.f32.mrf.mxu0
      %v1469 = vadd.f32 %v1190, %v1468
      %v1470 = vpop.f32.mrf.mxu0
      %v1471 = vadd.f32 %v1192, %v1470
      %1472 = vmatmul.bf16.gmra.mxu0 %v986
      %v1473 = vpop.f32.mrf.mxu0
      %v1474 = vadd.f32 %v1195, %v1473
      %v1475 = vpop.f32.mrf.mxu0
      %v1476 = vadd.f32 %v1197, %v1475
      %1477 = vmatmul.bf16.gmra.mxu0 %v989
      %v1478 = vpop.f32.mrf.mxu0
      %v1479 = vadd.f32 %v1200, %v1478
      %v1480 = vpop.f32.mrf.mxu0
      %v1481 = vadd.f32 %v1202, %v1480
      %1482 = vmatmul.bf16.gmra.mxu0 %v992
      %v1483 = vpop.f32.mrf.mxu0
      %v1484 = vadd.f32 %v1205, %v1483
      %v1485 = vpop.f32.mrf.mxu0
      %v1486 = vadd.f32 %v1207, %v1485
      %1487 = vmatmul.bf16.gmra.mxu0 %v995
      %v1488 = vpop.f32.mrf.mxu0
      %v1489 = vadd.f32 %v1210, %v1488
      %v1490 = vpop.f32.mrf.mxu0
      %v1491 = vadd.f32 %v1212, %v1490
      %1492 = vmatmul.bf16.gmra.mxu0 %v998
      %v1493 = vpop.f32.mrf.mxu0
      %v1494 = vadd.f32 %v1215, %v1493
      %v1495 = vpop.f32.mrf.mxu0
      %v1496 = vadd.f32 %v1217, %v1495
      %1497 = vmatmul.bf16.gmra.mxu0 %v1001
      %v1498 = vpop.f32.mrf.mxu0
      %v1499 = vadd.f32 %v1220, %v1498
      %v1500 = vpop.f32.mrf.mxu0
      %v1501 = vadd.f32 %v1222, %v1500
      %1502 = vmatmul.bf16.gmra.mxu0 %v1004
      %v1503 = vpop.f32.mrf.mxu0
      %v1504 = vadd.f32 %v1225, %v1503
      %v1505 = vpop.f32.mrf.mxu0
      %v1506 = vadd.f32 %v1227, %v1505
      %1507 = vmatmul.bf16.gmra.mxu0 %v1007
      %v1508 = vpop.f32.mrf.mxu0
      %v1509 = vadd.f32 %v1230, %v1508
      %v1510 = vpop.f32.mrf.mxu0
      %v1511 = vadd.f32 %v1232, %v1510
      %1512 = vmatmul.bf16.gmra.mxu0 %v1010
      %v1513 = vpop.f32.mrf.mxu0
      %v1514 = vadd.f32 %v1235, %v1513
      %v1515 = vpop.f32.mrf.mxu0
      %v1516 = vadd.f32 %v1237, %v1515
      %1517 = vmatmul.bf16.gmra.mxu0 %v1013
      %v1518 = vpop.f32.mrf.mxu0
      %v1519 = vadd.f32 %v1240, %v1518
      %v1520 = vpop.f32.mrf.mxu0
      %v1521 = vadd.f32 %v1242, %v1520
      %1522 = vmatmul.bf16.gmra.mxu0 %v1016
      %v1523 = vpop.f32.mrf.mxu0
      %v1524 = vadd.f32 %v1245, %v1523
      %v1525 = vpop.f32.mrf.mxu0
      %v1526 = vadd.f32 %v1247, %v1525
      %1527 = vmatmul.bf16.gmra.mxu0 %v1019
      %v1528 = vpop.f32.mrf.mxu0
      %v1529 = vadd.f32 %v1250, %v1528
      %v1530 = vpop.f32.mrf.mxu0
      %v1531 = vadd.f32 %v1252, %v1530
      %1532 = vmatmul.bf16.gmra.mxu0 %v1022
      %v1533 = vpop.f32.mrf.mxu0
      %v1534 = vadd.f32 %v1255, %v1533
      %v1535 = vpop.f32.mrf.mxu0
      %v1536 = vadd.f32 %v1257, %v1535
      %1537 = vmatmul.bf16.gmra.mxu0 %v1025
      %v1538 = vpop.f32.mrf.mxu0
      %v1539 = vadd.f32 %v1260, %v1538
      %v1540 = vpop.f32.mrf.mxu0
      %v1541 = vadd.f32 %v1262, %v1540
      %1542 = vmatmul.bf16.gmra.mxu0 %v1028
      %v1543 = vpop.f32.mrf.mxu0
      %v1544 = vadd.f32 %v1265, %v1543
      %v1545 = vpop.f32.mrf.mxu0
      %v1546 = vadd.f32 %v1267, %v1545
      %1547 = vmatmul.bf16.gmra.mxu0 %v1031
      %v1548 = vpop.f32.mrf.mxu0
      %v1549 = vadd.f32 %v1270, %v1548
      %v1550 = vpop.f32.mrf.mxu0
      %v1551 = vadd.f32 %v1272, %v1550
      %1552 = vmatmul.bf16.gmra.mxu0 %v1034
      %v1553 = vpop.f32.mrf.mxu0
      %v1554 = vadd.f32 %v1275, %v1553
      %v1555 = vpop.f32.mrf.mxu0
      %v1556 = vadd.f32 %v1277, %v1555
      %1557 = vmatmul.bf16.gmra.mxu0 %v1037
      %v1558 = vpop.f32.mrf.mxu0
      %v1559 = vadd.f32 %v1280, %v1558
      %v1560 = vpop.f32.mrf.mxu0
      %v1561 = vadd.f32 %v1282, %v1560
      %1562 = vmatmul.bf16.gmra.mxu0 %v1040
      %v1563 = vpop.f32.mrf.mxu0
      %v1564 = vadd.f32 %v1285, %v1563
      %v1565 = vpop.f32.mrf.mxu0
      %v1566 = vadd.f32 %v1287, %v1565
      %1567 = vmatmul.bf16.gmra.mxu0 %v1043
      %v1568 = vpop.f32.mrf.mxu0
      %v1569 = vadd.f32 %v1290, %v1568
      %v1570 = vpop.f32.mrf.mxu0
      %v1571 = vadd.f32 %v1292, %v1570
      %1572 = vmatmul.bf16.gmra.mxu0 %v1046
      %v1573 = vpop.f32.mrf.mxu0
      %v1574 = vadd.f32 %v1295, %v1573
      %v1575 = vpop.f32.mrf.mxu0
      %v1576 = vadd.f32 %v1297, %v1575
      %1577 = vmatmul.bf16.gmra.mxu0 %v1049
      %v1578 = vpop.f32.mrf.mxu0
      %v1579 = vadd.f32 %v1300, %v1578
      %v1580 = vpop.f32.mrf.mxu0
      %v1581 = vadd.f32 %v1302, %v1580
      %1582 = vmatmul.bf16.gmra.mxu0 %v1052
      %v1583 = vpop.f32.mrf.mxu0
      %v1584 = vadd.f32 %v1305, %v1583
      %v1585 = vpop.f32.mrf.mxu0
      %v1586 = vadd.f32 %v1307, %v1585
      %1587 = vmatmul.bf16.gmra.mxu0 %v1055
      %v1588 = vpop.f32.mrf.mxu0
      %v1589 = vadd.f32 %v1310, %v1588
      %v1590 = vpop.f32.mrf.mxu0
      %v1591 = vadd.f32 %v1312, %v1590
      %1592 = vmatmul.bf16.gmra.mxu0 %v1058
      %v1593 = vpop.f32.mrf.mxu0
      %v1594 = vadd.f32 %v1315, %v1593
      %v1595 = vpop.f32.mrf.mxu0
      %v1596 = vadd.f32 %v1317, %v1595
      %1597 = vmatmul.bf16.gmra.mxu0 %v1061
      %v1598 = vpop.f32.mrf.mxu0
      %v1599 = vadd.f32 %v1320, %v1598
      %v1600 = vpop.f32.mrf.mxu0
      %v1601 = vadd.f32 %v1322, %v1600
      %1602 = vmatmul.bf16.gmra.mxu0 %v1064
      %v1603 = vpop.f32.mrf.mxu0
      %v1604 = vadd.f32 %v1325, %v1603
      %v1605 = vpop.f32.mrf.mxu0
      %v1606 = vadd.f32 %v1327, %v1605
      %1607 = vmatmul.bf16.gmra.mxu0 %v1067
      %v1608 = vpop.f32.mrf.mxu0
      %v1609 = vadd.f32 %v1330, %v1608
      %v1610 = vpop.f32.mrf.mxu0
      %v1611 = vadd.f32 %v1332, %v1610
      %1612 = vmatmul.bf16.gmra.mxu0 %v1070
      %v1613 = vpop.f32.mrf.mxu0
      %v1614 = vadd.f32 %v1335, %v1613
      %v1615 = vpop.f32.mrf.mxu0
      %v1616 = vadd.f32 %v1337, %v1615
      %1617 = vmatmul.bf16.gmra.mxu0 %v1073
      %v1618 = vpop.f32.mrf.mxu0
      %v1619 = vadd.f32 %v1340, %v1618
      %v1620 = vpop.f32.mrf.mxu0
      %v1621 = vadd.f32 %v1342, %v1620
      %1622 = vmatmul.bf16.gmra.mxu0 %v1076
      %v1623 = vpop.f32.mrf.mxu0
      %v1624 = vadd.f32 %v1345, %v1623
      %v1625 = vpop.f32.mrf.mxu0
      %v1626 = vadd.f32 %v1347, %v1625
      %1627 = vmatmul.bf16.gmra.mxu0 %v1079
      %v1628 = vpop.f32.mrf.mxu0
      %v1629 = vadd.f32 %v1350, %v1628
      %v1630 = vpop.f32.mrf.mxu0
      %v1631 = vadd.f32 %v1352, %v1630
      %1632 = vmatmul.bf16.gmra.mxu0 %v1082
      %v1633 = vpop.f32.mrf.mxu0
      %v1634 = vadd.f32 %v1355, %v1633
      %v1635 = vpop.f32.mrf.mxu0
      %v1636 = vadd.f32 %v1357, %v1635
      %1637 = vmatmul.bf16.gmra.mxu0 %v1085
      %v1638 = vpop.f32.mrf.mxu0
      %v1639 = vadd.f32 %v1360, %v1638
      %v1640 = vpop.f32.mrf.mxu0
      %v1641 = vadd.f32 %v1362, %v1640
      %1642 = vmatmul.bf16.gmra.mxu0 %v1088
      %v1643 = vpop.f32.mrf.mxu0
      %v1644 = vadd.f32 %v1365, %v1643
      %v1645 = vpop.f32.mrf.mxu0
      %v1646 = vadd.f32 %v1367, %v1645
      %1647 = vmatmul.bf16.gmra.mxu0 %v1091
      %v1648 = vpop.f32.mrf.mxu0
      %v1649 = vadd.f32 %v1370, %v1648
      %v1650 = vpop.f32.mrf.mxu0
      %v1651 = vadd.f32 %v1372, %v1650
      %1652 = vmatmul.bf16.gmra.mxu0 %v1094
      %v1653 = vpop.f32.mrf.mxu0
      %v1654 = vadd.f32 %v1375, %v1653
      %v1655 = vpop.f32.mrf.mxu0
      %v1656 = vadd.f32 %v1377, %v1655
      %1657 = vdwg.mxu0
      %v1658 = vld [vmem:[%s218] sm:$0xff]
      %v1659 = vld [vmem:[%s218 + $0x8] sm:$0xff]
      %v1660 = vld [vmem:[%s218 + $0x10] sm:$0xff]
      %v1661 = vld [vmem:[%s218 + $0x18] sm:$0xff]
      %v1662 = vld [vmem:[%s218 + $0x20] sm:$0xff]
      %v1663 = vld [vmem:[%s218 + $0x28] sm:$0xff]
      %v1664 = vld [vmem:[%s218 + $0x30] sm:$0xff]
      %v1665 = vld [vmem:[%s218 + $0x38] sm:$0xff]
      %v1666 = vld [vmem:[%s218 + $0x40] sm:$0xff]
      %v1667 = vld [vmem:[%s218 + $0x48] sm:$0xff]
      %v1668 = vld [vmem:[%s218 + $0x50] sm:$0xff]
      %v1669 = vld [vmem:[%s218 + $0x58] sm:$0xff]
      %v1670 = vld [vmem:[%s218 + $0x60] sm:$0xff]
      %v1671 = vld [vmem:[%s218 + $0x68] sm:$0xff]
      %v1672 = vld [vmem:[%s218 + $0x70] sm:$0xff]
      %v1673 = vld [vmem:[%s218 + $0x78] sm:$0xff]
      %v1674 = vld [vmem:[%s218 + $0x80] sm:$0xff]
      %v1675 = vld [vmem:[%s218 + $0x88] sm:$0xff]
      %v1676 = vld [vmem:[%s218 + $0x90] sm:$0xff]
      %v1677 = vld [vmem:[%s218 + $0x98] sm:$0xff]
      %v1678 = vld [vmem:[%s218 + $0xa0] sm:$0xff]
      %v1679 = vld [vmem:[%s218 + $0xa8] sm:$0xff]
      %v1680 = vld [vmem:[%s218 + $0xb0] sm:$0xff]
      %v1681 = vld [vmem:[%s218 + $0xb8] sm:$0xff]
      %v1682 = vld [vmem:[%s218 + $0xc0] sm:$0xff]
      %v1683 = vld [vmem:[%s218 + $0xc8] sm:$0xff]
      %v1684 = vld [vmem:[%s218 + $0xd0] sm:$0xff]
      %v1685 = vld [vmem:[%s218 + $0xd8] sm:$0xff]
      %v1686 = vld [vmem:[%s218 + $0xe0] sm:$0xff]
      %v1687 = vld [vmem:[%s218 + $0xe8] sm:$0xff]
      %v1688 = vld [vmem:[%s218 + $0xf0] sm:$0xff]
      %v1689 = vld [vmem:[%s218 + $0xf8] sm:$0xff]
      %v1690 = vld [vmem:[%s218 + $0x100] sm:$0xff]
      %v1691 = vld [vmem:[%s218 + $0x108] sm:$0xff]
      %v1692 = vld [vmem:[%s218 + $0x110] sm:$0xff]
      %v1693 = vld [vmem:[%s218 + $0x118] sm:$0xff]
      %v1694 = vld [vmem:[%s218 + $0x120] sm:$0xff]
      %v1695 = vld [vmem:[%s218 + $0x128] sm:$0xff]
      %v1696 = vld [vmem:[%s218 + $0x130] sm:$0xff]
      %v1697 = vld [vmem:[%s218 + $0x138] sm:$0xff]
      %v1698 = vld [vmem:[%s218 + $0x140] sm:$0xff]
      %v1699 = vld [vmem:[%s218 + $0x148] sm:$0xff]
      %v1700 = vld [vmem:[%s218 + $0x150] sm:$0xff]
      %v1701 = vld [vmem:[%s218 + $0x158] sm:$0xff]
      %v1702 = vld [vmem:[%s218 + $0x160] sm:$0xff]
      %v1703 = vld [vmem:[%s218 + $0x168] sm:$0xff]
      %v1704 = vld [vmem:[%s218 + $0x170] sm:$0xff]
      %v1705 = vld [vmem:[%s218 + $0x178] sm:$0xff]
      %v1706 = vld [vmem:[%s218 + $0x180] sm:$0xff]
      %v1707 = vld [vmem:[%s218 + $0x188] sm:$0xff]
      %v1708 = vld [vmem:[%s218 + $0x190] sm:$0xff]
      %v1709 = vld [vmem:[%s218 + $0x198] sm:$0xff]
      %v1710 = vld [vmem:[%s218 + $0x1a0] sm:$0xff]
      %v1711 = vld [vmem:[%s218 + $0x1a8] sm:$0xff]
      %v1712 = vld [vmem:[%s218 + $0x1b0] sm:$0xff]
      %v1713 = vld [vmem:[%s218 + $0x1b8] sm:$0xff]
      %v1714 = vld [vmem:[%s218 + $0x1c0] sm:$0xff]
      %v1715 = vld [vmem:[%s218 + $0x1c8] sm:$0xff]
      %v1716 = vld [vmem:[%s218 + $0x1d0] sm:$0xff]
      %v1717 = vld [vmem:[%s218 + $0x1d8] sm:$0xff]
      %v1718 = vld [vmem:[%s218 + $0x1e0] sm:$0xff]
      %v1719 = vld [vmem:[%s218 + $0x1e8] sm:$0xff]
      %v1720 = vld [vmem:[%s218 + $0x1f0] sm:$0xff]
      %v1721 = vld [vmem:[%s218 + $0x1f8] sm:$0xff]
      %v1722 = vld [vmem:[%s218 + $0x200] sm:$0xff]
      %v1723 = vld [vmem:[%s218 + $0x208] sm:$0xff]
      %v1724 = vld [vmem:[%s218 + $0x210] sm:$0xff]
      %v1725 = vld [vmem:[%s218 + $0x218] sm:$0xff]
      %v1726 = vld [vmem:[%s218 + $0x220] sm:$0xff]
      %v1727 = vld [vmem:[%s218 + $0x228] sm:$0xff]
      %v1728 = vld [vmem:[%s218 + $0x230] sm:$0xff]
      %v1729 = vld [vmem:[%s218 + $0x238] sm:$0xff]
      %v1730 = vld [vmem:[%s218 + $0x240] sm:$0xff]
      %v1731 = vld [vmem:[%s218 + $0x248] sm:$0xff]
      %v1732 = vld [vmem:[%s218 + $0x250] sm:$0xff]
      %v1733 = vld [vmem:[%s218 + $0x258] sm:$0xff]
      %v1734 = vld [vmem:[%s218 + $0x260] sm:$0xff]
      %v1735 = vld [vmem:[%s218 + $0x268] sm:$0xff]
      %v1736 = vld [vmem:[%s218 + $0x270] sm:$0xff]
      %v1737 = vld [vmem:[%s218 + $0x278] sm:$0xff]
      %v1738 = vld [vmem:[%s218 + $0x280] sm:$0xff]
      %v1739 = vld [vmem:[%s218 + $0x288] sm:$0xff]
      %v1740 = vld [vmem:[%s218 + $0x290] sm:$0xff]
      %v1741 = vld [vmem:[%s218 + $0x298] sm:$0xff]
      %v1742 = vld [vmem:[%s218 + $0x2a0] sm:$0xff]
      %v1743 = vld [vmem:[%s218 + $0x2a8] sm:$0xff]
      %v1744 = vld [vmem:[%s218 + $0x2b0] sm:$0xff]
      %v1745 = vld [vmem:[%s218 + $0x2b8] sm:$0xff]
      %v1746 = vld [vmem:[%s218 + $0x2c0] sm:$0xff]
      %v1747 = vld [vmem:[%s218 + $0x2c8] sm:$0xff]
      %v1748 = vld [vmem:[%s218 + $0x2d0] sm:$0xff]
      %v1749 = vld [vmem:[%s218 + $0x2d8] sm:$0xff]
      %v1750 = vld [vmem:[%s218 + $0x2e0] sm:$0xff]
      %v1751 = vld [vmem:[%s218 + $0x2e8] sm:$0xff]
      %v1752 = vld [vmem:[%s218 + $0x2f0] sm:$0xff]
      %v1753 = vld [vmem:[%s218 + $0x2f8] sm:$0xff]
      %v1754 = vld [vmem:[%s218 + $0x300] sm:$0xff]
      %v1755 = vld [vmem:[%s218 + $0x308] sm:$0xff]
      %v1756 = vld [vmem:[%s218 + $0x310] sm:$0xff]
      %v1757 = vld [vmem:[%s218 + $0x318] sm:$0xff]
      %v1758 = vld [vmem:[%s218 + $0x320] sm:$0xff]
      %v1759 = vld [vmem:[%s218 + $0x328] sm:$0xff]
      %v1760 = vld [vmem:[%s218 + $0x330] sm:$0xff]
      %v1761 = vld [vmem:[%s218 + $0x338] sm:$0xff]
      %v1762 = vld [vmem:[%s218 + $0x340] sm:$0xff]
      %v1763 = vld [vmem:[%s218 + $0x348] sm:$0xff]
      %v1764 = vld [vmem:[%s218 + $0x350] sm:$0xff]
      %v1765 = vld [vmem:[%s218 + $0x358] sm:$0xff]
      %v1766 = vadd.f32 %v1389, %v1658
      %v1767 = vadd.f32 %v1391, %v1659
      %v1768 = vadd.f32 %v1394, %v1660
      %v1769 = vadd.f32 %v1396, %v1661
      %v1770 = vadd.f32 %v1399, %v1662
      %v1771 = vadd.f32 %v1401, %v1663
      %v1772 = vadd.f32 %v1404, %v1664
      %v1773 = vadd.f32 %v1406, %v1665
      %v1774 = vadd.f32 %v1409, %v1666
      %v1775 = vadd.f32 %v1411, %v1667
      %v1776 = vadd.f32 %v1414, %v1668
      %v1777 = vadd.f32 %v1416, %v1669
      %v1778 = vadd.f32 %v1419, %v1670
      %v1779 = vadd.f32 %v1421, %v1671
      %v1780 = vadd.f32 %v1424, %v1672
      %v1781 = vadd.f32 %v1426, %v1673
      %v1782 = vadd.f32 %v1429, %v1674
      %v1783 = vadd.f32 %v1431, %v1675
      %v1784 = vadd.f32 %v1434, %v1676
      %v1785 = vadd.f32 %v1436, %v1677
      %v1786 = vadd.f32 %v1439, %v1678
      %v1787 = vadd.f32 %v1441, %v1679
      %v1788 = vadd.f32 %v1444, %v1680
      %v1789 = vadd.f32 %v1446, %v1681
      %v1790 = vadd.f32 %v1449, %v1682
      %v1791 = vadd.f32 %v1451, %v1683
      %v1792 = vadd.f32 %v1454, %v1684
      %v1793 = vadd.f32 %v1456, %v1685
      %v1794 = vadd.f32 %v1459, %v1686
      %v1795 = vadd.f32 %v1461, %v1687
      %v1796 = vadd.f32 %v1464, %v1688
      %v1797 = vadd.f32 %v1466, %v1689
      %v1798 = vadd.f32 %v1469, %v1690
      %v1799 = vadd.f32 %v1471, %v1691
      %v1800 = vadd.f32 %v1474, %v1692
      %v1801 = vadd.f32 %v1476, %v1693
      %v1802 = vadd.f32 %v1479, %v1694
      %v1803 = vadd.f32 %v1481, %v1695
      %v1804 = vadd.f32 %v1484, %v1696
      %v1805 = vadd.f32 %v1486, %v1697
      %v1806 = vadd.f32 %v1489, %v1698
      %v1807 = vadd.f32 %v1491, %v1699
      %v1808 = vadd.f32 %v1494, %v1700
      %v1809 = vadd.f32 %v1496, %v1701
      %v1810 = vadd.f32 %v1499, %v1702
      %v1811 = vadd.f32 %v1501, %v1703
      %v1812 = vadd.f32 %v1504, %v1704
      %v1813 = vadd.f32 %v1506, %v1705
      %v1814 = vadd.f32 %v1509, %v1706
      %v1815 = vadd.f32 %v1511, %v1707
      %v1816 = vadd.f32 %v1514, %v1708
      %v1817 = vadd.f32 %v1516, %v1709
      %v1818 = vadd.f32 %v1519, %v1710
      %v1819 = vadd.f32 %v1521, %v1711
      %v1820 = vadd.f32 %v1524, %v1712
      %v1821 = vadd.f32 %v1526, %v1713
      %v1822 = vadd.f32 %v1529, %v1714
      %v1823 = vadd.f32 %v1531, %v1715
      %v1824 = vadd.f32 %v1534, %v1716
      %v1825 = vadd.f32 %v1536, %v1717
      %v1826 = vadd.f32 %v1539, %v1718
      %v1827 = vadd.f32 %v1541, %v1719
      %v1828 = vadd.f32 %v1544, %v1720
      %v1829 = vadd.f32 %v1546, %v1721
      %v1830 = vadd.f32 %v1549, %v1722
      %v1831 = vadd.f32 %v1551, %v1723
      %v1832 = vadd.f32 %v1554, %v1724
      %v1833 = vadd.f32 %v1556, %v1725
      %v1834 = vadd.f32 %v1559, %v1726
      %v1835 = vadd.f32 %v1561, %v1727
      %v1836 = vadd.f32 %v1564, %v1728
      %v1837 = vadd.f32 %v1566, %v1729
      %v1838 = vadd.f32 %v1569, %v1730
      %v1839 = vadd.f32 %v1571, %v1731
      %v1840 = vadd.f32 %v1574, %v1732
      %v1841 = vadd.f32 %v1576, %v1733
      %v1842 = vadd.f32 %v1579, %v1734
      %v1843 = vadd.f32 %v1581, %v1735
      %v1844 = vadd.f32 %v1584, %v1736
      %v1845 = vadd.f32 %v1586, %v1737
      %v1846 = vadd.f32 %v1589, %v1738
      %v1847 = vadd.f32 %v1591, %v1739
      %v1848 = vadd.f32 %v1594, %v1740
      %v1849 = vadd.f32 %v1596, %v1741
      %v1850 = vadd.f32 %v1599, %v1742
      %v1851 = vadd.f32 %v1601, %v1743
      %v1852 = vadd.f32 %v1604, %v1744
      %v1853 = vadd.f32 %v1606, %v1745
      %v1854 = vadd.f32 %v1609, %v1746
      %v1855 = vadd.f32 %v1611, %v1747
      %v1856 = vadd.f32 %v1614, %v1748
      %v1857 = vadd.f32 %v1616, %v1749
      %v1858 = vadd.f32 %v1619, %v1750
      %v1859 = vadd.f32 %v1621, %v1751
      %v1860 = vadd.f32 %v1624, %v1752
      %v1861 = vadd.f32 %v1626, %v1753
      %v1862 = vadd.f32 %v1629, %v1754
      %v1863 = vadd.f32 %v1631, %v1755
      %v1864 = vadd.f32 %v1634, %v1756
      %v1865 = vadd.f32 %v1636, %v1757
      %v1866 = vadd.f32 %v1639, %v1758
      %v1867 = vadd.f32 %v1641, %v1759
      %v1868 = vadd.f32 %v1644, %v1760
      %v1869 = vadd.f32 %v1646, %v1761
      %v1870 = vadd.f32 %v1649, %v1762
      %v1871 = vadd.f32 %v1651, %v1763
      %v1872 = vadd.f32 %v1654, %v1764
      %v1873 = vadd.f32 %v1656, %v1765
      %v1874 = vmax.f32 %v1766, 0.0
      %v1875 = vmax.f32 %v1767, 0.0
      %v1876 = vmax.f32 %v1768, 0.0
      %v1877 = vmax.f32 %v1769, 0.0
      %v1878 = vmax.f32 %v1770, 0.0
      %v1879 = vmax.f32 %v1771, 0.0
      %v1880 = vmax.f32 %v1772, 0.0
      %v1881 = vmax.f32 %v1773, 0.0
      %v1882 = vmax.f32 %v1774, 0.0
      %v1883 = vmax.f32 %v1775, 0.0
      %v1884 = vmax.f32 %v1776, 0.0
      %v1885 = vmax.f32 %v1777, 0.0
      %v1886 = vmax.f32 %v1778, 0.0
      %v1887 = vmax.f32 %v1779, 0.0
      %v1888 = vmax.f32 %v1780, 0.0
      %v1889 = vmax.f32 %v1781, 0.0
      %v1890 = vmax.f32 %v1782, 0.0
      %v1891 = vmax.f32 %v1783, 0.0
      %v1892 = vmax.f32 %v1784, 0.0
      %v1893 = vmax.f32 %v1785, 0.0
      %v1894 = vmax.f32 %v1786, 0.0
      %v1895 = vmax.f32 %v1787, 0.0
      %v1896 = vmax.f32 %v1788, 0.0
      %v1897 = vmax.f32 %v1789, 0.0
      %v1898 = vmax.f32 %v1790, 0.0
      %v1899 = vmax.f32 %v1791, 0.0
      %v1900 = vmax.f32 %v1792, 0.0
      %v1901 = vmax.f32 %v1793, 0.0
      %v1902 = vmax.f32 %v1794, 0.0
      %v1903 = vmax.f32 %v1795, 0.0
      %v1904 = vmax.f32 %v1796, 0.0
      %v1905 = vmax.f32 %v1797, 0.0
      %v1906 = vmax.f32 %v1798, 0.0
      %v1907 = vmax.f32 %v1799, 0.0
      %v1908 = vmax.f32 %v1800, 0.0
      %v1909 = vmax.f32 %v1801, 0.0
      %v1910 = vmax.f32 %v1802, 0.0
      %v1911 = vmax.f32 %v1803, 0.0
      %v1912 = vmax.f32 %v1804, 0.0
      %v1913 = vmax.f32 %v1805, 0.0
      %v1914 = vmax.f32 %v1806, 0.0
      %v1915 = vmax.f32 %v1807, 0.0
      %v1916 = vmax.f32 %v1808, 0.0
      %v1917 = vmax.f32 %v1809, 0.0
      %v1918 = vmax.f32 %v1810, 0.0
      %v1919 = vmax.f32 %v1811, 0.0
      %v1920 = vmax.f32 %v1812, 0.0
      %v1921 = vmax.f32 %v1813, 0.0
      %v1922 = vmax.f32 %v1814, 0.0
      %v1923 = vmax.f32 %v1815, 0.0
      %v1924 = vmax.f32 %v1816, 0.0
      %v1925 = vmax.f32 %v1817, 0.0
      %v1926 = vmax.f32 %v1818, 0.0
      %v1927 = vmax.f32 %v1819, 0.0
      %v1928 = vmax.f32 %v1820, 0.0
      %v1929 = vmax.f32 %v1821, 0.0
      %v1930 = vmax.f32 %v1822, 0.0
      %v1931 = vmax.f32 %v1823, 0.0
      %v1932 = vmax.f32 %v1824, 0.0
      %v1933 = vmax.f32 %v1825, 0.0
      %v1934 = vmax.f32 %v1826, 0.0
      %v1935 = vmax.f32 %v1827, 0.0
      %v1936 = vmax.f32 %v1828, 0.0
      %v1937 = vmax.f32 %v1829, 0.0
      %v1938 = vmax.f32 %v1830, 0.0
      %v1939 = vmax.f32 %v1831, 0.0
      %v1940 = vmax.f32 %v1832, 0.0
      %v1941 = vmax.f32 %v1833, 0.0
      %v1942 = vmax.f32 %v1834, 0.0
      %v1943 = vmax.f32 %v1835, 0.0
      %v1944 = vmax.f32 %v1836, 0.0
      %v1945 = vmax.f32 %v1837, 0.0
      %v1946 = vmax.f32 %v1838, 0.0
      %v1947 = vmax.f32 %v1839, 0.0
      %v1948 = vmax.f32 %v1840, 0.0
      %v1949 = vmax.f32 %v1841, 0.0
      %v1950 = vmax.f32 %v1842, 0.0
      %v1951 = vmax.f32 %v1843, 0.0
      %v1952 = vmax.f32 %v1844, 0.0
      %v1953 = vmax.f32 %v1845, 0.0
      %v1954 = vmax.f32 %v1846, 0.0
      %v1955 = vmax.f32 %v1847, 0.0
      %v1956 = vmax.f32 %v1848, 0.0
      %v1957 = vmax.f32 %v1849, 0.0
      %v1958 = vmax.f32 %v1850, 0.0
      %v1959 = vmax.f32 %v1851, 0.0
      %v1960 = vmax.f32 %v1852, 0.0
      %v1961 = vmax.f32 %v1853, 0.0
      %v1962 = vmax.f32 %v1854, 0.0
      %v1963 = vmax.f32 %v1855, 0.0
      %v1964 = vmax.f32 %v1856, 0.0
      %v1965 = vmax.f32 %v1857, 0.0
      %v1966 = vmax.f32 %v1858, 0.0
      %v1967 = vmax.f32 %v1859, 0.0
      %v1968 = vmax.f32 %v1860, 0.0
      %v1969 = vmax.f32 %v1861, 0.0
      %v1970 = vmax.f32 %v1862, 0.0
      %v1971 = vmax.f32 %v1863, 0.0
      %v1972 = vmax.f32 %v1864, 0.0
      %v1973 = vmax.f32 %v1865, 0.0
      %v1974 = vmax.f32 %v1866, 0.0
      %v1975 = vmax.f32 %v1867, 0.0
      %v1976 = vmax.f32 %v1868, 0.0
      %v1977 = vmax.f32 %v1869, 0.0
      %v1978 = vmax.f32 %v1870, 0.0
      %v1979 = vmax.f32 %v1871, 0.0
      %v1980 = vmax.f32 %v1872, 0.0
      %v1981 = vmax.f32 %v1873, 0.0
      %vm1982 = vcmask 64512
      %1983 = vst.msk [vmem:[%s224] sm:$0xff] %vm1982, %v1874
      %1984 = vst.msk [vmem:[%s224 + $0x8] sm:$0xff] %vm1982, %v1875
      %1985 = vst.msk [vmem:[%s224 + $0x10] sm:$0xff] %vm1982, %v1876
      %1986 = vst.msk [vmem:[%s224 + $0x18] sm:$0xff] %vm1982, %v1877
      %1987 = vst.msk [vmem:[%s224 + $0x20] sm:$0xff] %vm1982, %v1878
      %1988 = vst.msk [vmem:[%s224 + $0x28] sm:$0xff] %vm1982, %v1879
      %1989 = vst.msk [vmem:[%s224 + $0x30] sm:$0xff] %vm1982, %v1880
      %1990 = vst.msk [vmem:[%s224 + $0x38] sm:$0xff] %vm1982, %v1881
      %1991 = vst.msk [vmem:[%s224 + $0x40] sm:$0xff] %vm1982, %v1882
      %1992 = vst.msk [vmem:[%s224 + $0x48] sm:$0xff] %vm1982, %v1883
      %1993 = vst.msk [vmem:[%s224 + $0x50] sm:$0xff] %vm1982, %v1884
      %1994 = vst.msk [vmem:[%s224 + $0x58] sm:$0xff] %vm1982, %v1885
      %1995 = vst.msk [vmem:[%s224 + $0x60] sm:$0xff] %vm1982, %v1886
      %1996 = vst.msk [vmem:[%s224 + $0x68] sm:$0xff] %vm1982, %v1887
      %1997 = vst.msk [vmem:[%s224 + $0x70] sm:$0xff] %vm1982, %v1888
      %1998 = vst.msk [vmem:[%s224 + $0x78] sm:$0xff] %vm1982, %v1889
      %1999 = vst.msk [vmem:[%s224 + $0x80] sm:$0xff] %vm1982, %v1890
      %2000 = vst.msk [vmem:[%s224 + $0x88] sm:$0xff] %vm1982, %v1891
      %2001 = vst.msk [vmem:[%s224 + $0x90] sm:$0xff] %vm1982, %v1892
      %2002 = vst.msk [vmem:[%s224 + $0x98] sm:$0xff] %vm1982, %v1893
      %2003 = vst.msk [vmem:[%s224 + $0xa0] sm:$0xff] %vm1982, %v1894
      %2004 = vst.msk [vmem:[%s224 + $0xa8] sm:$0xff] %vm1982, %v1895
      %2005 = vst.msk [vmem:[%s224 + $0xb0] sm:$0xff] %vm1982, %v1896
      %2006 = vst.msk [vmem:[%s224 + $0xb8] sm:$0xff] %vm1982, %v1897
      %2007 = vst.msk [vmem:[%s224 + $0xc0] sm:$0xff] %vm1982, %v1898
      %2008 = vst.msk [vmem:[%s224 + $0xc8] sm:$0xff] %vm1982, %v1899
      %2009 = vst.msk [vmem:[%s224 + $0xd0] sm:$0xff] %vm1982, %v1900
      %2010 = vst.msk [vmem:[%s224 + $0xd8] sm:$0xff] %vm1982, %v1901
      %2011 = vst.msk [vmem:[%s224 + $0xe0] sm:$0xff] %vm1982, %v1902
      %2012 = vst.msk [vmem:[%s224 + $0xe8] sm:$0xff] %vm1982, %v1903
      %2013 = vst.msk [vmem:[%s224 + $0xf0] sm:$0xff] %vm1982, %v1904
      %2014 = vst.msk [vmem:[%s224 + $0xf8] sm:$0xff] %vm1982, %v1905
      %2015 = vst.msk [vmem:[%s224 + $0x100] sm:$0xff] %vm1982, %v1906
      %2016 = vst.msk [vmem:[%s224 + $0x108] sm:$0xff] %vm1982, %v1907
      %2017 = vst.msk [vmem:[%s224 + $0x110] sm:$0xff] %vm1982, %v1908
      %2018 = vst.msk [vmem:[%s224 + $0x118] sm:$0xff] %vm1982, %v1909
      %2019 = vst.msk [vmem:[%s224 + $0x120] sm:$0xff] %vm1982, %v1910
      %2020 = vst.msk [vmem:[%s224 + $0x128] sm:$0xff] %vm1982, %v1911
      %2021 = vst.msk [vmem:[%s224 + $0x130] sm:$0xff] %vm1982, %v1912
      %2022 = vst.msk [vmem:[%s224 + $0x138] sm:$0xff] %vm1982, %v1913
      %2023 = vst.msk [vmem:[%s224 + $0x140] sm:$0xff] %vm1982, %v1914
      %2024 = vst.msk [vmem:[%s224 + $0x148] sm:$0xff] %vm1982, %v1915
      %2025 = vst.msk [vmem:[%s224 + $0x150] sm:$0xff] %vm1982, %v1916
      %2026 = vst.msk [vmem:[%s224 + $0x158] sm:$0xff] %vm1982, %v1917
      %2027 = vst.msk [vmem:[%s224 + $0x160] sm:$0xff] %vm1982, %v1918
      %2028 = vst.msk [vmem:[%s224 + $0x168] sm:$0xff] %vm1982, %v1919
      %2029 = vst.msk [vmem:[%s224 + $0x170] sm:$0xff] %vm1982, %v1920
      %2030 = vst.msk [vmem:[%s224 + $0x178] sm:$0xff] %vm1982, %v1921
      %2031 = vst.msk [vmem:[%s224 + $0x180] sm:$0xff] %vm1982, %v1922
      %2032 = vst.msk [vmem:[%s224 + $0x188] sm:$0xff] %vm1982, %v1923
      %2033 = vst.msk [vmem:[%s224 + $0x190] sm:$0xff] %vm1982, %v1924
      %2034 = vst.msk [vmem:[%s224 + $0x198] sm:$0xff] %vm1982, %v1925
      %2035 = vst.msk [vmem:[%s224 + $0x1a0] sm:$0xff] %vm1982, %v1926
      %2036 = vst.msk [vmem:[%s224 + $0x1a8] sm:$0xff] %vm1982, %v1927
      %2037 = vst.msk [vmem:[%s224 + $0x1b0] sm:$0xff] %vm1982, %v1928
      %2038 = vst.msk [vmem:[%s224 + $0x1b8] sm:$0xff] %vm1982, %v1929
      %2039 = vst.msk [vmem:[%s224 + $0x1c0] sm:$0xff] %vm1982, %v1930
      %2040 = vst.msk [vmem:[%s224 + $0x1c8] sm:$0xff] %vm1982, %v1931
      %2041 = vst.msk [vmem:[%s224 + $0x1d0] sm:$0xff] %vm1982, %v1932
      %2042 = vst.msk [vmem:[%s224 + $0x1d8] sm:$0xff] %vm1982, %v1933
      %2043 = vst.msk [vmem:[%s224 + $0x1e0] sm:$0xff] %vm1982, %v1934
      %2044 = vst.msk [vmem:[%s224 + $0x1e8] sm:$0xff] %vm1982, %v1935
      %2045 = vst.msk [vmem:[%s224 + $0x1f0] sm:$0xff] %vm1982, %v1936
      %2046 = vst.msk [vmem:[%s224 + $0x1f8] sm:$0xff] %vm1982, %v1937
      %2047 = vst.msk [vmem:[%s224 + $0x200] sm:$0xff] %vm1982, %v1938
      %2048 = vst.msk [vmem:[%s224 + $0x208] sm:$0xff] %vm1982, %v1939
      %2049 = vst.msk [vmem:[%s224 + $0x210] sm:$0xff] %vm1982, %v1940
      %2050 = vst.msk [vmem:[%s224 + $0x218] sm:$0xff] %vm1982, %v1941
      %2051 = vst.msk [vmem:[%s224 + $0x220] sm:$0xff] %vm1982, %v1942
      %2052 = vst.msk [vmem:[%s224 + $0x228] sm:$0xff] %vm1982, %v1943
      %2053 = vst.msk [vmem:[%s224 + $0x230] sm:$0xff] %vm1982, %v1944
      %2054 = vst.msk [vmem:[%s224 + $0x238] sm:$0xff] %vm1982, %v1945
      %2055 = vst.msk [vmem:[%s224 + $0x240] sm:$0xff] %vm1982, %v1946
      %2056 = vst.msk [vmem:[%s224 + $0x248] sm:$0xff] %vm1982, %v1947
      %2057 = vst.msk [vmem:[%s224 + $0x250] sm:$0xff] %vm1982, %v1948
      %2058 = vst.msk [vmem:[%s224 + $0x258] sm:$0xff] %vm1982, %v1949
      %2059 = vst.msk [vmem:[%s224 + $0x260] sm:$0xff] %vm1982, %v1950
      %2060 = vst.msk [vmem:[%s224 + $0x268] sm:$0xff] %vm1982, %v1951
      %2061 = vst.msk [vmem:[%s224 + $0x270] sm:$0xff] %vm1982, %v1952
      %2062 = vst.msk [vmem:[%s224 + $0x278] sm:$0xff] %vm1982, %v1953
      %2063 = vst.msk [vmem:[%s224 + $0x280] sm:$0xff] %vm1982, %v1954
      %2064 = vst.msk [vmem:[%s224 + $0x288] sm:$0xff] %vm1982, %v1955
      %2065 = vst.msk [vmem:[%s224 + $0x290] sm:$0xff] %vm1982, %v1956
      %2066 = vst.msk [vmem:[%s224 + $0x298] sm:$0xff] %vm1982, %v1957
      %2067 = vst.msk [vmem:[%s224 + $0x2a0] sm:$0xff] %vm1982, %v1958
      %2068 = vst.msk [vmem:[%s224 + $0x2a8] sm:$0xff] %vm1982, %v1959
      %2069 = vst.msk [vmem:[%s224 + $0x2b0] sm:$0xff] %vm1982, %v1960
      %2070 = vst.msk [vmem:[%s224 + $0x2b8] sm:$0xff] %vm1982, %v1961
      %2071 = vst.msk [vmem:[%s224 + $0x2c0] sm:$0xff] %vm1982, %v1962
      %2072 = vst.msk [vmem:[%s224 + $0x2c8] sm:$0xff] %vm1982, %v1963
      %2073 = vst.msk [vmem:[%s224 + $0x2d0] sm:$0xff] %vm1982, %v1964
      %2074 = vst.msk [vmem:[%s224 + $0x2d8] sm:$0xff] %vm1982, %v1965
      %2075 = vst.msk [vmem:[%s224 + $0x2e0] sm:$0xff] %vm1982, %v1966
      %2076 = vst.msk [vmem:[%s224 + $0x2e8] sm:$0xff] %vm1982, %v1967
      %2077 = vst.msk [vmem:[%s224 + $0x2f0] sm:$0xff] %vm1982, %v1968
      %2078 = vst.msk [vmem:[%s224 + $0x2f8] sm:$0xff] %vm1982, %v1969
      %2079 = vst.msk [vmem:[%s224 + $0x300] sm:$0xff] %vm1982, %v1970
      %2080 = vst.msk [vmem:[%s224 + $0x308] sm:$0xff] %vm1982, %v1971
      %2081 = vst.msk [vmem:[%s224 + $0x310] sm:$0xff] %vm1982, %v1972
      %2082 = vst.msk [vmem:[%s224 + $0x318] sm:$0xff] %vm1982, %v1973
      %2083 = vst.msk [vmem:[%s224 + $0x320] sm:$0xff] %vm1982, %v1974
      %2084 = vst.msk [vmem:[%s224 + $0x328] sm:$0xff] %vm1982, %v1975
      %2085 = vst.msk [vmem:[%s224 + $0x330] sm:$0xff] %vm1982, %v1976
      %2086 = vst.msk [vmem:[%s224 + $0x338] sm:$0xff] %vm1982, %v1977
      %2087 = vst.msk [vmem:[%s224 + $0x340] sm:$0xff] %vm1982, %v1978
      %2088 = vst.msk [vmem:[%s224 + $0x348] sm:$0xff] %vm1982, %v1979
      %2089 = vst.msk [vmem:[%s224 + $0x350] sm:$0xff] %vm1982, %v1980
      %2090 = vst.msk [vmem:[%s224 + $0x358] sm:$0xff] %vm1982, %v1981
      %s2091 = smul.u32 108, %s15
      %p2092 = scmp.lt.s32.totalorder %s2091, 647
      %s2093 = scalar_select %p2092, %s2091, 647
      %s2094 = smul.addr %s2093, 8
      %s2095 = scalar_lea.vmem %s4, %s2094
      // Predicated region
      $region37: #{network_forward.11} parent=35 // pred_check
        %p2096 = pneg %p127
      $region38: #{network_forward.11} parent=35 // pred_check_branch
        %2098 = sbr.rel (%p2096) target = $region40
      $region39: #{network_forward.11} parent=35 // pred_region
        %s2099 = smul.u32 108, %s15
      $region40: #{network_forward.11} parent=35 // pred_fallthru
        _
    $region36: #{network_forward.11} parent=5 // pred_fallthru
      _
    %p2100 = scmp.le.s32.totalorder 2, %s10
    // Predicated region
    $region41: #{network_forward.11} parent=5 // pred_check
      %p2101 = pneg %p2100
    $region42: #{network_forward.11} parent=5 // pred_check_branch
      %2103 = sbr.rel (%p2101) target = $region44
    $region43: #{network_forward.11} parent=5 // pred_region
      %s2104 = ssub.s32 %s10, 2
      // Predicated region
      $region45: #{network_forward.11} parent=43 // pred_check
        %p2105 = pneg %p133
      $region46: #{network_forward.11} parent=43 // pred_check_branch
        %2107 = sbr.rel (%p2105) target = $region48
      $region47: #{network_forward.11} parent=43 // pred_region
        %s2108 = smul.u32 108, %s16
        %p2109 = scmp.lt.s32.totalorder %s2108, 647
        %s2110 = scalar_select %p2109, %s2108, 647
        %s2111 = smul.addr %s2110, 8
        %s2112 = scalar_lea.vmem %s4, %s2111
      $region48: #{network_forward.11} parent=43 // pred_fallthru
        _
    $region44: #{network_forward.11} parent=5 // pred_fallthru
      _
  $region6: #{network_forward.11} parent=0 // loop_footer
    %s14 = sadd.s32 1, %s10
  $region7: #{network_forward.11} parent=0 // loop_footer_branch
    %9 = sbr.rel target = $region3
  $region8: #{network_forward.11} parent=0 // loop_exit
    _

// kernel: network_forward.12
$region0: #{network_forward.12}
  #allocation0 [shape = 'u32[]', space=smem, size = 0x4, offset = 0x4, fixed_abs, tag = 'smem constant byte address 0x4 - core index']
  #allocation1 [shape = 'u32[72,128]{1,0:T(1,128)}', space=vmem, size = 0x9000, scoped, tag = 'internal scratch']
  %s0 = inlined_call_operand.vmem [shape: bf16[400,216], index: 0, kind: input, shape index: {}]
  %s1 = inlined_call_operand.vmem [shape: bf16[216,16], index: 1, kind: input, shape index: {}]
  %s2 = inlined_call_operand.vmem [shape: f32[1,16], index: 2, kind: input, shape index: {}]
  %s3 = inlined_call_operand.vmem [shape: f32[400,16], index: 3, kind: output, shape index: {}]
  %s4 = sld [smem:[#allocation0]]
  $region45: #{network_forward.12} parent=0
    _
  %s6 = ssub.s32 1, %s4
  %s7 = scalar_select 0, %s6, %s4
  loop: start=0, step=1, limit=4
  $region2: #{network_forward.12} parent=0 // loop_pre_header
    _
  $region3: #{network_forward.12} parent=0 // loop_header
    %s9 = sphi 0, %s13
    %p10 = scmp.ge.s32.totalorder %s9, 4
    %s19 = sphi 0, %s21
    %s22 = sphi 0, %s19
    %s23 = sphi 0, %s22
    %s39 = sphi 0, %s23
    %s43 = sphi 0, %s43
    %s45 = sphi 0, %s43
    %s46 = sphi 0, %s45
    %s60 = sphi 0, %s46
    %s64 = sphi 0, %s64
    %s66 = sphi 0, %s64
    %s67 = sphi 0, %s66
    %s81 = sphi 0, %s67
    %s87 = sphi 0, %s89
    %s90 = sphi 0, %s87
    %s91 = sphi 0, %s90
    %s107 = sphi 0, %s91
  $region4: #{network_forward.12} parent=0 // loop_header_branch
    %12 = sbr.rel (%p10) target = $region8
  $region5: #{network_forward.12} parent=0 // loop_body
    %s14 = ssub.s32 %s9, 1
    %s15 = ssub.s32 %s9, 2
    %s16 = sadd.s32 %s9, 1
    %s17 = ssub.s32 %s9, %s16
    %p18 = scmp.eq.s32.totalorder %s17, 0
    %s20 = sadd.s32 %s19, 1
    %s21 = scalar_select %p18, %s19, %s20
    %p24 = pneg %p18
    %p25 = scmp.eq.s32.totalorder %s9, 1
    %p26 = por %p24, %p25
    %p27 = scmp.ne.s32.totalorder %s19, %s22
    %p28 = scmp.eq.s32.totalorder %s9, 0
    %p29 = por %p27, %p28
    %p30 = scmp.ne.s32.totalorder %s19, %s22
    %p31 = scmp.eq.s32.totalorder %s14, 1
    %p32 = por %p30, %p31
    %p33 = scmp.ne.s32.totalorder %s22, %s23
    %p34 = scmp.eq.s32.totalorder %s14, 0
    %p35 = por %p33, %p34
    %p36 = scmp.ne.s32.totalorder %s22, %s23
    %p37 = scmp.eq.s32.totalorder %s15, 1
    %p38 = por %p36, %p37
    %p40 = scmp.ne.s32.totalorder %s23, %s39
    %p41 = scmp.eq.s32.totalorder %s15, 0
    %p42 = por %p40, %p41
    %s44 = sadd.s32 %s43, 1
    %p47 = scmp.eq.s32.totalorder %s9, 1
    %p48 = scmp.ne.s32.totalorder %s43, %s45
    %p49 = scmp.eq.s32.totalorder %s9, 0
    %p50 = por %p48, %p49
    %p51 = scmp.ne.s32.totalorder %s43, %s45
    %p52 = scmp.eq.s32.totalorder %s14, 1
    %p53 = por %p51, %p52
    %p54 = scmp.ne.s32.totalorder %s45, %s46
    %p55 = scmp.eq.s32.totalorder %s14, 0
    %p56 = por %p54, %p55
    %p57 = scmp.ne.s32.totalorder %s45, %s46
    %p58 = scmp.eq.s32.totalorder %s15, 1
    %p59 = por %p57, %p58
    %p61 = scmp.ne.s32.totalorder %s46, %s60
    %p62 = scmp.eq.s32.totalorder %s15, 0
    %p63 = por %p61, %p62
    %s65 = sadd.s32 %s64, 1
    %p68 = scmp.eq.s32.totalorder %s9, 1
    %p69 = scmp.ne.s32.totalorder %s64, %s66
    %p70 = scmp.eq.s32.totalorder %s9, 0
    %p71 = por %p69, %p70
    %p72 = scmp.ne.s32.totalorder %s64, %s66
    %p73 = scmp.eq.s32.totalorder %s14, 1
    %p74 = por %p72, %p73
    %p75 = scmp.ne.s32.totalorder %s66, %s67
    %p76 = scmp.eq.s32.totalorder %s14, 0
    %p77 = por %p75, %p76
    %p78 = scmp.ne.s32.totalorder %s66, %s67
    %p79 = scmp.eq.s32.totalorder %s15, 1
    %p80 = por %p78, %p79
    %p82 = scmp.ne.s32.totalorder %s67, %s81
    %p83 = scmp.eq.s32.totalorder %s15, 0
    %p84 = por %p82, %p83
    %s85 = ssub.s32 %s9, %s16
    %p86 = scmp.eq.s32.totalorder %s85, 0
    %s88 = sadd.s32 %s87, 1
    %s89 = scalar_select %p86, %s87, %s88
    %p92 = pneg %p86
    %p93 = scmp.eq.s32.totalorder %s9, 1
    %p94 = por %p92, %p93
    %p95 = scmp.ne.s32.totalorder %s87, %s90
    %p96 = scmp.eq.s32.totalorder %s9, 0
    %p97 = por %p95, %p96
    %p98 = scmp.ne.s32.totalorder %s87, %s90
    %p99 = scmp.eq.s32.totalorder %s14, 1
    %p100 = por %p98, %p99
    %p101 = scmp.ne.s32.totalorder %s90, %s91
    %p102 = scmp.eq.s32.totalorder %s14, 0
    %p103 = por %p101, %p102
    %p104 = scmp.ne.s32.totalorder %s90, %s91
    %p105 = scmp.eq.s32.totalorder %s15, 1
    %p106 = por %p104, %p105
    %p108 = scmp.ne.s32.totalorder %s91, %s107
    %p109 = scmp.eq.s32.totalorder %s15, 0
    %p110 = por %p108, %p109
    %p111 = scmp.le.s32.totalorder 1, %s9
    %p112 = scmp.lt.s32.totalorder %s9, 3
    %p113 = pnand %p111, %p112
    %p114 = pneg %p113
    // Predicated region
    $region9: #{network_forward.12} parent=5 // pred_check
      _
    $region10: #{network_forward.12} parent=5 // pred_check_branch
      %116 = sbr.rel (%p113) target = $region12
    $region11: #{network_forward.12} parent=5 // pred_region
      %s117 = ssub.s32 %s9, 1
      // Predicated region
      $region13: #{network_forward.12} parent=11 // pred_check
        %p118 = pneg %p56
      $region14: #{network_forward.12} parent=11 // pred_check_branch
        %120 = sbr.rel (%p118) target = $region16
      $region15: #{network_forward.12} parent=11 // pred_region
        _
      $region16: #{network_forward.12} parent=11 // pred_fallthru
        _
      // Predicated region
      $region17: #{network_forward.12} parent=11 // pred_check
        %p121 = pneg %p77
      $region18: #{network_forward.12} parent=11 // pred_check_branch
        %123 = sbr.rel (%p121) target = $region20
      $region19: #{network_forward.12} parent=11 // pred_region
        _
      $region20: #{network_forward.12} parent=11 // pred_fallthru
        _
    $region12: #{network_forward.12} parent=5 // pred_fallthru
      _
    %p124 = scmp.lt.s32.totalorder %s9, 2
    // Predicated region
    $region21: #{network_forward.12} parent=5 // pred_check
      %p125 = pneg %p124
    $region22: #{network_forward.12} parent=5 // pred_check_branch
      %127 = sbr.rel (%p125) target = $region24
    $region23: #{network_forward.12} parent=5 // pred_region
      // Predicated region
      $region25: #{network_forward.12} parent=23 // pred_check
        %p128 = pneg %p29
      $region26: #{network_forward.12} parent=23 // pred_check_branch
        %130 = sbr.rel (%p128) target = $region28
      $region27: #{network_forward.12} parent=23 // pred_region
        %s131 = smul.u32 25, %s9
        %p132 = scmp.lt.s32.totalorder %s131, 49
        %s133 = scalar_select %p132, %s131, 49
        %s134 = smul.addr %s133, 2
        %s135 = smul.addr %s134, 4
        %s136 = scalar_lea.vmem %s0, %s135
        %s137 = smul.u32 25, %s9
      $region28: #{network_forward.12} parent=23 // pred_fallthru
        _
    $region24: #{network_forward.12} parent=5 // pred_fallthru
      _
    %p138 = scmp.le.s32.totalorder 1, %s9
    %p139 = scmp.lt.s32.totalorder %s9, 3
    %p140 = pnand %p138, %p139
    %p141 = pneg %p140
    // Predicated region
    $region29: #{network_forward.12} parent=5 // pred_check
      _
    $region30: #{network_forward.12} parent=5 // pred_check_branch
      %143 = sbr.rel (%p140) target = $region32
    $region31: #{network_forward.12} parent=5 // pred_region
      %s144 = ssub.s32 %s9, 1
      %s145 = smul.u32 25, %s14
      %p146 = scmp.lt.s32.totalorder %s145, 49
      %s147 = scalar_select %p146, %s145, 49
      %s148 = smul.addr %s147, 2
      %s149 = smul.addr %s148, 4
      %s150 = scalar_lea.vmem %s0, %s149
      %p151 = pneg %p35
      %p152 = pneg %p32
      %p153 = pneg %p56
      %p154 = pneg %p53
      %p155 = pneg %p77
      %p156 = pneg %p74
      %p157 = pneg %p103
      %p158 = pneg %p100
      %s159 = smul.u32 25, %s14
      %p160 = scmp.lt.s32.totalorder %s159, 49
      %s161 = scalar_select %p160, %s159, 49
      %s162 = smul.addr %s161, 8
      %s163 = scalar_lea.vmem %s3, %s162
      %s164 = smul.u32 25, %s14
      %p165 = scmp.lt.s32.totalorder %s164, 49
      %s166 = scalar_select %p165, %s164, 49
      %s167 = smul.addr %s166, 2
      %s168 = smul.addr %s167, 4
      %s169 = scalar_lea.vmem %s0, %s168
      %s170 = smul.u32 25, %s14
      %s171 = smul.u32 25, %s14
      %p172 = scmp.lt.s32.totalorder %s171, 49
      %s173 = scalar_select %p172, %s171, 49
      %s174 = smul.addr %s173, 8
      %s175 = scalar_lea.vmem %s3, %s174
      %s176 = smul.u32 25, %s14
      %v178 = vld [vmem:[%s169] sm:$0xff]
      %v179 = vld [vmem:[%s169 + $0x8] sm:$0xff]
      %v180 = vld [vmem:[%s169 + $0x10] sm:$0xff]
      %v181 = vld [vmem:[%s169 + $0x18] sm:$0xff]
      %v182 = vld [vmem:[%s169 + $0x20] sm:$0xff]
      %v183 = vld [vmem:[%s169 + $0x28] sm:$0xff]
      %v184 = vld [vmem:[%s169 + $0x30] sm:$0xff]
      %v185 = vld [vmem:[%s169 + $0x38] sm:$0xff]
      %v186 = vld [vmem:[%s169 + $0x40] sm:$0xff]
      %v187 = vld [vmem:[%s169 + $0x48] sm:$0xff]
      %v188 = vld [vmem:[%s169 + $0x50] sm:$0xff]
      %v189 = vld [vmem:[%s169 + $0x58] sm:$0xff]
      %v190 = vld [vmem:[%s169 + $0x60] sm:$0xff]
      %v191 = vld [vmem:[%s169 + $0x68] sm:$0xff]
      %v192 = vld [vmem:[%s169 + $0x70] sm:$0xff]
      %v193 = vld [vmem:[%s169 + $0x78] sm:$0xff]
      %v194 = vld [vmem:[%s169 + $0x80] sm:$0xff]
      %v195 = vld [vmem:[%s169 + $0x88] sm:$0xff]
      %v196 = vld [vmem:[%s169 + $0x90] sm:$0xff]
      %v197 = vld [vmem:[%s169 + $0x98] sm:$0xff]
      %v198 = vld [vmem:[%s169 + $0xa0] sm:$0xff]
      %v199 = vld [vmem:[%s169 + $0xa8] sm:$0xff]
      %v200 = vld [vmem:[%s169 + $0xb0] sm:$0xff]
      %v201 = vld [vmem:[%s169 + $0xb8] sm:$0xff]
      %v202 = vld [vmem:[%s169 + $0xc0] sm:$0xff]
      %v203 = vld [vmem:[%s1] sm:$0xf]
      %v204 = vld [vmem:[%s1 + $0x4] sm:$0xf]
      %v205 = vld [vmem:[%s1 + $0x8] sm:$0xf]
      %v206 = vld [vmem:[%s1 + $0xc] sm:$0xf]
      %v207 = vld [vmem:[%s1 + $0x10] sm:$0xf]
      %v208 = vld [vmem:[%s1 + $0x14] sm:$0xf]
      %v209 = vld [vmem:[%s1 + $0x18] sm:$0xf]
      %v210 = vld [vmem:[%s1 + $0x1c] sm:$0xf]
      %v211 = vld [vmem:[%s1 + $0x20] sm:$0xf]
      %v212 = vld [vmem:[%s1 + $0x24] sm:$0xf]
      %v213 = vld [vmem:[%s1 + $0x28] sm:$0xf]
      %v214 = vld [vmem:[%s1 + $0x2c] sm:$0xf]
      %v215 = vld [vmem:[%s1 + $0x30] sm:$0xf]
      %v216 = vld [vmem:[%s1 + $0x34] sm:$0xf]
      %v217 = vld [vmem:[%s1 + $0x38] sm:$0xf]
      %v218 = vld [vmem:[%s1 + $0x3c] sm:$0xf]
      %v219 = vld [vmem:[%s1 + $0x40] sm:$0xf]
      %v220 = vld [vmem:[%s1 + $0x44] sm:$0xf]
      %v221 = vld [vmem:[%s1 + $0x48] sm:$0xf]
      %v222 = vld [vmem:[%s1 + $0x4c] sm:$0xf]
      %v223 = vld [vmem:[%s1 + $0x50] sm:$0xf]
      %v224 = vld [vmem:[%s1 + $0x54] sm:$0xf]
      %v225 = vld [vmem:[%s1 + $0x58] sm:$0xf]
      %v226 = vld [vmem:[%s1 + $0x5c] sm:$0xf]
      %v227 = vld [vmem:[%s1 + $0x60] sm:$0xf]
      %v228 = vld [vmem:[%s1 + $0x64] sm:$0xf]
      %v229 = vld [vmem:[%s1 + $0x68] sm:$0xf]
      %v230 = vld [vmem:[%s2] sm:$0x1]
      %v232 = vperm.slane %v230, 0
      %v259 = vunpack.c.l.b16 %v178
      %v260 = vunpack.c.h.b16 %v178
      %v261 = vunpack.c.l.b16 %v179
      %v262 = vunpack.c.h.b16 %v179
      %v263 = vunpack.c.l.b16 %v180
      %v264 = vunpack.c.h.b16 %v180
      %v265 = vunpack.c.l.b16 %v181
      %v266 = vunpack.c.h.b16 %v181
      %v267 = vunpack.c.l.b16 %v182
      %v268 = vunpack.c.h.b16 %v182
      %v269 = vunpack.c.l.b16 %v183
      %v270 = vunpack.c.h.b16 %v183
      %v271 = vunpack.c.l.b16 %v184
      %v272 = vunpack.c.h.b16 %v184
      %v273 = vunpack.c.l.b16 %v185
      %v274 = vunpack.c.h.b16 %v185
      %v275 = vunpack.c.l.b16 %v186
      %v276 = vunpack.c.h.b16 %v186
      %v277 = vunpack.c.l.b16 %v187
      %v278 = vunpack.c.h.b16 %v187
      %v279 = vunpack.c.l.b16 %v188
      %v280 = vunpack.c.h.b16 %v188
      %v281 = vunpack.c.l.b16 %v189
      %v282 = vunpack.c.h.b16 %v189
      %v283 = vunpack.c.l.b16 %v190
      %v284 = vunpack.c.h.b16 %v190
      %v285 = vunpack.c.l.b16 %v191
      %v286 = vunpack.c.h.b16 %v191
      %v287 = vunpack.c.l.b16 %v192
      %v288 = vunpack.c.h.b16 %v192
      %v289 = vunpack.c.l.b16 %v193
      %v290 = vunpack.c.h.b16 %v193
      %v291 = vunpack.c.l.b16 %v194
      %v292 = vunpack.c.h.b16 %v194
      %v293 = vunpack.c.l.b16 %v195
      %v294 = vunpack.c.h.b16 %v195
      %v295 = vunpack.c.l.b16 %v196
      %v296 = vunpack.c.h.b16 %v196
      %v297 = vunpack.c.l.b16 %v197
      %v298 = vunpack.c.h.b16 %v197
      %v299 = vunpack.c.l.b16 %v198
      %v300 = vunpack.c.h.b16 %v198
      %v301 = vunpack.c.l.b16 %v199
      %v302 = vunpack.c.h.b16 %v199
      %v303 = vunpack.c.l.b16 %v200
      %v304 = vunpack.c.h.b16 %v200
      %v305 = vunpack.c.l.b16 %v201
      %v306 = vunpack.c.h.b16 %v201
      %v307 = vunpack.c.l.b16 %v202
      %v308 = vunpack.c.h.b16 %v202
      %v309 = vpack.c.b16 %v261, %v259
      %v310 = vpack.c.b16 %v262, %v260
      %v311 = vpack.c.b16 %v265, %v263
      %v312 = vpack.c.b16 %v266, %v264
      %v313 = vpack.c.b16 %v269, %v267
      %v314 = vpack.c.b16 %v270, %v268
      %v315 = vpack.c.b16 %v273, %v271
      %v316 = vpack.c.b16 %v274, %v272
      %v317 = vpack.c.b16 %v277, %v275
      %v318 = vpack.c.b16 %v278, %v276
      %v319 = vpack.c.b16 %v281, %v279
      %v320 = vpack.c.b16 %v282, %v280
      %v321 = vpack.c.b16 %v285, %v283
      %v322 = vpack.c.b16 %v286, %v284
      %v323 = vpack.c.b16 %v289, %v287
      %v324 = vpack.c.b16 %v290, %v288
      %v325 = vpack.c.b16 %v293, %v291
      %v326 = vpack.c.b16 %v294, %v292
      %v327 = vpack.c.b16 %v297, %v295
      %v328 = vpack.c.b16 %v298, %v296
      %v329 = vpack.c.b16 %v301, %v299
      %v330 = vpack.c.b16 %v302, %v300
      %v331 = vpack.c.b16 %v305, %v303
      %v332 = vpack.c.b16 %v306, %v304
      %v333 = vpack.c.b16 %v307, %v307
      %v334 = vpack.c.b16 %v308, %v308
      %v375 = vunpack.c.l.b16 %v203
      %v376 = vunpack.c.l.b16 %v204
      %v377 = vunpack.c.l.b16 %v205
      %v378 = vunpack.c.l.b16 %v206
      %v379 = vunpack.c.l.b16 %v207
      %v380 = vunpack.c.l.b16 %v208
      %v381 = vunpack.c.l.b16 %v209
      %v382 = vunpack.c.l.b16 %v210
      %v383 = vunpack.c.l.b16 %v211
      %v384 = vunpack.c.l.b16 %v212
      %v385 = vunpack.c.l.b16 %v213
      %v386 = vunpack.c.l.b16 %v214
      %v387 = vunpack.c.l.b16 %v215
      %v388 = vunpack.c.l.b16 %v216
      %v389 = vunpack.c.l.b16 %v217
      %v390 = vunpack.c.l.b16 %v218
      %v391 = vunpack.c.l.b16 %v219
      %v392 = vunpack.c.l.b16 %v220
      %v393 = vunpack.c.l.b16 %v221
      %v394 = vunpack.c.l.b16 %v222
      %v395 = vunpack.c.l.b16 %v223
      %v396 = vunpack.c.l.b16 %v224
      %v397 = vunpack.c.l.b16 %v225
      %v398 = vunpack.c.l.b16 %v226
      %v399 = vunpack.c.l.b16 %v227
      %v400 = vunpack.c.l.b16 %v228
      %v401 = vunpack.c.l.b16 %v229
      %v402 = vpack.c.b16 %v376, %v375
      %v403 = vpack.c.b16 %v378, %v377
      %v404 = vpack.c.b16 %v380, %v379
      %v405 = vpack.c.b16 %v382, %v381
      %v406 = vpack.c.b16 %v384, %v383
      %v407 = vpack.c.b16 %v386, %v385
      %v408 = vpack.c.b16 %v388, %v387
      %v409 = vpack.c.b16 %v390, %v389
      %v410 = vpack.c.b16 %v392, %v391
      %v411 = vpack.c.b16 %v394, %v393
      %v412 = vpack.c.b16 %v396, %v395
      %v413 = vpack.c.b16 %v398, %v397
      %v414 = vpack.c.b16 %v400, %v399
      %v415 = vpack.c.b16 %v401, %v401
      %vm429 = vcmask 719872
      %v431 = vsel %vm429, %v310, 0
      %v434 = vsel %vm429, %v312, 0
      %v437 = vsel %vm429, %v314, 0
      %v440 = vsel %vm429, %v316, 0
      %v443 = vsel %vm429, %v318, 0
      %v446 = vsel %vm429, %v320, 0
      %v449 = vsel %vm429, %v322, 0
      %v452 = vsel %vm429, %v324, 0
      %v455 = vsel %vm429, %v326, 0
      %v458 = vsel %vm429, %v328, 0
      %v461 = vsel %vm429, %v330, 0
      %v464 = vsel %vm429, %v332, 0
      %v467 = vsel %vm429, %v334, 0
      %vm469 = vcmask 1043456
      %v471 = vsel %vm469, %v415, 0
      %473 = vmatpush.bf16.msra.mxu0 %v409
      %474 = vmatpush.bf16.msra.mxu0 %v408
      %475 = vmatpush.bf16.msra.mxu0 %v407
      %476 = vmatpush.bf16.msra.mxu0 %v406
      %477 = vmatpush.bf16.msra.mxu0 %v405
      %478 = vmatpush.bf16.msra.mxu0 %v404
      %479 = vmatpush.bf16.msra.mxu0 %v403
      %480 = vmatpush.bf16.msra.mxu0 %v402
      %481 = vmatmul.bf16.gmra.mxu0 %v309
      %v482 = vpop.f32.mrf.mxu0
      %v483 = vadd.f32 %v232, %v482
      %v484 = vpop.f32.mrf.mxu0
      %v485 = vadd.f32 %v232, %v484
      %486 = vmatmul.bf16.gmra.mxu0 %v311
      %v487 = vpop.f32.mrf.mxu0
      %v488 = vadd.f32 %v232, %v487
      %v489 = vpop.f32.mrf.mxu0
      %v490 = vadd.f32 %v232, %v489
      %491 = vmatmul.bf16.gmra.mxu0 %v313
      %v492 = vpop.f32.mrf.mxu0
      %v493 = vadd.f32 %v232, %v492
      %v494 = vpop.f32.mrf.mxu0
      %v495 = vadd.f32 %v232, %v494
      %496 = vmatmul.bf16.gmra.mxu0 %v315
      %v497 = vpop.f32.mrf.mxu0
      %v498 = vadd.f32 %v232, %v497
      %v499 = vpop.f32.mrf.mxu0
      %v500 = vadd.f32 %v232, %v499
      %501 = vmatmul.bf16.gmra.mxu0 %v317
      %v502 = vpop.f32.mrf.mxu0
      %v503 = vadd.f32 %v232, %v502
      %v504 = vpop.f32.mrf.mxu0
      %v505 = vadd.f32 %v232, %v504
      %506 = vmatmul.bf16.gmra.mxu0 %v319
      %v507 = vpop.f32.mrf.mxu0
      %v508 = vadd.f32 %v232, %v507
      %v509 = vpop.f32.mrf.mxu0
      %v510 = vadd.f32 %v232, %v509
      %511 = vmatmul.bf16.gmra.mxu0 %v321
      %v512 = vpop.f32.mrf.mxu0
      %v513 = vadd.f32 %v232, %v512
      %v514 = vpop.f32.mrf.mxu0
      %v515 = vadd.f32 %v232, %v514
      %516 = vmatmul.bf16.gmra.mxu0 %v323
      %v517 = vpop.f32.mrf.mxu0
      %v518 = vadd.f32 %v232, %v517
      %v519 = vpop.f32.mrf.mxu0
      %v520 = vadd.f32 %v232, %v519
      %521 = vmatmul.bf16.gmra.mxu0 %v325
      %v522 = vpop.f32.mrf.mxu0
      %v523 = vadd.f32 %v232, %v522
      %v524 = vpop.f32.mrf.mxu0
      %v525 = vadd.f32 %v232, %v524
      %526 = vmatmul.bf16.gmra.mxu0 %v327
      %v527 = vpop.f32.mrf.mxu0
      %v528 = vadd.f32 %v232, %v527
      %v529 = vpop.f32.mrf.mxu0
      %v530 = vadd.f32 %v232, %v529
      %531 = vmatmul.bf16.gmra.mxu0 %v329
      %v532 = vpop.f32.mrf.mxu0
      %v533 = vadd.f32 %v232, %v532
      %v534 = vpop.f32.mrf.mxu0
      %v535 = vadd.f32 %v232, %v534
      %536 = vmatmul.bf16.gmra.mxu0 %v331
      %v537 = vpop.f32.mrf.mxu0
      %v538 = vadd.f32 %v232, %v537
      %v539 = vpop.f32.mrf.mxu0
      %v540 = vadd.f32 %v232, %v539
      %541 = vmatmul.bf16.gmra.mxu0 %v333
      %v542 = vpop.f32.mrf.mxu0
      %v543 = vadd.f32 %v232, %v542
      %v544 = vpop.f32.mrf.mxu0
      %545 = vdwg.mxu0
      %546 = vmatpush.bf16.msra.mxu0 0
      %547 = vmatpush.bf16.msra.mxu0 0
      %548 = vmatpush.bf16.msra.mxu0 %v471
      %549 = vmatpush.bf16.msra.mxu0 %v414
      %550 = vmatpush.bf16.msra.mxu0 %v413
      %551 = vmatpush.bf16.msra.mxu0 %v412
      %552 = vmatpush.bf16.msra.mxu0 %v411
      %553 = vmatpush.bf16.msra.mxu0 %v410
      %554 = vmatmul.bf16.gmra.mxu0 %v431
      %v555 = vpop.f32.mrf.mxu0
      %v556 = vadd.f32 %v483, %v555
      %v557 = vpop.f32.mrf.mxu0
      %v558 = vadd.f32 %v485, %v557
      %559 = vmatmul.bf16.gmra.mxu0 %v434
      %v560 = vpop.f32.mrf.mxu0
      %v561 = vadd.f32 %v488, %v560
      %v562 = vpop.f32.mrf.mxu0
      %v563 = vadd.f32 %v490, %v562
      %564 = vmatmul.bf16.gmra.mxu0 %v437
      %v565 = vpop.f32.mrf.mxu0
      %v566 = vadd.f32 %v493, %v565
      %v567 = vpop.f32.mrf.mxu0
      %v568 = vadd.f32 %v495, %v567
      %569 = vmatmul.bf16.gmra.mxu0 %v440
      %v570 = vpop.f32.mrf.mxu0
      %v571 = vadd.f32 %v498, %v570
      %v572 = vpop.f32.mrf.mxu0
      %v573 = vadd.f32 %v500, %v572
      %574 = vmatmul.bf16.gmra.mxu0 %v443
      %v575 = vpop.f32.mrf.mxu0
      %v576 = vadd.f32 %v503, %v575
      %v577 = vpop.f32.mrf.mxu0
      %v578 = vadd.f32 %v505, %v577
      %579 = vmatmul.bf16.gmra.mxu0 %v446
      %v580 = vpop.f32.mrf.mxu0
      %v581 = vadd.f32 %v508, %v580
      %v582 = vpop.f32.mrf.mxu0
      %v583 = vadd.f32 %v510, %v582
      %584 = vmatmul.bf16.gmra.mxu0 %v449
      %v585 = vpop.f32.mrf.mxu0
      %v586 = vadd.f32 %v513, %v585
      %v587 = vpop.f32.mrf.mxu0
      %v588 = vadd.f32 %v515, %v587
      %589 = vmatmul.bf16.gmra.mxu0 %v452
      %v590 = vpop.f32.mrf.mxu0
      %v591 = vadd.f32 %v518, %v590
      %v592 = vpop.f32.mrf.mxu0
      %v593 = vadd.f32 %v520, %v592
      %594 = vmatmul.bf16.gmra.mxu0 %v455
      %v595 = vpop.f32.mrf.mxu0
      %v596 = vadd.f32 %v523, %v595
      %v597 = vpop.f32.mrf.mxu0
      %v598 = vadd.f32 %v525, %v597
      %599 = vmatmul.bf16.gmra.mxu0 %v458
      %v600 = vpop.f32.mrf.mxu0
      %v601 = vadd.f32 %v528, %v600
      %v602 = vpop.f32.mrf.mxu0
      %v603 = vadd.f32 %v530, %v602
      %604 = vmatmul.bf16.gmra.mxu0 %v461
      %v605 = vpop.f32.mrf.mxu0
      %v606 = vadd.f32 %v533, %v605
      %v607 = vpop.f32.mrf.mxu0
      %v608 = vadd.f32 %v535, %v607
      %609 = vmatmul.bf16.gmra.mxu0 %v464
      %v610 = vpop.f32.mrf.mxu0
      %v611 = vadd.f32 %v538, %v610
      %v612 = vpop.f32.mrf.mxu0
      %v613 = vadd.f32 %v540, %v612
      %614 = vmatmul.bf16.gmra.mxu0 %v467
      %v615 = vpop.f32.mrf.mxu0
      %v616 = vadd.f32 %v543, %v615
      %v617 = vpop.f32.mrf.mxu0
      %618 = vdwg.mxu0
      %v619 = vmax.f32 %v556, 0.0
      %v620 = vmax.f32 %v558, 0.0
      %v621 = vmax.f32 %v561, 0.0
      %v622 = vmax.f32 %v563, 0.0
      %v623 = vmax.f32 %v566, 0.0
      %v624 = vmax.f32 %v568, 0.0
      %v625 = vmax.f32 %v571, 0.0
      %v626 = vmax.f32 %v573, 0.0
      %v627 = vmax.f32 %v576, 0.0
      %v628 = vmax.f32 %v578, 0.0
      %v629 = vmax.f32 %v581, 0.0
      %v630 = vmax.f32 %v583, 0.0
      %v631 = vmax.f32 %v586, 0.0
      %v632 = vmax.f32 %v588, 0.0
      %v633 = vmax.f32 %v591, 0.0
      %v634 = vmax.f32 %v593, 0.0
      %v635 = vmax.f32 %v596, 0.0
      %v636 = vmax.f32 %v598, 0.0
      %v637 = vmax.f32 %v601, 0.0
      %v638 = vmax.f32 %v603, 0.0
      %v639 = vmax.f32 %v606, 0.0
      %v640 = vmax.f32 %v608, 0.0
      %v641 = vmax.f32 %v611, 0.0
      %v642 = vmax.f32 %v613, 0.0
      %v643 = vmax.f32 %v616, 0.0
      %vm644 = vcmask 130048
      %645 = vst.msk [vmem:[%s175] sm:$0xff] %vm644, %v619
      %646 = vst.msk [vmem:[%s175 + $0x8] sm:$0xff] %vm644, %v620
      %647 = vst.msk [vmem:[%s175 + $0x10] sm:$0xff] %vm644, %v621
      %648 = vst.msk [vmem:[%s175 + $0x18] sm:$0xff] %vm644, %v622
      %649 = vst.msk [vmem:[%s175 + $0x20] sm:$0xff] %vm644, %v623
      %650 = vst.msk [vmem:[%s175 + $0x28] sm:$0xff] %vm644, %v624
      %651 = vst.msk [vmem:[%s175 + $0x30] sm:$0xff] %vm644, %v625
      %652 = vst.msk [vmem:[%s175 + $0x38] sm:$0xff] %vm644, %v626
      %653 = vst.msk [vmem:[%s175 + $0x40] sm:$0xff] %vm644, %v627
      %654 = vst.msk [vmem:[%s175 + $0x48] sm:$0xff] %vm644, %v628
      %655 = vst.msk [vmem:[%s175 + $0x50] sm:$0xff] %vm644, %v629
      %656 = vst.msk [vmem:[%s175 + $0x58] sm:$0xff] %vm644, %v630
      %657 = vst.msk [vmem:[%s175 + $0x60] sm:$0xff] %vm644, %v631
      %658 = vst.msk [vmem:[%s175 + $0x68] sm:$0xff] %vm644, %v632
      %659 = vst.msk [vmem:[%s175 + $0x70] sm:$0xff] %vm644, %v633
      %660 = vst.msk [vmem:[%s175 + $0x78] sm:$0xff] %vm644, %v634
      %661 = vst.msk [vmem:[%s175 + $0x80] sm:$0xff] %vm644, %v635
      %662 = vst.msk [vmem:[%s175 + $0x88] sm:$0xff] %vm644, %v636
      %663 = vst.msk [vmem:[%s175 + $0x90] sm:$0xff] %vm644, %v637
      %664 = vst.msk [vmem:[%s175 + $0x98] sm:$0xff] %vm644, %v638
      %665 = vst.msk [vmem:[%s175 + $0xa0] sm:$0xff] %vm644, %v639
      %666 = vst.msk [vmem:[%s175 + $0xa8] sm:$0xff] %vm644, %v640
      %667 = vst.msk [vmem:[%s175 + $0xb0] sm:$0xff] %vm644, %v641
      %668 = vst.msk [vmem:[%s175 + $0xb8] sm:$0xff] %vm644, %v642
      %669 = vst.msk [vmem:[%s175 + $0xc0] sm:$0xff] %vm644, %v643
      %s670 = smul.u32 25, %s14
      %p671 = scmp.lt.s32.totalorder %s670, 49
      %s672 = scalar_select %p671, %s670, 49
      %s673 = smul.addr %s672, 8
      %s674 = scalar_lea.vmem %s3, %s673
      // Predicated region
      $region33: #{network_forward.12} parent=31 // pred_check
        %p675 = pneg %p100
      $region34: #{network_forward.12} parent=31 // pred_check_branch
        %677 = sbr.rel (%p675) target = $region36
      $region35: #{network_forward.12} parent=31 // pred_region
        %s678 = smul.u32 25, %s14
      $region36: #{network_forward.12} parent=31 // pred_fallthru
        _
    $region32: #{network_forward.12} parent=5 // pred_fallthru
      _
    %p679 = scmp.le.s32.totalorder 2, %s9
    // Predicated region
    $region37: #{network_forward.12} parent=5 // pred_check
      %p680 = pneg %p679
    $region38: #{network_forward.12} parent=5 // pred_check_branch
      %682 = sbr.rel (%p680) target = $region40
    $region39: #{network_forward.12} parent=5 // pred_region
      %s683 = ssub.s32 %s9, 2
      // Predicated region
      $region41: #{network_forward.12} parent=39 // pred_check
        %p684 = pneg %p106
      $region42: #{network_forward.12} parent=39 // pred_check_branch
        %686 = sbr.rel (%p684) target = $region44
      $region43: #{network_forward.12} parent=39 // pred_region
        %s687 = smul.u32 25, %s15
        %p688 = scmp.lt.s32.totalorder %s687, 49
        %s689 = scalar_select %p688, %s687, 49
        %s690 = smul.addr %s689, 8
        %s691 = scalar_lea.vmem %s3, %s690
      $region44: #{network_forward.12} parent=39 // pred_fallthru
        _
    $region40: #{network_forward.12} parent=5 // pred_fallthru
      _
  $region6: #{network_forward.12} parent=0 // loop_footer
    %s13 = sadd.s32 1, %s9
  $region7: #{network_forward.12} parent=0 // loop_footer_branch
    %8 = sbr.rel target = $region3
  $region8: #{network_forward.12} parent=0 // loop_exit
    _

// kernel: network_forward.13
$region0: #{network_forward.13}
  #allocation0 [shape = 'u32[]', space=smem, size = 0x4, offset = 0x4, fixed_abs, tag = 'smem constant byte address 0x4 - core index']
  #allocation1 [shape = 'u32[72,128]{1,0:T(1,128)}', space=vmem, size = 0x9000, scoped, tag = 'internal scratch']
  %s0 = inlined_call_operand.vmem [shape: bf16[400,432], index: 0, kind: input, shape index: {}]
  %s1 = inlined_call_operand.vmem [shape: bf16[432,16], index: 1, kind: input, shape index: {}]
  %s2 = inlined_call_operand.vmem [shape: f32[1,16], index: 2, kind: input, shape index: {}]
  %s3 = inlined_call_operand.vmem [shape: f32[400,16], index: 3, kind: output, shape index: {}]
  %s4 = sld [smem:[#allocation0]]
  $region45: #{network_forward.13} parent=0
    _
  %s6 = ssub.s32 1, %s4
  %s7 = scalar_select 0, %s6, %s4
  loop: start=0, step=1, limit=4
  $region2: #{network_forward.13} parent=0 // loop_pre_header
    _
  $region3: #{network_forward.13} parent=0 // loop_header
    %s9 = sphi 0, %s13
    %p10 = scmp.ge.s32.totalorder %s9, 4
    %s19 = sphi 0, %s21
    %s22 = sphi 0, %s19
    %s23 = sphi 0, %s22
    %s39 = sphi 0, %s23
    %s43 = sphi 0, %s43
    %s45 = sphi 0, %s43
    %s46 = sphi 0, %s45
    %s60 = sphi 0, %s46
    %s64 = sphi 0, %s64
    %s66 = sphi 0, %s64
    %s67 = sphi 0, %s66
    %s81 = sphi 0, %s67
    %s87 = sphi 0, %s89
    %s90 = sphi 0, %s87
    %s91 = sphi 0, %s90
    %s107 = sphi 0, %s91
  $region4: #{network_forward.13} parent=0 // loop_header_branch
    %12 = sbr.rel (%p10) target = $region8
  $region5: #{network_forward.13} parent=0 // loop_body
    %s14 = ssub.s32 %s9, 1
    %s15 = ssub.s32 %s9, 2
    %s16 = sadd.s32 %s9, 1
    %s17 = ssub.s32 %s9, %s16
    %p18 = scmp.eq.s32.totalorder %s17, 0
    %s20 = sadd.s32 %s19, 1
    %s21 = scalar_select %p18, %s19, %s20
    %p24 = pneg %p18
    %p25 = scmp.eq.s32.totalorder %s9, 1
    %p26 = por %p24, %p25
    %p27 = scmp.ne.s32.totalorder %s19, %s22
    %p28 = scmp.eq.s32.totalorder %s9, 0
    %p29 = por %p27, %p28
    %p30 = scmp.ne.s32.totalorder %s19, %s22
    %p31 = scmp.eq.s32.totalorder %s14, 1
    %p32 = por %p30, %p31
    %p33 = scmp.ne.s32.totalorder %s22, %s23
    %p34 = scmp.eq.s32.totalorder %s14, 0
    %p35 = por %p33, %p34
    %p36 = scmp.ne.s32.totalorder %s22, %s23
    %p37 = scmp.eq.s32.totalorder %s15, 1
    %p38 = por %p36, %p37
    %p40 = scmp.ne.s32.totalorder %s23, %s39
    %p41 = scmp.eq.s32.totalorder %s15, 0
    %p42 = por %p40, %p41
    %s44 = sadd.s32 %s43, 1
    %p47 = scmp.eq.s32.totalorder %s9, 1
    %p48 = scmp.ne.s32.totalorder %s43, %s45
    %p49 = scmp.eq.s32.totalorder %s9, 0
    %p50 = por %p48, %p49
    %p51 = scmp.ne.s32.totalorder %s43, %s45
    %p52 = scmp.eq.s32.totalorder %s14, 1
    %p53 = por %p51, %p52
    %p54 = scmp.ne.s32.totalorder %s45, %s46
    %p55 = scmp.eq.s32.totalorder %s14, 0
    %p56 = por %p54, %p55
    %p57 = scmp.ne.s32.totalorder %s45, %s46
    %p58 = scmp.eq.s32.totalorder %s15, 1
    %p59 = por %p57, %p58
    %p61 = scmp.ne.s32.totalorder %s46, %s60
    %p62 = scmp.eq.s32.totalorder %s15, 0
    %p63 = por %p61, %p62
    %s65 = sadd.s32 %s64, 1
    %p68 = scmp.eq.s32.totalorder %s9, 1
    %p69 = scmp.ne.s32.totalorder %s64, %s66
    %p70 = scmp.eq.s32.totalorder %s9, 0
    %p71 = por %p69, %p70
    %p72 = scmp.ne.s32.totalorder %s64, %s66
    %p73 = scmp.eq.s32.totalorder %s14, 1
    %p74 = por %p72, %p73
    %p75 = scmp.ne.s32.totalorder %s66, %s67
    %p76 = scmp.eq.s32.totalorder %s14, 0
    %p77 = por %p75, %p76
    %p78 = scmp.ne.s32.totalorder %s66, %s67
    %p79 = scmp.eq.s32.totalorder %s15, 1
    %p80 = por %p78, %p79
    %p82 = scmp.ne.s32.totalorder %s67, %s81
    %p83 = scmp.eq.s32.totalorder %s15, 0
    %p84 = por %p82, %p83
    %s85 = ssub.s32 %s9, %s16
    %p86 = scmp.eq.s32.totalorder %s85, 0
    %s88 = sadd.s32 %s87, 1
    %s89 = scalar_select %p86, %s87, %s88
    %p92 = pneg %p86
    %p93 = scmp.eq.s32.totalorder %s9, 1
    %p94 = por %p92, %p93
    %p95 = scmp.ne.s32.totalorder %s87, %s90
    %p96 = scmp.eq.s32.totalorder %s9, 0
    %p97 = por %p95, %p96
    %p98 = scmp.ne.s32.totalorder %s87, %s90
    %p99 = scmp.eq.s32.totalorder %s14, 1
    %p100 = por %p98, %p99
    %p101 = scmp.ne.s32.totalorder %s90, %s91
    %p102 = scmp.eq.s32.totalorder %s14, 0
    %p103 = por %p101, %p102
    %p104 = scmp.ne.s32.totalorder %s90, %s91
    %p105 = scmp.eq.s32.totalorder %s15, 1
    %p106 = por %p104, %p105
    %p108 = scmp.ne.s32.totalorder %s91, %s107
    %p109 = scmp.eq.s32.totalorder %s15, 0
    %p110 = por %p108, %p109
    %p111 = scmp.le.s32.totalorder 1, %s9
    %p112 = scmp.lt.s32.totalorder %s9, 3
    %p113 = pnand %p111, %p112
    %p114 = pneg %p113
    // Predicated region
    $region9: #{network_forward.13} parent=5 // pred_check
      _
    $region10: #{network_forward.13} parent=5 // pred_check_branch
      %116 = sbr.rel (%p113) target = $region12
    $region11: #{network_forward.13} parent=5 // pred_region
      %s117 = ssub.s32 %s9, 1
      // Predicated region
      $region13: #{network_forward.13} parent=11 // pred_check
        %p118 = pneg %p56
      $region14: #{network_forward.13} parent=11 // pred_check_branch
        %120 = sbr.rel (%p118) target = $region16
      $region15: #{network_forward.13} parent=11 // pred_region
        _
      $region16: #{network_forward.13} parent=11 // pred_fallthru
        _
      // Predicated region
      $region17: #{network_forward.13} parent=11 // pred_check
        %p121 = pneg %p77
      $region18: #{network_forward.13} parent=11 // pred_check_branch
        %123 = sbr.rel (%p121) target = $region20
      $region19: #{network_forward.13} parent=11 // pred_region
        _
      $region20: #{network_forward.13} parent=11 // pred_fallthru
        _
    $region12: #{network_forward.13} parent=5 // pred_fallthru
      _
    %p124 = scmp.lt.s32.totalorder %s9, 2
    // Predicated region
    $region21: #{network_forward.13} parent=5 // pred_check
      %p125 = pneg %p124
    $region22: #{network_forward.13} parent=5 // pred_check_branch
      %127 = sbr.rel (%p125) target = $region24
    $region23: #{network_forward.13} parent=5 // pred_region
      // Predicated region
      $region25: #{network_forward.13} parent=23 // pred_check
        %p128 = pneg %p29
      $region26: #{network_forward.13} parent=23 // pred_check_branch
        %130 = sbr.rel (%p128) target = $region28
      $region27: #{network_forward.13} parent=23 // pred_region
        %s131 = smul.u32 25, %s9
        %p132 = scmp.lt.s32.totalorder %s131, 49
        %s133 = scalar_select %p132, %s131, 49
        %s134 = smul.addr %s133, 4
        %s135 = smul.addr %s134, 4
        %s136 = scalar_lea.vmem %s0, %s135
        %s137 = smul.u32 25, %s9
      $region28: #{network_forward.13} parent=23 // pred_fallthru
        _
    $region24: #{network_forward.13} parent=5 // pred_fallthru
      _
    %p138 = scmp.le.s32.totalorder 1, %s9
    %p139 = scmp.lt.s32.totalorder %s9, 3
    %p140 = pnand %p138, %p139
    %p141 = pneg %p140
    // Predicated region
    $region29: #{network_forward.13} parent=5 // pred_check
      _
    $region30: #{network_forward.13} parent=5 // pred_check_branch
      %143 = sbr.rel (%p140) target = $region32
    $region31: #{network_forward.13} parent=5 // pred_region
      %s144 = ssub.s32 %s9, 1
      %s145 = smul.u32 25, %s14
      %p146 = scmp.lt.s32.totalorder %s145, 49
      %s147 = scalar_select %p146, %s145, 49
      %s148 = smul.addr %s147, 4
      %s149 = smul.addr %s148, 4
      %s150 = scalar_lea.vmem %s0, %s149
      %p151 = pneg %p35
      %p152 = pneg %p32
      %p153 = pneg %p56
      %p154 = pneg %p53
      %p155 = pneg %p77
      %p156 = pneg %p74
      %p157 = pneg %p103
      %p158 = pneg %p100
      %s159 = smul.u32 25, %s14
      %p160 = scmp.lt.s32.totalorder %s159, 49
      %s161 = scalar_select %p160, %s159, 49
      %s162 = smul.addr %s161, 8
      %s163 = scalar_lea.vmem %s3, %s162
      %s164 = smul.u32 25, %s14
      %p165 = scmp.lt.s32.totalorder %s164, 49
      %s166 = scalar_select %p165, %s164, 49
      %s167 = smul.addr %s166, 4
      %s168 = smul.addr %s167, 4
      %s169 = scalar_lea.vmem %s0, %s168
      %s170 = smul.u32 25, %s14
      %s171 = smul.u32 25, %s14
      %p172 = scmp.lt.s32.totalorder %s171, 49
      %s173 = scalar_select %p172, %s171, 49
      %s174 = smul.addr %s173, 8
      %s175 = scalar_lea.vmem %s3, %s174
      %s176 = smul.u32 25, %s14
      %v178 = vld [vmem:[%s169] sm:$0xff]
      %v179 = vld [vmem:[%s169 + $0x8] sm:$0xff]
      %v180 = vld [vmem:[%s169 + $0x10] sm:$0xff]
      %v181 = vld [vmem:[%s169 + $0x18] sm:$0xff]
      %v182 = vld [vmem:[%s169 + $0x20] sm:$0xff]
      %v183 = vld [vmem:[%s169 + $0x28] sm:$0xff]
      %v184 = vld [vmem:[%s169 + $0x30] sm:$0xff]
      %v185 = vld [vmem:[%s169 + $0x38] sm:$0xff]
      %v186 = vld [vmem:[%s169 + $0x40] sm:$0xff]
      %v187 = vld [vmem:[%s169 + $0x48] sm:$0xff]
      %v188 = vld [vmem:[%s169 + $0x50] sm:$0xff]
      %v189 = vld [vmem:[%s169 + $0x58] sm:$0xff]
      %v190 = vld [vmem:[%s169 + $0x60] sm:$0xff]
      %v191 = vld [vmem:[%s169 + $0x68] sm:$0xff]
      %v192 = vld [vmem:[%s169 + $0x70] sm:$0xff]
      %v193 = vld [vmem:[%s169 + $0x78] sm:$0xff]
      %v194 = vld [vmem:[%s169 + $0x80] sm:$0xff]
      %v195 = vld [vmem:[%s169 + $0x88] sm:$0xff]
      %v196 = vld [vmem:[%s169 + $0x90] sm:$0xff]
      %v197 = vld [vmem:[%s169 + $0x98] sm:$0xff]
      %v198 = vld [vmem:[%s169 + $0xa0] sm:$0xff]
      %v199 = vld [vmem:[%s169 + $0xa8] sm:$0xff]
      %v200 = vld [vmem:[%s169 + $0xb0] sm:$0xff]
      %v201 = vld [vmem:[%s169 + $0xb8] sm:$0xff]
      %v202 = vld [vmem:[%s169 + $0xc0] sm:$0xff]
      %v203 = vld [vmem:[%s169 + $0xc8] sm:$0xff]
      %v204 = vld [vmem:[%s169 + $0xd0] sm:$0xff]
      %v205 = vld [vmem:[%s169 + $0xd8] sm:$0xff]
      %v206 = vld [vmem:[%s169 + $0xe0] sm:$0xff]
      %v207 = vld [vmem:[%s169 + $0xe8] sm:$0xff]
      %v208 = vld [vmem:[%s169 + $0xf0] sm:$0xff]
      %v209 = vld [vmem:[%s169 + $0xf8] sm:$0xff]
      %v210 = vld [vmem:[%s169 + $0x100] sm:$0xff]
      %v211 = vld [vmem:[%s169 + $0x108] sm:$0xff]
      %v212 = vld [vmem:[%s169 + $0x110] sm:$0xff]
      %v213 = vld [vmem:[%s169 + $0x118] sm:$0xff]
      %v214 = vld [vmem:[%s169 + $0x120] sm:$0xff]
      %v215 = vld [vmem:[%s169 + $0x128] sm:$0xff]
      %v216 = vld [vmem:[%s169 + $0x130] sm:$0xff]
      %v217 = vld [vmem:[%s169 + $0x138] sm:$0xff]
      %v218 = vld [vmem:[%s169 + $0x140] sm:$0xff]
      %v219 = vld [vmem:[%s169 + $0x148] sm:$0xff]
      %v220 = vld [vmem:[%s169 + $0x150] sm:$0xff]
      %v221 = vld [vmem:[%s169 + $0x158] sm:$0xff]
      %v222 = vld [vmem:[%s169 + $0x160] sm:$0xff]
      %v223 = vld [vmem:[%s169 + $0x168] sm:$0xff]
      %v224 = vld [vmem:[%s169 + $0x170] sm:$0xff]
      %v225 = vld [vmem:[%s169 + $0x178] sm:$0xff]
      %v226 = vld [vmem:[%s169 + $0x180] sm:$0xff]
      %v227 = vld [vmem:[%s169 + $0x188] sm:$0xff]
      %v228 = vld [vmem:[%s1] sm:$0xf]
      %v229 = vld [vmem:[%s1 + $0x4] sm:$0xf]
      %v230 = vld [vmem:[%s1 + $0x8] sm:$0xf]
      %v231 = vld [vmem:[%s1 + $0xc] sm:$0xf]
      %v232 = vld [vmem:[%s1 + $0x10] sm:$0xf]
      %v233 = vld [vmem:[%s1 + $0x14] sm:$0xf]
      %v234 = vld [vmem:[%s1 + $0x18] sm:$0xf]
      %v235 = vld [vmem:[%s1 + $0x1c] sm:$0xf]
      %v236 = vld [vmem:[%s1 + $0x20] sm:$0xf]
      %v237 = vld [vmem:[%s1 + $0x24] sm:$0xf]
      %v238 = vld [vmem:[%s1 + $0x28] sm:$0xf]
      %v239 = vld [vmem:[%s1 + $0x2c] sm:$0xf]
      %v240 = vld [vmem:[%s1 + $0x30] sm:$0xf]
      %v241 = vld [vmem:[%s1 + $0x34] sm:$0xf]
      %v242 = vld [vmem:[%s1 + $0x38] sm:$0xf]
      %v243 = vld [vmem:[%s1 + $0x3c] sm:$0xf]
      %v244 = vld [vmem:[%s1 + $0x40] sm:$0xf]
      %v245 = vld [vmem:[%s1 + $0x44] sm:$0xf]
      %v246 = vld [vmem:[%s1 + $0x48] sm:$0xf]
      %v247 = vld [vmem:[%s1 + $0x4c] sm:$0xf]
      %v248 = vld [vmem:[%s1 + $0x50] sm:$0xf]
      %v249 = vld [vmem:[%s1 + $0x54] sm:$0xf]
      %v250 = vld [vmem:[%s1 + $0x58] sm:$0xf]
      %v251 = vld [vmem:[%s1 + $0x5c] sm:$0xf]
      %v252 = vld [vmem:[%s1 + $0x60] sm:$0xf]
      %v253 = vld [vmem:[%s1 + $0x64] sm:$0xf]
      %v254 = vld [vmem:[%s1 + $0x68] sm:$0xf]
      %v255 = vld [vmem:[%s1 + $0x6c] sm:$0xf]
      %v256 = vld [vmem:[%s1 + $0x70] sm:$0xf]
      %v257 = vld [vmem:[%s1 + $0x74] sm:$0xf]
      %v258 = vld [vmem:[%s1 + $0x78] sm:$0xf]
      %v259 = vld [vmem:[%s1 + $0x7c] sm:$0xf]
      %v260 = vld [vmem:[%s1 + $0x80] sm:$0xf]
      %v261 = vld [vmem:[%s1 + $0x84] sm:$0xf]
      %v262 = vld [vmem:[%s1 + $0x88] sm:$0xf]
      %v263 = vld [vmem:[%s1 + $0x8c] sm:$0xf]
      %v264 = vld [vmem:[%s1 + $0x90] sm:$0xf]
      %v265 = vld [vmem:[%s1 + $0x94] sm:$0xf]
      %v266 = vld [vmem:[%s1 + $0x98] sm:$0xf]
      %v267 = vld [vmem:[%s1 + $0x9c] sm:$0xf]
      %v268 = vld [vmem:[%s1 + $0xa0] sm:$0xf]
      %v269 = vld [vmem:[%s1 + $0xa4] sm:$0xf]
      %v270 = vld [vmem:[%s1 + $0xa8] sm:$0xf]
      %v271 = vld [vmem:[%s1 + $0xac] sm:$0xf]
      %v272 = vld [vmem:[%s1 + $0xb0] sm:$0xf]
      %v273 = vld [vmem:[%s1 + $0xb4] sm:$0xf]
      %v274 = vld [vmem:[%s1 + $0xb8] sm:$0xf]
      %v275 = vld [vmem:[%s1 + $0xbc] sm:$0xf]
      %v276 = vld [vmem:[%s1 + $0xc0] sm:$0xf]
      %v277 = vld [vmem:[%s1 + $0xc4] sm:$0xf]
      %v278 = vld [vmem:[%s1 + $0xc8] sm:$0xf]
      %v279 = vld [vmem:[%s1 + $0xcc] sm:$0xf]
      %v280 = vld [vmem:[%s1 + $0xd0] sm:$0xf]
      %v281 = vld [vmem:[%s1 + $0xd4] sm:$0xf]
      %v282 = vld [vmem:[%s2] sm:$0x1]
      %v284 = vperm.slane %v282, 0
      %v336 = vunpack.c.l.b16 %v178
      %v337 = vunpack.c.h.b16 %v178
      %v338 = vunpack.c.l.b16 %v179
      %v339 = vunpack.c.h.b16 %v179
      %v340 = vunpack.c.l.b16 %v180
      %v341 = vunpack.c.h.b16 %v180
      %v342 = vunpack.c.l.b16 %v181
      %v343 = vunpack.c.h.b16 %v181
      %v344 = vunpack.c.l.b16 %v182
      %v345 = vunpack.c.h.b16 %v182
      %v346 = vunpack.c.l.b16 %v183
      %v347 = vunpack.c.h.b16 %v183
      %v348 = vunpack.c.l.b16 %v184
      %v349 = vunpack.c.h.b16 %v184
      %v350 = vunpack.c.l.b16 %v185
      %v351 = vunpack.c.h.b16 %v185
      %v352 = vunpack.c.l.b16 %v186
      %v353 = vunpack.c.h.b16 %v186
      %v354 = vunpack.c.l.b16 %v187
      %v355 = vunpack.c.h.b16 %v187
      %v356 = vunpack.c.l.b16 %v188
      %v357 = vunpack.c.h.b16 %v188
      %v358 = vunpack.c.l.b16 %v189
      %v359 = vunpack.c.h.b16 %v189
      %v360 = vunpack.c.l.b16 %v190
      %v361 = vunpack.c.h.b16 %v190
      %v362 = vunpack.c.l.b16 %v191
      %v363 = vunpack.c.h.b16 %v191
      %v364 = vunpack.c.l.b16 %v192
      %v365 = vunpack.c.h.b16 %v192
      %v366 = vunpack.c.l.b16 %v193
      %v367 = vunpack.c.h.b16 %v193
      %v368 = vunpack.c.l.b16 %v194
      %v369 = vunpack.c.h.b16 %v194
      %v370 = vunpack.c.l.b16 %v195
      %v371 = vunpack.c.h.b16 %v195
      %v372 = vunpack.c.l.b16 %v196
      %v373 = vunpack.c.h.b16 %v196
      %v374 = vunpack.c.l.b16 %v197
      %v375 = vunpack.c.h.b16 %v197
      %v376 = vunpack.c.l.b16 %v198
      %v377 = vunpack.c.h.b16 %v198
      %v378 = vunpack.c.l.b16 %v199
      %v379 = vunpack.c.h.b16 %v199
      %v380 = vunpack.c.l.b16 %v200
      %v381 = vunpack.c.h.b16 %v200
      %v382 = vunpack.c.l.b16 %v201
      %v383 = vunpack.c.h.b16 %v201
      %v384 = vunpack.c.l.b16 %v202
      %v385 = vunpack.c.h.b16 %v202
      %v386 = vunpack.c.l.b16 %v203
      %v387 = vunpack.c.h.b16 %v203
      %v388 = vunpack.c.l.b16 %v204
      %v389 = vunpack.c.h.b16 %v204
      %v390 = vunpack.c.l.b16 %v205
      %v391 = vunpack.c.h.b16 %v205
      %v392 = vunpack.c.l.b16 %v206
      %v393 = vunpack.c.h.b16 %v206
      %v394 = vunpack.c.l.b16 %v207
      %v395 = vunpack.c.h.b16 %v207
      %v396 = vunpack.c.l.b16 %v208
      %v397 = vunpack.c.h.b16 %v208
      %v398 = vunpack.c.l.b16 %v209
      %v399 = vunpack.c.h.b16 %v209
      %v400 = vunpack.c.l.b16 %v210
      %v401 = vunpack.c.h.b16 %v210
      %v402 = vunpack.c.l.b16 %v211
      %v403 = vunpack.c.h.b16 %v211
      %v404 = vunpack.c.l.b16 %v212
      %v405 = vunpack.c.h.b16 %v212
      %v406 = vunpack.c.l.b16 %v213
      %v407 = vunpack.c.h.b16 %v213
      %v408 = vunpack.c.l.b16 %v214
      %v409 = vunpack.c.h.b16 %v214
      %v410 = vunpack.c.l.b16 %v215
      %v411 = vunpack.c.h.b16 %v215
      %v412 = vunpack.c.l.b16 %v216
      %v413 = vunpack.c.h.b16 %v216
      %v414 = vunpack.c.l.b16 %v217
      %v415 = vunpack.c.h.b16 %v217
      %v416 = vunpack.c.l.b16 %v218
      %v417 = vunpack.c.h.b16 %v218
      %v418 = vunpack.c.l.b16 %v219
      %v419 = vunpack.c.h.b16 %v219
      %v420 = vunpack.c.l.b16 %v220
      %v421 = vunpack.c.h.b16 %v220
      %v422 = vunpack.c.l.b16 %v221
      %v423 = vunpack.c.h.b16 %v221
      %v424 = vunpack.c.l.b16 %v222
      %v425 = vunpack.c.h.b16 %v222
      %v426 = vunpack.c.l.b16 %v223
      %v427 = vunpack.c.h.b16 %v223
      %v428 = vunpack.c.l.b16 %v224
      %v429 = vunpack.c.h.b16 %v224
      %v430 = vunpack.c.l.b16 %v225
      %v431 = vunpack.c.h.b16 %v225
      %v432 = vunpack.c.l.b16 %v226
      %v433 = vunpack.c.h.b16 %v226
      %v434 = vunpack.c.l.b16 %v227
      %v435 = vunpack.c.h.b16 %v227
      %v436 = vpack.c.b16 %v340, %v336
      %v437 = vpack.c.b16 %v341, %v337
      %v438 = vpack.c.b16 %v342, %v338
      %v439 = vpack.c.b16 %v343, %v339
      %v440 = vpack.c.b16 %v348, %v344
      %v441 = vpack.c.b16 %v349, %v345
      %v442 = vpack.c.b16 %v350, %v346
      %v443 = vpack.c.b16 %v351, %v347
      %v444 = vpack.c.b16 %v356, %v352
      %v445 = vpack.c.b16 %v357, %v353
      %v446 = vpack.c.b16 %v358, %v354
      %v447 = vpack.c.b16 %v359, %v355
      %v448 = vpack.c.b16 %v364, %v360
      %v449 = vpack.c.b16 %v365, %v361
      %v450 = vpack.c.b16 %v366, %v362
      %v451 = vpack.c.b16 %v367, %v363
      %v452 = vpack.c.b16 %v372, %v368
      %v453 = vpack.c.b16 %v373, %v369
      %v454 = vpack.c.b16 %v374, %v370
      %v455 = vpack.c.b16 %v375, %v371
      %v456 = vpack.c.b16 %v380, %v376
      %v457 = vpack.c.b16 %v381, %v377
      %v458 = vpack.c.b16 %v382, %v378
      %v459 = vpack.c.b16 %v383, %v379
      %v460 = vpack.c.b16 %v388, %v384
      %v461 = vpack.c.b16 %v389, %v385
      %v462 = vpack.c.b16 %v390, %v386
      %v463 = vpack.c.b16 %v391, %v387
      %v464 = vpack.c.b16 %v396, %v392
      %v465 = vpack.c.b16 %v397, %v393
      %v466 = vpack.c.b16 %v398, %v394
      %v467 = vpack.c.b16 %v399, %v395
      %v468 = vpack.c.b16 %v404, %v400
      %v469 = vpack.c.b16 %v405, %v401
      %v470 = vpack.c.b16 %v406, %v402
      %v471 = vpack.c.b16 %v407, %v403
      %v472 = vpack.c.b16 %v412, %v408
      %v473 = vpack.c.b16 %v413, %v409
      %v474 = vpack.c.b16 %v414, %v410
      %v475 = vpack.c.b16 %v415, %v411
      %v476 = vpack.c.b16 %v420, %v416
      %v477 = vpack.c.b16 %v421, %v417
      %v478 = vpack.c.b16 %v422, %v418
      %v479 = vpack.c.b16 %v423, %v419
      %v480 = vpack.c.b16 %v428, %v424
      %v481 = vpack.c.b16 %v429, %v425
      %v482 = vpack.c.b16 %v430, %v426
      %v483 = vpack.c.b16 %v431, %v427
      %v484 = vpack.c.b16 %v432, %v432
      %v485 = vpack.c.b16 %v433, %v433
      %v486 = vpack.c.b16 %v434, %v434
      %v487 = vpack.c.b16 %v435, %v435
      %v581 = vunpack.c.l.b16 %v228
      %v582 = vunpack.c.l.b16 %v229
      %v583 = vunpack.c.l.b16 %v230
      %v584 = vunpack.c.l.b16 %v231
      %v585 = vunpack.c.l.b16 %v232
      %v586 = vunpack.c.l.b16 %v233
      %v587 = vunpack.c.l.b16 %v234
      %v588 = vunpack.c.l.b16 %v235
      %v589 = vunpack.c.l.b16 %v236
      %v590 = vunpack.c.l.b16 %v237
      %v591 = vunpack.c.l.b16 %v238
      %v592 = vunpack.c.l.b16 %v239
      %v593 = vunpack.c.l.b16 %v240
      %v594 = vunpack.c.l.b16 %v241
      %v595 = vunpack.c.l.b16 %v242
      %v596 = vunpack.c.l.b16 %v243
      %v597 = vunpack.c.l.b16 %v244
      %v598 = vunpack.c.l.b16 %v245
      %v599 = vunpack.c.l.b16 %v246
      %v600 = vunpack.c.l.b16 %v247
      %v601 = vunpack.c.l.b16 %v248
      %v602 = vunpack.c.l.b16 %v249
      %v603 = vunpack.c.l.b16 %v250
      %v604 = vunpack.c.l.b16 %v251
      %v605 = vunpack.c.l.b16 %v252
      %v606 = vunpack.c.l.b16 %v253
      %v607 = vunpack.c.l.b16 %v254
      %v608 = vunpack.c.l.b16 %v255
      %v609 = vunpack.c.l.b16 %v256
      %v610 = vunpack.c.l.b16 %v257
      %v611 = vunpack.c.l.b16 %v258
      %v612 = vunpack.c.l.b16 %v259
      %v613 = vunpack.c.l.b16 %v260
      %v614 = vunpack.c.l.b16 %v261
      %v615 = vunpack.c.l.b16 %v262
      %v616 = vunpack.c.l.b16 %v263
      %v617 = vunpack.c.l.b16 %v264
      %v618 = vunpack.c.l.b16 %v265
      %v619 = vunpack.c.l.b16 %v266
      %v620 = vunpack.c.l.b16 %v267
      %v621 = vunpack.c.l.b16 %v268
      %v622 = vunpack.c.l.b16 %v269
      %v623 = vunpack.c.l.b16 %v270
      %v624 = vunpack.c.l.b16 %v271
      %v625 = vunpack.c.l.b16 %v272
      %v626 = vunpack.c.l.b16 %v273
      %v627 = vunpack.c.l.b16 %v274
      %v628 = vunpack.c.l.b16 %v275
      %v629 = vunpack.c.l.b16 %v276
      %v630 = vunpack.c.l.b16 %v277
      %v631 = vunpack.c.l.b16 %v278
      %v632 = vunpack.c.l.b16 %v279
      %v633 = vunpack.c.l.b16 %v280
      %v634 = vunpack.c.l.b16 %v281
      %v635 = vpack.c.b16 %v582, %v581
      %v636 = vpack.c.b16 %v584, %v583
      %v637 = vpack.c.b16 %v586, %v585
      %v638 = vpack.c.b16 %v588, %v587
      %v639 = vpack.c.b16 %v590, %v589
      %v640 = vpack.c.b16 %v592, %v591
      %v641 = vpack.c.b16 %v594, %v593
      %v642 = vpack.c.b16 %v596, %v595
      %v643 = vpack.c.b16 %v598, %v597
      %v644 = vpack.c.b16 %v600, %v599
      %v645 = vpack.c.b16 %v602, %v601
      %v646 = vpack.c.b16 %v604, %v603
      %v647 = vpack.c.b16 %v606, %v605
      %v648 = vpack.c.b16 %v608, %v607
      %v649 = vpack.c.b16 %v610, %v609
      %v650 = vpack.c.b16 %v612, %v611
      %v651 = vpack.c.b16 %v614, %v613
      %v652 = vpack.c.b16 %v616, %v615
      %v653 = vpack.c.b16 %v618, %v617
      %v654 = vpack.c.b16 %v620, %v619
      %v655 = vpack.c.b16 %v622, %v621
      %v656 = vpack.c.b16 %v624, %v623
      %v657 = vpack.c.b16 %v626, %v625
      %v658 = vpack.c.b16 %v628, %v627
      %v659 = vpack.c.b16 %v630, %v629
      %v660 = vpack.c.b16 %v632, %v631
      %v661 = vpack.c.b16 %v634, %v633
      %vm689 = vcmask 392192
      %v691 = vsel %vm689, %v439, 0
      %v694 = vsel %vm689, %v443, 0
      %v697 = vsel %vm689, %v447, 0
      %v700 = vsel %vm689, %v451, 0
      %v703 = vsel %vm689, %v455, 0
      %v706 = vsel %vm689, %v459, 0
      %v709 = vsel %vm689, %v463, 0
      %v712 = vsel %vm689, %v467, 0
      %v715 = vsel %vm689, %v471, 0
      %v718 = vsel %vm689, %v475, 0
      %v721 = vsel %vm689, %v479, 0
      %v724 = vsel %vm689, %v483, 0
      %v727 = vsel %vm689, %v487, 0
      %729 = vmatpush.bf16.msra.mxu0 %v642
      %730 = vmatpush.bf16.msra.mxu0 %v641
      %731 = vmatpush.bf16.msra.mxu0 %v640
      %732 = vmatpush.bf16.msra.mxu0 %v639
      %733 = vmatpush.bf16.msra.mxu0 %v638
      %734 = vmatpush.bf16.msra.mxu0 %v637
      %735 = vmatpush.bf16.msra.mxu0 %v636
      %736 = vmatpush.bf16.msra.mxu0 %v635
      %737 = vmatmul.bf16.gmra.mxu0 %v436
      %v738 = vpop.f32.mrf.mxu0
      %v739 = vadd.f32 %v284, %v738
      %v740 = vpop.f32.mrf.mxu0
      %v741 = vadd.f32 %v284, %v740
      %742 = vmatmul.bf16.gmra.mxu0 %v440
      %v743 = vpop.f32.mrf.mxu0
      %v744 = vadd.f32 %v284, %v743
      %v745 = vpop.f32.mrf.mxu0
      %v746 = vadd.f32 %v284, %v745
      %747 = vmatmul.bf16.gmra.mxu0 %v444
      %v748 = vpop.f32.mrf.mxu0
      %v749 = vadd.f32 %v284, %v748
      %v750 = vpop.f32.mrf.mxu0
      %v751 = vadd.f32 %v284, %v750
      %752 = vmatmul.bf16.gmra.mxu0 %v448
      %v753 = vpop.f32.mrf.mxu0
      %v754 = vadd.f32 %v284, %v753
      %v755 = vpop.f32.mrf.mxu0
      %v756 = vadd.f32 %v284, %v755
      %757 = vmatmul.bf16.gmra.mxu0 %v452
      %v758 = vpop.f32.mrf.mxu0
      %v759 = vadd.f32 %v284, %v758
      %v760 = vpop.f32.mrf.mxu0
      %v761 = vadd.f32 %v284, %v760
      %762 = vmatmul.bf16.gmra.mxu0 %v456
      %v763 = vpop.f32.mrf.mxu0
      %v764 = vadd.f32 %v284, %v763
      %v765 = vpop.f32.mrf.mxu0
      %v766 = vadd.f32 %v284, %v765
      %767 = vmatmul.bf16.gmra.mxu0 %v460
      %v768 = vpop.f32.mrf.mxu0
      %v769 = vadd.f32 %v284, %v768
      %v770 = vpop.f32.mrf.mxu0
      %v771 = vadd.f32 %v284, %v770
      %772 = vmatmul.bf16.gmra.mxu0 %v464
      %v773 = vpop.f32.mrf.mxu0
      %v774 = vadd.f32 %v284, %v773
      %v775 = vpop.f32.mrf.mxu0
      %v776 = vadd.f32 %v284, %v775
      %777 = vmatmul.bf16.gmra.mxu0 %v468
      %v778 = vpop.f32.mrf.mxu0
      %v779 = vadd.f32 %v284, %v778
      %v780 = vpop.f32.mrf.mxu0
      %v781 = vadd.f32 %v284, %v780
      %782 = vmatmul.bf16.gmra.mxu0 %v472
      %v783 = vpop.f32.mrf.mxu0
      %v784 = vadd.f32 %v284, %v783
      %v785 = vpop.f32.mrf.mxu0
      %v786 = vadd.f32 %v284, %v785
      %787 = vmatmul.bf16.gmra.mxu0 %v476
      %v788 = vpop.f32.mrf.mxu0
      %v789 = vadd.f32 %v284, %v788
      %v790 = vpop.f32.mrf.mxu0
      %v791 = vadd.f32 %v284, %v790
      %792 = vmatmul.bf16.gmra.mxu0 %v480
      %v793 = vpop.f32.mrf.mxu0
      %v794 = vadd.f32 %v284, %v793
      %v795 = vpop.f32.mrf.mxu0
      %v796 = vadd.f32 %v284, %v795
      %797 = vmatmul.bf16.gmra.mxu0 %v484
      %v798 = vpop.f32.mrf.mxu0
      %v799 = vadd.f32 %v284, %v798
      %v800 = vpop.f32.mrf.mxu0
      %801 = vdwg.mxu0
      %802 = vmatpush.bf16.msra.mxu0 %v650
      %803 = vmatpush.bf16.msra.mxu0 %v649
      %804 = vmatpush.bf16.msra.mxu0 %v648
      %805 = vmatpush.bf16.msra.mxu0 %v647
      %806 = vmatpush.bf16.msra.mxu0 %v646
      %807 = vmatpush.bf16.msra.mxu0 %v645
      %808 = vmatpush.bf16.msra.mxu0 %v644
      %809 = vmatpush.bf16.msra.mxu0 %v643
      %810 = vmatmul.bf16.gmra.mxu0 %v437
      %v811 = vpop.f32.mrf.mxu0
      %v812 = vadd.f32 %v739, %v811
      %v813 = vpop.f32.mrf.mxu0
      %v814 = vadd.f32 %v741, %v813
      %815 = vmatmul.bf16.gmra.mxu0 %v441
      %v816 = vpop.f32.mrf.mxu0
      %v817 = vadd.f32 %v744, %v816
      %v818 = vpop.f32.mrf.mxu0
      %v819 = vadd.f32 %v746, %v818
      %820 = vmatmul.bf16.gmra.mxu0 %v445
      %v821 = vpop.f32.mrf.mxu0
      %v822 = vadd.f32 %v749, %v821
      %v823 = vpop.f32.mrf.mxu0
      %v824 = vadd.f32 %v751, %v823
      %825 = vmatmul.bf16.gmra.mxu0 %v449
      %v826 = vpop.f32.mrf.mxu0
      %v827 = vadd.f32 %v754, %v826
      %v828 = vpop.f32.mrf.mxu0
      %v829 = vadd.f32 %v756, %v828
      %830 = vmatmul.bf16.gmra.mxu0 %v453
      %v831 = vpop.f32.mrf.mxu0
      %v832 = vadd.f32 %v759, %v831
      %v833 = vpop.f32.mrf.mxu0
      %v834 = vadd.f32 %v761, %v833
      %835 = vmatmul.bf16.gmra.mxu0 %v457
      %v836 = vpop.f32.mrf.mxu0
      %v837 = vadd.f32 %v764, %v836
      %v838 = vpop.f32.mrf.mxu0
      %v839 = vadd.f32 %v766, %v838
      %840 = vmatmul.bf16.gmra.mxu0 %v461
      %v841 = vpop.f32.mrf.mxu0
      %v842 = vadd.f32 %v769, %v841
      %v843 = vpop.f32.mrf.mxu0
      %v844 = vadd.f32 %v771, %v843
      %845 = vmatmul.bf16.gmra.mxu0 %v465
      %v846 = vpop.f32.mrf.mxu0
      %v847 = vadd.f32 %v774, %v846
      %v848 = vpop.f32.mrf.mxu0
      %v849 = vadd.f32 %v776, %v848
      %850 = vmatmul.bf16.gmra.mxu0 %v469
      %v851 = vpop.f32.mrf.mxu0
      %v852 = vadd.f32 %v779, %v851
      %v853 = vpop.f32.mrf.mxu0
      %v854 = vadd.f32 %v781, %v853
      %855 = vmatmul.bf16.gmra.mxu0 %v473
      %v856 = vpop.f32.mrf.mxu0
      %v857 = vadd.f32 %v784, %v856
      %v858 = vpop.f32.mrf.mxu0
      %v859 = vadd.f32 %v786, %v858
      %860 = vmatmul.bf16.gmra.mxu0 %v477
      %v861 = vpop.f32.mrf.mxu0
      %v862 = vadd.f32 %v789, %v861
      %v863 = vpop.f32.mrf.mxu0
      %v864 = vadd.f32 %v791, %v863
      %865 = vmatmul.bf16.gmra.mxu0 %v481
      %v866 = vpop.f32.mrf.mxu0
      %v867 = vadd.f32 %v794, %v866
      %v868 = vpop.f32.mrf.mxu0
      %v869 = vadd.f32 %v796, %v868
      %870 = vmatmul.bf16.gmra.mxu0 %v485
      %v871 = vpop.f32.mrf.mxu0
      %v872 = vadd.f32 %v799, %v871
      %v873 = vpop.f32.mrf.mxu0
      %874 = vdwg.mxu0
      %875 = vmatpush.bf16.msra.mxu0 %v658
      %876 = vmatpush.bf16.msra.mxu0 %v657
      %877 = vmatpush.bf16.msra.mxu0 %v656
      %878 = vmatpush.bf16.msra.mxu0 %v655
      %879 = vmatpush.bf16.msra.mxu0 %v654
      %880 = vmatpush.bf16.msra.mxu0 %v653
      %881 = vmatpush.bf16.msra.mxu0 %v652
      %882 = vmatpush.bf16.msra.mxu0 %v651
      %883 = vmatmul.bf16.gmra.mxu0 %v438
      %v884 = vpop.f32.mrf.mxu0
      %v885 = vadd.f32 %v812, %v884
      %v886 = vpop.f32.mrf.mxu0
      %v887 = vadd.f32 %v814, %v886
      %888 = vmatmul.bf16.gmra.mxu0 %v442
      %v889 = vpop.f32.mrf.mxu0
      %v890 = vadd.f32 %v817, %v889
      %v891 = vpop.f32.mrf.mxu0
      %v892 = vadd.f32 %v819, %v891
      %893 = vmatmul.bf16.gmra.mxu0 %v446
      %v894 = vpop.f32.mrf.mxu0
      %v895 = vadd.f32 %v822, %v894
      %v896 = vpop.f32.mrf.mxu0
      %v897 = vadd.f32 %v824, %v896
      %898 = vmatmul.bf16.gmra.mxu0 %v450
      %v899 = vpop.f32.mrf.mxu0
      %v900 = vadd.f32 %v827, %v899
      %v901 = vpop.f32.mrf.mxu0
      %v902 = vadd.f32 %v829, %v901
      %903 = vmatmul.bf16.gmra.mxu0 %v454
      %v904 = vpop.f32.mrf.mxu0
      %v905 = vadd.f32 %v832, %v904
      %v906 = vpop.f32.mrf.mxu0
      %v907 = vadd.f32 %v834, %v906
      %908 = vmatmul.bf16.gmra.mxu0 %v458
      %v909 = vpop.f32.mrf.mxu0
      %v910 = vadd.f32 %v837, %v909
      %v911 = vpop.f32.mrf.mxu0
      %v912 = vadd.f32 %v839, %v911
      %913 = vmatmul.bf16.gmra.mxu0 %v462
      %v914 = vpop.f32.mrf.mxu0
      %v915 = vadd.f32 %v842, %v914
      %v916 = vpop.f32.mrf.mxu0
      %v917 = vadd.f32 %v844, %v916
      %918 = vmatmul.bf16.gmra.mxu0 %v466
      %v919 = vpop.f32.mrf.mxu0
      %v920 = vadd.f32 %v847, %v919
      %v921 = vpop.f32.mrf.mxu0
      %v922 = vadd.f32 %v849, %v921
      %923 = vmatmul.bf16.gmra.mxu0 %v470
      %v924 = vpop.f32.mrf.mxu0
      %v925 = vadd.f32 %v852, %v924
      %v926 = vpop.f32.mrf.mxu0
      %v927 = vadd.f32 %v854, %v926
      %928 = vmatmul.bf16.gmra.mxu0 %v474
      %v929 = vpop.f32.mrf.mxu0
      %v930 = vadd.f32 %v857, %v929
      %v931 = vpop.f32.mrf.mxu0
      %v932 = vadd.f32 %v859, %v931
      %933 = vmatmul.bf16.gmra.mxu0 %v478
      %v934 = vpop.f32.mrf.mxu0
      %v935 = vadd.f32 %v862, %v934
      %v936 = vpop.f32.mrf.mxu0
      %v937 = vadd.f32 %v864, %v936
      %938 = vmatmul.bf16.gmra.mxu0 %v482
      %v939 = vpop.f32.mrf.mxu0
      %v940 = vadd.f32 %v867, %v939
      %v941 = vpop.f32.mrf.mxu0
      %v942 = vadd.f32 %v869, %v941
      %943 = vmatmul.bf16.gmra.mxu0 %v486
      %v944 = vpop.f32.mrf.mxu0
      %v945 = vadd.f32 %v872, %v944
      %v946 = vpop.f32.mrf.mxu0
      %947 = vdwg.mxu0
      %948 = vmatpush.bf16.msra.mxu0 0
      %949 = vmatpush.bf16.msra.mxu0 0
      %950 = vmatpush.bf16.msra.mxu0 0
      %951 = vmatpush.bf16.msra.mxu0 0
      %952 = vmatpush.bf16.msra.mxu0 0
      %953 = vmatpush.bf16.msra.mxu0 %v661
      %954 = vmatpush.bf16.msra.mxu0 %v660
      %955 = vmatpush.bf16.msra.mxu0 %v659
      %956 = vmatmul.bf16.gmra.mxu0 %v691
      %v957 = vpop.f32.mrf.mxu0
      %v958 = vadd.f32 %v885, %v957
      %v959 = vpop.f32.mrf.mxu0
      %v960 = vadd.f32 %v887, %v959
      %961 = vmatmul.bf16.gmra.mxu0 %v694
      %v962 = vpop.f32.mrf.mxu0
      %v963 = vadd.f32 %v890, %v962
      %v964 = vpop.f32.mrf.mxu0
      %v965 = vadd.f32 %v892, %v964
      %966 = vmatmul.bf16.gmra.mxu0 %v697
      %v967 = vpop.f32.mrf.mxu0
      %v968 = vadd.f32 %v895, %v967
      %v969 = vpop.f32.mrf.mxu0
      %v970 = vadd.f32 %v897, %v969
      %971 = vmatmul.bf16.gmra.mxu0 %v700
      %v972 = vpop.f32.mrf.mxu0
      %v973 = vadd.f32 %v900, %v972
      %v974 = vpop.f32.mrf.mxu0
      %v975 = vadd.f32 %v902, %v974
      %976 = vmatmul.bf16.gmra.mxu0 %v703
      %v977 = vpop.f32.mrf.mxu0
      %v978 = vadd.f32 %v905, %v977
      %v979 = vpop.f32.mrf.mxu0
      %v980 = vadd.f32 %v907, %v979
      %981 = vmatmul.bf16.gmra.mxu0 %v706
      %v982 = vpop.f32.mrf.mxu0
      %v983 = vadd.f32 %v910, %v982
      %v984 = vpop.f32.mrf.mxu0
      %v985 = vadd.f32 %v912, %v984
      %986 = vmatmul.bf16.gmra.mxu0 %v709
      %v987 = vpop.f32.mrf.mxu0
      %v988 = vadd.f32 %v915, %v987
      %v989 = vpop.f32.mrf.mxu0
      %v990 = vadd.f32 %v917, %v989
      %991 = vmatmul.bf16.gmra.mxu0 %v712
      %v992 = vpop.f32.mrf.mxu0
      %v993 = vadd.f32 %v920, %v992
      %v994 = vpop.f32.mrf.mxu0
      %v995 = vadd.f32 %v922, %v994
      %996 = vmatmul.bf16.gmra.mxu0 %v715
      %v997 = vpop.f32.mrf.mxu0
      %v998 = vadd.f32 %v925, %v997
      %v999 = vpop.f32.mrf.mxu0
      %v1000 = vadd.f32 %v927, %v999
      %1001 = vmatmul.bf16.gmra.mxu0 %v718
      %v1002 = vpop.f32.mrf.mxu0
      %v1003 = vadd.f32 %v930, %v1002
      %v1004 = vpop.f32.mrf.mxu0
      %v1005 = vadd.f32 %v932, %v1004
      %1006 = vmatmul.bf16.gmra.mxu0 %v721
      %v1007 = vpop.f32.mrf.mxu0
      %v1008 = vadd.f32 %v935, %v1007
      %v1009 = vpop.f32.mrf.mxu0
      %v1010 = vadd.f32 %v937, %v1009
      %1011 = vmatmul.bf16.gmra.mxu0 %v724
      %v1012 = vpop.f32.mrf.mxu0
      %v1013 = vadd.f32 %v940, %v1012
      %v1014 = vpop.f32.mrf.mxu0
      %v1015 = vadd.f32 %v942, %v1014
      %1016 = vmatmul.bf16.gmra.mxu0 %v727
      %v1017 = vpop.f32.mrf.mxu0
      %v1018 = vadd.f32 %v945, %v1017
      %v1019 = vpop.f32.mrf.mxu0
      %1020 = vdwg.mxu0
      %v1021 = vmax.f32 %v958, 0.0
      %v1022 = vmax.f32 %v960, 0.0
      %v1023 = vmax.f32 %v963, 0.0
      %v1024 = vmax.f32 %v965, 0.0
      %v1025 = vmax.f32 %v968, 0.0
      %v1026 = vmax.f32 %v970, 0.0
      %v1027 = vmax.f32 %v973, 0.0
      %v1028 = vmax.f32 %v975, 0.0
      %v1029 = vmax.f32 %v978, 0.0
      %v1030 = vmax.f32 %v980, 0.0
      %v1031 = vmax.f32 %v983, 0.0
      %v1032 = vmax.f32 %v985, 0.0
      %v1033 = vmax.f32 %v988, 0.0
      %v1034 = vmax.f32 %v990, 0.0
      %v1035 = vmax.f32 %v993, 0.0
      %v1036 = vmax.f32 %v995, 0.0
      %v1037 = vmax.f32 %v998, 0.0
      %v1038 = vmax.f32 %v1000, 0.0
      %v1039 = vmax.f32 %v1003, 0.0
      %v1040 = vmax.f32 %v1005, 0.0
      %v1041 = vmax.f32 %v1008, 0.0
      %v1042 = vmax.f32 %v1010, 0.0
      %v1043 = vmax.f32 %v1013, 0.0
      %v1044 = vmax.f32 %v1015, 0.0
      %v1045 = vmax.f32 %v1018, 0.0
      %vm1046 = vcmask 130048
      %1047 = vst.msk [vmem:[%s175] sm:$0xff] %vm1046, %v1021
      %1048 = vst.msk [vmem:[%s175 + $0x8] sm:$0xff] %vm1046, %v1022
      %1049 = vst.msk [vmem:[%s175 + $0x10] sm:$0xff] %vm1046, %v1023
      %1050 = vst.msk [vmem:[%s175 + $0x18] sm:$0xff] %vm1046, %v1024
      %1051 = vst.msk [vmem:[%s175 + $0x20] sm:$0xff] %vm1046, %v1025
      %1052 = vst.msk [vmem:[%s175 + $0x28] sm:$0xff] %vm1046, %v1026
      %1053 = vst.msk [vmem:[%s175 + $0x30] sm:$0xff] %vm1046, %v1027
      %1054 = vst.msk [vmem:[%s175 + $0x38] sm:$0xff] %vm1046, %v1028
      %1055 = vst.msk [vmem:[%s175 + $0x40] sm:$0xff] %vm1046, %v1029
      %1056 = vst.msk [vmem:[%s175 + $0x48] sm:$0xff] %vm1046, %v1030
      %1057 = vst.msk [vmem:[%s175 + $0x50] sm:$0xff] %vm1046, %v1031
      %1058 = vst.msk [vmem:[%s175 + $0x58] sm:$0xff] %vm1046, %v1032
      %1059 = vst.msk [vmem:[%s175 + $0x60] sm:$0xff] %vm1046, %v1033
      %1060 = vst.msk [vmem:[%s175 + $0x68] sm:$0xff] %vm1046, %v1034
      %1061 = vst.msk [vmem:[%s175 + $0x70] sm:$0xff] %vm1046, %v1035
      %1062 = vst.msk [vmem:[%s175 + $0x78] sm:$0xff] %vm1046, %v1036
      %1063 = vst.msk [vmem:[%s175 + $0x80] sm:$0xff] %vm1046, %v1037
      %1064 = vst.msk [vmem:[%s175 + $0x88] sm:$0xff] %vm1046, %v1038
      %1065 = vst.msk [vmem:[%s175 + $0x90] sm:$0xff] %vm1046, %v1039
      %1066 = vst.msk [vmem:[%s175 + $0x98] sm:$0xff] %vm1046, %v1040
      %1067 = vst.msk [vmem:[%s175 + $0xa0] sm:$0xff] %vm1046, %v1041
      %1068 = vst.msk [vmem:[%s175 + $0xa8] sm:$0xff] %vm1046, %v1042
      %1069 = vst.msk [vmem:[%s175 + $0xb0] sm:$0xff] %vm1046, %v1043
      %1070 = vst.msk [vmem:[%s175 + $0xb8] sm:$0xff] %vm1046, %v1044
      %1071 = vst.msk [vmem:[%s175 + $0xc0] sm:$0xff] %vm1046, %v1045
      %s1072 = smul.u32 25, %s14
      %p1073 = scmp.lt.s32.totalorder %s1072, 49
      %s1074 = scalar_select %p1073, %s1072, 49
      %s1075 = smul.addr %s1074, 8
      %s1076 = scalar_lea.vmem %s3, %s1075
      // Predicated region
      $region33: #{network_forward.13} parent=31 // pred_check
        %p1077 = pneg %p100
      $region34: #{network_forward.13} parent=31 // pred_check_branch
        %1079 = sbr.rel (%p1077) target = $region36
      $region35: #{network_forward.13} parent=31 // pred_region
        %s1080 = smul.u32 25, %s14
      $region36: #{network_forward.13} parent=31 // pred_fallthru
        _
    $region32: #{network_forward.13} parent=5 // pred_fallthru
      _
    %p1081 = scmp.le.s32.totalorder 2, %s9
    // Predicated region
    $region37: #{network_forward.13} parent=5 // pred_check
      %p1082 = pneg %p1081
    $region38: #{network_forward.13} parent=5 // pred_check_branch
      %1084 = sbr.rel (%p1082) target = $region40
    $region39: #{network_forward.13} parent=5 // pred_region
      %s1085 = ssub.s32 %s9, 2
      // Predicated region
      $region41: #{network_forward.13} parent=39 // pred_check
        %p1086 = pneg %p106
      $region42: #{network_forward.13} parent=39 // pred_check_branch
        %1088 = sbr.rel (%p1086) target = $region44
      $region43: #{network_forward.13} parent=39 // pred_region
        %s1089 = smul.u32 25, %s15
        %p1090 = scmp.lt.s32.totalorder %s1089, 49
        %s1091 = scalar_select %p1090, %s1089, 49
        %s1092 = smul.addr %s1091, 8
        %s1093 = scalar_lea.vmem %s3, %s1092
      $region44: #{network_forward.13} parent=39 // pred_fallthru
        _
    $region40: #{network_forward.13} parent=5 // pred_fallthru
      _
  $region6: #{network_forward.13} parent=0 // loop_footer
    %s13 = sadd.s32 1, %s9
  $region7: #{network_forward.13} parent=0 // loop_footer_branch
    %8 = sbr.rel target = $region3
  $region8: #{network_forward.13} parent=0 // loop_exit
    _

// kernel: network_forward.14
$region0: #{network_forward.14}
  #allocation0 [shape = 'u32[]', space=smem, size = 0x4, offset = 0x4, fixed_abs, tag = 'smem constant byte address 0x4 - core index']
  #allocation1 [shape = 'u32[72,128]{1,0:T(1,128)}', space=vmem, size = 0x9000, scoped, tag = 'internal scratch']
  %s0 = inlined_call_operand.vmem [shape: bf16[400,432], index: 0, kind: input, shape index: {}]
  %s1 = inlined_call_operand.vmem [shape: bf16[432,16], index: 1, kind: input, shape index: {}]
  %s2 = inlined_call_operand.vmem [shape: f32[1,16], index: 2, kind: input, shape index: {}]
  %s3 = inlined_call_operand.vmem [shape: f32[400,16], index: 3, kind: input, shape index: {}]
  %s4 = inlined_call_operand.vmem [shape: f32[400,16], index: 4, kind: output, shape index: {}]
  %s5 = sld [smem:[#allocation0]]
  $region49: #{network_forward.14} parent=0
    _
  %s7 = ssub.s32 1, %s5
  %s8 = scalar_select 0, %s7, %s5
  loop: start=0, step=1, limit=4
  $region2: #{network_forward.14} parent=0 // loop_pre_header
    _
  $region3: #{network_forward.14} parent=0 // loop_header
    %s10 = sphi 0, %s14
    %p11 = scmp.ge.s32.totalorder %s10, 4
    %s20 = sphi 0, %s22
    %s23 = sphi 0, %s20
    %s24 = sphi 0, %s23
    %s40 = sphi 0, %s24
    %s44 = sphi 0, %s44
    %s46 = sphi 0, %s44
    %s47 = sphi 0, %s46
    %s61 = sphi 0, %s47
    %s65 = sphi 0, %s65
    %s67 = sphi 0, %s65
    %s68 = sphi 0, %s67
    %s82 = sphi 0, %s68
    %s88 = sphi 0, %s90
    %s91 = sphi 0, %s88
    %s92 = sphi 0, %s91
    %s108 = sphi 0, %s92
    %s114 = sphi 0, %s116
    %s117 = sphi 0, %s114
    %s118 = sphi 0, %s117
    %s134 = sphi 0, %s118
  $region4: #{network_forward.14} parent=0 // loop_header_branch
    %13 = sbr.rel (%p11) target = $region8
  $region5: #{network_forward.14} parent=0 // loop_body
    %s15 = ssub.s32 %s10, 1
    %s16 = ssub.s32 %s10, 2
    %s17 = sadd.s32 %s10, 1
    %s18 = ssub.s32 %s10, %s17
    %p19 = scmp.eq.s32.totalorder %s18, 0
    %s21 = sadd.s32 %s20, 1
    %s22 = scalar_select %p19, %s20, %s21
    %p25 = pneg %p19
    %p26 = scmp.eq.s32.totalorder %s10, 1
    %p27 = por %p25, %p26
    %p28 = scmp.ne.s32.totalorder %s20, %s23
    %p29 = scmp.eq.s32.totalorder %s10, 0
    %p30 = por %p28, %p29
    %p31 = scmp.ne.s32.totalorder %s20, %s23
    %p32 = scmp.eq.s32.totalorder %s15, 1
    %p33 = por %p31, %p32
    %p34 = scmp.ne.s32.totalorder %s23, %s24
    %p35 = scmp.eq.s32.totalorder %s15, 0
    %p36 = por %p34, %p35
    %p37 = scmp.ne.s32.totalorder %s23, %s24
    %p38 = scmp.eq.s32.totalorder %s16, 1
    %p39 = por %p37, %p38
    %p41 = scmp.ne.s32.totalorder %s24, %s40
    %p42 = scmp.eq.s32.totalorder %s16, 0
    %p43 = por %p41, %p42
    %s45 = sadd.s32 %s44, 1
    %p48 = scmp.eq.s32.totalorder %s10, 1
    %p49 = scmp.ne.s32.totalorder %s44, %s46
    %p50 = scmp.eq.s32.totalorder %s10, 0
    %p51 = por %p49, %p50
    %p52 = scmp.ne.s32.totalorder %s44, %s46
    %p53 = scmp.eq.s32.totalorder %s15, 1
    %p54 = por %p52, %p53
    %p55 = scmp.ne.s32.totalorder %s46, %s47
    %p56 = scmp.eq.s32.totalorder %s15, 0
    %p57 = por %p55, %p56
    %p58 = scmp.ne.s32.totalorder %s46, %s47
    %p59 = scmp.eq.s32.totalorder %s16, 1
    %p60 = por %p58, %p59
    %p62 = scmp.ne.s32.totalorder %s47, %s61
    %p63 = scmp.eq.s32.totalorder %s16, 0
    %p64 = por %p62, %p63
    %s66 = sadd.s32 %s65, 1
    %p69 = scmp.eq.s32.totalorder %s10, 1
    %p70 = scmp.ne.s32.totalorder %s65, %s67
    %p71 = scmp.eq.s32.totalorder %s10, 0
    %p72 = por %p70, %p71
    %p73 = scmp.ne.s32.totalorder %s65, %s67
    %p74 = scmp.eq.s32.totalorder %s15, 1
    %p75 = por %p73, %p74
    %p76 = scmp.ne.s32.totalorder %s67, %s68
    %p77 = scmp.eq.s32.totalorder %s15, 0
    %p78 = por %p76, %p77
    %p79 = scmp.ne.s32.totalorder %s67, %s68
    %p80 = scmp.eq.s32.totalorder %s16, 1
    %p81 = por %p79, %p80
    %p83 = scmp.ne.s32.totalorder %s68, %s82
    %p84 = scmp.eq.s32.totalorder %s16, 0
    %p85 = por %p83, %p84
    %s86 = ssub.s32 %s10, %s17
    %p87 = scmp.eq.s32.totalorder %s86, 0
    %s89 = sadd.s32 %s88, 1
    %s90 = scalar_select %p87, %s88, %s89
    %p93 = pneg %p87
    %p94 = scmp.eq.s32.totalorder %s10, 1
    %p95 = por %p93, %p94
    %p96 = scmp.ne.s32.totalorder %s88, %s91
    %p97 = scmp.eq.s32.totalorder %s10, 0
    %p98 = por %p96, %p97
    %p99 = scmp.ne.s32.totalorder %s88, %s91
    %p100 = scmp.eq.s32.totalorder %s15, 1
    %p101 = por %p99, %p100
    %p102 = scmp.ne.s32.totalorder %s91, %s92
    %p103 = scmp.eq.s32.totalorder %s15, 0
    %p104 = por %p102, %p103
    %p105 = scmp.ne.s32.totalorder %s91, %s92
    %p106 = scmp.eq.s32.totalorder %s16, 1
    %p107 = por %p105, %p106
    %p109 = scmp.ne.s32.totalorder %s92, %s108
    %p110 = scmp.eq.s32.totalorder %s16, 0
    %p111 = por %p109, %p110
    %s112 = ssub.s32 %s10, %s17
    %p113 = scmp.eq.s32.totalorder %s112, 0
    %s115 = sadd.s32 %s114, 1
    %s116 = scalar_select %p113, %s114, %s115
    %p119 = pneg %p113
    %p120 = scmp.eq.s32.totalorder %s10, 1
    %p121 = por %p119, %p120
    %p122 = scmp.ne.s32.totalorder %s114, %s117
    %p123 = scmp.eq.s32.totalorder %s10, 0
    %p124 = por %p122, %p123
    %p125 = scmp.ne.s32.totalorder %s114, %s117
    %p126 = scmp.eq.s32.totalorder %s15, 1
    %p127 = por %p125, %p126
    %p128 = scmp.ne.s32.totalorder %s117, %s118
    %p129 = scmp.eq.s32.totalorder %s15, 0
    %p130 = por %p128, %p129
    %p131 = scmp.ne.s32.totalorder %s117, %s118
    %p132 = scmp.eq.s32.totalorder %s16, 1
    %p133 = por %p131, %p132
    %p135 = scmp.ne.s32.totalorder %s118, %s134
    %p136 = scmp.eq.s32.totalorder %s16, 0
    %p137 = por %p135, %p136
    %p138 = scmp.le.s32.totalorder 1, %s10
    %p139 = scmp.lt.s32.totalorder %s10, 3
    %p140 = pnand %p138, %p139
    %p141 = pneg %p140
    // Predicated region
    $region9: #{network_forward.14} parent=5 // pred_check
      _
    $region10: #{network_forward.14} parent=5 // pred_check_branch
      %143 = sbr.rel (%p140) target = $region12
    $region11: #{network_forward.14} parent=5 // pred_region
      %s144 = ssub.s32 %s10, 1
      // Predicated region
      $region13: #{network_forward.14} parent=11 // pred_check
        %p145 = pneg %p57
      $region14: #{network_forward.14} parent=11 // pred_check_branch
        %147 = sbr.rel (%p145) target = $region16
      $region15: #{network_forward.14} parent=11 // pred_region
        _
      $region16: #{network_forward.14} parent=11 // pred_fallthru
        _
      // Predicated region
      $region17: #{network_forward.14} parent=11 // pred_check
        %p148 = pneg %p78
      $region18: #{network_forward.14} parent=11 // pred_check_branch
        %150 = sbr.rel (%p148) target = $region20
      $region19: #{network_forward.14} parent=11 // pred_region
        _
      $region20: #{network_forward.14} parent=11 // pred_fallthru
        _
    $region12: #{network_forward.14} parent=5 // pred_fallthru
      _
    %p151 = scmp.lt.s32.totalorder %s10, 2
    // Predicated region
    $region21: #{network_forward.14} parent=5 // pred_check
      %p152 = pneg %p151
    $region22: #{network_forward.14} parent=5 // pred_check_branch
      %154 = sbr.rel (%p152) target = $region24
    $region23: #{network_forward.14} parent=5 // pred_region
      // Predicated region
      $region25: #{network_forward.14} parent=23 // pred_check
        %p155 = pneg %p30
      $region26: #{network_forward.14} parent=23 // pred_check_branch
        %157 = sbr.rel (%p155) target = $region28
      $region27: #{network_forward.14} parent=23 // pred_region
        %s158 = smul.u32 25, %s10
        %p159 = scmp.lt.s32.totalorder %s158, 49
        %s160 = scalar_select %p159, %s158, 49
        %s161 = smul.addr %s160, 4
        %s162 = smul.addr %s161, 4
        %s163 = scalar_lea.vmem %s0, %s162
        %s164 = smul.u32 25, %s10
      $region28: #{network_forward.14} parent=23 // pred_fallthru
        _
      // Predicated region
      $region29: #{network_forward.14} parent=23 // pred_check
        %p165 = pneg %p98
      $region30: #{network_forward.14} parent=23 // pred_check_branch
        %167 = sbr.rel (%p165) target = $region32
      $region31: #{network_forward.14} parent=23 // pred_region
        %s168 = smul.u32 25, %s10
        %p169 = scmp.lt.s32.totalorder %s168, 49
        %s170 = scalar_select %p169, %s168, 49
        %s171 = smul.addr %s170, 8
        %s172 = scalar_lea.vmem %s3, %s171
        %s173 = smul.u32 25, %s10
      $region32: #{network_forward.14} parent=23 // pred_fallthru
        _
    $region24: #{network_forward.14} parent=5 // pred_fallthru
      _
    %p174 = scmp.le.s32.totalorder 1, %s10
    %p175 = scmp.lt.s32.totalorder %s10, 3
    %p176 = pnand %p174, %p175
    %p177 = pneg %p176
    // Predicated region
    $region33: #{network_forward.14} parent=5 // pred_check
      _
    $region34: #{network_forward.14} parent=5 // pred_check_branch
      %179 = sbr.rel (%p176) target = $region36
    $region35: #{network_forward.14} parent=5 // pred_region
      %s180 = ssub.s32 %s10, 1
      %s181 = smul.u32 25, %s15
      %p182 = scmp.lt.s32.totalorder %s181, 49
      %s183 = scalar_select %p182, %s181, 49
      %s184 = smul.addr %s183, 4
      %s185 = smul.addr %s184, 4
      %s186 = scalar_lea.vmem %s0, %s185
      %p187 = pneg %p36
      %p188 = pneg %p33
      %p189 = pneg %p57
      %p190 = pneg %p54
      %p191 = pneg %p78
      %p192 = pneg %p75
      %s193 = smul.u32 25, %s15
      %p194 = scmp.lt.s32.totalorder %s193, 49
      %s195 = scalar_select %p194, %s193, 49
      %s196 = smul.addr %s195, 8
      %s197 = scalar_lea.vmem %s3, %s196
      %p198 = pneg %p104
      %p199 = pneg %p101
      %p200 = pneg %p130
      %p201 = pneg %p127
      %s202 = smul.u32 25, %s15
      %p203 = scmp.lt.s32.totalorder %s202, 49
      %s204 = scalar_select %p203, %s202, 49
      %s205 = smul.addr %s204, 8
      %s206 = scalar_lea.vmem %s4, %s205
      %s207 = smul.u32 25, %s15
      %p208 = scmp.lt.s32.totalorder %s207, 49
      %s209 = scalar_select %p208, %s207, 49
      %s210 = smul.addr %s209, 4
      %s211 = smul.addr %s210, 4
      %s212 = scalar_lea.vmem %s0, %s211
      %s213 = smul.u32 25, %s15
      %s214 = smul.u32 25, %s15
      %p215 = scmp.lt.s32.totalorder %s214, 49
      %s216 = scalar_select %p215, %s214, 49
      %s217 = smul.addr %s216, 8
      %s218 = scalar_lea.vmem %s3, %s217
      %s219 = smul.u32 25, %s15
      %s220 = smul.u32 25, %s15
      %p221 = scmp.lt.s32.totalorder %s220, 49
      %s222 = scalar_select %p221, %s220, 49
      %s223 = smul.addr %s222, 8
      %s224 = scalar_lea.vmem %s4, %s223
      %s225 = smul.u32 25, %s15
      %v227 = vld [vmem:[%s212] sm:$0xff]
      %v228 = vld [vmem:[%s212 + $0x8] sm:$0xff]
      %v229 = vld [vmem:[%s212 + $0x10] sm:$0xff]
      %v230 = vld [vmem:[%s212 + $0x18] sm:$0xff]
      %v231 = vld [vmem:[%s212 + $0x20] sm:$0xff]
      %v232 = vld [vmem:[%s212 + $0x28] sm:$0xff]
      %v233 = vld [vmem:[%s212 + $0x30] sm:$0xff]
      %v234 = vld [vmem:[%s212 + $0x38] sm:$0xff]
      %v235 = vld [vmem:[%s212 + $0x40] sm:$0xff]
      %v236 = vld [vmem:[%s212 + $0x48] sm:$0xff]
      %v237 = vld [vmem:[%s212 + $0x50] sm:$0xff]
      %v238 = vld [vmem:[%s212 + $0x58] sm:$0xff]
      %v239 = vld [vmem:[%s212 + $0x60] sm:$0xff]
      %v240 = vld [vmem:[%s212 + $0x68] sm:$0xff]
      %v241 = vld [vmem:[%s212 + $0x70] sm:$0xff]
      %v242 = vld [vmem:[%s212 + $0x78] sm:$0xff]
      %v243 = vld [vmem:[%s212 + $0x80] sm:$0xff]
      %v244 = vld [vmem:[%s212 + $0x88] sm:$0xff]
      %v245 = vld [vmem:[%s212 + $0x90] sm:$0xff]
      %v246 = vld [vmem:[%s212 + $0x98] sm:$0xff]
      %v247 = vld [vmem:[%s212 + $0xa0] sm:$0xff]
      %v248 = vld [vmem:[%s212 + $0xa8] sm:$0xff]
      %v249 = vld [vmem:[%s212 + $0xb0] sm:$0xff]
      %v250 = vld [vmem:[%s212 + $0xb8] sm:$0xff]
      %v251 = vld [vmem:[%s212 + $0xc0] sm:$0xff]
      %v252 = vld [vmem:[%s212 + $0xc8] sm:$0xff]
      %v253 = vld [vmem:[%s212 + $0xd0] sm:$0xff]
      %v254 = vld [vmem:[%s212 + $0xd8] sm:$0xff]
      %v255 = vld [vmem:[%s212 + $0xe0] sm:$0xff]
      %v256 = vld [vmem:[%s212 + $0xe8] sm:$0xff]
      %v257 = vld [vmem:[%s212 + $0xf0] sm:$0xff]
      %v258 = vld [vmem:[%s212 + $0xf8] sm:$0xff]
      %v259 = vld [vmem:[%s212 + $0x100] sm:$0xff]
      %v260 = vld [vmem:[%s212 + $0x108] sm:$0xff]
      %v261 = vld [vmem:[%s212 + $0x110] sm:$0xff]
      %v262 = vld [vmem:[%s212 + $0x118] sm:$0xff]
      %v263 = vld [vmem:[%s212 + $0x120] sm:$0xff]
      %v264 = vld [vmem:[%s212 + $0x128] sm:$0xff]
      %v265 = vld [vmem:[%s212 + $0x130] sm:$0xff]
      %v266 = vld [vmem:[%s212 + $0x138] sm:$0xff]
      %v267 = vld [vmem:[%s212 + $0x140] sm:$0xff]
      %v268 = vld [vmem:[%s212 + $0x148] sm:$0xff]
      %v269 = vld [vmem:[%s212 + $0x150] sm:$0xff]
      %v270 = vld [vmem:[%s212 + $0x158] sm:$0xff]
      %v271 = vld [vmem:[%s212 + $0x160] sm:$0xff]
      %v272 = vld [vmem:[%s212 + $0x168] sm:$0xff]
      %v273 = vld [vmem:[%s212 + $0x170] sm:$0xff]
      %v274 = vld [vmem:[%s212 + $0x178] sm:$0xff]
      %v275 = vld [vmem:[%s212 + $0x180] sm:$0xff]
      %v276 = vld [vmem:[%s212 + $0x188] sm:$0xff]
      %v277 = vld [vmem:[%s1] sm:$0xf]
      %v278 = vld [vmem:[%s1 + $0x4] sm:$0xf]
      %v279 = vld [vmem:[%s1 + $0x8] sm:$0xf]
      %v280 = vld [vmem:[%s1 + $0xc] sm:$0xf]
      %v281 = vld [vmem:[%s1 + $0x10] sm:$0xf]
      %v282 = vld [vmem:[%s1 + $0x14] sm:$0xf]
      %v283 = vld [vmem:[%s1 + $0x18] sm:$0xf]
      %v284 = vld [vmem:[%s1 + $0x1c] sm:$0xf]
      %v285 = vld [vmem:[%s1 + $0x20] sm:$0xf]
      %v286 = vld [vmem:[%s1 + $0x24] sm:$0xf]
      %v287 = vld [vmem:[%s1 + $0x28] sm:$0xf]
      %v288 = vld [vmem:[%s1 + $0x2c] sm:$0xf]
      %v289 = vld [vmem:[%s1 + $0x30] sm:$0xf]
      %v290 = vld [vmem:[%s1 + $0x34] sm:$0xf]
      %v291 = vld [vmem:[%s1 + $0x38] sm:$0xf]
      %v292 = vld [vmem:[%s1 + $0x3c] sm:$0xf]
      %v293 = vld [vmem:[%s1 + $0x40] sm:$0xf]
      %v294 = vld [vmem:[%s1 + $0x44] sm:$0xf]
      %v295 = vld [vmem:[%s1 + $0x48] sm:$0xf]
      %v296 = vld [vmem:[%s1 + $0x4c] sm:$0xf]
      %v297 = vld [vmem:[%s1 + $0x50] sm:$0xf]
      %v298 = vld [vmem:[%s1 + $0x54] sm:$0xf]
      %v299 = vld [vmem:[%s1 + $0x58] sm:$0xf]
      %v300 = vld [vmem:[%s1 + $0x5c] sm:$0xf]
      %v301 = vld [vmem:[%s1 + $0x60] sm:$0xf]
      %v302 = vld [vmem:[%s1 + $0x64] sm:$0xf]
      %v303 = vld [vmem:[%s1 + $0x68] sm:$0xf]
      %v304 = vld [vmem:[%s1 + $0x6c] sm:$0xf]
      %v305 = vld [vmem:[%s1 + $0x70] sm:$0xf]
      %v306 = vld [vmem:[%s1 + $0x74] sm:$0xf]
      %v307 = vld [vmem:[%s1 + $0x78] sm:$0xf]
      %v308 = vld [vmem:[%s1 + $0x7c] sm:$0xf]
      %v309 = vld [vmem:[%s1 + $0x80] sm:$0xf]
      %v310 = vld [vmem:[%s1 + $0x84] sm:$0xf]
      %v311 = vld [vmem:[%s1 + $0x88] sm:$0xf]
      %v312 = vld [vmem:[%s1 + $0x8c] sm:$0xf]
      %v313 = vld [vmem:[%s1 + $0x90] sm:$0xf]
      %v314 = vld [vmem:[%s1 + $0x94] sm:$0xf]
      %v315 = vld [vmem:[%s1 + $0x98] sm:$0xf]
      %v316 = vld [vmem:[%s1 + $0x9c] sm:$0xf]
      %v317 = vld [vmem:[%s1 + $0xa0] sm:$0xf]
      %v318 = vld [vmem:[%s1 + $0xa4] sm:$0xf]
      %v319 = vld [vmem:[%s1 + $0xa8] sm:$0xf]
      %v320 = vld [vmem:[%s1 + $0xac] sm:$0xf]
      %v321 = vld [vmem:[%s1 + $0xb0] sm:$0xf]
      %v322 = vld [vmem:[%s1 + $0xb4] sm:$0xf]
      %v323 = vld [vmem:[%s1 + $0xb8] sm:$0xf]
      %v324 = vld [vmem:[%s1 + $0xbc] sm:$0xf]
      %v325 = vld [vmem:[%s1 + $0xc0] sm:$0xf]
      %v326 = vld [vmem:[%s1 + $0xc4] sm:$0xf]
      %v327 = vld [vmem:[%s1 + $0xc8] sm:$0xf]
      %v328 = vld [vmem:[%s1 + $0xcc] sm:$0xf]
      %v329 = vld [vmem:[%s1 + $0xd0] sm:$0xf]
      %v330 = vld [vmem:[%s1 + $0xd4] sm:$0xf]
      %v331 = vld [vmem:[%s2] sm:$0x1]
      %v333 = vperm.slane %v331, 0
      %v385 = vunpack.c.l.b16 %v227
      %v386 = vunpack.c.h.b16 %v227
      %v387 = vunpack.c.l.b16 %v228
      %v388 = vunpack.c.h.b16 %v228
      %v389 = vunpack.c.l.b16 %v229
      %v390 = vunpack.c.h.b16 %v229
      %v391 = vunpack.c.l.b16 %v230
      %v392 = vunpack.c.h.b16 %v230
      %v393 = vunpack.c.l.b16 %v231
      %v394 = vunpack.c.h.b16 %v231
      %v395 = vunpack.c.l.b16 %v232
      %v396 = vunpack.c.h.b16 %v232
      %v397 = vunpack.c.l.b16 %v233
      %v398 = vunpack.c.h.b16 %v233
      %v399 = vunpack.c.l.b16 %v234
      %v400 = vunpack.c.h.b16 %v234
      %v401 = vunpack.c.l.b16 %v235
      %v402 = vunpack.c.h.b16 %v235
      %v403 = vunpack.c.l.b16 %v236
      %v404 = vunpack.c.h.b16 %v236
      %v405 = vunpack.c.l.b16 %v237
      %v406 = vunpack.c.h.b16 %v237
      %v407 = vunpack.c.l.b16 %v238
      %v408 = vunpack.c.h.b16 %v238
      %v409 = vunpack.c.l.b16 %v239
      %v410 = vunpack.c.h.b16 %v239
      %v411 = vunpack.c.l.b16 %v240
      %v412 = vunpack.c.h.b16 %v240
      %v413 = vunpack.c.l.b16 %v241
      %v414 = vunpack.c.h.b16 %v241
      %v415 = vunpack.c.l.b16 %v242
      %v416 = vunpack.c.h.b16 %v242
      %v417 = vunpack.c.l.b16 %v243
      %v418 = vunpack.c.h.b16 %v243
      %v419 = vunpack.c.l.b16 %v244
      %v420 = vunpack.c.h.b16 %v244
      %v421 = vunpack.c.l.b16 %v245
      %v422 = vunpack.c.h.b16 %v245
      %v423 = vunpack.c.l.b16 %v246
      %v424 = vunpack.c.h.b16 %v246
      %v425 = vunpack.c.l.b16 %v247
      %v426 = vunpack.c.h.b16 %v247
      %v427 = vunpack.c.l.b16 %v248
      %v428 = vunpack.c.h.b16 %v248
      %v429 = vunpack.c.l.b16 %v249
      %v430 = vunpack.c.h.b16 %v249
      %v431 = vunpack.c.l.b16 %v250
      %v432 = vunpack.c.h.b16 %v250
      %v433 = vunpack.c.l.b16 %v251
      %v434 = vunpack.c.h.b16 %v251
      %v435 = vunpack.c.l.b16 %v252
      %v436 = vunpack.c.h.b16 %v252
      %v437 = vunpack.c.l.b16 %v253
      %v438 = vunpack.c.h.b16 %v253
      %v439 = vunpack.c.l.b16 %v254
      %v440 = vunpack.c.h.b16 %v254
      %v441 = vunpack.c.l.b16 %v255
      %v442 = vunpack.c.h.b16 %v255
      %v443 = vunpack.c.l.b16 %v256
      %v444 = vunpack.c.h.b16 %v256
      %v445 = vunpack.c.l.b16 %v257
      %v446 = vunpack.c.h.b16 %v257
      %v447 = vunpack.c.l.b16 %v258
      %v448 = vunpack.c.h.b16 %v258
      %v449 = vunpack.c.l.b16 %v259
      %v450 = vunpack.c.h.b16 %v259
      %v451 = vunpack.c.l.b16 %v260
      %v452 = vunpack.c.h.b16 %v260
      %v453 = vunpack.c.l.b16 %v261
      %v454 = vunpack.c.h.b16 %v261
      %v455 = vunpack.c.l.b16 %v262
      %v456 = vunpack.c.h.b16 %v262
      %v457 = vunpack.c.l.b16 %v263
      %v458 = vunpack.c.h.b16 %v263
      %v459 = vunpack.c.l.b16 %v264
      %v460 = vunpack.c.h.b16 %v264
      %v461 = vunpack.c.l.b16 %v265
      %v462 = vunpack.c.h.b16 %v265
      %v463 = vunpack.c.l.b16 %v266
      %v464 = vunpack.c.h.b16 %v266
      %v465 = vunpack.c.l.b16 %v267
      %v466 = vunpack.c.h.b16 %v267
      %v467 = vunpack.c.l.b16 %v268
      %v468 = vunpack.c.h.b16 %v268
      %v469 = vunpack.c.l.b16 %v269
      %v470 = vunpack.c.h.b16 %v269
      %v471 = vunpack.c.l.b16 %v270
      %v472 = vunpack.c.h.b16 %v270
      %v473 = vunpack.c.l.b16 %v271
      %v474 = vunpack.c.h.b16 %v271
      %v475 = vunpack.c.l.b16 %v272
      %v476 = vunpack.c.h.b16 %v272
      %v477 = vunpack.c.l.b16 %v273
      %v478 = vunpack.c.h.b16 %v273
      %v479 = vunpack.c.l.b16 %v274
      %v480 = vunpack.c.h.b16 %v274
      %v481 = vunpack.c.l.b16 %v275
      %v482 = vunpack.c.h.b16 %v275
      %v483 = vunpack.c.l.b16 %v276
      %v484 = vunpack.c.h.b16 %v276
      %v485 = vpack.c.b16 %v389, %v385
      %v486 = vpack.c.b16 %v390, %v386
      %v487 = vpack.c.b16 %v391, %v387
      %v488 = vpack.c.b16 %v392, %v388
      %v489 = vpack.c.b16 %v397, %v393
      %v490 = vpack.c.b16 %v398, %v394
      %v491 = vpack.c.b16 %v399, %v395
      %v492 = vpack.c.b16 %v400, %v396
      %v493 = vpack.c.b16 %v405, %v401
      %v494 = vpack.c.b16 %v406, %v402
      %v495 = vpack.c.b16 %v407, %v403
      %v496 = vpack.c.b16 %v408, %v404
      %v497 = vpack.c.b16 %v413, %v409
      %v498 = vpack.c.b16 %v414, %v410
      %v499 = vpack.c.b16 %v415, %v411
      %v500 = vpack.c.b16 %v416, %v412
      %v501 = vpack.c.b16 %v421, %v417
      %v502 = vpack.c.b16 %v422, %v418
      %v503 = vpack.c.b16 %v423, %v419
      %v504 = vpack.c.b16 %v424, %v420
      %v505 = vpack.c.b16 %v429, %v425
      %v506 = vpack.c.b16 %v430, %v426
      %v507 = vpack.c.b16 %v431, %v427
      %v508 = vpack.c.b16 %v432, %v428
      %v509 = vpack.c.b16 %v437, %v433
      %v510 = vpack.c.b16 %v438, %v434
      %v511 = vpack.c.b16 %v439, %v435
      %v512 = vpack.c.b16 %v440, %v436
      %v513 = vpack.c.b16 %v445, %v441
      %v514 = vpack.c.b16 %v446, %v442
      %v515 = vpack.c.b16 %v447, %v443
      %v516 = vpack.c.b16 %v448, %v444
      %v517 = vpack.c.b16 %v453, %v449
      %v518 = vpack.c.b16 %v454, %v450
      %v519 = vpack.c.b16 %v455, %v451
      %v520 = vpack.c.b16 %v456, %v452
      %v521 = vpack.c.b16 %v461, %v457
      %v522 = vpack.c.b16 %v462, %v458
      %v523 = vpack.c.b16 %v463, %v459
      %v524 = vpack.c.b16 %v464, %v460
      %v525 = vpack.c.b16 %v469, %v465
      %v526 = vpack.c.b16 %v470, %v466
      %v527 = vpack.c.b16 %v471, %v467
      %v528 = vpack.c.b16 %v472, %v468
      %v529 = vpack.c.b16 %v477, %v473
      %v530 = vpack.c.b16 %v478, %v474
      %v531 = vpack.c.b16 %v479, %v475
      %v532 = vpack.c.b16 %v480, %v476
      %v533 = vpack.c.b16 %v481, %v481
      %v534 = vpack.c.b16 %v482, %v482
      %v535 = vpack.c.b16 %v483, %v483
      %v536 = vpack.c.b16 %v484, %v484
      %v630 = vunpack.c.l.b16 %v277
      %v631 = vunpack.c.l.b16 %v278
      %v632 = vunpack.c.l.b16 %v279
      %v633 = vunpack.c.l.b16 %v280
      %v634 = vunpack.c.l.b16 %v281
      %v635 = vunpack.c.l.b16 %v282
      %v636 = vunpack.c.l.b16 %v283
      %v637 = vunpack.c.l.b16 %v284
      %v638 = vunpack.c.l.b16 %v285
      %v639 = vunpack.c.l.b16 %v286
      %v640 = vunpack.c.l.b16 %v287
      %v641 = vunpack.c.l.b16 %v288
      %v642 = vunpack.c.l.b16 %v289
      %v643 = vunpack.c.l.b16 %v290
      %v644 = vunpack.c.l.b16 %v291
      %v645 = vunpack.c.l.b16 %v292
      %v646 = vunpack.c.l.b16 %v293
      %v647 = vunpack.c.l.b16 %v294
      %v648 = vunpack.c.l.b16 %v295
      %v649 = vunpack.c.l.b16 %v296
      %v650 = vunpack.c.l.b16 %v297
      %v651 = vunpack.c.l.b16 %v298
      %v652 = vunpack.c.l.b16 %v299
      %v653 = vunpack.c.l.b16 %v300
      %v654 = vunpack.c.l.b16 %v301
      %v655 = vunpack.c.l.b16 %v302
      %v656 = vunpack.c.l.b16 %v303
      %v657 = vunpack.c.l.b16 %v304
      %v658 = vunpack.c.l.b16 %v305
      %v659 = vunpack.c.l.b16 %v306
      %v660 = vunpack.c.l.b16 %v307
      %v661 = vunpack.c.l.b16 %v308
      %v662 = vunpack.c.l.b16 %v309
      %v663 = vunpack.c.l.b16 %v310
      %v664 = vunpack.c.l.b16 %v311
      %v665 = vunpack.c.l.b16 %v312
      %v666 = vunpack.c.l.b16 %v313
      %v667 = vunpack.c.l.b16 %v314
      %v668 = vunpack.c.l.b16 %v315
      %v669 = vunpack.c.l.b16 %v316
      %v670 = vunpack.c.l.b16 %v317
      %v671 = vunpack.c.l.b16 %v318
      %v672 = vunpack.c.l.b16 %v319
      %v673 = vunpack.c.l.b16 %v320
      %v674 = vunpack.c.l.b16 %v321
      %v675 = vunpack.c.l.b16 %v322
      %v676 = vunpack.c.l.b16 %v323
      %v677 = vunpack.c.l.b16 %v324
      %v678 = vunpack.c.l.b16 %v325
      %v679 = vunpack.c.l.b16 %v326
      %v680 = vunpack.c.l.b16 %v327
      %v681 = vunpack.c.l.b16 %v328
      %v682 = vunpack.c.l.b16 %v329
      %v683 = vunpack.c.l.b16 %v330
      %v684 = vpack.c.b16 %v631, %v630
      %v685 = vpack.c.b16 %v633, %v632
      %v686 = vpack.c.b16 %v635, %v634
      %v687 = vpack.c.b16 %v637, %v636
      %v688 = vpack.c.b16 %v639, %v638
      %v689 = vpack.c.b16 %v641, %v640
      %v690 = vpack.c.b16 %v643, %v642
      %v691 = vpack.c.b16 %v645, %v644
      %v692 = vpack.c.b16 %v647, %v646
      %v693 = vpack.c.b16 %v649, %v648
      %v694 = vpack.c.b16 %v651, %v650
      %v695 = vpack.c.b16 %v653, %v652
      %v696 = vpack.c.b16 %v655, %v654
      %v697 = vpack.c.b16 %v657, %v656
      %v698 = vpack.c.b16 %v659, %v658
      %v699 = vpack.c.b16 %v661, %v660
      %v700 = vpack.c.b16 %v663, %v662
      %v701 = vpack.c.b16 %v665, %v664
      %v702 = vpack.c.b16 %v667, %v666
      %v703 = vpack.c.b16 %v669, %v668
      %v704 = vpack.c.b16 %v671, %v670
      %v705 = vpack.c.b16 %v673, %v672
      %v706 = vpack.c.b16 %v675, %v674
      %v707 = vpack.c.b16 %v677, %v676
      %v708 = vpack.c.b16 %v679, %v678
      %v709 = vpack.c.b16 %v681, %v680
      %v710 = vpack.c.b16 %v683, %v682
      %vm738 = vcmask 392192
      %v740 = vsel %vm738, %v488, 0
      %v743 = vsel %vm738, %v492, 0
      %v746 = vsel %vm738, %v496, 0
      %v749 = vsel %vm738, %v500, 0
      %v752 = vsel %vm738, %v504, 0
      %v755 = vsel %vm738, %v508, 0
      %v758 = vsel %vm738, %v512, 0
      %v761 = vsel %vm738, %v516, 0
      %v764 = vsel %vm738, %v520, 0
      %v767 = vsel %vm738, %v524, 0
      %v770 = vsel %vm738, %v528, 0
      %v773 = vsel %vm738, %v532, 0
      %v776 = vsel %vm738, %v536, 0
      %778 = vmatpush.bf16.msra.mxu0 %v691
      %779 = vmatpush.bf16.msra.mxu0 %v690
      %780 = vmatpush.bf16.msra.mxu0 %v689
      %781 = vmatpush.bf16.msra.mxu0 %v688
      %782 = vmatpush.bf16.msra.mxu0 %v687
      %783 = vmatpush.bf16.msra.mxu0 %v686
      %784 = vmatpush.bf16.msra.mxu0 %v685
      %785 = vmatpush.bf16.msra.mxu0 %v684
      %786 = vmatmul.bf16.gmra.mxu0 %v485
      %v787 = vpop.f32.mrf.mxu0
      %v788 = vadd.f32 %v333, %v787
      %v789 = vpop.f32.mrf.mxu0
      %v790 = vadd.f32 %v333, %v789
      %791 = vmatmul.bf16.gmra.mxu0 %v489
      %v792 = vpop.f32.mrf.mxu0
      %v793 = vadd.f32 %v333, %v792
      %v794 = vpop.f32.mrf.mxu0
      %v795 = vadd.f32 %v333, %v794
      %796 = vmatmul.bf16.gmra.mxu0 %v493
      %v797 = vpop.f32.mrf.mxu0
      %v798 = vadd.f32 %v333, %v797
      %v799 = vpop.f32.mrf.mxu0
      %v800 = vadd.f32 %v333, %v799
      %801 = vmatmul.bf16.gmra.mxu0 %v497
      %v802 = vpop.f32.mrf.mxu0
      %v803 = vadd.f32 %v333, %v802
      %v804 = vpop.f32.mrf.mxu0
      %v805 = vadd.f32 %v333, %v804
      %806 = vmatmul.bf16.gmra.mxu0 %v501
      %v807 = vpop.f32.mrf.mxu0
      %v808 = vadd.f32 %v333, %v807
      %v809 = vpop.f32.mrf.mxu0
      %v810 = vadd.f32 %v333, %v809
      %811 = vmatmul.bf16.gmra.mxu0 %v505
      %v812 = vpop.f32.mrf.mxu0
      %v813 = vadd.f32 %v333, %v812
      %v814 = vpop.f32.mrf.mxu0
      %v815 = vadd.f32 %v333, %v814
      %816 = vmatmul.bf16.gmra.mxu0 %v509
      %v817 = vpop.f32.mrf.mxu0
      %v818 = vadd.f32 %v333, %v817
      %v819 = vpop.f32.mrf.mxu0
      %v820 = vadd.f32 %v333, %v819
      %821 = vmatmul.bf16.gmra.mxu0 %v513
      %v822 = vpop.f32.mrf.mxu0
      %v823 = vadd.f32 %v333, %v822
      %v824 = vpop.f32.mrf.mxu0
      %v825 = vadd.f32 %v333, %v824
      %826 = vmatmul.bf16.gmra.mxu0 %v517
      %v827 = vpop.f32.mrf.mxu0
      %v828 = vadd.f32 %v333, %v827
      %v829 = vpop.f32.mrf.mxu0
      %v830 = vadd.f32 %v333, %v829
      %831 = vmatmul.bf16.gmra.mxu0 %v521
      %v832 = vpop.f32.mrf.mxu0
      %v833 = vadd.f32 %v333, %v832
      %v834 = vpop.f32.mrf.mxu0
      %v835 = vadd.f32 %v333, %v834
      %836 = vmatmul.bf16.gmra.mxu0 %v525
      %v837 = vpop.f32.mrf.mxu0
      %v838 = vadd.f32 %v333, %v837
      %v839 = vpop.f32.mrf.mxu0
      %v840 = vadd.f32 %v333, %v839
      %841 = vmatmul.bf16.gmra.mxu0 %v529
      %v842 = vpop.f32.mrf.mxu0
      %v843 = vadd.f32 %v333, %v842
      %v844 = vpop.f32.mrf.mxu0
      %v845 = vadd.f32 %v333, %v844
      %846 = vmatmul.bf16.gmra.mxu0 %v533
      %v847 = vpop.f32.mrf.mxu0
      %v848 = vadd.f32 %v333, %v847
      %v849 = vpop.f32.mrf.mxu0
      %850 = vdwg.mxu0
      %851 = vmatpush.bf16.msra.mxu0 %v699
      %852 = vmatpush.bf16.msra.mxu0 %v698
      %853 = vmatpush.bf16.msra.mxu0 %v697
      %854 = vmatpush.bf16.msra.mxu0 %v696
      %855 = vmatpush.bf16.msra.mxu0 %v695
      %856 = vmatpush.bf16.msra.mxu0 %v694
      %857 = vmatpush.bf16.msra.mxu0 %v693
      %858 = vmatpush.bf16.msra.mxu0 %v692
      %859 = vmatmul.bf16.gmra.mxu0 %v486
      %v860 = vpop.f32.mrf.mxu0
      %v861 = vadd.f32 %v788, %v860
      %v862 = vpop.f32.mrf.mxu0
      %v863 = vadd.f32 %v790, %v862
      %864 = vmatmul.bf16.gmra.mxu0 %v490
      %v865 = vpop.f32.mrf.mxu0
      %v866 = vadd.f32 %v793, %v865
      %v867 = vpop.f32.mrf.mxu0
      %v868 = vadd.f32 %v795, %v867
      %869 = vmatmul.bf16.gmra.mxu0 %v494
      %v870 = vpop.f32.mrf.mxu0
      %v871 = vadd.f32 %v798, %v870
      %v872 = vpop.f32.mrf.mxu0
      %v873 = vadd.f32 %v800, %v872
      %874 = vmatmul.bf16.gmra.mxu0 %v498
      %v875 = vpop.f32.mrf.mxu0
      %v876 = vadd.f32 %v803, %v875
      %v877 = vpop.f32.mrf.mxu0
      %v878 = vadd.f32 %v805, %v877
      %879 = vmatmul.bf16.gmra.mxu0 %v502
      %v880 = vpop.f32.mrf.mxu0
      %v881 = vadd.f32 %v808, %v880
      %v882 = vpop.f32.mrf.mxu0
      %v883 = vadd.f32 %v810, %v882
      %884 = vmatmul.bf16.gmra.mxu0 %v506
      %v885 = vpop.f32.mrf.mxu0
      %v886 = vadd.f32 %v813, %v885
      %v887 = vpop.f32.mrf.mxu0
      %v888 = vadd.f32 %v815, %v887
      %889 = vmatmul.bf16.gmra.mxu0 %v510
      %v890 = vpop.f32.mrf.mxu0
      %v891 = vadd.f32 %v818, %v890
      %v892 = vpop.f32.mrf.mxu0
      %v893 = vadd.f32 %v820, %v892
      %894 = vmatmul.bf16.gmra.mxu0 %v514
      %v895 = vpop.f32.mrf.mxu0
      %v896 = vadd.f32 %v823, %v895
      %v897 = vpop.f32.mrf.mxu0
      %v898 = vadd.f32 %v825, %v897
      %899 = vmatmul.bf16.gmra.mxu0 %v518
      %v900 = vpop.f32.mrf.mxu0
      %v901 = vadd.f32 %v828, %v900
      %v902 = vpop.f32.mrf.mxu0
      %v903 = vadd.f32 %v830, %v902
      %904 = vmatmul.bf16.gmra.mxu0 %v522
      %v905 = vpop.f32.mrf.mxu0
      %v906 = vadd.f32 %v833, %v905
      %v907 = vpop.f32.mrf.mxu0
      %v908 = vadd.f32 %v835, %v907
      %909 = vmatmul.bf16.gmra.mxu0 %v526
      %v910 = vpop.f32.mrf.mxu0
      %v911 = vadd.f32 %v838, %v910
      %v912 = vpop.f32.mrf.mxu0
      %v913 = vadd.f32 %v840, %v912
      %914 = vmatmul.bf16.gmra.mxu0 %v530
      %v915 = vpop.f32.mrf.mxu0
      %v916 = vadd.f32 %v843, %v915
      %v917 = vpop.f32.mrf.mxu0
      %v918 = vadd.f32 %v845, %v917
      %919 = vmatmul.bf16.gmra.mxu0 %v534
      %v920 = vpop.f32.mrf.mxu0
      %v921 = vadd.f32 %v848, %v920
      %v922 = vpop.f32.mrf.mxu0
      %923 = vdwg.mxu0
      %924 = vmatpush.bf16.msra.mxu0 %v707
      %925 = vmatpush.bf16.msra.mxu0 %v706
      %926 = vmatpush.bf16.msra.mxu0 %v705
      %927 = vmatpush.bf16.msra.mxu0 %v704
      %928 = vmatpush.bf16.msra.mxu0 %v703
      %929 = vmatpush.bf16.msra.mxu0 %v702
      %930 = vmatpush.bf16.msra.mxu0 %v701
      %931 = vmatpush.bf16.msra.mxu0 %v700
      %932 = vmatmul.bf16.gmra.mxu0 %v487
      %v933 = vpop.f32.mrf.mxu0
      %v934 = vadd.f32 %v861, %v933
      %v935 = vpop.f32.mrf.mxu0
      %v936 = vadd.f32 %v863, %v935
      %937 = vmatmul.bf16.gmra.mxu0 %v491
      %v938 = vpop.f32.mrf.mxu0
      %v939 = vadd.f32 %v866, %v938
      %v940 = vpop.f32.mrf.mxu0
      %v941 = vadd.f32 %v868, %v940
      %942 = vmatmul.bf16.gmra.mxu0 %v495
      %v943 = vpop.f32.mrf.mxu0
      %v944 = vadd.f32 %v871, %v943
      %v945 = vpop.f32.mrf.mxu0
      %v946 = vadd.f32 %v873, %v945
      %947 = vmatmul.bf16.gmra.mxu0 %v499
      %v948 = vpop.f32.mrf.mxu0
      %v949 = vadd.f32 %v876, %v948
      %v950 = vpop.f32.mrf.mxu0
      %v951 = vadd.f32 %v878, %v950
      %952 = vmatmul.bf16.gmra.mxu0 %v503
      %v953 = vpop.f32.mrf.mxu0
      %v954 = vadd.f32 %v881, %v953
      %v955 = vpop.f32.mrf.mxu0
      %v956 = vadd.f32 %v883, %v955
      %957 = vmatmul.bf16.gmra.mxu0 %v507
      %v958 = vpop.f32.mrf.mxu0
      %v959 = vadd.f32 %v886, %v958
      %v960 = vpop.f32.mrf.mxu0
      %v961 = vadd.f32 %v888, %v960
      %962 = vmatmul.bf16.gmra.mxu0 %v511
      %v963 = vpop.f32.mrf.mxu0
      %v964 = vadd.f32 %v891, %v963
      %v965 = vpop.f32.mrf.mxu0
      %v966 = vadd.f32 %v893, %v965
      %967 = vmatmul.bf16.gmra.mxu0 %v515
      %v968 = vpop.f32.mrf.mxu0
      %v969 = vadd.f32 %v896, %v968
      %v970 = vpop.f32.mrf.mxu0
      %v971 = vadd.f32 %v898, %v970
      %972 = vmatmul.bf16.gmra.mxu0 %v519
      %v973 = vpop.f32.mrf.mxu0
      %v974 = vadd.f32 %v901, %v973
      %v975 = vpop.f32.mrf.mxu0
      %v976 = vadd.f32 %v903, %v975
      %977 = vmatmul.bf16.gmra.mxu0 %v523
      %v978 = vpop.f32.mrf.mxu0
      %v979 = vadd.f32 %v906, %v978
      %v980 = vpop.f32.mrf.mxu0
      %v981 = vadd.f32 %v908, %v980
      %982 = vmatmul.bf16.gmra.mxu0 %v527
      %v983 = vpop.f32.mrf.mxu0
      %v984 = vadd.f32 %v911, %v983
      %v985 = vpop.f32.mrf.mxu0
      %v986 = vadd.f32 %v913, %v985
      %987 = vmatmul.bf16.gmra.mxu0 %v531
      %v988 = vpop.f32.mrf.mxu0
      %v989 = vadd.f32 %v916, %v988
      %v990 = vpop.f32.mrf.mxu0
      %v991 = vadd.f32 %v918, %v990
      %992 = vmatmul.bf16.gmra.mxu0 %v535
      %v993 = vpop.f32.mrf.mxu0
      %v994 = vadd.f32 %v921, %v993
      %v995 = vpop.f32.mrf.mxu0
      %996 = vdwg.mxu0
      %997 = vmatpush.bf16.msra.mxu0 0
      %998 = vmatpush.bf16.msra.mxu0 0
      %999 = vmatpush.bf16.msra.mxu0 0
      %1000 = vmatpush.bf16.msra.mxu0 0
      %1001 = vmatpush.bf16.msra.mxu0 0
      %1002 = vmatpush.bf16.msra.mxu0 %v710
      %1003 = vmatpush.bf16.msra.mxu0 %v709
      %1004 = vmatpush.bf16.msra.mxu0 %v708
      %1005 = vmatmul.bf16.gmra.mxu0 %v740
      %v1006 = vpop.f32.mrf.mxu0
      %v1007 = vadd.f32 %v934, %v1006
      %v1008 = vpop.f32.mrf.mxu0
      %v1009 = vadd.f32 %v936, %v1008
      %1010 = vmatmul.bf16.gmra.mxu0 %v743
      %v1011 = vpop.f32.mrf.mxu0
      %v1012 = vadd.f32 %v939, %v1011
      %v1013 = vpop.f32.mrf.mxu0
      %v1014 = vadd.f32 %v941, %v1013
      %1015 = vmatmul.bf16.gmra.mxu0 %v746
      %v1016 = vpop.f32.mrf.mxu0
      %v1017 = vadd.f32 %v944, %v1016
      %v1018 = vpop.f32.mrf.mxu0
      %v1019 = vadd.f32 %v946, %v1018
      %1020 = vmatmul.bf16.gmra.mxu0 %v749
      %v1021 = vpop.f32.mrf.mxu0
      %v1022 = vadd.f32 %v949, %v1021
      %v1023 = vpop.f32.mrf.mxu0
      %v1024 = vadd.f32 %v951, %v1023
      %1025 = vmatmul.bf16.gmra.mxu0 %v752
      %v1026 = vpop.f32.mrf.mxu0
      %v1027 = vadd.f32 %v954, %v1026
      %v1028 = vpop.f32.mrf.mxu0
      %v1029 = vadd.f32 %v956, %v1028
      %1030 = vmatmul.bf16.gmra.mxu0 %v755
      %v1031 = vpop.f32.mrf.mxu0
      %v1032 = vadd.f32 %v959, %v1031
      %v1033 = vpop.f32.mrf.mxu0
      %v1034 = vadd.f32 %v961, %v1033
      %1035 = vmatmul.bf16.gmra.mxu0 %v758
      %v1036 = vpop.f32.mrf.mxu0
      %v1037 = vadd.f32 %v964, %v1036
      %v1038 = vpop.f32.mrf.mxu0
      %v1039 = vadd.f32 %v966, %v1038
      %1040 = vmatmul.bf16.gmra.mxu0 %v761
      %v1041 = vpop.f32.mrf.mxu0
      %v1042 = vadd.f32 %v969, %v1041
      %v1043 = vpop.f32.mrf.mxu0
      %v1044 = vadd.f32 %v971, %v1043
      %1045 = vmatmul.bf16.gmra.mxu0 %v764
      %v1046 = vpop.f32.mrf.mxu0
      %v1047 = vadd.f32 %v974, %v1046
      %v1048 = vpop.f32.mrf.mxu0
      %v1049 = vadd.f32 %v976, %v1048
      %1050 = vmatmul.bf16.gmra.mxu0 %v767
      %v1051 = vpop.f32.mrf.mxu0
      %v1052 = vadd.f32 %v979, %v1051
      %v1053 = vpop.f32.mrf.mxu0
      %v1054 = vadd.f32 %v981, %v1053
      %1055 = vmatmul.bf16.gmra.mxu0 %v770
      %v1056 = vpop.f32.mrf.mxu0
      %v1057 = vadd.f32 %v984, %v1056
      %v1058 = vpop.f32.mrf.mxu0
      %v1059 = vadd.f32 %v986, %v1058
      %1060 = vmatmul.bf16.gmra.mxu0 %v773
      %v1061 = vpop.f32.mrf.mxu0
      %v1062 = vadd.f32 %v989, %v1061
      %v1063 = vpop.f32.mrf.mxu0
      %v1064 = vadd.f32 %v991, %v1063
      %1065 = vmatmul.bf16.gmra.mxu0 %v776
      %v1066 = vpop.f32.mrf.mxu0
      %v1067 = vadd.f32 %v994, %v1066
      %v1068 = vpop.f32.mrf.mxu0
      %1069 = vdwg.mxu0
      %v1070 = vld [vmem:[%s218] sm:$0xff]
      %v1071 = vld [vmem:[%s218 + $0x8] sm:$0xff]
      %v1072 = vld [vmem:[%s218 + $0x10] sm:$0xff]
      %v1073 = vld [vmem:[%s218 + $0x18] sm:$0xff]
      %v1074 = vld [vmem:[%s218 + $0x20] sm:$0xff]
      %v1075 = vld [vmem:[%s218 + $0x28] sm:$0xff]
      %v1076 = vld [vmem:[%s218 + $0x30] sm:$0xff]
      %v1077 = vld [vmem:[%s218 + $0x38] sm:$0xff]
      %v1078 = vld [vmem:[%s218 + $0x40] sm:$0xff]
      %v1079 = vld [vmem:[%s218 + $0x48] sm:$0xff]
      %v1080 = vld [vmem:[%s218 + $0x50] sm:$0xff]
      %v1081 = vld [vmem:[%s218 + $0x58] sm:$0xff]
      %v1082 = vld [vmem:[%s218 + $0x60] sm:$0xff]
      %v1083 = vld [vmem:[%s218 + $0x68] sm:$0xff]
      %v1084 = vld [vmem:[%s218 + $0x70] sm:$0xff]
      %v1085 = vld [vmem:[%s218 + $0x78] sm:$0xff]
      %v1086 = vld [vmem:[%s218 + $0x80] sm:$0xff]
      %v1087 = vld [vmem:[%s218 + $0x88] sm:$0xff]
      %v1088 = vld [vmem:[%s218 + $0x90] sm:$0xff]
      %v1089 = vld [vmem:[%s218 + $0x98] sm:$0xff]
      %v1090 = vld [vmem:[%s218 + $0xa0] sm:$0xff]
      %v1091 = vld [vmem:[%s218 + $0xa8] sm:$0xff]
      %v1092 = vld [vmem:[%s218 + $0xb0] sm:$0xff]
      %v1093 = vld [vmem:[%s218 + $0xb8] sm:$0xff]
      %v1094 = vld [vmem:[%s218 + $0xc0] sm:$0xff]
      %v1095 = vadd.f32 %v1007, %v1070
      %v1096 = vadd.f32 %v1009, %v1071
      %v1097 = vadd.f32 %v1012, %v1072
      %v1098 = vadd.f32 %v1014, %v1073
      %v1099 = vadd.f32 %v1017, %v1074
      %v1100 = vadd.f32 %v1019, %v1075
      %v1101 = vadd.f32 %v1022, %v1076
      %v1102 = vadd.f32 %v1024, %v1077
      %v1103 = vadd.f32 %v1027, %v1078
      %v1104 = vadd.f32 %v1029, %v1079
      %v1105 = vadd.f32 %v1032, %v1080
      %v1106 = vadd.f32 %v1034, %v1081
      %v1107 = vadd.f32 %v1037, %v1082
      %v1108 = vadd.f32 %v1039, %v1083
      %v1109 = vadd.f32 %v1042, %v1084
      %v1110 = vadd.f32 %v1044, %v1085
      %v1111 = vadd.f32 %v1047, %v1086
      %v1112 = vadd.f32 %v1049, %v1087
      %v1113 = vadd.f32 %v1052, %v1088
      %v1114 = vadd.f32 %v1054, %v1089
      %v1115 = vadd.f32 %v1057, %v1090
      %v1116 = vadd.f32 %v1059, %v1091
      %v1117 = vadd.f32 %v1062, %v1092
      %v1118 = vadd.f32 %v1064, %v1093
      %v1119 = vadd.f32 %v1067, %v1094
      %v1120 = vmax.f32 %v1095, 0.0
      %v1121 = vmax.f32 %v1096, 0.0
      %v1122 = vmax.f32 %v1097, 0.0
      %v1123 = vmax.f32 %v1098, 0.0
      %v1124 = vmax.f32 %v1099, 0.0
      %v1125 = vmax.f32 %v1100, 0.0
      %v1126 = vmax.f32 %v1101, 0.0
      %v1127 = vmax.f32 %v1102, 0.0
      %v1128 = vmax.f32 %v1103, 0.0
      %v1129 = vmax.f32 %v1104, 0.0
      %v1130 = vmax.f32 %v1105, 0.0
      %v1131 = vmax.f32 %v1106, 0.0
      %v1132 = vmax.f32 %v1107, 0.0
      %v1133 = vmax.f32 %v1108, 0.0
      %v1134 = vmax.f32 %v1109, 0.0
      %v1135 = vmax.f32 %v1110, 0.0
      %v1136 = vmax.f32 %v1111, 0.0
      %v1137 = vmax.f32 %v1112, 0.0
      %v1138 = vmax.f32 %v1113, 0.0
      %v1139 = vmax.f32 %v1114, 0.0
      %v1140 = vmax.f32 %v1115, 0.0
      %v1141 = vmax.f32 %v1116, 0.0
      %v1142 = vmax.f32 %v1117, 0.0
      %v1143 = vmax.f32 %v1118, 0.0
      %v1144 = vmax.f32 %v1119, 0.0
      %vm1145 = vcmask 130048
      %1146 = vst.msk [vmem:[%s224] sm:$0xff] %vm1145, %v1120
      %1147 = vst.msk [vmem:[%s224 + $0x8] sm:$0xff] %vm1145, %v1121
      %1148 = vst.msk [vmem:[%s224 + $0x10] sm:$0xff] %vm1145, %v1122
      %1149 = vst.msk [vmem:[%s224 + $0x18] sm:$0xff] %vm1145, %v1123
      %1150 = vst.msk [vmem:[%s224 + $0x20] sm:$0xff] %vm1145, %v1124
      %1151 = vst.msk [vmem:[%s224 + $0x28] sm:$0xff] %vm1145, %v1125
      %1152 = vst.msk [vmem:[%s224 + $0x30] sm:$0xff] %vm1145, %v1126
      %1153 = vst.msk [vmem:[%s224 + $0x38] sm:$0xff] %vm1145, %v1127
      %1154 = vst.msk [vmem:[%s224 + $0x40] sm:$0xff] %vm1145, %v1128
      %1155 = vst.msk [vmem:[%s224 + $0x48] sm:$0xff] %vm1145, %v1129
      %1156 = vst.msk [vmem:[%s224 + $0x50] sm:$0xff] %vm1145, %v1130
      %1157 = vst.msk [vmem:[%s224 + $0x58] sm:$0xff] %vm1145, %v1131
      %1158 = vst.msk [vmem:[%s224 + $0x60] sm:$0xff] %vm1145, %v1132
      %1159 = vst.msk [vmem:[%s224 + $0x68] sm:$0xff] %vm1145, %v1133
      %1160 = vst.msk [vmem:[%s224 + $0x70] sm:$0xff] %vm1145, %v1134
      %1161 = vst.msk [vmem:[%s224 + $0x78] sm:$0xff] %vm1145, %v1135
      %1162 = vst.msk [vmem:[%s224 + $0x80] sm:$0xff] %vm1145, %v1136
      %1163 = vst.msk [vmem:[%s224 + $0x88] sm:$0xff] %vm1145, %v1137
      %1164 = vst.msk [vmem:[%s224 + $0x90] sm:$0xff] %vm1145, %v1138
      %1165 = vst.msk [vmem:[%s224 + $0x98] sm:$0xff] %vm1145, %v1139
      %1166 = vst.msk [vmem:[%s224 + $0xa0] sm:$0xff] %vm1145, %v1140
      %1167 = vst.msk [vmem:[%s224 + $0xa8] sm:$0xff] %vm1145, %v1141
      %1168 = vst.msk [vmem:[%s224 + $0xb0] sm:$0xff] %vm1145, %v1142
      %1169 = vst.msk [vmem:[%s224 + $0xb8] sm:$0xff] %vm1145, %v1143
      %1170 = vst.msk [vmem:[%s224 + $0xc0] sm:$0xff] %vm1145, %v1144
      %s1171 = smul.u32 25, %s15
      %p1172 = scmp.lt.s32.totalorder %s1171, 49
      %s1173 = scalar_select %p1172, %s1171, 49
      %s1174 = smul.addr %s1173, 8
      %s1175 = scalar_lea.vmem %s4, %s1174
      // Predicated region
      $region37: #{network_forward.14} parent=35 // pred_check
        %p1176 = pneg %p127
      $region38: #{network_forward.14} parent=35 // pred_check_branch
        %1178 = sbr.rel (%p1176) target = $region40
      $region39: #{network_forward.14} parent=35 // pred_region
        %s1179 = smul.u32 25, %s15
      $region40: #{network_forward.14} parent=35 // pred_fallthru
        _
    $region36: #{network_forward.14} parent=5 // pred_fallthru
      _
    %p1180 = scmp.le.s32.totalorder 2, %s10
    // Predicated region
    $region41: #{network_forward.14} parent=5 // pred_check
      %p1181 = pneg %p1180
    $region42: #{network_forward.14} parent=5 // pred_check_branch
      %1183 = sbr.rel (%p1181) target = $region44
    $region43: #{network_forward.14} parent=5 // pred_region
      %s1184 = ssub.s32 %s10, 2
      // Predicated region
      $region45: #{network_forward.14} parent=43 // pred_check
        %p1185 = pneg %p133
      $region46: #{network_forward.14} parent=43 // pred_check_branch
        %1187 = sbr.rel (%p1185) target = $region48
      $region47: #{network_forward.14} parent=43 // pred_region
        %s1188 = smul.u32 25, %s16
        %p1189 = scmp.lt.s32.totalorder %s1188, 49
        %s1190 = scalar_select %p1189, %s1188, 49
        %s1191 = smul.addr %s1190, 8
        %s1192 = scalar_lea.vmem %s4, %s1191
      $region48: #{network_forward.14} parent=43 // pred_fallthru
        _
    $region44: #{network_forward.14} parent=5 // pred_fallthru
      _
  $region6: #{network_forward.14} parent=0 // loop_footer
    %s14 = sadd.s32 1, %s10
  $region7: #{network_forward.14} parent=0 // loop_footer_branch
    %9 = sbr.rel target = $region3
  $region8: #{network_forward.14} parent=0 // loop_exit
    _

// kernel: network_forward.15
$region0: #{network_forward.15}
  #allocation0 [shape = 'u32[]', space=smem, size = 0x4, offset = 0x4, fixed_abs, tag = 'smem constant byte address 0x4 - core index']
  #allocation1 [shape = 'u32[72,128]{1,0:T(1,128)}', space=vmem, size = 0x9000, scoped, tag = 'internal scratch']
  %s0 = inlined_call_operand.vmem [shape: bf16[16,432], index: 0, kind: input, shape index: {}]
  %s1 = inlined_call_operand.vmem [shape: bf16[432,32], index: 1, kind: input, shape index: {}]
  %s2 = inlined_call_operand.vmem [shape: f32[1,32], index: 2, kind: input, shape index: {}]
  %s3 = inlined_call_operand.vmem [shape: f32[16,32], index: 3, kind: output, shape index: {}]
  %s4 = sld [smem:[#allocation0]]
  $region45: #{network_forward.15} parent=0
    _
  %s6 = ssub.s32 1, %s4
  %s7 = scalar_select 0, %s6, %s4
  loop: start=0, step=1, limit=4
  $region2: #{network_forward.15} parent=0 // loop_pre_header
    _
  $region3: #{network_forward.15} parent=0 // loop_header
    %s9 = sphi 0, %s13
    %p10 = scmp.ge.s32.totalorder %s9, 4
    %s19 = sphi 0, %s21
    %s22 = sphi 0, %s19
    %s23 = sphi 0, %s22
    %s39 = sphi 0, %s23
    %s43 = sphi 0, %s43
    %s45 = sphi 0, %s43
    %s46 = sphi 0, %s45
    %s60 = sphi 0, %s46
    %s64 = sphi 0, %s64
    %s66 = sphi 0, %s64
    %s67 = sphi 0, %s66
    %s81 = sphi 0, %s67
    %s87 = sphi 0, %s89
    %s90 = sphi 0, %s87
    %s91 = sphi 0, %s90
    %s107 = sphi 0, %s91
  $region4: #{network_forward.15} parent=0 // loop_header_branch
    %12 = sbr.rel (%p10) target = $region8
  $region5: #{network_forward.15} parent=0 // loop_body
    %s14 = ssub.s32 %s9, 1
    %s15 = ssub.s32 %s9, 2
    %s16 = sadd.s32 %s9, 1
    %s17 = ssub.s32 %s9, %s16
    %p18 = scmp.eq.s32.totalorder %s17, 0
    %s20 = sadd.s32 %s19, 1
    %s21 = scalar_select %p18, %s19, %s20
    %p24 = pneg %p18
    %p25 = scmp.eq.s32.totalorder %s9, 1
    %p26 = por %p24, %p25
    %p27 = scmp.ne.s32.totalorder %s19, %s22
    %p28 = scmp.eq.s32.totalorder %s9, 0
    %p29 = por %p27, %p28
    %p30 = scmp.ne.s32.totalorder %s19, %s22
    %p31 = scmp.eq.s32.totalorder %s14, 1
    %p32 = por %p30, %p31
    %p33 = scmp.ne.s32.totalorder %s22, %s23
    %p34 = scmp.eq.s32.totalorder %s14, 0
    %p35 = por %p33, %p34
    %p36 = scmp.ne.s32.totalorder %s22, %s23
    %p37 = scmp.eq.s32.totalorder %s15, 1
    %p38 = por %p36, %p37
    %p40 = scmp.ne.s32.totalorder %s23, %s39
    %p41 = scmp.eq.s32.totalorder %s15, 0
    %p42 = por %p40, %p41
    %s44 = sadd.s32 %s43, 1
    %p47 = scmp.eq.s32.totalorder %s9, 1
    %p48 = scmp.ne.s32.totalorder %s43, %s45
    %p49 = scmp.eq.s32.totalorder %s9, 0
    %p50 = por %p48, %p49
    %p51 = scmp.ne.s32.totalorder %s43, %s45
    %p52 = scmp.eq.s32.totalorder %s14, 1
    %p53 = por %p51, %p52
    %p54 = scmp.ne.s32.totalorder %s45, %s46
    %p55 = scmp.eq.s32.totalorder %s14, 0
    %p56 = por %p54, %p55
    %p57 = scmp.ne.s32.totalorder %s45, %s46
    %p58 = scmp.eq.s32.totalorder %s15, 1
    %p59 = por %p57, %p58
    %p61 = scmp.ne.s32.totalorder %s46, %s60
    %p62 = scmp.eq.s32.totalorder %s15, 0
    %p63 = por %p61, %p62
    %s65 = sadd.s32 %s64, 1
    %p68 = scmp.eq.s32.totalorder %s9, 1
    %p69 = scmp.ne.s32.totalorder %s64, %s66
    %p70 = scmp.eq.s32.totalorder %s9, 0
    %p71 = por %p69, %p70
    %p72 = scmp.ne.s32.totalorder %s64, %s66
    %p73 = scmp.eq.s32.totalorder %s14, 1
    %p74 = por %p72, %p73
    %p75 = scmp.ne.s32.totalorder %s66, %s67
    %p76 = scmp.eq.s32.totalorder %s14, 0
    %p77 = por %p75, %p76
    %p78 = scmp.ne.s32.totalorder %s66, %s67
    %p79 = scmp.eq.s32.totalorder %s15, 1
    %p80 = por %p78, %p79
    %p82 = scmp.ne.s32.totalorder %s67, %s81
    %p83 = scmp.eq.s32.totalorder %s15, 0
    %p84 = por %p82, %p83
    %s85 = ssub.s32 %s9, %s16
    %p86 = scmp.eq.s32.totalorder %s85, 0
    %s88 = sadd.s32 %s87, 1
    %s89 = scalar_select %p86, %s87, %s88
    %p92 = pneg %p86
    %p93 = scmp.eq.s32.totalorder %s9, 1
    %p94 = por %p92, %p93
    %p95 = scmp.ne.s32.totalorder %s87, %s90
    %p96 = scmp.eq.s32.totalorder %s9, 0
    %p97 = por %p95, %p96
    %p98 = scmp.ne.s32.totalorder %s87, %s90
    %p99 = scmp.eq.s32.totalorder %s14, 1
    %p100 = por %p98, %p99
    %p101 = scmp.ne.s32.totalorder %s90, %s91
    %p102 = scmp.eq.s32.totalorder %s14, 0
    %p103 = por %p101, %p102
    %p104 = scmp.ne.s32.totalorder %s90, %s91
    %p105 = scmp.eq.s32.totalorder %s15, 1
    %p106 = por %p104, %p105
    %p108 = scmp.ne.s32.totalorder %s91, %s107
    %p109 = scmp.eq.s32.totalorder %s15, 0
    %p110 = por %p108, %p109
    %p111 = scmp.le.s32.totalorder 1, %s9
    %p112 = scmp.lt.s32.totalorder %s9, 3
    %p113 = pnand %p111, %p112
    %p114 = pneg %p113
    // Predicated region
    $region9: #{network_forward.15} parent=5 // pred_check
      _
    $region10: #{network_forward.15} parent=5 // pred_check_branch
      %116 = sbr.rel (%p113) target = $region12
    $region11: #{network_forward.15} parent=5 // pred_region
      %s117 = ssub.s32 %s9, 1
      // Predicated region
      $region13: #{network_forward.15} parent=11 // pred_check
        %p118 = pneg %p56
      $region14: #{network_forward.15} parent=11 // pred_check_branch
        %120 = sbr.rel (%p118) target = $region16
      $region15: #{network_forward.15} parent=11 // pred_region
        _
      $region16: #{network_forward.15} parent=11 // pred_fallthru
        _
      // Predicated region
      $region17: #{network_forward.15} parent=11 // pred_check
        %p121 = pneg %p77
      $region18: #{network_forward.15} parent=11 // pred_check_branch
        %123 = sbr.rel (%p121) target = $region20
      $region19: #{network_forward.15} parent=11 // pred_region
        _
      $region20: #{network_forward.15} parent=11 // pred_fallthru
        _
    $region12: #{network_forward.15} parent=5 // pred_fallthru
      _
    %p124 = scmp.lt.s32.totalorder %s9, 2
    // Predicated region
    $region21: #{network_forward.15} parent=5 // pred_check
      %p125 = pneg %p124
    $region22: #{network_forward.15} parent=5 // pred_check_branch
      %127 = sbr.rel (%p125) target = $region24
    $region23: #{network_forward.15} parent=5 // pred_region
      // Predicated region
      $region25: #{network_forward.15} parent=23 // pred_check
        %p128 = pneg %p29
      $region26: #{network_forward.15} parent=23 // pred_check_branch
        %130 = sbr.rel (%p128) target = $region28
      $region27: #{network_forward.15} parent=23 // pred_region
        %p131 = scmp.lt.s32.totalorder %s9, 1
        %s132 = scalar_select %p131, %s9, 1
        %s133 = smul.addr %s132, 4
        %s134 = smul.addr %s133, 4
        %s135 = scalar_lea.vmem %s0, %s134
      $region28: #{network_forward.15} parent=23 // pred_fallthru
        _
    $region24: #{network_forward.15} parent=5 // pred_fallthru
      _
    %p136 = scmp.le.s32.totalorder 1, %s9
    %p137 = scmp.lt.s32.totalorder %s9, 3
    %p138 = pnand %p136, %p137
    %p139 = pneg %p138
    // Predicated region
    $region29: #{network_forward.15} parent=5 // pred_check
      _
    $region30: #{network_forward.15} parent=5 // pred_check_branch
      %141 = sbr.rel (%p138) target = $region32
    $region31: #{network_forward.15} parent=5 // pred_region
      %s142 = ssub.s32 %s9, 1
      %p143 = scmp.lt.s32.totalorder %s14, 1
      %s144 = scalar_select %p143, %s14, 1
      %s145 = smul.addr %s144, 4
      %s146 = smul.addr %s145, 4
      %s147 = scalar_lea.vmem %s0, %s146
      %p148 = pneg %p35
      %p149 = pneg %p32
      %p150 = pneg %p56
      %p151 = pneg %p53
      %p152 = pneg %p77
      %p153 = pneg %p74
      %p154 = pneg %p103
      %p155 = pneg %p100
      %p156 = scmp.lt.s32.totalorder %s14, 1
      %s157 = scalar_select %p156, %s14, 1
      %s158 = smul.addr %s157, 8
      %s159 = scalar_lea.vmem %s3, %s158
      %p160 = scmp.lt.s32.totalorder %s14, 1
      %s161 = scalar_select %p160, %s14, 1
      %s162 = smul.addr %s161, 4
      %s163 = smul.addr %s162, 4
      %s164 = scalar_lea.vmem %s0, %s163
      %p165 = scmp.lt.s32.totalorder %s14, 1
      %s166 = scalar_select %p165, %s14, 1
      %s167 = smul.addr %s166, 8
      %s168 = scalar_lea.vmem %s3, %s167
      %v170 = vld [vmem:[%s164] sm:$0xff]
      %v171 = vld [vmem:[%s164 + $0x8] sm:$0xff]
      %v172 = vld [vmem:[%s1] sm:$0xf]
      %v173 = vld [vmem:[%s1 + $0x4] sm:$0xf]
      %v174 = vld [vmem:[%s1 + $0x8] sm:$0xf]
      %v175 = vld [vmem:[%s1 + $0xc] sm:$0xf]
      %v176 = vld [vmem:[%s1 + $0x10] sm:$0xf]
      %v177 = vld [vmem:[%s1 + $0x14] sm:$0xf]
      %v178 = vld [vmem:[%s1 + $0x18] sm:$0xf]
      %v179 = vld [vmem:[%s1 + $0x1c] sm:$0xf]
      %v180 = vld [vmem:[%s1 + $0x20] sm:$0xf]
      %v181 = vld [vmem:[%s1 + $0x24] sm:$0xf]
      %v182 = vld [vmem:[%s1 + $0x28] sm:$0xf]
      %v183 = vld [vmem:[%s1 + $0x2c] sm:$0xf]
      %v184 = vld [vmem:[%s1 + $0x30] sm:$0xf]
      %v185 = vld [vmem:[%s1 + $0x34] sm:$0xf]
      %v186 = vld [vmem:[%s1 + $0x38] sm:$0xf]
      %v187 = vld [vmem:[%s1 + $0x3c] sm:$0xf]
      %v188 = vld [vmem:[%s1 + $0x40] sm:$0xf]
      %v189 = vld [vmem:[%s1 + $0x44] sm:$0xf]
      %v190 = vld [vmem:[%s1 + $0x48] sm:$0xf]
      %v191 = vld [vmem:[%s1 + $0x4c] sm:$0xf]
      %v192 = vld [vmem:[%s1 + $0x50] sm:$0xf]
      %v193 = vld [vmem:[%s1 + $0x54] sm:$0xf]
      %v194 = vld [vmem:[%s1 + $0x58] sm:$0xf]
      %v195 = vld [vmem:[%s1 + $0x5c] sm:$0xf]
      %v196 = vld [vmem:[%s1 + $0x60] sm:$0xf]
      %v197 = vld [vmem:[%s1 + $0x64] sm:$0xf]
      %v198 = vld [vmem:[%s1 + $0x68] sm:$0xf]
      %v199 = vld [vmem:[%s1 + $0x6c] sm:$0xf]
      %v200 = vld [vmem:[%s1 + $0x70] sm:$0xf]
      %v201 = vld [vmem:[%s1 + $0x74] sm:$0xf]
      %v202 = vld [vmem:[%s1 + $0x78] sm:$0xf]
      %v203 = vld [vmem:[%s1 + $0x7c] sm:$0xf]
      %v204 = vld [vmem:[%s1 + $0x80] sm:$0xf]
      %v205 = vld [vmem:[%s1 + $0x84] sm:$0xf]
      %v206 = vld [vmem:[%s1 + $0x88] sm:$0xf]
      %v207 = vld [vmem:[%s1 + $0x8c] sm:$0xf]
      %v208 = vld [vmem:[%s1 + $0x90] sm:$0xf]
      %v209 = vld [vmem:[%s1 + $0x94] sm:$0xf]
      %v210 = vld [vmem:[%s1 + $0x98] sm:$0xf]
      %v211 = vld [vmem:[%s1 + $0x9c] sm:$0xf]
      %v212 = vld [vmem:[%s1 + $0xa0] sm:$0xf]
      %v213 = vld [vmem:[%s1 + $0xa4] sm:$0xf]
      %v214 = vld [vmem:[%s1 + $0xa8] sm:$0xf]
      %v215 = vld [vmem:[%s1 + $0xac] sm:$0xf]
      %v216 = vld [vmem:[%s1 + $0xb0] sm:$0xf]
      %v217 = vld [vmem:[%s1 + $0xb4] sm:$0xf]
      %v218 = vld [vmem:[%s1 + $0xb8] sm:$0xf]
      %v219 = vld [vmem:[%s1 + $0xbc] sm:$0xf]
      %v220 = vld [vmem:[%s1 + $0xc0] sm:$0xf]
      %v221 = vld [vmem:[%s1 + $0xc4] sm:$0xf]
      %v222 = vld [vmem:[%s1 + $0xc8] sm:$0xf]
      %v223 = vld [vmem:[%s1 + $0xcc] sm:$0xf]
      %v224 = vld [vmem:[%s1 + $0xd0] sm:$0xf]
      %v225 = vld [vmem:[%s1 + $0xd4] sm:$0xf]
      %v226 = vld [vmem:[%s2] sm:$0x1]
      %v228 = vperm.slane %v226, 0
      %v232 = vunpack.c.l.b16 %v170
      %v233 = vunpack.c.h.b16 %v170
      %v234 = vunpack.c.l.b16 %v171
      %v235 = vunpack.c.h.b16 %v171
      %v236 = vpack.c.b16 %v232, %v232
      %v237 = vpack.c.b16 %v233, %v233
      %v238 = vpack.c.b16 %v234, %v234
      %v239 = vpack.c.b16 %v235, %v235
      %v297 = vunpack.c.l.b16 %v172
      %v298 = vunpack.c.l.b16 %v173
      %v299 = vunpack.c.l.b16 %v174
      %v300 = vunpack.c.l.b16 %v175
      %v301 = vunpack.c.l.b16 %v176
      %v302 = vunpack.c.l.b16 %v177
      %v303 = vunpack.c.l.b16 %v178
      %v304 = vunpack.c.l.b16 %v179
      %v305 = vunpack.c.l.b16 %v180
      %v306 = vunpack.c.l.b16 %v181
      %v307 = vunpack.c.l.b16 %v182
      %v308 = vunpack.c.l.b16 %v183
      %v309 = vunpack.c.l.b16 %v184
      %v310 = vunpack.c.l.b16 %v185
      %v311 = vunpack.c.l.b16 %v186
      %v312 = vunpack.c.l.b16 %v187
      %v313 = vunpack.c.l.b16 %v188
      %v314 = vunpack.c.l.b16 %v189
      %v315 = vunpack.c.l.b16 %v190
      %v316 = vunpack.c.l.b16 %v191
      %v317 = vunpack.c.l.b16 %v192
      %v318 = vunpack.c.l.b16 %v193
      %v319 = vunpack.c.l.b16 %v194
      %v320 = vunpack.c.l.b16 %v195
      %v321 = vunpack.c.l.b16 %v196
      %v322 = vunpack.c.l.b16 %v197
      %v323 = vunpack.c.l.b16 %v198
      %v324 = vunpack.c.l.b16 %v199
      %v325 = vunpack.c.l.b16 %v200
      %v326 = vunpack.c.l.b16 %v201
      %v327 = vunpack.c.l.b16 %v202
      %v328 = vunpack.c.l.b16 %v203
      %v329 = vunpack.c.l.b16 %v204
      %v330 = vunpack.c.l.b16 %v205
      %v331 = vunpack.c.l.b16 %v206
      %v332 = vunpack.c.l.b16 %v207
      %v333 = vunpack.c.l.b16 %v208
      %v334 = vunpack.c.l.b16 %v209
      %v335 = vunpack.c.l.b16 %v210
      %v336 = vunpack.c.l.b16 %v211
      %v337 = vunpack.c.l.b16 %v212
      %v338 = vunpack.c.l.b16 %v213
      %v339 = vunpack.c.l.b16 %v214
      %v340 = vunpack.c.l.b16 %v215
      %v341 = vunpack.c.l.b16 %v216
      %v342 = vunpack.c.l.b16 %v217
      %v343 = vunpack.c.l.b16 %v218
      %v344 = vunpack.c.l.b16 %v219
      %v345 = vunpack.c.l.b16 %v220
      %v346 = vunpack.c.l.b16 %v221
      %v347 = vunpack.c.l.b16 %v222
      %v348 = vunpack.c.l.b16 %v223
      %v349 = vunpack.c.l.b16 %v224
      %v350 = vunpack.c.l.b16 %v225
      %v351 = vpack.c.b16 %v298, %v297
      %v352 = vpack.c.b16 %v300, %v299
      %v353 = vpack.c.b16 %v302, %v301
      %v354 = vpack.c.b16 %v304, %v303
      %v355 = vpack.c.b16 %v306, %v305
      %v356 = vpack.c.b16 %v308, %v307
      %v357 = vpack.c.b16 %v310, %v309
      %v358 = vpack.c.b16 %v312, %v311
      %v359 = vpack.c.b16 %v314, %v313
      %v360 = vpack.c.b16 %v316, %v315
      %v361 = vpack.c.b16 %v318, %v317
      %v362 = vpack.c.b16 %v320, %v319
      %v363 = vpack.c.b16 %v322, %v321
      %v364 = vpack.c.b16 %v324, %v323
      %v365 = vpack.c.b16 %v326, %v325
      %v366 = vpack.c.b16 %v328, %v327
      %v367 = vpack.c.b16 %v330, %v329
      %v368 = vpack.c.b16 %v332, %v331
      %v369 = vpack.c.b16 %v334, %v333
      %v370 = vpack.c.b16 %v336, %v335
      %v371 = vpack.c.b16 %v338, %v337
      %v372 = vpack.c.b16 %v340, %v339
      %v373 = vpack.c.b16 %v342, %v341
      %v374 = vpack.c.b16 %v344, %v343
      %v375 = vpack.c.b16 %v346, %v345
      %v376 = vpack.c.b16 %v348, %v347
      %v377 = vpack.c.b16 %v350, %v349
      %vm405 = vcmask 392192
      %v407 = vsel %vm405, %v239, 0
      %409 = vmatpush.bf16.msra.mxu0 %v358
      %410 = vmatpush.bf16.msra.mxu0 %v357
      %411 = vmatpush.bf16.msra.mxu0 %v356
      %412 = vmatpush.bf16.msra.mxu0 %v355
      %413 = vmatpush.bf16.msra.mxu0 %v354
      %414 = vmatpush.bf16.msra.mxu0 %v353
      %415 = vmatpush.bf16.msra.mxu0 %v352
      %416 = vmatpush.bf16.msra.mxu0 %v351
      %417 = vmatmul.bf16.gmra.mxu0 %v236
      %v418 = vpop.f32.mrf.mxu0
      %v419 = vadd.f32 %v228, %v418
      %v420 = vpop.f32.mrf.mxu0
      %421 = vdwg.mxu0
      %422 = vmatpush.bf16.msra.mxu0 %v366
      %423 = vmatpush.bf16.msra.mxu0 %v365
      %424 = vmatpush.bf16.msra.mxu0 %v364
      %425 = vmatpush.bf16.msra.mxu0 %v363
      %426 = vmatpush.bf16.msra.mxu0 %v362
      %427 = vmatpush.bf16.msra.mxu0 %v361
      %428 = vmatpush.bf16.msra.mxu0 %v360
      %429 = vmatpush.bf16.msra.mxu0 %v359
      %430 = vmatmul.bf16.gmra.mxu0 %v237
      %v431 = vpop.f32.mrf.mxu0
      %v432 = vadd.f32 %v419, %v431
      %v433 = vpop.f32.mrf.mxu0
      %434 = vdwg.mxu0
      %435 = vmatpush.bf16.msra.mxu0 %v374
      %436 = vmatpush.bf16.msra.mxu0 %v373
      %437 = vmatpush.bf16.msra.mxu0 %v372
      %438 = vmatpush.bf16.msra.mxu0 %v371
      %439 = vmatpush.bf16.msra.mxu0 %v370
      %440 = vmatpush.bf16.msra.mxu0 %v369
      %441 = vmatpush.bf16.msra.mxu0 %v368
      %442 = vmatpush.bf16.msra.mxu0 %v367
      %443 = vmatmul.bf16.gmra.mxu0 %v238
      %v444 = vpop.f32.mrf.mxu0
      %v445 = vadd.f32 %v432, %v444
      %v446 = vpop.f32.mrf.mxu0
      %447 = vdwg.mxu0
      %448 = vmatpush.bf16.msra.mxu0 0
      %449 = vmatpush.bf16.msra.mxu0 0
      %450 = vmatpush.bf16.msra.mxu0 0
      %451 = vmatpush.bf16.msra.mxu0 0
      %452 = vmatpush.bf16.msra.mxu0 0
      %453 = vmatpush.bf16.msra.mxu0 %v377
      %454 = vmatpush.bf16.msra.mxu0 %v376
      %455 = vmatpush.bf16.msra.mxu0 %v375
      %456 = vmatmul.bf16.gmra.mxu0 %v407
      %v457 = vpop.f32.mrf.mxu0
      %v458 = vadd.f32 %v445, %v457
      %v459 = vpop.f32.mrf.mxu0
      %460 = vdwg.mxu0
      %vm461 = vcmask 261120
      %462 = vst.msk [vmem:[%s168] sm:$0xff] %vm461, %v458
      %p463 = scmp.lt.s32.totalorder %s14, 1
      %s464 = scalar_select %p463, %s14, 1
      %s465 = smul.addr %s464, 8
      %s466 = scalar_lea.vmem %s3, %s465
      // Predicated region
      $region33: #{network_forward.15} parent=31 // pred_check
        %p467 = pneg %p100
      $region34: #{network_forward.15} parent=31 // pred_check_branch
        %469 = sbr.rel (%p467) target = $region36
      $region35: #{network_forward.15} parent=31 // pred_region
        _
      $region36: #{network_forward.15} parent=31 // pred_fallthru
        _
    $region32: #{network_forward.15} parent=5 // pred_fallthru
      _
    %p470 = scmp.le.s32.totalorder 2, %s9
    // Predicated region
    $region37: #{network_forward.15} parent=5 // pred_check
      %p471 = pneg %p470
    $region38: #{network_forward.15} parent=5 // pred_check_branch
      %473 = sbr.rel (%p471) target = $region40
    $region39: #{network_forward.15} parent=5 // pred_region
      %s474 = ssub.s32 %s9, 2
      // Predicated region
      $region41: #{network_forward.15} parent=39 // pred_check
        %p475 = pneg %p106
      $region42: #{network_forward.15} parent=39 // pred_check_branch
        %477 = sbr.rel (%p475) target = $region44
      $region43: #{network_forward.15} parent=39 // pred_region
        %p478 = scmp.lt.s32.totalorder %s15, 1
        %s479 = scalar_select %p478, %s15, 1
        %s480 = smul.addr %s479, 8
        %s481 = scalar_lea.vmem %s3, %s480
      $region44: #{network_forward.15} parent=39 // pred_fallthru
        _
    $region40: #{network_forward.15} parent=5 // pred_fallthru
      _
  $region6: #{network_forward.15} parent=0 // loop_footer
    %s13 = sadd.s32 1, %s9
  $region7: #{network_forward.15} parent=0 // loop_footer_branch
    %8 = sbr.rel target = $region3
  $region8: #{network_forward.15} parent=0 // loop_exit
    _

</llo_original>
